<compile_context>
chip_gen: v7x
topology: tpu7x:2x2x1
jax: 0.10.0
libtpu: 0.0.40
codegen_flags: <defaults>
</compile_context>

<pallas_src>
import functools

import numpy as np
import jax
import jax.numpy as jnp
from jax.experimental import pallas as pl
from jax.experimental.pallas import tpu as pltpu


def _round_up(n, m):
    return ((n + m - 1) // m) * m


# ----------------------------------------------------------------------------
# Host-side parameter preparation (runs once, outside the kernel)
# ----------------------------------------------------------------------------
def _conv_band_mats(w_oihw, w_in, k_pad, half_pad):
    """Banded per-kh weight matrices for 'conv = 5 row-shifted matmuls'.

    Input lanes are ordered (w, cin), zero-padded to k_pad.  Output lanes are
    ordered (ow % 2, ow // 2, cout), each parity half zero-padded to half_pad
    lanes, so the 2x2 W-pool is a max of two 128-lane-aligned slices.
    """
    w = np.asarray(w_oihw, dtype=np.float32)
    c_out, c_in, kh, kw = w.shape
    w_out = w_in - kw + 1
    mats = np.zeros((kh, k_pad, 2 * half_pad), np.float32)
    for i in range(kh):
        for ow in range(w_out):
            pw, rw = divmod(ow, 2)
            col = rw * half_pad + pw * c_out
            for j in range(kw):
                wi = ow + j
                mats[i, wi * c_in:(wi + 1) * c_in, col:col + c_out] = w[:, :, i, j].T
    return mats


def _conv_band_bias(b, w_pool, half_pad):
    b = np.asarray(b, np.float32)
    half = np.zeros((half_pad,), np.float32)
    half[: w_pool * b.shape[0]] = np.tile(b, w_pool)
    return np.concatenate([half, half]).reshape(1, 2 * half_pad)


def prepare_lenet_params(params, compute_dtype=jnp.float32):
    """Rearranges PyTorch-layout LeNet params into the fused-kernel layout."""
    cd = compute_dtype
    f32 = np.float32

    # conv1: input lanes (w*3+c) -> (5, 96, 256); conv2: lanes (w*6+c) padded
    # to 128 -> (5, 128, 256).  Zero-padded K rows / N cols are harmless.
    w1 = _conv_band_mats(params["conv1_w"], w_in=32, k_pad=96, half_pad=128)
    w2 = _conv_band_mats(params["conv2_w"], w_in=14, k_pad=128, half_pad=128)
    b1 = _conv_band_bias(params["conv1_b"], w_pool=14, half_pad=128)   # (1, 256)
    b2 = _conv_band_bias(params["conv2_b"], w_pool=5, half_pad=128)    # (1, 256)

    # fc1 consumes features laid out rows=(h, b), lanes=(w*16 + c); bake the
    # PyTorch (c, h, w) flatten order into the weight, then pad K 80->128 and
    # N 120->128 so everything downstream is 128-lane dense.
    fc1 = (np.asarray(params["fc1_w"], f32).reshape(120, 16, 5, 5)
           .transpose(2, 3, 1, 0).reshape(5, 80, 120))
    fc1p = np.zeros((5, 128, 128), f32)
    fc1p[:, :80, :120] = fc1
    fc1_b = np.zeros((1, 128), f32)
    fc1_b[0, :120] = np.asarray(params["fc1_b"], f32)

    fc2 = np.zeros((128, 128), f32)
    fc2[:120, :84] = np.asarray(params["fc2_w"], f32).T
    fc2_b = np.zeros((1, 128), f32)
    fc2_b[0, :84] = np.asarray(params["fc2_b"], f32)

    fc3 = np.zeros((128, 128), f32)
    fc3[:84, :100] = np.asarray(params["fc3_w"], f32).T
    fc3_b = np.zeros((1, 128), f32)
    fc3_b[0, :100] = np.asarray(params["fc3_b"], f32)

    return {
        "w1": jnp.asarray(w1, cd), "b1": jnp.asarray(b1, jnp.float32),
        "w2": jnp.asarray(w2, cd), "b2": jnp.asarray(b2, jnp.float32),
        "fc1": jnp.asarray(fc1p, cd), "fc1_b": jnp.asarray(fc1_b, jnp.float32),
        "fc2": jnp.asarray(fc2, cd), "fc2_b": jnp.asarray(fc2_b, jnp.float32),
        "fc3": jnp.asarray(fc3, cd), "fc3_b": jnp.asarray(fc3_b, jnp.float32),
    }


# ----------------------------------------------------------------------------
# Fused Pallas kernel: whole LeNet forward for one batch tile
# ----------------------------------------------------------------------------
def _lenet_fused_kernel(x_ref, w1_ref, b1_ref, w2_ref, b2_ref,
                        fc1_ref, fc1b_ref, fc2_ref, fc2b_ref,
                        fc3_ref, fc3b_ref, o_ref):
    f32 = jnp.float32
    bt = o_ref.shape[0]                       # batch-tile size
    cdt = w1_ref.dtype                        # MXU compute dtype (f32 or bf16)

    def conv_relu_pool(in_groups, w_ref, b_ref, rows_out):
        """5x5 valid conv + bias + ReLU + 2x2 max pool, fully VMEM-resident.

        in_groups: list of G 2-D values (already in cdt); group g holds input
        rows h with h % G == g, flattened as (h // G) * bt + b on the sublane
        axis.  Returns G // 2 pooled groups (cast to cdt) in the same layout.
        """
        n_g = len(in_groups)
        bias = b_ref[...]
        n_out = b_ref.shape[-1]               # 2 * 128 (lane-padded halves)
        outs = []
        for og in range(n_g):                 # output rows with oh % n_g == og
            acc = jnp.zeros((rows_out * bt, n_out), f32)
            for i in range(5):                # kernel-row (kh) shift
                gi = (og + i) % n_g
                d = (og + i) // n_g
                xs = in_groups[gi][d * bt:(d + rows_out) * bt, :]
                acc = acc + jnp.dot(xs, w_ref[i], preferred_element_type=f32)
            outs.append(jnp.maximum(acc + bias, 0.0))
        # 2x2 max pool: H across group pairs, W across 128-lane-aligned halves
        # (pure VPU max; padded lanes are zeros by construction).
        half = n_out // 2                     # == 128
        pooled = []
        for p in range(n_g // 2):
            m = jnp.maximum(outs[2 * p], outs[2 * p + 1])
            pooled.append(jnp.maximum(m[:, :half], m[:, half:]).astype(cdt))
        return pooled

    # conv1 + ReLU + pool : 4 groups of (8*bt, 96) -> 2 groups of (7*bt, 128)
    g_in = [x_ref[g] for g in range(4)]
    g1 = conv_relu_pool(g_in, w1_ref, b1_ref, rows_out=7)
    # conv2 + ReLU + pool : 2 groups of (7*bt, 128) -> 1 group of (5*bt, 128)
    g2 = conv_relu_pool(g1, w2_ref, b2_ref, rows_out=5)
    feat = g2[0]                              # rows = h*bt + b, lanes = w*16+c

    # fc1 (+ReLU): sum over the 5 pooled rows h of (bt, 128) @ (128, 128)
    acc = jnp.zeros((bt, fc1_ref.shape[-1]), f32)
    for h in range(5):
        acc = acc + jnp.dot(feat[h * bt:(h + 1) * bt, :], fc1_ref[h],
                            preferred_element_type=f32)
    a1 = jnp.maximum(acc + fc1b_ref[...], 0.0).astype(cdt)
    # fc2 (+ReLU), fc3 — all 128x128, lane-dense
    a2 = jnp.maximum(jnp.dot(a1, fc2_ref[...], preferred_element_type=f32)
                     + fc2b_ref[...], 0.0).astype(cdt)
    out = jnp.dot(a2, fc3_ref[...], preferred_element_type=f32) + fc3b_ref[...]
    o_ref[...] = out.astype(o_ref.dtype)      # full (bt, 128) unmasked store


# ----------------------------------------------------------------------------
# Wrapper
# ----------------------------------------------------------------------------
def _const_spec(a):
    n = a.ndim
    return pl.BlockSpec(a.shape, lambda t, n=n: (0,) * n)


@functools.partial(jax.jit, static_argnames=("tile_b",))
def lenet_apply(prep, x, *, tile_b=128):
    """Fused LeNet forward.  x: (B, 3, 32, 32) NCHW float32 -> (B, 100)."""
    B = x.shape[0]
    nb = -(-B // tile_b)                      # ceil-div
    b_pad = nb * tile_b
    in_dtype = prep["w1"].dtype

    # Cast first so the one-time NCHW -> grouped relayout moves compute-dtype
    # bytes (half the traffic in bf16); then pad batch to the tile multiple.
    x = x.astype(in_dtype)
    if b_pad != B:
        x = jnp.pad(x, ((0, b_pad - B), (0, 0), (0, 0), (0, 0)))

    # Row groups by (h % 4), rows flattened as (h//4)*tile_b + b, lanes = w*3+c.
    xr = x.transpose(0, 2, 3, 1).reshape(b_pad, 32, 96)             # (b, h, w*3+c)
    xr = xr.reshape(nb, tile_b, 8, 4, 96).transpose(0, 3, 2, 1, 4)  # (t, g, hg, b, l)
    xr = xr.reshape(nb * 4, 8 * tile_b, 96)

    weights = (prep["w1"], prep["b1"], prep["w2"], prep["b2"],
               prep["fc1"], prep["fc1_b"], prep["fc2"], prep["fc2_b"],
               prep["fc3"], prep["fc3_b"])

    # Note: weight BlockSpecs have constant index_maps, so their DMA only runs
    # on the first grid step; we leave them default-buffered (they are small).
    out = pl.pallas_call(
        _lenet_fused_kernel,
        out_shape=jax.ShapeDtypeStruct((b_pad, 128), jnp.float32),
        grid=(nb,),
        in_specs=[pl.BlockSpec((4, 8 * tile_b, 96), lambda t: (t, 0, 0))]
                 + [_const_spec(w) for w in weights],
        out_specs=pl.BlockSpec((tile_b, 128), lambda t: (t, 0)),
        compiler_params=pltpu.CompilerParams(
            dimension_semantics=("parallel",),
            vmem_limit_bytes=48 * 1024 * 1024),
    )(xr, *weights)
    return out[:B, :100]


def lenet_forward(params, x, *, tile_b=128, compute_dtype=jnp.float32):
    """LeNet forward via one fused Pallas kernel.

    tile_b: batch tile (primary tuning knob).  128 is a good default; prefer
      256 on v6e (2x256^2 MXU), cap around 256 (f32) / 512 (bf16) on v7x so
      nb >= 2 and VMEM (64 MiB physical) has headroom.
    compute_dtype: jnp.bfloat16 recommended on v6e/v7x (bf16-native MXU,
      halves weight/activation DMA; accumulation stays f32).  Default f32 so
      the tight reference tolerance is guaranteed.
    """
    prep = prepare_lenet_params(params, compute_dtype)
    B = x.shape[0]
    # Keep the tile a multiple of 16 (sublane-aligned for both f32 and bf16
    # row slices) and no larger than the rounded-up batch, so small batches
    # aren't mostly padding.
    tb = max(16, min(int(tile_b), _round_up(B, 16)))
    tb = _round_up(tb, 16)
    return lenet_apply(prep, x, tile_b=tb)


# ----------------------------------------------------------------------------
# PyTorch-style init + pure-JAX reference
# ----------------------------------------------------------------------------
def init_lenet_params(key):
    def uniform(key, shape, fan_in):
        bound = 1.0 / np.sqrt(float(fan_in))
        return jax.random.uniform(key, shape, jnp.float32, -bound, bound)

    ks = jax.random.split(key, 10)
    return {
        "conv1_w": uniform(ks[0], (6, 3, 5, 5), 3 * 5 * 5),
        "conv1_b": uniform(ks[1], (6,), 3 * 5 * 5),
        "conv2_w": uniform(ks[2], (16, 6, 5, 5), 6 * 5 * 5),
        "conv2_b": uniform(ks[3], (16,), 6 * 5 * 5),
        "fc1_w": uniform(ks[4], (120, 16 * 5 * 5), 16 * 5 * 5),
        "fc1_b": uniform(ks[5], (120,), 16 * 5 * 5),
        "fc2_w": uniform(ks[6], (84, 120), 120),
        "fc2_b": uniform(ks[7], (84,), 120),
        "fc3_w": uniform(ks[8], (100, 84), 84),
        "fc3_b": uniform(ks[9], (100,), 84),
    }


def lenet_reference(params, x):
    def conv(x, w, b):
        y = jax.lax.conv_general_dilated(
            x, w, window_strides=(1, 1), padding="VALID",
            dimension_numbers=("NCHW", "OIHW", "NCHW"))
        return jax.nn.relu(y + b.reshape(1, -1, 1, 1))

    def pool(x):
        return jax.lax.reduce_window(
            x, -jnp.inf, jax.lax.max, (1, 1, 2, 2), (1, 1, 2, 2), "VALID")

    out = pool(conv(x, params["conv1_w"], params["conv1_b"]))
    out = pool(conv(out, params["conv2_w"], params["conv2_b"]))
    out = out.reshape(out.shape[0], -1)
    out = jax.nn.relu(out @ params["fc1_w"].T + params["fc1_b"])
    out = jax.nn.relu(out @ params["fc2_w"].T + params["fc2_b"])
    out = out @ params["fc3_w"].T + params["fc3_b"]
    return out


if __name__ == "__main__":
    key = jax.random.PRNGKey(0)
    k_param, k_x = jax.random.split(key)
    params = init_lenet_params(k_param)

    # fc1 = Linear(16*5*5, 120) pins the spatial size to 32x32, channels to 3.
    x = jax.random.normal(k_x, (4, 3, 32, 32), dtype=jnp.float32)
    y_ref = lenet_reference(params, x)

    # Default f32 compute path: tight tolerance vs reference.
    y = jax.block_until_ready(lenet_forward(params, x))
    assert y.shape == (4, 100), y.shape
    max_err = float(jnp.max(jnp.abs(y - y_ref)))
    assert jnp.allclose(y, y_ref, atol=2e-3, rtol=2e-3), max_err

    # bf16 MXU path (recommended on v6e/v7x); f32 accumulation, looser tol.
    y_bf = jax.block_until_ready(
        lenet_forward(params, x, compute_dtype=jnp.bfloat16))
    max_err_bf = float(jnp.max(jnp.abs(y_bf - y_ref)))
    assert max_err_bf < 5e-2, max_err_bf

    print("KERNEL_OK")
</pallas_src>

<mosaic_0001>
module attributes {stable_mosaic.version = 11 : i64} {
  func.func @_lenet_fused_kernel(%arg0: i32, %arg1: memref<4x128x96xf32, #tpu.memory_space<vmem>>, %arg2: memref<5x96x256xf32, #tpu.memory_space<vmem>>, %arg3: memref<1x256xf32, #tpu.memory_space<vmem>>, %arg4: memref<5x128x256xf32, #tpu.memory_space<vmem>>, %arg5: memref<1x256xf32, #tpu.memory_space<vmem>>, %arg6: memref<5x128x128xf32, #tpu.memory_space<vmem>>, %arg7: memref<1x128xf32, #tpu.memory_space<vmem>>, %arg8: memref<128x128xf32, #tpu.memory_space<vmem>>, %arg9: memref<1x128xf32, #tpu.memory_space<vmem>>, %arg10: memref<128x128xf32, #tpu.memory_space<vmem>>, %arg11: memref<1x128xf32, #tpu.memory_space<vmem>>, %arg12: memref<16x128xf32, #tpu.memory_space<vmem>>) attributes {dimension_semantics = [#tpu.dimension_semantics<parallel>], iteration_bounds = array<i64: 1>, scalar_prefetch = 0 : i64, scratch_operands = 0 : i64, tpu.core_type = #tpu.core_type<tc>, window_params = [{transform_indices = @transform_0, window_bounds = array<i64: 4, 128, 96>}, {pipeline_mode = #tpu.pipeline_mode<synchronous>, transform_indices = @transform_1, window_bounds = array<i64: 5, 96, 256>}, {pipeline_mode = #tpu.pipeline_mode<synchronous>, transform_indices = @transform_2, window_bounds = array<i64: 1, 256>}, {pipeline_mode = #tpu.pipeline_mode<synchronous>, transform_indices = @transform_3, window_bounds = array<i64: 5, 128, 256>}, {pipeline_mode = #tpu.pipeline_mode<synchronous>, transform_indices = @transform_4, window_bounds = array<i64: 1, 256>}, {pipeline_mode = #tpu.pipeline_mode<synchronous>, transform_indices = @transform_5, window_bounds = array<i64: 5, 128, 128>}, {pipeline_mode = #tpu.pipeline_mode<synchronous>, transform_indices = @transform_6, window_bounds = array<i64: 1, 128>}, {pipeline_mode = #tpu.pipeline_mode<synchronous>, transform_indices = @transform_7, window_bounds = array<i64: 128, 128>}, {pipeline_mode = #tpu.pipeline_mode<synchronous>, transform_indices = @transform_8, window_bounds = array<i64: 1, 128>}, {pipeline_mode = #tpu.pipeline_mode<synchronous>, transform_indices = @transform_9, window_bounds = array<i64: 128, 128>}, {pipeline_mode = #tpu.pipeline_mode<synchronous>, transform_indices = @transform_10, window_bounds = array<i64: 1, 128>}, {transform_indices = @transform_11, window_bounds = array<i64: 16, 128>}]} {
    %c0 = arith.constant 0 : index
    %c0_0 = arith.constant 0 : index
    %c0_1 = arith.constant 0 : index
    %0 = vector.load %arg1[%c0, %c0_0, %c0_1] : memref<4x128x96xf32, #tpu.memory_space<vmem>>, vector<1x128x96xf32>
    %1 = vector.shape_cast %0 : vector<1x128x96xf32> to vector<128x96xf32>
    %c1 = arith.constant 1 : index
    %c0_2 = arith.constant 0 : index
    %c0_3 = arith.constant 0 : index
    %2 = vector.load %arg1[%c1, %c0_2, %c0_3] : memref<4x128x96xf32, #tpu.memory_space<vmem>>, vector<1x128x96xf32>
    %3 = vector.shape_cast %2 : vector<1x128x96xf32> to vector<128x96xf32>
    %c2 = arith.constant 2 : index
    %c0_4 = arith.constant 0 : index
    %c0_5 = arith.constant 0 : index
    %4 = vector.load %arg1[%c2, %c0_4, %c0_5] : memref<4x128x96xf32, #tpu.memory_space<vmem>>, vector<1x128x96xf32>
    %5 = vector.shape_cast %4 : vector<1x128x96xf32> to vector<128x96xf32>
    %c3 = arith.constant 3 : index
    %c0_6 = arith.constant 0 : index
    %c0_7 = arith.constant 0 : index
    %6 = vector.load %arg1[%c3, %c0_6, %c0_7] : memref<4x128x96xf32, #tpu.memory_space<vmem>>, vector<1x128x96xf32>
    %7 = vector.shape_cast %6 : vector<1x128x96xf32> to vector<128x96xf32>
    %c0_8 = arith.constant 0 : index
    %c0_9 = arith.constant 0 : index
    %8 = vector.load %arg3[%c0_8, %c0_9] : memref<1x256xf32, #tpu.memory_space<vmem>>, vector<1x256xf32>
    %cst = arith.constant 0.000000e+00 : f32
    %9 = vector.broadcast %cst : f32 to vector<112x256xf32>
    %10 = vector.extract_strided_slice %1 {offsets = [0, 0], sizes = [112, 96], strides = [1, 1]} : vector<128x96xf32> to vector<112x96xf32>
    %c0_10 = arith.constant 0 : index
    %c0_11 = arith.constant 0 : index
    %c0_12 = arith.constant 0 : index
    %11 = vector.load %arg2[%c0_10, %c0_11, %c0_12] : memref<5x96x256xf32, #tpu.memory_space<vmem>>, vector<1x96x256xf32>
    %12 = vector.shape_cast %11 : vector<1x96x256xf32> to vector<96x256xf32>
    %cst_13 = arith.constant dense<0.000000e+00> : vector<112x256xf32>
    %13 = tpu.matmul %10, %12, %cst_13 {dimension_numbers = #tpu.dot_dimension_numbers<[1], [0], [0], [1], [0, 0, 1, 1], [], []>} : vector<112x96xf32>, vector<96x256xf32>, vector<112x256xf32> -> vector<112x256xf32>
    %14 = arith.addf %9, %13 : vector<112x256xf32>
    %15 = vector.extract_strided_slice %3 {offsets = [0, 0], sizes = [112, 96], strides = [1, 1]} : vector<128x96xf32> to vector<112x96xf32>
    %c1_14 = arith.constant 1 : index
    %c0_15 = arith.constant 0 : index
    %c0_16 = arith.constant 0 : index
    %16 = vector.load %arg2[%c1_14, %c0_15, %c0_16] : memref<5x96x256xf32, #tpu.memory_space<vmem>>, vector<1x96x256xf32>
    %17 = vector.shape_cast %16 : vector<1x96x256xf32> to vector<96x256xf32>
    %cst_17 = arith.constant dense<0.000000e+00> : vector<112x256xf32>
    %18 = tpu.matmul %15, %17, %cst_17 {dimension_numbers = #tpu.dot_dimension_numbers<[1], [0], [0], [1], [0, 0, 1, 1], [], []>} : vector<112x96xf32>, vector<96x256xf32>, vector<112x256xf32> -> vector<112x256xf32>
    %19 = arith.addf %14, %18 : vector<112x256xf32>
    %20 = vector.extract_strided_slice %5 {offsets = [0, 0], sizes = [112, 96], strides = [1, 1]} : vector<128x96xf32> to vector<112x96xf32>
    %c2_18 = arith.constant 2 : index
    %c0_19 = arith.constant 0 : index
    %c0_20 = arith.constant 0 : index
    %21 = vector.load %arg2[%c2_18, %c0_19, %c0_20] : memref<5x96x256xf32, #tpu.memory_space<vmem>>, vector<1x96x256xf32>
    %22 = vector.shape_cast %21 : vector<1x96x256xf32> to vector<96x256xf32>
    %cst_21 = arith.constant dense<0.000000e+00> : vector<112x256xf32>
    %23 = tpu.matmul %20, %22, %cst_21 {dimension_numbers = #tpu.dot_dimension_numbers<[1], [0], [0], [1], [0, 0, 1, 1], [], []>} : vector<112x96xf32>, vector<96x256xf32>, vector<112x256xf32> -> vector<112x256xf32>
    %24 = arith.addf %19, %23 : vector<112x256xf32>
    %25 = vector.extract_strided_slice %7 {offsets = [0, 0], sizes = [112, 96], strides = [1, 1]} : vector<128x96xf32> to vector<112x96xf32>
    %c3_22 = arith.constant 3 : index
    %c0_23 = arith.constant 0 : index
    %c0_24 = arith.constant 0 : index
    %26 = vector.load %arg2[%c3_22, %c0_23, %c0_24] : memref<5x96x256xf32, #tpu.memory_space<vmem>>, vector<1x96x256xf32>
    %27 = vector.shape_cast %26 : vector<1x96x256xf32> to vector<96x256xf32>
    %cst_25 = arith.constant dense<0.000000e+00> : vector<112x256xf32>
    %28 = tpu.matmul %25, %27, %cst_25 {dimension_numbers = #tpu.dot_dimension_numbers<[1], [0], [0], [1], [0, 0, 1, 1], [], []>} : vector<112x96xf32>, vector<96x256xf32>, vector<112x256xf32> -> vector<112x256xf32>
    %29 = arith.addf %24, %28 : vector<112x256xf32>
    %30 = vector.extract_strided_slice %1 {offsets = [16, 0], sizes = [112, 96], strides = [1, 1]} : vector<128x96xf32> to vector<112x96xf32>
    %c4 = arith.constant 4 : index
    %c0_26 = arith.constant 0 : index
    %c0_27 = arith.constant 0 : index
    %31 = vector.load %arg2[%c4, %c0_26, %c0_27] : memref<5x96x256xf32, #tpu.memory_space<vmem>>, vector<1x96x256xf32>
    %32 = vector.shape_cast %31 : vector<1x96x256xf32> to vector<96x256xf32>
    %cst_28 = arith.constant dense<0.000000e+00> : vector<112x256xf32>
    %33 = tpu.matmul %30, %32, %cst_28 {dimension_numbers = #tpu.dot_dimension_numbers<[1], [0], [0], [1], [0, 0, 1, 1], [], []>} : vector<112x96xf32>, vector<96x256xf32>, vector<112x256xf32> -> vector<112x256xf32>
    %34 = arith.addf %29, %33 : vector<112x256xf32>
    %35 = vector.broadcast %8 : vector<1x256xf32> to vector<112x256xf32>
    %36 = arith.addf %34, %35 : vector<112x256xf32>
    %cst_29 = arith.constant 0.000000e+00 : f32
    %37 = vector.broadcast %cst_29 : f32 to vector<112x256xf32>
    %38 = arith.maximumf %36, %37 : vector<112x256xf32>
    %cst_30 = arith.constant 0.000000e+00 : f32
    %39 = vector.broadcast %cst_30 : f32 to vector<112x256xf32>
    %40 = vector.extract_strided_slice %3 {offsets = [0, 0], sizes = [112, 96], strides = [1, 1]} : vector<128x96xf32> to vector<112x96xf32>
    %c0_31 = arith.constant 0 : index
    %c0_32 = arith.constant 0 : index
    %c0_33 = arith.constant 0 : index
    %41 = vector.load %arg2[%c0_31, %c0_32, %c0_33] : memref<5x96x256xf32, #tpu.memory_space<vmem>>, vector<1x96x256xf32>
    %42 = vector.shape_cast %41 : vector<1x96x256xf32> to vector<96x256xf32>
    %cst_34 = arith.constant dense<0.000000e+00> : vector<112x256xf32>
    %43 = tpu.matmul %40, %42, %cst_34 {dimension_numbers = #tpu.dot_dimension_numbers<[1], [0], [0], [1], [0, 0, 1, 1], [], []>} : vector<112x96xf32>, vector<96x256xf32>, vector<112x256xf32> -> vector<112x256xf32>
    %44 = arith.addf %39, %43 : vector<112x256xf32>
    %45 = vector.extract_strided_slice %5 {offsets = [0, 0], sizes = [112, 96], strides = [1, 1]} : vector<128x96xf32> to vector<112x96xf32>
    %c1_35 = arith.constant 1 : index
    %c0_36 = arith.constant 0 : index
    %c0_37 = arith.constant 0 : index
    %46 = vector.load %arg2[%c1_35, %c0_36, %c0_37] : memref<5x96x256xf32, #tpu.memory_space<vmem>>, vector<1x96x256xf32>
    %47 = vector.shape_cast %46 : vector<1x96x256xf32> to vector<96x256xf32>
    %cst_38 = arith.constant dense<0.000000e+00> : vector<112x256xf32>
    %48 = tpu.matmul %45, %47, %cst_38 {dimension_numbers = #tpu.dot_dimension_numbers<[1], [0], [0], [1], [0, 0, 1, 1], [], []>} : vector<112x96xf32>, vector<96x256xf32>, vector<112x256xf32> -> vector<112x256xf32>
    %49 = arith.addf %44, %48 : vector<112x256xf32>
    %50 = vector.extract_strided_slice %7 {offsets = [0, 0], sizes = [112, 96], strides = [1, 1]} : vector<128x96xf32> to vector<112x96xf32>
    %c2_39 = arith.constant 2 : index
    %c0_40 = arith.constant 0 : index
    %c0_41 = arith.constant 0 : index
    %51 = vector.load %arg2[%c2_39, %c0_40, %c0_41] : memref<5x96x256xf32, #tpu.memory_space<vmem>>, vector<1x96x256xf32>
    %52 = vector.shape_cast %51 : vector<1x96x256xf32> to vector<96x256xf32>
    %cst_42 = arith.constant dense<0.000000e+00> : vector<112x256xf32>
    %53 = tpu.matmul %50, %52, %cst_42 {dimension_numbers = #tpu.dot_dimension_numbers<[1], [0], [0], [1], [0, 0, 1, 1], [], []>} : vector<112x96xf32>, vector<96x256xf32>, vector<112x256xf32> -> vector<112x256xf32>
    %54 = arith.addf %49, %53 : vector<112x256xf32>
    %55 = vector.extract_strided_slice %1 {offsets = [16, 0], sizes = [112, 96], strides = [1, 1]} : vector<128x96xf32> to vector<112x96xf32>
    %c3_43 = arith.constant 3 : index
    %c0_44 = arith.constant 0 : index
    %c0_45 = arith.constant 0 : index
    %56 = vector.load %arg2[%c3_43, %c0_44, %c0_45] : memref<5x96x256xf32, #tpu.memory_space<vmem>>, vector<1x96x256xf32>
    %57 = vector.shape_cast %56 : vector<1x96x256xf32> to vector<96x256xf32>
    %cst_46 = arith.constant dense<0.000000e+00> : vector<112x256xf32>
    %58 = tpu.matmul %55, %57, %cst_46 {dimension_numbers = #tpu.dot_dimension_numbers<[1], [0], [0], [1], [0, 0, 1, 1], [], []>} : vector<112x96xf32>, vector<96x256xf32>, vector<112x256xf32> -> vector<112x256xf32>
    %59 = arith.addf %54, %58 : vector<112x256xf32>
    %60 = vector.extract_strided_slice %3 {offsets = [16, 0], sizes = [112, 96], strides = [1, 1]} : vector<128x96xf32> to vector<112x96xf32>
    %c4_47 = arith.constant 4 : index
    %c0_48 = arith.constant 0 : index
    %c0_49 = arith.constant 0 : index
    %61 = vector.load %arg2[%c4_47, %c0_48, %c0_49] : memref<5x96x256xf32, #tpu.memory_space<vmem>>, vector<1x96x256xf32>
    %62 = vector.shape_cast %61 : vector<1x96x256xf32> to vector<96x256xf32>
    %cst_50 = arith.constant dense<0.000000e+00> : vector<112x256xf32>
    %63 = tpu.matmul %60, %62, %cst_50 {dimension_numbers = #tpu.dot_dimension_numbers<[1], [0], [0], [1], [0, 0, 1, 1], [], []>} : vector<112x96xf32>, vector<96x256xf32>, vector<112x256xf32> -> vector<112x256xf32>
    %64 = arith.addf %59, %63 : vector<112x256xf32>
    %65 = vector.broadcast %8 : vector<1x256xf32> to vector<112x256xf32>
    %66 = arith.addf %64, %65 : vector<112x256xf32>
    %cst_51 = arith.constant 0.000000e+00 : f32
    %67 = vector.broadcast %cst_51 : f32 to vector<112x256xf32>
    %68 = arith.maximumf %66, %67 : vector<112x256xf32>
    %cst_52 = arith.constant 0.000000e+00 : f32
    %69 = vector.broadcast %cst_52 : f32 to vector<112x256xf32>
    %70 = vector.extract_strided_slice %5 {offsets = [0, 0], sizes = [112, 96], strides = [1, 1]} : vector<128x96xf32> to vector<112x96xf32>
    %c0_53 = arith.constant 0 : index
    %c0_54 = arith.constant 0 : index
    %c0_55 = arith.constant 0 : index
    %71 = vector.load %arg2[%c0_53, %c0_54, %c0_55] : memref<5x96x256xf32, #tpu.memory_space<vmem>>, vector<1x96x256xf32>
    %72 = vector.shape_cast %71 : vector<1x96x256xf32> to vector<96x256xf32>
    %cst_56 = arith.constant dense<0.000000e+00> : vector<112x256xf32>
    %73 = tpu.matmul %70, %72, %cst_56 {dimension_numbers = #tpu.dot_dimension_numbers<[1], [0], [0], [1], [0, 0, 1, 1], [], []>} : vector<112x96xf32>, vector<96x256xf32>, vector<112x256xf32> -> vector<112x256xf32>
    %74 = arith.addf %69, %73 : vector<112x256xf32>
    %75 = vector.extract_strided_slice %7 {offsets = [0, 0], sizes = [112, 96], strides = [1, 1]} : vector<128x96xf32> to vector<112x96xf32>
    %c1_57 = arith.constant 1 : index
    %c0_58 = arith.constant 0 : index
    %c0_59 = arith.constant 0 : index
    %76 = vector.load %arg2[%c1_57, %c0_58, %c0_59] : memref<5x96x256xf32, #tpu.memory_space<vmem>>, vector<1x96x256xf32>
    %77 = vector.shape_cast %76 : vector<1x96x256xf32> to vector<96x256xf32>
    %cst_60 = arith.constant dense<0.000000e+00> : vector<112x256xf32>
    %78 = tpu.matmul %75, %77, %cst_60 {dimension_numbers = #tpu.dot_dimension_numbers<[1], [0], [0], [1], [0, 0, 1, 1], [], []>} : vector<112x96xf32>, vector<96x256xf32>, vector<112x256xf32> -> vector<112x256xf32>
    %79 = arith.addf %74, %78 : vector<112x256xf32>
    %80 = vector.extract_strided_slice %1 {offsets = [16, 0], sizes = [112, 96], strides = [1, 1]} : vector<128x96xf32> to vector<112x96xf32>
    %c2_61 = arith.constant 2 : index
    %c0_62 = arith.constant 0 : index
    %c0_63 = arith.constant 0 : index
    %81 = vector.load %arg2[%c2_61, %c0_62, %c0_63] : memref<5x96x256xf32, #tpu.memory_space<vmem>>, vector<1x96x256xf32>
    %82 = vector.shape_cast %81 : vector<1x96x256xf32> to vector<96x256xf32>
    %cst_64 = arith.constant dense<0.000000e+00> : vector<112x256xf32>
    %83 = tpu.matmul %80, %82, %cst_64 {dimension_numbers = #tpu.dot_dimension_numbers<[1], [0], [0], [1], [0, 0, 1, 1], [], []>} : vector<112x96xf32>, vector<96x256xf32>, vector<112x256xf32> -> vector<112x256xf32>
    %84 = arith.addf %79, %83 : vector<112x256xf32>
    %85 = vector.extract_strided_slice %3 {offsets = [16, 0], sizes = [112, 96], strides = [1, 1]} : vector<128x96xf32> to vector<112x96xf32>
    %c3_65 = arith.constant 3 : index
    %c0_66 = arith.constant 0 : index
    %c0_67 = arith.constant 0 : index
    %86 = vector.load %arg2[%c3_65, %c0_66, %c0_67] : memref<5x96x256xf32, #tpu.memory_space<vmem>>, vector<1x96x256xf32>
    %87 = vector.shape_cast %86 : vector<1x96x256xf32> to vector<96x256xf32>
    %cst_68 = arith.constant dense<0.000000e+00> : vector<112x256xf32>
    %88 = tpu.matmul %85, %87, %cst_68 {dimension_numbers = #tpu.dot_dimension_numbers<[1], [0], [0], [1], [0, 0, 1, 1], [], []>} : vector<112x96xf32>, vector<96x256xf32>, vector<112x256xf32> -> vector<112x256xf32>
    %89 = arith.addf %84, %88 : vector<112x256xf32>
    %90 = vector.extract_strided_slice %5 {offsets = [16, 0], sizes = [112, 96], strides = [1, 1]} : vector<128x96xf32> to vector<112x96xf32>
    %c4_69 = arith.constant 4 : index
    %c0_70 = arith.constant 0 : index
    %c0_71 = arith.constant 0 : index
    %91 = vector.load %arg2[%c4_69, %c0_70, %c0_71] : memref<5x96x256xf32, #tpu.memory_space<vmem>>, vector<1x96x256xf32>
    %92 = vector.shape_cast %91 : vector<1x96x256xf32> to vector<96x256xf32>
    %cst_72 = arith.constant dense<0.000000e+00> : vector<112x256xf32>
    %93 = tpu.matmul %90, %92, %cst_72 {dimension_numbers = #tpu.dot_dimension_numbers<[1], [0], [0], [1], [0, 0, 1, 1], [], []>} : vector<112x96xf32>, vector<96x256xf32>, vector<112x256xf32> -> vector<112x256xf32>
    %94 = arith.addf %89, %93 : vector<112x256xf32>
    %95 = vector.broadcast %8 : vector<1x256xf32> to vector<112x256xf32>
    %96 = arith.addf %94, %95 : vector<112x256xf32>
    %cst_73 = arith.constant 0.000000e+00 : f32
    %97 = vector.broadcast %cst_73 : f32 to vector<112x256xf32>
    %98 = arith.maximumf %96, %97 : vector<112x256xf32>
    %cst_74 = arith.constant 0.000000e+00 : f32
    %99 = vector.broadcast %cst_74 : f32 to vector<112x256xf32>
    %100 = vector.extract_strided_slice %7 {offsets = [0, 0], sizes = [112, 96], strides = [1, 1]} : vector<128x96xf32> to vector<112x96xf32>
    %c0_75 = arith.constant 0 : index
    %c0_76 = arith.constant 0 : index
    %c0_77 = arith.constant 0 : index
    %101 = vector.load %arg2[%c0_75, %c0_76, %c0_77] : memref<5x96x256xf32, #tpu.memory_space<vmem>>, vector<1x96x256xf32>
    %102 = vector.shape_cast %101 : vector<1x96x256xf32> to vector<96x256xf32>
    %cst_78 = arith.constant dense<0.000000e+00> : vector<112x256xf32>
    %103 = tpu.matmul %100, %102, %cst_78 {dimension_numbers = #tpu.dot_dimension_numbers<[1], [0], [0], [1], [0, 0, 1, 1], [], []>} : vector<112x96xf32>, vector<96x256xf32>, vector<112x256xf32> -> vector<112x256xf32>
    %104 = arith.addf %99, %103 : vector<112x256xf32>
    %105 = vector.extract_strided_slice %1 {offsets = [16, 0], sizes = [112, 96], strides = [1, 1]} : vector<128x96xf32> to vector<112x96xf32>
    %c1_79 = arith.constant 1 : index
    %c0_80 = arith.constant 0 : index
    %c0_81 = arith.constant 0 : index
    %106 = vector.load %arg2[%c1_79, %c0_80, %c0_81] : memref<5x96x256xf32, #tpu.memory_space<vmem>>, vector<1x96x256xf32>
    %107 = vector.shape_cast %106 : vector<1x96x256xf32> to vector<96x256xf32>
    %cst_82 = arith.constant dense<0.000000e+00> : vector<112x256xf32>
    %108 = tpu.matmul %105, %107, %cst_82 {dimension_numbers = #tpu.dot_dimension_numbers<[1], [0], [0], [1], [0, 0, 1, 1], [], []>} : vector<112x96xf32>, vector<96x256xf32>, vector<112x256xf32> -> vector<112x256xf32>
    %109 = arith.addf %104, %108 : vector<112x256xf32>
    %110 = vector.extract_strided_slice %3 {offsets = [16, 0], sizes = [112, 96], strides = [1, 1]} : vector<128x96xf32> to vector<112x96xf32>
    %c2_83 = arith.constant 2 : index
    %c0_84 = arith.constant 0 : index
    %c0_85 = arith.constant 0 : index
    %111 = vector.load %arg2[%c2_83, %c0_84, %c0_85] : memref<5x96x256xf32, #tpu.memory_space<vmem>>, vector<1x96x256xf32>
    %112 = vector.shape_cast %111 : vector<1x96x256xf32> to vector<96x256xf32>
    %cst_86 = arith.constant dense<0.000000e+00> : vector<112x256xf32>
    %113 = tpu.matmul %110, %112, %cst_86 {dimension_numbers = #tpu.dot_dimension_numbers<[1], [0], [0], [1], [0, 0, 1, 1], [], []>} : vector<112x96xf32>, vector<96x256xf32>, vector<112x256xf32> -> vector<112x256xf32>
    %114 = arith.addf %109, %113 : vector<112x256xf32>
    %115 = vector.extract_strided_slice %5 {offsets = [16, 0], sizes = [112, 96], strides = [1, 1]} : vector<128x96xf32> to vector<112x96xf32>
    %c3_87 = arith.constant 3 : index
    %c0_88 = arith.constant 0 : index
    %c0_89 = arith.constant 0 : index
    %116 = vector.load %arg2[%c3_87, %c0_88, %c0_89] : memref<5x96x256xf32, #tpu.memory_space<vmem>>, vector<1x96x256xf32>
    %117 = vector.shape_cast %116 : vector<1x96x256xf32> to vector<96x256xf32>
    %cst_90 = arith.constant dense<0.000000e+00> : vector<112x256xf32>
    %118 = tpu.matmul %115, %117, %cst_90 {dimension_numbers = #tpu.dot_dimension_numbers<[1], [0], [0], [1], [0, 0, 1, 1], [], []>} : vector<112x96xf32>, vector<96x256xf32>, vector<112x256xf32> -> vector<112x256xf32>
    %119 = arith.addf %114, %118 : vector<112x256xf32>
    %120 = vector.extract_strided_slice %7 {offsets = [16, 0], sizes = [112, 96], strides = [1, 1]} : vector<128x96xf32> to vector<112x96xf32>
    %c4_91 = arith.constant 4 : index
    %c0_92 = arith.constant 0 : index
    %c0_93 = arith.constant 0 : index
    %121 = vector.load %arg2[%c4_91, %c0_92, %c0_93] : memref<5x96x256xf32, #tpu.memory_space<vmem>>, vector<1x96x256xf32>
    %122 = vector.shape_cast %121 : vector<1x96x256xf32> to vector<96x256xf32>
    %cst_94 = arith.constant dense<0.000000e+00> : vector<112x256xf32>
    %123 = tpu.matmul %120, %122, %cst_94 {dimension_numbers = #tpu.dot_dimension_numbers<[1], [0], [0], [1], [0, 0, 1, 1], [], []>} : vector<112x96xf32>, vector<96x256xf32>, vector<112x256xf32> -> vector<112x256xf32>
    %124 = arith.addf %119, %123 : vector<112x256xf32>
    %125 = vector.broadcast %8 : vector<1x256xf32> to vector<112x256xf32>
    %126 = arith.addf %124, %125 : vector<112x256xf32>
    %cst_95 = arith.constant 0.000000e+00 : f32
    %127 = vector.broadcast %cst_95 : f32 to vector<112x256xf32>
    %128 = arith.maximumf %126, %127 : vector<112x256xf32>
    %129 = arith.maximumf %38, %68 : vector<112x256xf32>
    %130 = vector.extract_strided_slice %129 {offsets = [0, 0], sizes = [112, 128], strides = [1, 1]} : vector<112x256xf32> to vector<112x128xf32>
    %131 = vector.extract_strided_slice %129 {offsets = [0, 128], sizes = [112, 128], strides = [1, 1]} : vector<112x256xf32> to vector<112x128xf32>
    %132 = arith.maximumf %130, %131 : vector<112x128xf32>
    %133 = arith.maximumf %98, %128 : vector<112x256xf32>
    %134 = vector.extract_strided_slice %133 {offsets = [0, 0], sizes = [112, 128], strides = [1, 1]} : vector<112x256xf32> to vector<112x128xf32>
    %135 = vector.extract_strided_slice %133 {offsets = [0, 128], sizes = [112, 128], strides = [1, 1]} : vector<112x256xf32> to vector<112x128xf32>
    %136 = arith.maximumf %134, %135 : vector<112x128xf32>
    %c0_96 = arith.constant 0 : index
    %c0_97 = arith.constant 0 : index
    %137 = vector.load %arg5[%c0_96, %c0_97] : memref<1x256xf32, #tpu.memory_space<vmem>>, vector<1x256xf32>
    %cst_98 = arith.constant 0.000000e+00 : f32
    %138 = vector.broadcast %cst_98 : f32 to vector<80x256xf32>
    %139 = vector.extract_strided_slice %132 {offsets = [0, 0], sizes = [80, 128], strides = [1, 1]} : vector<112x128xf32> to vector<80x128xf32>
    %c0_99 = arith.constant 0 : index
    %c0_100 = arith.constant 0 : index
    %c0_101 = arith.constant 0 : index
    %140 = vector.load %arg4[%c0_99, %c0_100, %c0_101] : memref<5x128x256xf32, #tpu.memory_space<vmem>>, vector<1x128x256xf32>
    %141 = vector.shape_cast %140 : vector<1x128x256xf32> to vector<128x256xf32>
    %cst_102 = arith.constant dense<0.000000e+00> : vector<80x256xf32>
    %142 = tpu.matmul %139, %141, %cst_102 {dimension_numbers = #tpu.dot_dimension_numbers<[1], [0], [0], [1], [0, 0, 1, 1], [], []>} : vector<80x128xf32>, vector<128x256xf32>, vector<80x256xf32> -> vector<80x256xf32>
    %143 = arith.addf %138, %142 : vector<80x256xf32>
    %144 = vector.extract_strided_slice %136 {offsets = [0, 0], sizes = [80, 128], strides = [1, 1]} : vector<112x128xf32> to vector<80x128xf32>
    %c1_103 = arith.constant 1 : index
    %c0_104 = arith.constant 0 : index
    %c0_105 = arith.constant 0 : index
    %145 = vector.load %arg4[%c1_103, %c0_104, %c0_105] : memref<5x128x256xf32, #tpu.memory_space<vmem>>, vector<1x128x256xf32>
    %146 = vector.shape_cast %145 : vector<1x128x256xf32> to vector<128x256xf32>
    %cst_106 = arith.constant dense<0.000000e+00> : vector<80x256xf32>
    %147 = tpu.matmul %144, %146, %cst_106 {dimension_numbers = #tpu.dot_dimension_numbers<[1], [0], [0], [1], [0, 0, 1, 1], [], []>} : vector<80x128xf32>, vector<128x256xf32>, vector<80x256xf32> -> vector<80x256xf32>
    %148 = arith.addf %143, %147 : vector<80x256xf32>
    %149 = vector.extract_strided_slice %132 {offsets = [16, 0], sizes = [80, 128], strides = [1, 1]} : vector<112x128xf32> to vector<80x128xf32>
    %c2_107 = arith.constant 2 : index
    %c0_108 = arith.constant 0 : index
    %c0_109 = arith.constant 0 : index
    %150 = vector.load %arg4[%c2_107, %c0_108, %c0_109] : memref<5x128x256xf32, #tpu.memory_space<vmem>>, vector<1x128x256xf32>
    %151 = vector.shape_cast %150 : vector<1x128x256xf32> to vector<128x256xf32>
    %cst_110 = arith.constant dense<0.000000e+00> : vector<80x256xf32>
    %152 = tpu.matmul %149, %151, %cst_110 {dimension_numbers = #tpu.dot_dimension_numbers<[1], [0], [0], [1], [0, 0, 1, 1], [], []>} : vector<80x128xf32>, vector<128x256xf32>, vector<80x256xf32> -> vector<80x256xf32>
    %153 = arith.addf %148, %152 : vector<80x256xf32>
    %154 = vector.extract_strided_slice %136 {offsets = [16, 0], sizes = [80, 128], strides = [1, 1]} : vector<112x128xf32> to vector<80x128xf32>
    %c3_111 = arith.constant 3 : index
    %c0_112 = arith.constant 0 : index
    %c0_113 = arith.constant 0 : index
    %155 = vector.load %arg4[%c3_111, %c0_112, %c0_113] : memref<5x128x256xf32, #tpu.memory_space<vmem>>, vector<1x128x256xf32>
    %156 = vector.shape_cast %155 : vector<1x128x256xf32> to vector<128x256xf32>
    %cst_114 = arith.constant dense<0.000000e+00> : vector<80x256xf32>
    %157 = tpu.matmul %154, %156, %cst_114 {dimension_numbers = #tpu.dot_dimension_numbers<[1], [0], [0], [1], [0, 0, 1, 1], [], []>} : vector<80x128xf32>, vector<128x256xf32>, vector<80x256xf32> -> vector<80x256xf32>
    %158 = arith.addf %153, %157 : vector<80x256xf32>
    %159 = vector.extract_strided_slice %132 {offsets = [32, 0], sizes = [80, 128], strides = [1, 1]} : vector<112x128xf32> to vector<80x128xf32>
    %c4_115 = arith.constant 4 : index
    %c0_116 = arith.constant 0 : index
    %c0_117 = arith.constant 0 : index
    %160 = vector.load %arg4[%c4_115, %c0_116, %c0_117] : memref<5x128x256xf32, #tpu.memory_space<vmem>>, vector<1x128x256xf32>
    %161 = vector.shape_cast %160 : vector<1x128x256xf32> to vector<128x256xf32>
    %cst_118 = arith.constant dense<0.000000e+00> : vector<80x256xf32>
    %162 = tpu.matmul %159, %161, %cst_118 {dimension_numbers = #tpu.dot_dimension_numbers<[1], [0], [0], [1], [0, 0, 1, 1], [], []>} : vector<80x128xf32>, vector<128x256xf32>, vector<80x256xf32> -> vector<80x256xf32>
    %163 = arith.addf %158, %162 : vector<80x256xf32>
    %164 = vector.broadcast %137 : vector<1x256xf32> to vector<80x256xf32>
    %165 = arith.addf %163, %164 : vector<80x256xf32>
    %cst_119 = arith.constant 0.000000e+00 : f32
    %166 = vector.broadcast %cst_119 : f32 to vector<80x256xf32>
    %167 = arith.maximumf %165, %166 : vector<80x256xf32>
    %cst_120 = arith.constant 0.000000e+00 : f32
    %168 = vector.broadcast %cst_120 : f32 to vector<80x256xf32>
    %169 = vector.extract_strided_slice %136 {offsets = [0, 0], sizes = [80, 128], strides = [1, 1]} : vector<112x128xf32> to vector<80x128xf32>
    %c0_121 = arith.constant 0 : index
    %c0_122 = arith.constant 0 : index
    %c0_123 = arith.constant 0 : index
    %170 = vector.load %arg4[%c0_121, %c0_122, %c0_123] : memref<5x128x256xf32, #tpu.memory_space<vmem>>, vector<1x128x256xf32>
    %171 = vector.shape_cast %170 : vector<1x128x256xf32> to vector<128x256xf32>
    %cst_124 = arith.constant dense<0.000000e+00> : vector<80x256xf32>
    %172 = tpu.matmul %169, %171, %cst_124 {dimension_numbers = #tpu.dot_dimension_numbers<[1], [0], [0], [1], [0, 0, 1, 1], [], []>} : vector<80x128xf32>, vector<128x256xf32>, vector<80x256xf32> -> vector<80x256xf32>
    %173 = arith.addf %168, %172 : vector<80x256xf32>
    %174 = vector.extract_strided_slice %132 {offsets = [16, 0], sizes = [80, 128], strides = [1, 1]} : vector<112x128xf32> to vector<80x128xf32>
    %c1_125 = arith.constant 1 : index
    %c0_126 = arith.constant 0 : index
    %c0_127 = arith.constant 0 : index
    %175 = vector.load %arg4[%c1_125, %c0_126, %c0_127] : memref<5x128x256xf32, #tpu.memory_space<vmem>>, vector<1x128x256xf32>
    %176 = vector.shape_cast %175 : vector<1x128x256xf32> to vector<128x256xf32>
    %cst_128 = arith.constant dense<0.000000e+00> : vector<80x256xf32>
    %177 = tpu.matmul %174, %176, %cst_128 {dimension_numbers = #tpu.dot_dimension_numbers<[1], [0], [0], [1], [0, 0, 1, 1], [], []>} : vector<80x128xf32>, vector<128x256xf32>, vector<80x256xf32> -> vector<80x256xf32>
    %178 = arith.addf %173, %177 : vector<80x256xf32>
    %179 = vector.extract_strided_slice %136 {offsets = [16, 0], sizes = [80, 128], strides = [1, 1]} : vector<112x128xf32> to vector<80x128xf32>
    %c2_129 = arith.constant 2 : index
    %c0_130 = arith.constant 0 : index
    %c0_131 = arith.constant 0 : index
    %180 = vector.load %arg4[%c2_129, %c0_130, %c0_131] : memref<5x128x256xf32, #tpu.memory_space<vmem>>, vector<1x128x256xf32>
    %181 = vector.shape_cast %180 : vector<1x128x256xf32> to vector<128x256xf32>
    %cst_132 = arith.constant dense<0.000000e+00> : vector<80x256xf32>
    %182 = tpu.matmul %179, %181, %cst_132 {dimension_numbers = #tpu.dot_dimension_numbers<[1], [0], [0], [1], [0, 0, 1, 1], [], []>} : vector<80x128xf32>, vector<128x256xf32>, vector<80x256xf32> -> vector<80x256xf32>
    %183 = arith.addf %178, %182 : vector<80x256xf32>
    %184 = vector.extract_strided_slice %132 {offsets = [32, 0], sizes = [80, 128], strides = [1, 1]} : vector<112x128xf32> to vector<80x128xf32>
    %c3_133 = arith.constant 3 : index
    %c0_134 = arith.constant 0 : index
    %c0_135 = arith.constant 0 : index
    %185 = vector.load %arg4[%c3_133, %c0_134, %c0_135] : memref<5x128x256xf32, #tpu.memory_space<vmem>>, vector<1x128x256xf32>
    %186 = vector.shape_cast %185 : vector<1x128x256xf32> to vector<128x256xf32>
    %cst_136 = arith.constant dense<0.000000e+00> : vector<80x256xf32>
    %187 = tpu.matmul %184, %186, %cst_136 {dimension_numbers = #tpu.dot_dimension_numbers<[1], [0], [0], [1], [0, 0, 1, 1], [], []>} : vector<80x128xf32>, vector<128x256xf32>, vector<80x256xf32> -> vector<80x256xf32>
    %188 = arith.addf %183, %187 : vector<80x256xf32>
    %189 = vector.extract_strided_slice %136 {offsets = [32, 0], sizes = [80, 128], strides = [1, 1]} : vector<112x128xf32> to vector<80x128xf32>
    %c4_137 = arith.constant 4 : index
    %c0_138 = arith.constant 0 : index
    %c0_139 = arith.constant 0 : index
    %190 = vector.load %arg4[%c4_137, %c0_138, %c0_139] : memref<5x128x256xf32, #tpu.memory_space<vmem>>, vector<1x128x256xf32>
    %191 = vector.shape_cast %190 : vector<1x128x256xf32> to vector<128x256xf32>
    %cst_140 = arith.constant dense<0.000000e+00> : vector<80x256xf32>
    %192 = tpu.matmul %189, %191, %cst_140 {dimension_numbers = #tpu.dot_dimension_numbers<[1], [0], [0], [1], [0, 0, 1, 1], [], []>} : vector<80x128xf32>, vector<128x256xf32>, vector<80x256xf32> -> vector<80x256xf32>
    %193 = arith.addf %188, %192 : vector<80x256xf32>
    %194 = vector.broadcast %137 : vector<1x256xf32> to vector<80x256xf32>
    %195 = arith.addf %193, %194 : vector<80x256xf32>
    %cst_141 = arith.constant 0.000000e+00 : f32
    %196 = vector.broadcast %cst_141 : f32 to vector<80x256xf32>
    %197 = arith.maximumf %195, %196 : vector<80x256xf32>
    %198 = arith.maximumf %167, %197 : vector<80x256xf32>
    %199 = vector.extract_strided_slice %198 {offsets = [0, 0], sizes = [80, 128], strides = [1, 1]} : vector<80x256xf32> to vector<80x128xf32>
    %200 = vector.extract_strided_slice %198 {offsets = [0, 128], sizes = [80, 128], strides = [1, 1]} : vector<80x256xf32> to vector<80x128xf32>
    %201 = arith.maximumf %199, %200 : vector<80x128xf32>
    %cst_142 = arith.constant 0.000000e+00 : f32
    %202 = vector.broadcast %cst_142 : f32 to vector<16x128xf32>
    %203 = vector.extract_strided_slice %201 {offsets = [0, 0], sizes = [16, 128], strides = [1, 1]} : vector<80x128xf32> to vector<16x128xf32>
    %c0_143 = arith.constant 0 : index
    %c0_144 = arith.constant 0 : index
    %c0_145 = arith.constant 0 : index
    %204 = vector.load %arg6[%c0_143, %c0_144, %c0_145] : memref<5x128x128xf32, #tpu.memory_space<vmem>>, vector<1x128x128xf32>
    %205 = vector.shape_cast %204 : vector<1x128x128xf32> to vector<128x128xf32>
    %cst_146 = arith.constant dense<0.000000e+00> : vector<16x128xf32>
    %206 = tpu.matmul %203, %205, %cst_146 {dimension_numbers = #tpu.dot_dimension_numbers<[1], [0], [0], [1], [0, 0, 1, 1], [], []>} : vector<16x128xf32>, vector<128x128xf32>, vector<16x128xf32> -> vector<16x128xf32>
    %207 = arith.addf %202, %206 : vector<16x128xf32>
    %208 = vector.extract_strided_slice %201 {offsets = [16, 0], sizes = [16, 128], strides = [1, 1]} : vector<80x128xf32> to vector<16x128xf32>
    %c1_147 = arith.constant 1 : index
    %c0_148 = arith.constant 0 : index
    %c0_149 = arith.constant 0 : index
    %209 = vector.load %arg6[%c1_147, %c0_148, %c0_149] : memref<5x128x128xf32, #tpu.memory_space<vmem>>, vector<1x128x128xf32>
    %210 = vector.shape_cast %209 : vector<1x128x128xf32> to vector<128x128xf32>
    %cst_150 = arith.constant dense<0.000000e+00> : vector<16x128xf32>
    %211 = tpu.matmul %208, %210, %cst_150 {dimension_numbers = #tpu.dot_dimension_numbers<[1], [0], [0], [1], [0, 0, 1, 1], [], []>} : vector<16x128xf32>, vector<128x128xf32>, vector<16x128xf32> -> vector<16x128xf32>
    %212 = arith.addf %207, %211 : vector<16x128xf32>
    %213 = vector.extract_strided_slice %201 {offsets = [32, 0], sizes = [16, 128], strides = [1, 1]} : vector<80x128xf32> to vector<16x128xf32>
    %c2_151 = arith.constant 2 : index
    %c0_152 = arith.constant 0 : index
    %c0_153 = arith.constant 0 : index
    %214 = vector.load %arg6[%c2_151, %c0_152, %c0_153] : memref<5x128x128xf32, #tpu.memory_space<vmem>>, vector<1x128x128xf32>
    %215 = vector.shape_cast %214 : vector<1x128x128xf32> to vector<128x128xf32>
    %cst_154 = arith.constant dense<0.000000e+00> : vector<16x128xf32>
    %216 = tpu.matmul %213, %215, %cst_154 {dimension_numbers = #tpu.dot_dimension_numbers<[1], [0], [0], [1], [0, 0, 1, 1], [], []>} : vector<16x128xf32>, vector<128x128xf32>, vector<16x128xf32> -> vector<16x128xf32>
    %217 = arith.addf %212, %216 : vector<16x128xf32>
    %218 = vector.extract_strided_slice %201 {offsets = [48, 0], sizes = [16, 128], strides = [1, 1]} : vector<80x128xf32> to vector<16x128xf32>
    %c3_155 = arith.constant 3 : index
    %c0_156 = arith.constant 0 : index
    %c0_157 = arith.constant 0 : index
    %219 = vector.load %arg6[%c3_155, %c0_156, %c0_157] : memref<5x128x128xf32, #tpu.memory_space<vmem>>, vector<1x128x128xf32>
    %220 = vector.shape_cast %219 : vector<1x128x128xf32> to vector<128x128xf32>
    %cst_158 = arith.constant dense<0.000000e+00> : vector<16x128xf32>
    %221 = tpu.matmul %218, %220, %cst_158 {dimension_numbers = #tpu.dot_dimension_numbers<[1], [0], [0], [1], [0, 0, 1, 1], [], []>} : vector<16x128xf32>, vector<128x128xf32>, vector<16x128xf32> -> vector<16x128xf32>
    %222 = arith.addf %217, %221 : vector<16x128xf32>
    %223 = vector.extract_strided_slice %201 {offsets = [64, 0], sizes = [16, 128], strides = [1, 1]} : vector<80x128xf32> to vector<16x128xf32>
    %c4_159 = arith.constant 4 : index
    %c0_160 = arith.constant 0 : index
    %c0_161 = arith.constant 0 : index
    %224 = vector.load %arg6[%c4_159, %c0_160, %c0_161] : memref<5x128x128xf32, #tpu.memory_space<vmem>>, vector<1x128x128xf32>
    %225 = vector.shape_cast %224 : vector<1x128x128xf32> to vector<128x128xf32>
    %cst_162 = arith.constant dense<0.000000e+00> : vector<16x128xf32>
    %226 = tpu.matmul %223, %225, %cst_162 {dimension_numbers = #tpu.dot_dimension_numbers<[1], [0], [0], [1], [0, 0, 1, 1], [], []>} : vector<16x128xf32>, vector<128x128xf32>, vector<16x128xf32> -> vector<16x128xf32>
    %227 = arith.addf %222, %226 : vector<16x128xf32>
    %c0_163 = arith.constant 0 : index
    %c0_164 = arith.constant 0 : index
    %228 = vector.load %arg7[%c0_163, %c0_164] : memref<1x128xf32, #tpu.memory_space<vmem>>, vector<1x128xf32>
    %229 = vector.broadcast %228 : vector<1x128xf32> to vector<16x128xf32>
    %230 = arith.addf %227, %229 : vector<16x128xf32>
    %cst_165 = arith.constant 0.000000e+00 : f32
    %231 = vector.broadcast %cst_165 : f32 to vector<16x128xf32>
    %232 = arith.maximumf %230, %231 : vector<16x128xf32>
    %c0_166 = arith.constant 0 : index
    %c0_167 = arith.constant 0 : index
    %233 = vector.load %arg8[%c0_166, %c0_167] : memref<128x128xf32, #tpu.memory_space<vmem>>, vector<128x128xf32>
    %cst_168 = arith.constant dense<0.000000e+00> : vector<16x128xf32>
    %234 = tpu.matmul %232, %233, %cst_168 {dimension_numbers = #tpu.dot_dimension_numbers<[1], [0], [0], [1], [0, 0, 1, 1], [], []>} : vector<16x128xf32>, vector<128x128xf32>, vector<16x128xf32> -> vector<16x128xf32>
    %c0_169 = arith.constant 0 : index
    %c0_170 = arith.constant 0 : index
    %235 = vector.load %arg9[%c0_169, %c0_170] : memref<1x128xf32, #tpu.memory_space<vmem>>, vector<1x128xf32>
    %236 = vector.broadcast %235 : vector<1x128xf32> to vector<16x128xf32>
    %237 = arith.addf %234, %236 : vector<16x128xf32>
    %cst_171 = arith.constant 0.000000e+00 : f32
    %238 = vector.broadcast %cst_171 : f32 to vector<16x128xf32>
    %239 = arith.maximumf %237, %238 : vector<16x128xf32>
    %c0_172 = arith.constant 0 : index
    %c0_173 = arith.constant 0 : index
    %240 = vector.load %arg10[%c0_172, %c0_173] : memref<128x128xf32, #tpu.memory_space<vmem>>, vector<128x128xf32>
    %cst_174 = arith.constant dense<0.000000e+00> : vector<16x128xf32>
    %241 = tpu.matmul %239, %240, %cst_174 {dimension_numbers = #tpu.dot_dimension_numbers<[1], [0], [0], [1], [0, 0, 1, 1], [], []>} : vector<16x128xf32>, vector<128x128xf32>, vector<16x128xf32> -> vector<16x128xf32>
    %c0_175 = arith.constant 0 : index
    %c0_176 = arith.constant 0 : index
    %242 = vector.load %arg11[%c0_175, %c0_176] : memref<1x128xf32, #tpu.memory_space<vmem>>, vector<1x128xf32>
    %243 = vector.broadcast %242 : vector<1x128xf32> to vector<16x128xf32>
    %244 = arith.addf %241, %243 : vector<16x128xf32>
    %c0_177 = arith.constant 0 : index
    %c0_178 = arith.constant 0 : index
    %245 = vector.load %arg12[%c0_177, %c0_178] : memref<16x128xf32, #tpu.memory_space<vmem>>, vector<16x128xf32>
    tpu.vector_store %arg12[%c0_177, %c0_178], %244 {strides = array<i32>} : memref<16x128xf32, #tpu.memory_space<vmem>>, vector<16x128xf32>,
    return
  }
  func.func @transform_0(%arg0: i32) -> (i32, i32, i32) {
    %c0_i32 = arith.constant 0 : i32
    %c0_i32_0 = arith.constant 0 : i32
    %c0_i32_1 = arith.constant 0 : i32
    return %arg0, %c0_i32, %c0_i32_0 : i32, i32, i32
  }
  func.func @transform_1(%arg0: i32) -> (i32, i32, i32) {
    %c0_i32 = arith.constant 0 : i32
    %c0_i32_0 = arith.constant 0 : i32
    %c0_i32_1 = arith.constant 0 : i32
    %c0_i32_2 = arith.constant 0 : i32
    return %c0_i32, %c0_i32_0, %c0_i32_1 : i32, i32, i32
  }
  func.func @transform_2(%arg0: i32) -> (i32, i32) {
    %c0_i32 = arith.constant 0 : i32
    %c0_i32_0 = arith.constant 0 : i32
    %c0_i32_1 = arith.constant 0 : i32
    return %c0_i32, %c0_i32_0 : i32, i32
  }
  func.func @transform_3(%arg0: i32) -> (i32, i32, i32) {
    %c0_i32 = arith.constant 0 : i32
    %c0_i32_0 = arith.constant 0 : i32
    %c0_i32_1 = arith.constant 0 : i32
    %c0_i32_2 = arith.constant 0 : i32
    return %c0_i32, %c0_i32_0, %c0_i32_1 : i32, i32, i32
  }
  func.func @transform_4(%arg0: i32) -> (i32, i32) {
    %c0_i32 = arith.constant 0 : i32
    %c0_i32_0 = arith.constant 0 : i32
    %c0_i32_1 = arith.constant 0 : i32
    return %c0_i32, %c0_i32_0 : i32, i32
  }
  func.func @transform_5(%arg0: i32) -> (i32, i32, i32) {
    %c0_i32 = arith.constant 0 : i32
    %c0_i32_0 = arith.constant 0 : i32
    %c0_i32_1 = arith.constant 0 : i32
    %c0_i32_2 = arith.constant 0 : i32
    return %c0_i32, %c0_i32_0, %c0_i32_1 : i32, i32, i32
  }
  func.func @transform_6(%arg0: i32) -> (i32, i32) {
    %c0_i32 = arith.constant 0 : i32
    %c0_i32_0 = arith.constant 0 : i32
    %c0_i32_1 = arith.constant 0 : i32
    return %c0_i32, %c0_i32_0 : i32, i32
  }
  func.func @transform_7(%arg0: i32) -> (i32, i32) {
    %c0_i32 = arith.constant 0 : i32
    %c0_i32_0 = arith.constant 0 : i32
    %c0_i32_1 = arith.constant 0 : i32
    return %c0_i32, %c0_i32_0 : i32, i32
  }
  func.func @transform_8(%arg0: i32) -> (i32, i32) {
    %c0_i32 = arith.constant 0 : i32
    %c0_i32_0 = arith.constant 0 : i32
    %c0_i32_1 = arith.constant 0 : i32
    return %c0_i32, %c0_i32_0 : i32, i32
  }
  func.func @transform_9(%arg0: i32) -> (i32, i32) {
    %c0_i32 = arith.constant 0 : i32
    %c0_i32_0 = arith.constant 0 : i32
    %c0_i32_1 = arith.constant 0 : i32
    return %c0_i32, %c0_i32_0 : i32, i32
  }
  func.func @transform_10(%arg0: i32) -> (i32, i32) {
    %c0_i32 = arith.constant 0 : i32
    %c0_i32_0 = arith.constant 0 : i32
    %c0_i32_1 = arith.constant 0 : i32
    return %c0_i32, %c0_i32_0 : i32, i32
  }
  func.func @transform_11(%arg0: i32) -> (i32, i32) {
    %c0_i32 = arith.constant 0 : i32
    %c0_i32_0 = arith.constant 0 : i32
    return %arg0, %c0_i32 : i32, i32
  }
}

</mosaic_0001>

<llo_original>
// kernel: lenet_apply.1
$region0: #{lenet_apply.1}
  #allocation0 [shape = 'u32[]', space=smem, size = 0x4, offset = 0x4, fixed_abs, tag = 'smem constant byte address 0x4 - core index']
  #allocation1 [shape = 'u32[144,128]{1,0:T(1,128)}', space=vmem, size = 0x12000, scoped, tag = 'internal scratch']
  %s0 = inlined_call_operand.vmem [shape: f32[4,128,96], index: 0, kind: input, shape index: {}]
  %s1 = inlined_call_operand.vmem [shape: f32[5,96,256], index: 1, kind: input, shape index: {}]
  %s2 = inlined_call_operand.vmem [shape: f32[1,256], index: 2, kind: input, shape index: {}]
  %s3 = inlined_call_operand.vmem [shape: f32[5,128,256], index: 3, kind: input, shape index: {}]
  %s4 = inlined_call_operand.vmem [shape: f32[1,256], index: 4, kind: input, shape index: {}]
  %s5 = inlined_call_operand.vmem [shape: f32[5,128,128], index: 5, kind: input, shape index: {}]
  %s6 = inlined_call_operand.vmem [shape: f32[1,128], index: 6, kind: input, shape index: {}]
  %s7 = inlined_call_operand.vmem [shape: f32[128,128], index: 7, kind: input, shape index: {}]
  %s8 = inlined_call_operand.vmem [shape: f32[1,128], index: 8, kind: input, shape index: {}]
  %s9 = inlined_call_operand.vmem [shape: f32[128,128], index: 9, kind: input, shape index: {}]
  %s10 = inlined_call_operand.vmem [shape: f32[1,128], index: 10, kind: input, shape index: {}]
  %s11 = inlined_call_operand.vmem [shape: f32[16,128], index: 11, kind: output, shape index: {}]
  %s12 = sld [smem:[#allocation0]]
  $region54: #{lenet_apply.1} parent=0
    _
  %s14 = ssub.s32 1, %s12
  %s15 = scalar_select 0, %s14, %s12
  // Predicated region
  $region2: #{lenet_apply.1} parent=0 // pred_check
    _
  $region3: #{lenet_apply.1} parent=0 // pred_check_branch
    %17 = sbr.rel (0) target = $region5
  $region4: #{lenet_apply.1} parent=0 // pred_region
    _
  $region5: #{lenet_apply.1} parent=0 // pred_fallthru
    _
  // Predicated region
  $region6: #{lenet_apply.1} parent=0 // pred_check
    _
  $region7: #{lenet_apply.1} parent=0 // pred_check_branch
    %19 = sbr.rel (0) target = $region9
  $region8: #{lenet_apply.1} parent=0 // pred_region
    _
  $region9: #{lenet_apply.1} parent=0 // pred_fallthru
    _
  // Predicated region
  $region10: #{lenet_apply.1} parent=0 // pred_check
    _
  $region11: #{lenet_apply.1} parent=0 // pred_check_branch
    %21 = sbr.rel (0) target = $region13
  $region12: #{lenet_apply.1} parent=0 // pred_region
    _
  $region13: #{lenet_apply.1} parent=0 // pred_fallthru
    _
  // Predicated region
  $region14: #{lenet_apply.1} parent=0 // pred_check
    _
  $region15: #{lenet_apply.1} parent=0 // pred_check_branch
    %23 = sbr.rel (0) target = $region17
  $region16: #{lenet_apply.1} parent=0 // pred_region
    _
  $region17: #{lenet_apply.1} parent=0 // pred_fallthru
    _
  // Predicated region
  $region18: #{lenet_apply.1} parent=0 // pred_check
    _
  $region19: #{lenet_apply.1} parent=0 // pred_check_branch
    %25 = sbr.rel (0) target = $region21
  $region20: #{lenet_apply.1} parent=0 // pred_region
    _
  $region21: #{lenet_apply.1} parent=0 // pred_fallthru
    _
  // Predicated region
  $region22: #{lenet_apply.1} parent=0 // pred_check
    _
  $region23: #{lenet_apply.1} parent=0 // pred_check_branch
    %27 = sbr.rel (0) target = $region25
  $region24: #{lenet_apply.1} parent=0 // pred_region
    _
  $region25: #{lenet_apply.1} parent=0 // pred_fallthru
    _
  // Predicated region
  $region26: #{lenet_apply.1} parent=0 // pred_check
    _
  $region27: #{lenet_apply.1} parent=0 // pred_check_branch
    %29 = sbr.rel (0) target = $region29
  $region28: #{lenet_apply.1} parent=0 // pred_region
    _
  $region29: #{lenet_apply.1} parent=0 // pred_fallthru
    _
  // Predicated region
  $region30: #{lenet_apply.1} parent=0 // pred_check
    _
  $region31: #{lenet_apply.1} parent=0 // pred_check_branch
    %31 = sbr.rel (0) target = $region33
  $region32: #{lenet_apply.1} parent=0 // pred_region
    _
  $region33: #{lenet_apply.1} parent=0 // pred_fallthru
    _
  // Predicated region
  $region34: #{lenet_apply.1} parent=0 // pred_check
    _
  $region35: #{lenet_apply.1} parent=0 // pred_check_branch
    %33 = sbr.rel (0) target = $region37
  $region36: #{lenet_apply.1} parent=0 // pred_region
    _
  $region37: #{lenet_apply.1} parent=0 // pred_fallthru
    _
  // Predicated region
  $region38: #{lenet_apply.1} parent=0 // pred_check
    _
  $region39: #{lenet_apply.1} parent=0 // pred_check_branch
    %35 = sbr.rel (0) target = $region41
  $region40: #{lenet_apply.1} parent=0 // pred_region
    _
  $region41: #{lenet_apply.1} parent=0 // pred_fallthru
    _
  // Predicated region
  $region42: #{lenet_apply.1} parent=0 // pred_check
    _
  $region43: #{lenet_apply.1} parent=0 // pred_check_branch
    %37 = sbr.rel (0) target = $region45
  $region44: #{lenet_apply.1} parent=0 // pred_region
    _
  $region45: #{lenet_apply.1} parent=0 // pred_fallthru
    _
  %v38 = vld [vmem:[%s0] sm:$0xff]
  %v39 = vld [vmem:[%s0 + $0x8] sm:$0xff]
  %v40 = vld [vmem:[%s0 + $0x10] sm:$0xff]
  %v41 = vld [vmem:[%s0 + $0x18] sm:$0xff]
  %v42 = vld [vmem:[%s0 + $0x20] sm:$0xff]
  %v43 = vld [vmem:[%s0 + $0x28] sm:$0xff]
  %v44 = vld [vmem:[%s0 + $0x30] sm:$0xff]
  %v45 = vld [vmem:[%s0 + $0x38] sm:$0xff]
  %v46 = vld [vmem:[%s0 + $0x40] sm:$0xff]
  %v47 = vld [vmem:[%s0 + $0x48] sm:$0xff]
  %v48 = vld [vmem:[%s0 + $0x50] sm:$0xff]
  %v49 = vld [vmem:[%s0 + $0x58] sm:$0xff]
  %v50 = vld [vmem:[%s0 + $0x60] sm:$0xff]
  %v51 = vld [vmem:[%s0 + $0x68] sm:$0xff]
  %v52 = vld [vmem:[%s0 + $0x70] sm:$0xff]
  %v53 = vld [vmem:[%s0 + $0x78] sm:$0xff]
  %s54 = scalar_lea.vmem %s0, 128
  %v55 = vld [vmem:[%s54] sm:$0xff]
  %v56 = vld [vmem:[%s54 + $0x8] sm:$0xff]
  %v57 = vld [vmem:[%s54 + $0x10] sm:$0xff]
  %v58 = vld [vmem:[%s54 + $0x18] sm:$0xff]
  %v59 = vld [vmem:[%s54 + $0x20] sm:$0xff]
  %v60 = vld [vmem:[%s54 + $0x28] sm:$0xff]
  %v61 = vld [vmem:[%s54 + $0x30] sm:$0xff]
  %v62 = vld [vmem:[%s54 + $0x38] sm:$0xff]
  %v63 = vld [vmem:[%s54 + $0x40] sm:$0xff]
  %v64 = vld [vmem:[%s54 + $0x48] sm:$0xff]
  %v65 = vld [vmem:[%s54 + $0x50] sm:$0xff]
  %v66 = vld [vmem:[%s54 + $0x58] sm:$0xff]
  %v67 = vld [vmem:[%s54 + $0x60] sm:$0xff]
  %v68 = vld [vmem:[%s54 + $0x68] sm:$0xff]
  %v69 = vld [vmem:[%s54 + $0x70] sm:$0xff]
  %v70 = vld [vmem:[%s54 + $0x78] sm:$0xff]
  %s71 = scalar_lea.vmem %s0, 256
  %v72 = vld [vmem:[%s71] sm:$0xff]
  %v73 = vld [vmem:[%s71 + $0x8] sm:$0xff]
  %v74 = vld [vmem:[%s71 + $0x10] sm:$0xff]
  %v75 = vld [vmem:[%s71 + $0x18] sm:$0xff]
  %v76 = vld [vmem:[%s71 + $0x20] sm:$0xff]
  %v77 = vld [vmem:[%s71 + $0x28] sm:$0xff]
  %v78 = vld [vmem:[%s71 + $0x30] sm:$0xff]
  %v79 = vld [vmem:[%s71 + $0x38] sm:$0xff]
  %v80 = vld [vmem:[%s71 + $0x40] sm:$0xff]
  %v81 = vld [vmem:[%s71 + $0x48] sm:$0xff]
  %v82 = vld [vmem:[%s71 + $0x50] sm:$0xff]
  %v83 = vld [vmem:[%s71 + $0x58] sm:$0xff]
  %v84 = vld [vmem:[%s71 + $0x60] sm:$0xff]
  %v85 = vld [vmem:[%s71 + $0x68] sm:$0xff]
  %v86 = vld [vmem:[%s71 + $0x70] sm:$0xff]
  %v87 = vld [vmem:[%s71 + $0x78] sm:$0xff]
  %s88 = scalar_lea.vmem %s0, 384
  %v89 = vld [vmem:[%s88] sm:$0xff]
  %v90 = vld [vmem:[%s88 + $0x8] sm:$0xff]
  %v91 = vld [vmem:[%s88 + $0x10] sm:$0xff]
  %v92 = vld [vmem:[%s88 + $0x18] sm:$0xff]
  %v93 = vld [vmem:[%s88 + $0x20] sm:$0xff]
  %v94 = vld [vmem:[%s88 + $0x28] sm:$0xff]
  %v95 = vld [vmem:[%s88 + $0x30] sm:$0xff]
  %v96 = vld [vmem:[%s88 + $0x38] sm:$0xff]
  %v97 = vld [vmem:[%s88 + $0x40] sm:$0xff]
  %v98 = vld [vmem:[%s88 + $0x48] sm:$0xff]
  %v99 = vld [vmem:[%s88 + $0x50] sm:$0xff]
  %v100 = vld [vmem:[%s88 + $0x58] sm:$0xff]
  %v101 = vld [vmem:[%s88 + $0x60] sm:$0xff]
  %v102 = vld [vmem:[%s88 + $0x68] sm:$0xff]
  %v103 = vld [vmem:[%s88 + $0x70] sm:$0xff]
  %v104 = vld [vmem:[%s88 + $0x78] sm:$0xff]
  %v105 = vld [vmem:[%s2] sm:$0x3]
  %v106 = vld [vmem:[%s1] sm:$0xff]
  %v107 = vld [vmem:[%s1 + $0x8] sm:$0xff]
  %v108 = vld [vmem:[%s1 + $0x10] sm:$0xff]
  %v109 = vld [vmem:[%s1 + $0x18] sm:$0xff]
  %v110 = vld [vmem:[%s1 + $0x20] sm:$0xff]
  %v111 = vld [vmem:[%s1 + $0x28] sm:$0xff]
  %v112 = vld [vmem:[%s1 + $0x30] sm:$0xff]
  %v113 = vld [vmem:[%s1 + $0x38] sm:$0xff]
  %v114 = vld [vmem:[%s1 + $0x40] sm:$0xff]
  %v115 = vld [vmem:[%s1 + $0x48] sm:$0xff]
  %v116 = vld [vmem:[%s1 + $0x50] sm:$0xff]
  %v117 = vld [vmem:[%s1 + $0x58] sm:$0xff]
  %v118 = vld [vmem:[%s1 + $0x60] sm:$0xff]
  %v119 = vld [vmem:[%s1 + $0x68] sm:$0xff]
  %v120 = vld [vmem:[%s1 + $0x70] sm:$0xff]
  %v121 = vld [vmem:[%s1 + $0x78] sm:$0xff]
  %v122 = vld [vmem:[%s1 + $0x80] sm:$0xff]
  %v123 = vld [vmem:[%s1 + $0x88] sm:$0xff]
  %v124 = vld [vmem:[%s1 + $0x90] sm:$0xff]
  %v125 = vld [vmem:[%s1 + $0x98] sm:$0xff]
  %v126 = vld [vmem:[%s1 + $0xa0] sm:$0xff]
  %v127 = vld [vmem:[%s1 + $0xa8] sm:$0xff]
  %v128 = vld [vmem:[%s1 + $0xb0] sm:$0xff]
  %v129 = vld [vmem:[%s1 + $0xb8] sm:$0xff]
  %s130 = scalar_lea.vmem %s1, 192
  %v131 = vld [vmem:[%s130] sm:$0xff]
  %v132 = vld [vmem:[%s130 + $0x8] sm:$0xff]
  %v133 = vld [vmem:[%s130 + $0x10] sm:$0xff]
  %v134 = vld [vmem:[%s130 + $0x18] sm:$0xff]
  %v135 = vld [vmem:[%s130 + $0x20] sm:$0xff]
  %v136 = vld [vmem:[%s130 + $0x28] sm:$0xff]
  %v137 = vld [vmem:[%s130 + $0x30] sm:$0xff]
  %v138 = vld [vmem:[%s130 + $0x38] sm:$0xff]
  %v139 = vld [vmem:[%s130 + $0x40] sm:$0xff]
  %v140 = vld [vmem:[%s130 + $0x48] sm:$0xff]
  %v141 = vld [vmem:[%s130 + $0x50] sm:$0xff]
  %v142 = vld [vmem:[%s130 + $0x58] sm:$0xff]
  %v143 = vld [vmem:[%s130 + $0x60] sm:$0xff]
  %v144 = vld [vmem:[%s130 + $0x68] sm:$0xff]
  %v145 = vld [vmem:[%s130 + $0x70] sm:$0xff]
  %v146 = vld [vmem:[%s130 + $0x78] sm:$0xff]
  %v147 = vld [vmem:[%s130 + $0x80] sm:$0xff]
  %v148 = vld [vmem:[%s130 + $0x88] sm:$0xff]
  %v149 = vld [vmem:[%s130 + $0x90] sm:$0xff]
  %v150 = vld [vmem:[%s130 + $0x98] sm:$0xff]
  %v151 = vld [vmem:[%s130 + $0xa0] sm:$0xff]
  %v152 = vld [vmem:[%s130 + $0xa8] sm:$0xff]
  %v153 = vld [vmem:[%s130 + $0xb0] sm:$0xff]
  %v154 = vld [vmem:[%s130 + $0xb8] sm:$0xff]
  %vm155 = vcmask 785408
  %v157 = vsel %vm155, %v55, 0
  %v160 = vsel %vm155, %v56, 0
  %v163 = vsel %vm155, %v57, 0
  %v166 = vsel %vm155, %v58, 0
  %v169 = vsel %vm155, %v59, 0
  %v172 = vsel %vm155, %v60, 0
  %v175 = vsel %vm155, %v61, 0
  %v178 = vsel %vm155, %v62, 0
  %v181 = vsel %vm155, %v63, 0
  %v184 = vsel %vm155, %v64, 0
  %v187 = vsel %vm155, %v65, 0
  %v190 = vsel %vm155, %v66, 0
  %v193 = vsel %vm155, %v67, 0
  %v196 = vsel %vm155, %v68, 0
  %198 = vmatprep.subr.mxu0 %v132
  %199 = vmatpush1.msra.mxu0 %v131
  %200 = vmatprep.subr.mxu0 %v134
  %201 = vmatpush1.msra.mxu0 %v133
  %202 = vmatprep.subr.mxu0 %v136
  %203 = vmatpush1.msra.mxu0 %v135
  %204 = vmatprep.subr.mxu0 %v138
  %205 = vmatpush1.msra.mxu0 %v137
  %206 = vmatprep.subr.mxu0 %v140
  %207 = vmatpush1.msra.mxu0 %v139
  %208 = vmatprep.subr.mxu0 %v142
  %209 = vmatpush1.msra.mxu0 %v141
  %210 = vmatprep.subr.mxu0 %v144
  %211 = vmatpush1.msra.mxu0 %v143
  %212 = vmatprep.subr.mxu0 %v146
  %213 = vmatpush1.msra.mxu0 %v145
  %214 = vmatprep.subr.mxu0 %v148
  %215 = vmatpush1.msra.mxu0 %v147
  %216 = vmatprep.subr.mxu0 %v150
  %217 = vmatpush1.msra.mxu0 %v149
  %218 = vmatprep.subr.mxu0 %v152
  %219 = vmatpush1.msra.mxu0 %v151
  %220 = vmatprep.subr.mxu0 %v154
  %221 = vmatpush1.msra.mxu0 %v153
  %222 = vmatprep.subr.mxu0 0.0
  %223 = vmatpush1.msra.mxu0 0.0
  %224 = vmatprep.subr.mxu0 0.0
  %225 = vmatpush1.msra.mxu0 0.0
  %226 = vmatprep.subr.mxu0 0.0
  %227 = vmatpush1.msra.mxu0 0.0
  %228 = vmatprep.subr.mxu0 0.0
  %229 = vmatpush1.msra.mxu0 0.0
  %230 = vmatprep.subr.mxu0 0.0
  %231 = vmatpush1.msra.mxu0 0.0
  %232 = vmatprep.subr.mxu0 0.0
  %233 = vmatpush1.msra.mxu0 0.0
  %234 = vmatprep.subr.mxu0 0.0
  %235 = vmatpush1.msra.mxu0 0.0
  %236 = vmatprep.subr.mxu0 0.0
  %237 = vmatpush1.msra.mxu0 0.0
  %238 = vmatprep.subr.mxu0 0.0
  %239 = vmatpush1.msra.mxu0 0.0
  %240 = vmatprep.subr.mxu0 0.0
  %241 = vmatpush1.msra.mxu0 0.0
  %242 = vmatprep.subr.mxu0 0.0
  %243 = vmatpush1.msra.mxu0 0.0
  %244 = vmatprep.subr.mxu0 0.0
  %245 = vmatpush1.msra.mxu0 0.0
  %246 = vmatprep.subr.mxu0 0.0
  %247 = vmatpush1.msra.mxu0 0.0
  %248 = vmatprep.subr.mxu0 0.0
  %249 = vmatpush1.msra.mxu0 0.0
  %250 = vmatprep.subr.mxu0 0.0
  %251 = vmatpush1.msra.mxu0 0.0
  %252 = vmatprep.subr.mxu0 0.0
  %253 = vmatpush1.msra.mxu0 0.0
  %254 = vmatprep.subr.mxu0 0.0
  %255 = vmatpush1.msra.mxu0 0.0
  %256 = vmatprep.subr.mxu0 0.0
  %257 = vmatpush1.msra.mxu0 0.0
  %258 = vmatprep.subr.mxu0 0.0
  %259 = vmatpush1.msra.mxu0 0.0
  %260 = vmatprep.subr.mxu0 0.0
  %261 = vmatpush1.msra.mxu0 0.0
  %262 = vmatprep.mubr.f32.mxu0 0.0
  %263 = vmatmul.mubr.f32.gmra.mrb[0].mxu0 %v157
  %v264 = vpop.f32.mrb[0].mxu0
  %v265 = vadd.f32 0.0, %v264
  %v266 = vpop.f32.mrb[0].mxu0
  %v267 = vadd.f32 0.0, %v266
  %268 = vmatprep.mubr.f32.mxu0 0.0
  %269 = vmatmul.mubr.f32.gmra.mrb[0].mxu0 %v160
  %v270 = vpop.f32.mrb[0].mxu0
  %v271 = vadd.f32 0.0, %v270
  %v272 = vpop.f32.mrb[0].mxu0
  %v273 = vadd.f32 0.0, %v272
  %274 = vmatprep.mubr.f32.mxu0 0.0
  %275 = vmatmul.mubr.f32.gmra.mrb[0].mxu0 %v163
  %v276 = vpop.f32.mrb[0].mxu0
  %v277 = vadd.f32 0.0, %v276
  %v278 = vpop.f32.mrb[0].mxu0
  %v279 = vadd.f32 0.0, %v278
  %280 = vmatprep.mubr.f32.mxu0 0.0
  %281 = vmatmul.mubr.f32.gmra.mrb[0].mxu0 %v166
  %v282 = vpop.f32.mrb[0].mxu0
  %v283 = vadd.f32 0.0, %v282
  %v284 = vpop.f32.mrb[0].mxu0
  %v285 = vadd.f32 0.0, %v284
  %286 = vmatprep.mubr.f32.mxu0 0.0
  %287 = vmatmul.mubr.f32.gmra.mrb[0].mxu0 %v169
  %v288 = vpop.f32.mrb[0].mxu0
  %v289 = vadd.f32 0.0, %v288
  %v290 = vpop.f32.mrb[0].mxu0
  %v291 = vadd.f32 0.0, %v290
  %292 = vmatprep.mubr.f32.mxu0 0.0
  %293 = vmatmul.mubr.f32.gmra.mrb[0].mxu0 %v172
  %v294 = vpop.f32.mrb[0].mxu0
  %v295 = vadd.f32 0.0, %v294
  %v296 = vpop.f32.mrb[0].mxu0
  %v297 = vadd.f32 0.0, %v296
  %298 = vmatprep.mubr.f32.mxu0 0.0
  %299 = vmatmul.mubr.f32.gmra.mrb[0].mxu0 %v175
  %v300 = vpop.f32.mrb[0].mxu0
  %v301 = vadd.f32 0.0, %v300
  %v302 = vpop.f32.mrb[0].mxu0
  %v303 = vadd.f32 0.0, %v302
  %304 = vmatprep.mubr.f32.mxu0 0.0
  %305 = vmatmul.mubr.f32.gmra.mrb[0].mxu0 %v178
  %v306 = vpop.f32.mrb[0].mxu0
  %v307 = vadd.f32 0.0, %v306
  %v308 = vpop.f32.mrb[0].mxu0
  %v309 = vadd.f32 0.0, %v308
  %310 = vmatprep.mubr.f32.mxu0 0.0
  %311 = vmatmul.mubr.f32.gmra.mrb[0].mxu0 %v181
  %v312 = vpop.f32.mrb[0].mxu0
  %v313 = vadd.f32 0.0, %v312
  %v314 = vpop.f32.mrb[0].mxu0
  %v315 = vadd.f32 0.0, %v314
  %316 = vmatprep.mubr.f32.mxu0 0.0
  %317 = vmatmul.mubr.f32.gmra.mrb[0].mxu0 %v184
  %v318 = vpop.f32.mrb[0].mxu0
  %v319 = vadd.f32 0.0, %v318
  %v320 = vpop.f32.mrb[0].mxu0
  %v321 = vadd.f32 0.0, %v320
  %322 = vmatprep.mubr.f32.mxu0 0.0
  %323 = vmatmul.mubr.f32.gmra.mrb[0].mxu0 %v187
  %v324 = vpop.f32.mrb[0].mxu0
  %v325 = vadd.f32 0.0, %v324
  %v326 = vpop.f32.mrb[0].mxu0
  %v327 = vadd.f32 0.0, %v326
  %328 = vmatprep.mubr.f32.mxu0 0.0
  %329 = vmatmul.mubr.f32.gmra.mrb[0].mxu0 %v190
  %v330 = vpop.f32.mrb[0].mxu0
  %v331 = vadd.f32 0.0, %v330
  %v332 = vpop.f32.mrb[0].mxu0
  %v333 = vadd.f32 0.0, %v332
  %334 = vmatprep.mubr.f32.mxu0 0.0
  %335 = vmatmul.mubr.f32.gmra.mrb[0].mxu0 %v193
  %v336 = vpop.f32.mrb[0].mxu0
  %v337 = vadd.f32 0.0, %v336
  %v338 = vpop.f32.mrb[0].mxu0
  %v339 = vadd.f32 0.0, %v338
  %340 = vmatprep.mubr.f32.mxu0 0.0
  %341 = vmatmul.mubr.f32.gmra.mrb[0].mxu0 %v196
  %v342 = vpop.f32.mrb[0].mxu0
  %v343 = vadd.f32 0.0, %v342
  %v344 = vpop.f32.mrb[0].mxu0
  %v345 = vadd.f32 0.0, %v344
  %346 = vdwg.mxu0
  %v348 = vsel %vm155, %v38, 0
  %v351 = vsel %vm155, %v39, 0
  %v354 = vsel %vm155, %v40, 0
  %v357 = vsel %vm155, %v41, 0
  %v360 = vsel %vm155, %v42, 0
  %v363 = vsel %vm155, %v43, 0
  %v366 = vsel %vm155, %v44, 0
  %v369 = vsel %vm155, %v45, 0
  %v372 = vsel %vm155, %v46, 0
  %v375 = vsel %vm155, %v47, 0
  %v378 = vsel %vm155, %v48, 0
  %v381 = vsel %vm155, %v49, 0
  %v384 = vsel %vm155, %v50, 0
  %v387 = vsel %vm155, %v51, 0
  %389 = vmatprep.subr.mxu0 %v107
  %390 = vmatpush1.msra.mxu0 %v106
  %391 = vmatprep.subr.mxu0 %v109
  %392 = vmatpush1.msra.mxu0 %v108
  %393 = vmatprep.subr.mxu0 %v111
  %394 = vmatpush1.msra.mxu0 %v110
  %395 = vmatprep.subr.mxu0 %v113
  %396 = vmatpush1.msra.mxu0 %v112
  %397 = vmatprep.subr.mxu0 %v115
  %398 = vmatpush1.msra.mxu0 %v114
  %399 = vmatprep.subr.mxu0 %v117
  %400 = vmatpush1.msra.mxu0 %v116
  %401 = vmatprep.subr.mxu0 %v119
  %402 = vmatpush1.msra.mxu0 %v118
  %403 = vmatprep.subr.mxu0 %v121
  %404 = vmatpush1.msra.mxu0 %v120
  %405 = vmatprep.subr.mxu0 %v123
  %406 = vmatpush1.msra.mxu0 %v122
  %407 = vmatprep.subr.mxu0 %v125
  %408 = vmatpush1.msra.mxu0 %v124
  %409 = vmatprep.subr.mxu0 %v127
  %410 = vmatpush1.msra.mxu0 %v126
  %411 = vmatprep.subr.mxu0 %v129
  %412 = vmatpush1.msra.mxu0 %v128
  %413 = vmatprep.subr.mxu0 0.0
  %414 = vmatpush1.msra.mxu0 0.0
  %415 = vmatprep.subr.mxu0 0.0
  %416 = vmatpush1.msra.mxu0 0.0
  %417 = vmatprep.subr.mxu0 0.0
  %418 = vmatpush1.msra.mxu0 0.0
  %419 = vmatprep.subr.mxu0 0.0
  %420 = vmatpush1.msra.mxu0 0.0
  %421 = vmatprep.subr.mxu0 0.0
  %422 = vmatpush1.msra.mxu0 0.0
  %423 = vmatprep.subr.mxu0 0.0
  %424 = vmatpush1.msra.mxu0 0.0
  %425 = vmatprep.subr.mxu0 0.0
  %426 = vmatpush1.msra.mxu0 0.0
  %427 = vmatprep.subr.mxu0 0.0
  %428 = vmatpush1.msra.mxu0 0.0
  %429 = vmatprep.subr.mxu0 0.0
  %430 = vmatpush1.msra.mxu0 0.0
  %431 = vmatprep.subr.mxu0 0.0
  %432 = vmatpush1.msra.mxu0 0.0
  %433 = vmatprep.subr.mxu0 0.0
  %434 = vmatpush1.msra.mxu0 0.0
  %435 = vmatprep.subr.mxu0 0.0
  %436 = vmatpush1.msra.mxu0 0.0
  %437 = vmatprep.subr.mxu0 0.0
  %438 = vmatpush1.msra.mxu0 0.0
  %439 = vmatprep.subr.mxu0 0.0
  %440 = vmatpush1.msra.mxu0 0.0
  %441 = vmatprep.subr.mxu0 0.0
  %442 = vmatpush1.msra.mxu0 0.0
  %443 = vmatprep.subr.mxu0 0.0
  %444 = vmatpush1.msra.mxu0 0.0
  %445 = vmatprep.subr.mxu0 0.0
  %446 = vmatpush1.msra.mxu0 0.0
  %447 = vmatprep.subr.mxu0 0.0
  %448 = vmatpush1.msra.mxu0 0.0
  %449 = vmatprep.subr.mxu0 0.0
  %450 = vmatpush1.msra.mxu0 0.0
  %451 = vmatprep.subr.mxu0 0.0
  %452 = vmatpush1.msra.mxu0 0.0
  %453 = vmatprep.mubr.f32.mxu0 0.0
  %454 = vmatmul.mubr.f32.gmra.mrb[0].mxu0 %v348
  %v455 = vpop.f32.mrb[0].mxu0
  %v456 = vadd.f32 %v265, %v455
  %v457 = vpop.f32.mrb[0].mxu0
  %v458 = vadd.f32 %v267, %v457
  %459 = vmatprep.mubr.f32.mxu0 0.0
  %460 = vmatmul.mubr.f32.gmra.mrb[0].mxu0 %v351
  %v461 = vpop.f32.mrb[0].mxu0
  %v462 = vadd.f32 %v271, %v461
  %v463 = vpop.f32.mrb[0].mxu0
  %v464 = vadd.f32 %v273, %v463
  %465 = vmatprep.mubr.f32.mxu0 0.0
  %466 = vmatmul.mubr.f32.gmra.mrb[0].mxu0 %v354
  %v467 = vpop.f32.mrb[0].mxu0
  %v468 = vadd.f32 %v277, %v467
  %v469 = vpop.f32.mrb[0].mxu0
  %v470 = vadd.f32 %v279, %v469
  %471 = vmatprep.mubr.f32.mxu0 0.0
  %472 = vmatmul.mubr.f32.gmra.mrb[0].mxu0 %v357
  %v473 = vpop.f32.mrb[0].mxu0
  %v474 = vadd.f32 %v283, %v473
  %v475 = vpop.f32.mrb[0].mxu0
  %v476 = vadd.f32 %v285, %v475
  %477 = vmatprep.mubr.f32.mxu0 0.0
  %478 = vmatmul.mubr.f32.gmra.mrb[0].mxu0 %v360
  %v479 = vpop.f32.mrb[0].mxu0
  %v480 = vadd.f32 %v289, %v479
  %v481 = vpop.f32.mrb[0].mxu0
  %v482 = vadd.f32 %v291, %v481
  %483 = vmatprep.mubr.f32.mxu0 0.0
  %484 = vmatmul.mubr.f32.gmra.mrb[0].mxu0 %v363
  %v485 = vpop.f32.mrb[0].mxu0
  %v486 = vadd.f32 %v295, %v485
  %v487 = vpop.f32.mrb[0].mxu0
  %v488 = vadd.f32 %v297, %v487
  %489 = vmatprep.mubr.f32.mxu0 0.0
  %490 = vmatmul.mubr.f32.gmra.mrb[0].mxu0 %v366
  %v491 = vpop.f32.mrb[0].mxu0
  %v492 = vadd.f32 %v301, %v491
  %v493 = vpop.f32.mrb[0].mxu0
  %v494 = vadd.f32 %v303, %v493
  %495 = vmatprep.mubr.f32.mxu0 0.0
  %496 = vmatmul.mubr.f32.gmra.mrb[0].mxu0 %v369
  %v497 = vpop.f32.mrb[0].mxu0
  %v498 = vadd.f32 %v307, %v497
  %v499 = vpop.f32.mrb[0].mxu0
  %v500 = vadd.f32 %v309, %v499
  %501 = vmatprep.mubr.f32.mxu0 0.0
  %502 = vmatmul.mubr.f32.gmra.mrb[0].mxu0 %v372
  %v503 = vpop.f32.mrb[0].mxu0
  %v504 = vadd.f32 %v313, %v503
  %v505 = vpop.f32.mrb[0].mxu0
  %v506 = vadd.f32 %v315, %v505
  %507 = vmatprep.mubr.f32.mxu0 0.0
  %508 = vmatmul.mubr.f32.gmra.mrb[0].mxu0 %v375
  %v509 = vpop.f32.mrb[0].mxu0
  %v510 = vadd.f32 %v319, %v509
  %v511 = vpop.f32.mrb[0].mxu0
  %v512 = vadd.f32 %v321, %v511
  %513 = vmatprep.mubr.f32.mxu0 0.0
  %514 = vmatmul.mubr.f32.gmra.mrb[0].mxu0 %v378
  %v515 = vpop.f32.mrb[0].mxu0
  %v516 = vadd.f32 %v325, %v515
  %v517 = vpop.f32.mrb[0].mxu0
  %v518 = vadd.f32 %v327, %v517
  %519 = vmatprep.mubr.f32.mxu0 0.0
  %520 = vmatmul.mubr.f32.gmra.mrb[0].mxu0 %v381
  %v521 = vpop.f32.mrb[0].mxu0
  %v522 = vadd.f32 %v331, %v521
  %v523 = vpop.f32.mrb[0].mxu0
  %v524 = vadd.f32 %v333, %v523
  %525 = vmatprep.mubr.f32.mxu0 0.0
  %526 = vmatmul.mubr.f32.gmra.mrb[0].mxu0 %v384
  %v527 = vpop.f32.mrb[0].mxu0
  %v528 = vadd.f32 %v337, %v527
  %v529 = vpop.f32.mrb[0].mxu0
  %v530 = vadd.f32 %v339, %v529
  %531 = vmatprep.mubr.f32.mxu0 0.0
  %532 = vmatmul.mubr.f32.gmra.mrb[0].mxu0 %v387
  %v533 = vpop.f32.mrb[0].mxu0
  %v534 = vadd.f32 %v343, %v533
  %v535 = vpop.f32.mrb[0].mxu0
  %v536 = vadd.f32 %v345, %v535
  %537 = vdwg.mxu0
  %s538 = scalar_lea.vmem %s1, 384
  %v539 = vld [vmem:[%s538] sm:$0xff]
  %v540 = vld [vmem:[%s538 + $0x8] sm:$0xff]
  %v541 = vld [vmem:[%s538 + $0x10] sm:$0xff]
  %v542 = vld [vmem:[%s538 + $0x18] sm:$0xff]
  %v543 = vld [vmem:[%s538 + $0x20] sm:$0xff]
  %v544 = vld [vmem:[%s538 + $0x28] sm:$0xff]
  %v545 = vld [vmem:[%s538 + $0x30] sm:$0xff]
  %v546 = vld [vmem:[%s538 + $0x38] sm:$0xff]
  %v547 = vld [vmem:[%s538 + $0x40] sm:$0xff]
  %v548 = vld [vmem:[%s538 + $0x48] sm:$0xff]
  %v549 = vld [vmem:[%s538 + $0x50] sm:$0xff]
  %v550 = vld [vmem:[%s538 + $0x58] sm:$0xff]
  %v551 = vld [vmem:[%s538 + $0x60] sm:$0xff]
  %v552 = vld [vmem:[%s538 + $0x68] sm:$0xff]
  %v553 = vld [vmem:[%s538 + $0x70] sm:$0xff]
  %v554 = vld [vmem:[%s538 + $0x78] sm:$0xff]
  %v555 = vld [vmem:[%s538 + $0x80] sm:$0xff]
  %v556 = vld [vmem:[%s538 + $0x88] sm:$0xff]
  %v557 = vld [vmem:[%s538 + $0x90] sm:$0xff]
  %v558 = vld [vmem:[%s538 + $0x98] sm:$0xff]
  %v559 = vld [vmem:[%s538 + $0xa0] sm:$0xff]
  %v560 = vld [vmem:[%s538 + $0xa8] sm:$0xff]
  %v561 = vld [vmem:[%s538 + $0xb0] sm:$0xff]
  %v562 = vld [vmem:[%s538 + $0xb8] sm:$0xff]
  %v564 = vsel %vm155, %v72, 0
  %v567 = vsel %vm155, %v73, 0
  %v570 = vsel %vm155, %v74, 0
  %v573 = vsel %vm155, %v75, 0
  %v576 = vsel %vm155, %v76, 0
  %v579 = vsel %vm155, %v77, 0
  %v582 = vsel %vm155, %v78, 0
  %v585 = vsel %vm155, %v79, 0
  %v588 = vsel %vm155, %v80, 0
  %v591 = vsel %vm155, %v81, 0
  %v594 = vsel %vm155, %v82, 0
  %v597 = vsel %vm155, %v83, 0
  %v600 = vsel %vm155, %v84, 0
  %v603 = vsel %vm155, %v85, 0
  %605 = vmatprep.subr.mxu0 %v540
  %606 = vmatpush1.msra.mxu0 %v539
  %607 = vmatprep.subr.mxu0 %v542
  %608 = vmatpush1.msra.mxu0 %v541
  %609 = vmatprep.subr.mxu0 %v544
  %610 = vmatpush1.msra.mxu0 %v543
  %611 = vmatprep.subr.mxu0 %v546
  %612 = vmatpush1.msra.mxu0 %v545
  %613 = vmatprep.subr.mxu0 %v548
  %614 = vmatpush1.msra.mxu0 %v547
  %615 = vmatprep.subr.mxu0 %v550
  %616 = vmatpush1.msra.mxu0 %v549
  %617 = vmatprep.subr.mxu0 %v552
  %618 = vmatpush1.msra.mxu0 %v551
  %619 = vmatprep.subr.mxu0 %v554
  %620 = vmatpush1.msra.mxu0 %v553
  %621 = vmatprep.subr.mxu0 %v556
  %622 = vmatpush1.msra.mxu0 %v555
  %623 = vmatprep.subr.mxu0 %v558
  %624 = vmatpush1.msra.mxu0 %v557
  %625 = vmatprep.subr.mxu0 %v560
  %626 = vmatpush1.msra.mxu0 %v559
  %627 = vmatprep.subr.mxu0 %v562
  %628 = vmatpush1.msra.mxu0 %v561
  %629 = vmatprep.subr.mxu0 0.0
  %630 = vmatpush1.msra.mxu0 0.0
  %631 = vmatprep.subr.mxu0 0.0
  %632 = vmatpush1.msra.mxu0 0.0
  %633 = vmatprep.subr.mxu0 0.0
  %634 = vmatpush1.msra.mxu0 0.0
  %635 = vmatprep.subr.mxu0 0.0
  %636 = vmatpush1.msra.mxu0 0.0
  %637 = vmatprep.subr.mxu0 0.0
  %638 = vmatpush1.msra.mxu0 0.0
  %639 = vmatprep.subr.mxu0 0.0
  %640 = vmatpush1.msra.mxu0 0.0
  %641 = vmatprep.subr.mxu0 0.0
  %642 = vmatpush1.msra.mxu0 0.0
  %643 = vmatprep.subr.mxu0 0.0
  %644 = vmatpush1.msra.mxu0 0.0
  %645 = vmatprep.subr.mxu0 0.0
  %646 = vmatpush1.msra.mxu0 0.0
  %647 = vmatprep.subr.mxu0 0.0
  %648 = vmatpush1.msra.mxu0 0.0
  %649 = vmatprep.subr.mxu0 0.0
  %650 = vmatpush1.msra.mxu0 0.0
  %651 = vmatprep.subr.mxu0 0.0
  %652 = vmatpush1.msra.mxu0 0.0
  %653 = vmatprep.subr.mxu0 0.0
  %654 = vmatpush1.msra.mxu0 0.0
  %655 = vmatprep.subr.mxu0 0.0
  %656 = vmatpush1.msra.mxu0 0.0
  %657 = vmatprep.subr.mxu0 0.0
  %658 = vmatpush1.msra.mxu0 0.0
  %659 = vmatprep.subr.mxu0 0.0
  %660 = vmatpush1.msra.mxu0 0.0
  %661 = vmatprep.subr.mxu0 0.0
  %662 = vmatpush1.msra.mxu0 0.0
  %663 = vmatprep.subr.mxu0 0.0
  %664 = vmatpush1.msra.mxu0 0.0
  %665 = vmatprep.subr.mxu0 0.0
  %666 = vmatpush1.msra.mxu0 0.0
  %667 = vmatprep.subr.mxu0 0.0
  %668 = vmatpush1.msra.mxu0 0.0
  %669 = vmatprep.mubr.f32.mxu0 0.0
  %670 = vmatmul.mubr.f32.gmra.mrb[0].mxu0 %v564
  %v671 = vpop.f32.mrb[0].mxu0
  %v672 = vadd.f32 0.0, %v671
  %v673 = vpop.f32.mrb[0].mxu0
  %v674 = vadd.f32 0.0, %v673
  %675 = vmatprep.mubr.f32.mxu0 0.0
  %676 = vmatmul.mubr.f32.gmra.mrb[0].mxu0 %v567
  %v677 = vpop.f32.mrb[0].mxu0
  %v678 = vadd.f32 0.0, %v677
  %v679 = vpop.f32.mrb[0].mxu0
  %v680 = vadd.f32 0.0, %v679
  %681 = vmatprep.mubr.f32.mxu0 0.0
  %682 = vmatmul.mubr.f32.gmra.mrb[0].mxu0 %v570
  %v683 = vpop.f32.mrb[0].mxu0
  %v684 = vadd.f32 0.0, %v683
  %v685 = vpop.f32.mrb[0].mxu0
  %v686 = vadd.f32 0.0, %v685
  %687 = vmatprep.mubr.f32.mxu0 0.0
  %688 = vmatmul.mubr.f32.gmra.mrb[0].mxu0 %v573
  %v689 = vpop.f32.mrb[0].mxu0
  %v690 = vadd.f32 0.0, %v689
  %v691 = vpop.f32.mrb[0].mxu0
  %v692 = vadd.f32 0.0, %v691
  %693 = vmatprep.mubr.f32.mxu0 0.0
  %694 = vmatmul.mubr.f32.gmra.mrb[0].mxu0 %v576
  %v695 = vpop.f32.mrb[0].mxu0
  %v696 = vadd.f32 0.0, %v695
  %v697 = vpop.f32.mrb[0].mxu0
  %v698 = vadd.f32 0.0, %v697
  %699 = vmatprep.mubr.f32.mxu0 0.0
  %700 = vmatmul.mubr.f32.gmra.mrb[0].mxu0 %v579
  %v701 = vpop.f32.mrb[0].mxu0
  %v702 = vadd.f32 0.0, %v701
  %v703 = vpop.f32.mrb[0].mxu0
  %v704 = vadd.f32 0.0, %v703
  %705 = vmatprep.mubr.f32.mxu0 0.0
  %706 = vmatmul.mubr.f32.gmra.mrb[0].mxu0 %v582
  %v707 = vpop.f32.mrb[0].mxu0
  %v708 = vadd.f32 0.0, %v707
  %v709 = vpop.f32.mrb[0].mxu0
  %v710 = vadd.f32 0.0, %v709
  %711 = vmatprep.mubr.f32.mxu0 0.0
  %712 = vmatmul.mubr.f32.gmra.mrb[0].mxu0 %v585
  %v713 = vpop.f32.mrb[0].mxu0
  %v714 = vadd.f32 0.0, %v713
  %v715 = vpop.f32.mrb[0].mxu0
  %v716 = vadd.f32 0.0, %v715
  %717 = vmatprep.mubr.f32.mxu0 0.0
  %718 = vmatmul.mubr.f32.gmra.mrb[0].mxu0 %v588
  %v719 = vpop.f32.mrb[0].mxu0
  %v720 = vadd.f32 0.0, %v719
  %v721 = vpop.f32.mrb[0].mxu0
  %v722 = vadd.f32 0.0, %v721
  %723 = vmatprep.mubr.f32.mxu0 0.0
  %724 = vmatmul.mubr.f32.gmra.mrb[0].mxu0 %v591
  %v725 = vpop.f32.mrb[0].mxu0
  %v726 = vadd.f32 0.0, %v725
  %v727 = vpop.f32.mrb[0].mxu0
  %v728 = vadd.f32 0.0, %v727
  %729 = vmatprep.mubr.f32.mxu0 0.0
  %730 = vmatmul.mubr.f32.gmra.mrb[0].mxu0 %v594
  %v731 = vpop.f32.mrb[0].mxu0
  %v732 = vadd.f32 0.0, %v731
  %v733 = vpop.f32.mrb[0].mxu0
  %v734 = vadd.f32 0.0, %v733
  %735 = vmatprep.mubr.f32.mxu0 0.0
  %736 = vmatmul.mubr.f32.gmra.mrb[0].mxu0 %v597
  %v737 = vpop.f32.mrb[0].mxu0
  %v738 = vadd.f32 0.0, %v737
  %v739 = vpop.f32.mrb[0].mxu0
  %v740 = vadd.f32 0.0, %v739
  %741 = vmatprep.mubr.f32.mxu0 0.0
  %742 = vmatmul.mubr.f32.gmra.mrb[0].mxu0 %v600
  %v743 = vpop.f32.mrb[0].mxu0
  %v744 = vadd.f32 0.0, %v743
  %v745 = vpop.f32.mrb[0].mxu0
  %v746 = vadd.f32 0.0, %v745
  %747 = vmatprep.mubr.f32.mxu0 0.0
  %748 = vmatmul.mubr.f32.gmra.mrb[0].mxu0 %v603
  %v749 = vpop.f32.mrb[0].mxu0
  %v750 = vadd.f32 0.0, %v749
  %v751 = vpop.f32.mrb[0].mxu0
  %v752 = vadd.f32 0.0, %v751
  %753 = vdwg.mxu0
  %v754 = vadd.f32 %v456, %v672
  %v755 = vadd.f32 %v458, %v674
  %v756 = vadd.f32 %v462, %v678
  %v757 = vadd.f32 %v464, %v680
  %v758 = vadd.f32 %v468, %v684
  %v759 = vadd.f32 %v470, %v686
  %v760 = vadd.f32 %v474, %v690
  %v761 = vadd.f32 %v476, %v692
  %v762 = vadd.f32 %v480, %v696
  %v763 = vadd.f32 %v482, %v698
  %v764 = vadd.f32 %v486, %v702
  %v765 = vadd.f32 %v488, %v704
  %v766 = vadd.f32 %v492, %v708
  %v767 = vadd.f32 %v494, %v710
  %v768 = vadd.f32 %v498, %v714
  %v769 = vadd.f32 %v500, %v716
  %v770 = vadd.f32 %v504, %v720
  %v771 = vadd.f32 %v506, %v722
  %v772 = vadd.f32 %v510, %v726
  %v773 = vadd.f32 %v512, %v728
  %v774 = vadd.f32 %v516, %v732
  %v775 = vadd.f32 %v518, %v734
  %v776 = vadd.f32 %v522, %v738
  %v777 = vadd.f32 %v524, %v740
  %v778 = vadd.f32 %v528, %v744
  %v779 = vadd.f32 %v530, %v746
  %v780 = vadd.f32 %v534, %v750
  %v781 = vadd.f32 %v536, %v752
  %s782 = scalar_lea.vmem %s1, 576
  %v783 = vld [vmem:[%s782] sm:$0xff]
  %v784 = vld [vmem:[%s782 + $0x8] sm:$0xff]
  %v785 = vld [vmem:[%s782 + $0x10] sm:$0xff]
  %v786 = vld [vmem:[%s782 + $0x18] sm:$0xff]
  %v787 = vld [vmem:[%s782 + $0x20] sm:$0xff]
  %v788 = vld [vmem:[%s782 + $0x28] sm:$0xff]
  %v789 = vld [vmem:[%s782 + $0x30] sm:$0xff]
  %v790 = vld [vmem:[%s782 + $0x38] sm:$0xff]
  %v791 = vld [vmem:[%s782 + $0x40] sm:$0xff]
  %v792 = vld [vmem:[%s782 + $0x48] sm:$0xff]
  %v793 = vld [vmem:[%s782 + $0x50] sm:$0xff]
  %v794 = vld [vmem:[%s782 + $0x58] sm:$0xff]
  %v795 = vld [vmem:[%s782 + $0x60] sm:$0xff]
  %v796 = vld [vmem:[%s782 + $0x68] sm:$0xff]
  %v797 = vld [vmem:[%s782 + $0x70] sm:$0xff]
  %v798 = vld [vmem:[%s782 + $0x78] sm:$0xff]
  %v799 = vld [vmem:[%s782 + $0x80] sm:$0xff]
  %v800 = vld [vmem:[%s782 + $0x88] sm:$0xff]
  %v801 = vld [vmem:[%s782 + $0x90] sm:$0xff]
  %v802 = vld [vmem:[%s782 + $0x98] sm:$0xff]
  %v803 = vld [vmem:[%s782 + $0xa0] sm:$0xff]
  %v804 = vld [vmem:[%s782 + $0xa8] sm:$0xff]
  %v805 = vld [vmem:[%s782 + $0xb0] sm:$0xff]
  %v806 = vld [vmem:[%s782 + $0xb8] sm:$0xff]
  %v808 = vsel %vm155, %v89, 0
  %v811 = vsel %vm155, %v90, 0
  %v814 = vsel %vm155, %v91, 0
  %v817 = vsel %vm155, %v92, 0
  %v820 = vsel %vm155, %v93, 0
  %v823 = vsel %vm155, %v94, 0
  %v826 = vsel %vm155, %v95, 0
  %v829 = vsel %vm155, %v96, 0
  %v832 = vsel %vm155, %v97, 0
  %v835 = vsel %vm155, %v98, 0
  %v838 = vsel %vm155, %v99, 0
  %v841 = vsel %vm155, %v100, 0
  %v844 = vsel %vm155, %v101, 0
  %v847 = vsel %vm155, %v102, 0
  %849 = vmatprep.subr.mxu0 %v784
  %850 = vmatpush1.msra.mxu0 %v783
  %851 = vmatprep.subr.mxu0 %v786
  %852 = vmatpush1.msra.mxu0 %v785
  %853 = vmatprep.subr.mxu0 %v788
  %854 = vmatpush1.msra.mxu0 %v787
  %855 = vmatprep.subr.mxu0 %v790
  %856 = vmatpush1.msra.mxu0 %v789
  %857 = vmatprep.subr.mxu0 %v792
  %858 = vmatpush1.msra.mxu0 %v791
  %859 = vmatprep.subr.mxu0 %v794
  %860 = vmatpush1.msra.mxu0 %v793
  %861 = vmatprep.subr.mxu0 %v796
  %862 = vmatpush1.msra.mxu0 %v795
  %863 = vmatprep.subr.mxu0 %v798
  %864 = vmatpush1.msra.mxu0 %v797
  %865 = vmatprep.subr.mxu0 %v800
  %866 = vmatpush1.msra.mxu0 %v799
  %867 = vmatprep.subr.mxu0 %v802
  %868 = vmatpush1.msra.mxu0 %v801
  %869 = vmatprep.subr.mxu0 %v804
  %870 = vmatpush1.msra.mxu0 %v803
  %871 = vmatprep.subr.mxu0 %v806
  %872 = vmatpush1.msra.mxu0 %v805
  %873 = vmatprep.subr.mxu0 0.0
  %874 = vmatpush1.msra.mxu0 0.0
  %875 = vmatprep.subr.mxu0 0.0
  %876 = vmatpush1.msra.mxu0 0.0
  %877 = vmatprep.subr.mxu0 0.0
  %878 = vmatpush1.msra.mxu0 0.0
  %879 = vmatprep.subr.mxu0 0.0
  %880 = vmatpush1.msra.mxu0 0.0
  %881 = vmatprep.subr.mxu0 0.0
  %882 = vmatpush1.msra.mxu0 0.0
  %883 = vmatprep.subr.mxu0 0.0
  %884 = vmatpush1.msra.mxu0 0.0
  %885 = vmatprep.subr.mxu0 0.0
  %886 = vmatpush1.msra.mxu0 0.0
  %887 = vmatprep.subr.mxu0 0.0
  %888 = vmatpush1.msra.mxu0 0.0
  %889 = vmatprep.subr.mxu0 0.0
  %890 = vmatpush1.msra.mxu0 0.0
  %891 = vmatprep.subr.mxu0 0.0
  %892 = vmatpush1.msra.mxu0 0.0
  %893 = vmatprep.subr.mxu0 0.0
  %894 = vmatpush1.msra.mxu0 0.0
  %895 = vmatprep.subr.mxu0 0.0
  %896 = vmatpush1.msra.mxu0 0.0
  %897 = vmatprep.subr.mxu0 0.0
  %898 = vmatpush1.msra.mxu0 0.0
  %899 = vmatprep.subr.mxu0 0.0
  %900 = vmatpush1.msra.mxu0 0.0
  %901 = vmatprep.subr.mxu0 0.0
  %902 = vmatpush1.msra.mxu0 0.0
  %903 = vmatprep.subr.mxu0 0.0
  %904 = vmatpush1.msra.mxu0 0.0
  %905 = vmatprep.subr.mxu0 0.0
  %906 = vmatpush1.msra.mxu0 0.0
  %907 = vmatprep.subr.mxu0 0.0
  %908 = vmatpush1.msra.mxu0 0.0
  %909 = vmatprep.subr.mxu0 0.0
  %910 = vmatpush1.msra.mxu0 0.0
  %911 = vmatprep.subr.mxu0 0.0
  %912 = vmatpush1.msra.mxu0 0.0
  %913 = vmatprep.mubr.f32.mxu0 0.0
  %914 = vmatmul.mubr.f32.gmra.mrb[0].mxu0 %v808
  %v915 = vpop.f32.mrb[0].mxu0
  %v916 = vadd.f32 0.0, %v915
  %v917 = vpop.f32.mrb[0].mxu0
  %v918 = vadd.f32 0.0, %v917
  %919 = vmatprep.mubr.f32.mxu0 0.0
  %920 = vmatmul.mubr.f32.gmra.mrb[0].mxu0 %v811
  %v921 = vpop.f32.mrb[0].mxu0
  %v922 = vadd.f32 0.0, %v921
  %v923 = vpop.f32.mrb[0].mxu0
  %v924 = vadd.f32 0.0, %v923
  %925 = vmatprep.mubr.f32.mxu0 0.0
  %926 = vmatmul.mubr.f32.gmra.mrb[0].mxu0 %v814
  %v927 = vpop.f32.mrb[0].mxu0
  %v928 = vadd.f32 0.0, %v927
  %v929 = vpop.f32.mrb[0].mxu0
  %v930 = vadd.f32 0.0, %v929
  %931 = vmatprep.mubr.f32.mxu0 0.0
  %932 = vmatmul.mubr.f32.gmra.mrb[0].mxu0 %v817
  %v933 = vpop.f32.mrb[0].mxu0
  %v934 = vadd.f32 0.0, %v933
  %v935 = vpop.f32.mrb[0].mxu0
  %v936 = vadd.f32 0.0, %v935
  %937 = vmatprep.mubr.f32.mxu0 0.0
  %938 = vmatmul.mubr.f32.gmra.mrb[0].mxu0 %v820
  %v939 = vpop.f32.mrb[0].mxu0
  %v940 = vadd.f32 0.0, %v939
  %v941 = vpop.f32.mrb[0].mxu0
  %v942 = vadd.f32 0.0, %v941
  %943 = vmatprep.mubr.f32.mxu0 0.0
  %944 = vmatmul.mubr.f32.gmra.mrb[0].mxu0 %v823
  %v945 = vpop.f32.mrb[0].mxu0
  %v946 = vadd.f32 0.0, %v945
  %v947 = vpop.f32.mrb[0].mxu0
  %v948 = vadd.f32 0.0, %v947
  %949 = vmatprep.mubr.f32.mxu0 0.0
  %950 = vmatmul.mubr.f32.gmra.mrb[0].mxu0 %v826
  %v951 = vpop.f32.mrb[0].mxu0
  %v952 = vadd.f32 0.0, %v951
  %v953 = vpop.f32.mrb[0].mxu0
  %v954 = vadd.f32 0.0, %v953
  %955 = vmatprep.mubr.f32.mxu0 0.0
  %956 = vmatmul.mubr.f32.gmra.mrb[0].mxu0 %v829
  %v957 = vpop.f32.mrb[0].mxu0
  %v958 = vadd.f32 0.0, %v957
  %v959 = vpop.f32.mrb[0].mxu0
  %v960 = vadd.f32 0.0, %v959
  %961 = vmatprep.mubr.f32.mxu0 0.0
  %962 = vmatmul.mubr.f32.gmra.mrb[0].mxu0 %v832
  %v963 = vpop.f32.mrb[0].mxu0
  %v964 = vadd.f32 0.0, %v963
  %v965 = vpop.f32.mrb[0].mxu0
  %v966 = vadd.f32 0.0, %v965
  %967 = vmatprep.mubr.f32.mxu0 0.0
  %968 = vmatmul.mubr.f32.gmra.mrb[0].mxu0 %v835
  %v969 = vpop.f32.mrb[0].mxu0
  %v970 = vadd.f32 0.0, %v969
  %v971 = vpop.f32.mrb[0].mxu0
  %v972 = vadd.f32 0.0, %v971
  %973 = vmatprep.mubr.f32.mxu0 0.0
  %974 = vmatmul.mubr.f32.gmra.mrb[0].mxu0 %v838
  %v975 = vpop.f32.mrb[0].mxu0
  %v976 = vadd.f32 0.0, %v975
  %v977 = vpop.f32.mrb[0].mxu0
  %v978 = vadd.f32 0.0, %v977
  %979 = vmatprep.mubr.f32.mxu0 0.0
  %980 = vmatmul.mubr.f32.gmra.mrb[0].mxu0 %v841
  %v981 = vpop.f32.mrb[0].mxu0
  %v982 = vadd.f32 0.0, %v981
  %v983 = vpop.f32.mrb[0].mxu0
  %v984 = vadd.f32 0.0, %v983
  %985 = vmatprep.mubr.f32.mxu0 0.0
  %986 = vmatmul.mubr.f32.gmra.mrb[0].mxu0 %v844
  %v987 = vpop.f32.mrb[0].mxu0
  %v988 = vadd.f32 0.0, %v987
  %v989 = vpop.f32.mrb[0].mxu0
  %v990 = vadd.f32 0.0, %v989
  %991 = vmatprep.mubr.f32.mxu0 0.0
  %992 = vmatmul.mubr.f32.gmra.mrb[0].mxu0 %v847
  %v993 = vpop.f32.mrb[0].mxu0
  %v994 = vadd.f32 0.0, %v993
  %v995 = vpop.f32.mrb[0].mxu0
  %v996 = vadd.f32 0.0, %v995
  %997 = vdwg.mxu0
  %v998 = vadd.f32 %v754, %v916
  %v999 = vadd.f32 %v755, %v918
  %v1000 = vadd.f32 %v756, %v922
  %v1001 = vadd.f32 %v757, %v924
  %v1002 = vadd.f32 %v758, %v928
  %v1003 = vadd.f32 %v759, %v930
  %v1004 = vadd.f32 %v760, %v934
  %v1005 = vadd.f32 %v761, %v936
  %v1006 = vadd.f32 %v762, %v940
  %v1007 = vadd.f32 %v763, %v942
  %v1008 = vadd.f32 %v764, %v946
  %v1009 = vadd.f32 %v765, %v948
  %v1010 = vadd.f32 %v766, %v952
  %v1011 = vadd.f32 %v767, %v954
  %v1012 = vadd.f32 %v768, %v958
  %v1013 = vadd.f32 %v769, %v960
  %v1014 = vadd.f32 %v770, %v964
  %v1015 = vadd.f32 %v771, %v966
  %v1016 = vadd.f32 %v772, %v970
  %v1017 = vadd.f32 %v773, %v972
  %v1018 = vadd.f32 %v774, %v976
  %v1019 = vadd.f32 %v775, %v978
  %v1020 = vadd.f32 %v776, %v982
  %v1021 = vadd.f32 %v777, %v984
  %v1022 = vadd.f32 %v778, %v988
  %v1023 = vadd.f32 %v779, %v990
  %v1024 = vadd.f32 %v780, %v994
  %v1025 = vadd.f32 %v781, %v996
  %s1026 = scalar_lea.vmem %s1, 768
  %v1027 = vld [vmem:[%s1026] sm:$0xff]
  %v1028 = vld [vmem:[%s1026 + $0x8] sm:$0xff]
  %v1029 = vld [vmem:[%s1026 + $0x10] sm:$0xff]
  %v1030 = vld [vmem:[%s1026 + $0x18] sm:$0xff]
  %v1031 = vld [vmem:[%s1026 + $0x20] sm:$0xff]
  %v1032 = vld [vmem:[%s1026 + $0x28] sm:$0xff]
  %v1033 = vld [vmem:[%s1026 + $0x30] sm:$0xff]
  %v1034 = vld [vmem:[%s1026 + $0x38] sm:$0xff]
  %v1035 = vld [vmem:[%s1026 + $0x40] sm:$0xff]
  %v1036 = vld [vmem:[%s1026 + $0x48] sm:$0xff]
  %v1037 = vld [vmem:[%s1026 + $0x50] sm:$0xff]
  %v1038 = vld [vmem:[%s1026 + $0x58] sm:$0xff]
  %v1039 = vld [vmem:[%s1026 + $0x60] sm:$0xff]
  %v1040 = vld [vmem:[%s1026 + $0x68] sm:$0xff]
  %v1041 = vld [vmem:[%s1026 + $0x70] sm:$0xff]
  %v1042 = vld [vmem:[%s1026 + $0x78] sm:$0xff]
  %v1043 = vld [vmem:[%s1026 + $0x80] sm:$0xff]
  %v1044 = vld [vmem:[%s1026 + $0x88] sm:$0xff]
  %v1045 = vld [vmem:[%s1026 + $0x90] sm:$0xff]
  %v1046 = vld [vmem:[%s1026 + $0x98] sm:$0xff]
  %v1047 = vld [vmem:[%s1026 + $0xa0] sm:$0xff]
  %v1048 = vld [vmem:[%s1026 + $0xa8] sm:$0xff]
  %v1049 = vld [vmem:[%s1026 + $0xb0] sm:$0xff]
  %v1050 = vld [vmem:[%s1026 + $0xb8] sm:$0xff]
  %v1052 = vsel %vm155, %v52, 0
  %v1055 = vsel %vm155, %v53, 0
  %1057 = vmatprep.subr.mxu0 %v1028
  %1058 = vmatpush1.msra.mxu0 %v1027
  %1059 = vmatprep.subr.mxu0 %v1030
  %1060 = vmatpush1.msra.mxu0 %v1029
  %1061 = vmatprep.subr.mxu0 %v1032
  %1062 = vmatpush1.msra.mxu0 %v1031
  %1063 = vmatprep.subr.mxu0 %v1034
  %1064 = vmatpush1.msra.mxu0 %v1033
  %1065 = vmatprep.subr.mxu0 %v1036
  %1066 = vmatpush1.msra.mxu0 %v1035
  %1067 = vmatprep.subr.mxu0 %v1038
  %1068 = vmatpush1.msra.mxu0 %v1037
  %1069 = vmatprep.subr.mxu0 %v1040
  %1070 = vmatpush1.msra.mxu0 %v1039
  %1071 = vmatprep.subr.mxu0 %v1042
  %1072 = vmatpush1.msra.mxu0 %v1041
  %1073 = vmatprep.subr.mxu0 %v1044
  %1074 = vmatpush1.msra.mxu0 %v1043
  %1075 = vmatprep.subr.mxu0 %v1046
  %1076 = vmatpush1.msra.mxu0 %v1045
  %1077 = vmatprep.subr.mxu0 %v1048
  %1078 = vmatpush1.msra.mxu0 %v1047
  %1079 = vmatprep.subr.mxu0 %v1050
  %1080 = vmatpush1.msra.mxu0 %v1049
  %1081 = vmatprep.subr.mxu0 0.0
  %1082 = vmatpush1.msra.mxu0 0.0
  %1083 = vmatprep.subr.mxu0 0.0
  %1084 = vmatpush1.msra.mxu0 0.0
  %1085 = vmatprep.subr.mxu0 0.0
  %1086 = vmatpush1.msra.mxu0 0.0
  %1087 = vmatprep.subr.mxu0 0.0
  %1088 = vmatpush1.msra.mxu0 0.0
  %1089 = vmatprep.subr.mxu0 0.0
  %1090 = vmatpush1.msra.mxu0 0.0
  %1091 = vmatprep.subr.mxu0 0.0
  %1092 = vmatpush1.msra.mxu0 0.0
  %1093 = vmatprep.subr.mxu0 0.0
  %1094 = vmatpush1.msra.mxu0 0.0
  %1095 = vmatprep.subr.mxu0 0.0
  %1096 = vmatpush1.msra.mxu0 0.0
  %1097 = vmatprep.subr.mxu0 0.0
  %1098 = vmatpush1.msra.mxu0 0.0
  %1099 = vmatprep.subr.mxu0 0.0
  %1100 = vmatpush1.msra.mxu0 0.0
  %1101 = vmatprep.subr.mxu0 0.0
  %1102 = vmatpush1.msra.mxu0 0.0
  %1103 = vmatprep.subr.mxu0 0.0
  %1104 = vmatpush1.msra.mxu0 0.0
  %1105 = vmatprep.subr.mxu0 0.0
  %1106 = vmatpush1.msra.mxu0 0.0
  %1107 = vmatprep.subr.mxu0 0.0
  %1108 = vmatpush1.msra.mxu0 0.0
  %1109 = vmatprep.subr.mxu0 0.0
  %1110 = vmatpush1.msra.mxu0 0.0
  %1111 = vmatprep.subr.mxu0 0.0
  %1112 = vmatpush1.msra.mxu0 0.0
  %1113 = vmatprep.subr.mxu0 0.0
  %1114 = vmatpush1.msra.mxu0 0.0
  %1115 = vmatprep.subr.mxu0 0.0
  %1116 = vmatpush1.msra.mxu0 0.0
  %1117 = vmatprep.subr.mxu0 0.0
  %1118 = vmatpush1.msra.mxu0 0.0
  %1119 = vmatprep.subr.mxu0 0.0
  %1120 = vmatpush1.msra.mxu0 0.0
  %1121 = vmatprep.mubr.f32.mxu0 0.0
  %1122 = vmatmul.mubr.f32.gmra.mrb[0].mxu0 %v354
  %v1123 = vpop.f32.mrb[0].mxu0
  %v1124 = vadd.f32 0.0, %v1123
  %v1125 = vpop.f32.mrb[0].mxu0
  %v1126 = vadd.f32 0.0, %v1125
  %1127 = vmatprep.mubr.f32.mxu0 0.0
  %1128 = vmatmul.mubr.f32.gmra.mrb[0].mxu0 %v357
  %v1129 = vpop.f32.mrb[0].mxu0
  %v1130 = vadd.f32 0.0, %v1129
  %v1131 = vpop.f32.mrb[0].mxu0
  %v1132 = vadd.f32 0.0, %v1131
  %1133 = vmatprep.mubr.f32.mxu0 0.0
  %1134 = vmatmul.mubr.f32.gmra.mrb[0].mxu0 %v360
  %v1135 = vpop.f32.mrb[0].mxu0
  %v1136 = vadd.f32 0.0, %v1135
  %v1137 = vpop.f32.mrb[0].mxu0
  %v1138 = vadd.f32 0.0, %v1137
  %1139 = vmatprep.mubr.f32.mxu0 0.0
  %1140 = vmatmul.mubr.f32.gmra.mrb[0].mxu0 %v363
  %v1141 = vpop.f32.mrb[0].mxu0
  %v1142 = vadd.f32 0.0, %v1141
  %v1143 = vpop.f32.mrb[0].mxu0
  %v1144 = vadd.f32 0.0, %v1143
  %1145 = vmatprep.mubr.f32.mxu0 0.0
  %1146 = vmatmul.mubr.f32.gmra.mrb[0].mxu0 %v366
  %v1147 = vpop.f32.mrb[0].mxu0
  %v1148 = vadd.f32 0.0, %v1147
  %v1149 = vpop.f32.mrb[0].mxu0
  %v1150 = vadd.f32 0.0, %v1149
  %1151 = vmatprep.mubr.f32.mxu0 0.0
  %1152 = vmatmul.mubr.f32.gmra.mrb[0].mxu0 %v369
  %v1153 = vpop.f32.mrb[0].mxu0
  %v1154 = vadd.f32 0.0, %v1153
  %v1155 = vpop.f32.mrb[0].mxu0
  %v1156 = vadd.f32 0.0, %v1155
  %1157 = vmatprep.mubr.f32.mxu0 0.0
  %1158 = vmatmul.mubr.f32.gmra.mrb[0].mxu0 %v372
  %v1159 = vpop.f32.mrb[0].mxu0
  %v1160 = vadd.f32 0.0, %v1159
  %v1161 = vpop.f32.mrb[0].mxu0
  %v1162 = vadd.f32 0.0, %v1161
  %1163 = vmatprep.mubr.f32.mxu0 0.0
  %1164 = vmatmul.mubr.f32.gmra.mrb[0].mxu0 %v375
  %v1165 = vpop.f32.mrb[0].mxu0
  %v1166 = vadd.f32 0.0, %v1165
  %v1167 = vpop.f32.mrb[0].mxu0
  %v1168 = vadd.f32 0.0, %v1167
  %1169 = vmatprep.mubr.f32.mxu0 0.0
  %1170 = vmatmul.mubr.f32.gmra.mrb[0].mxu0 %v378
  %v1171 = vpop.f32.mrb[0].mxu0
  %v1172 = vadd.f32 0.0, %v1171
  %v1173 = vpop.f32.mrb[0].mxu0
  %v1174 = vadd.f32 0.0, %v1173
  %1175 = vmatprep.mubr.f32.mxu0 0.0
  %1176 = vmatmul.mubr.f32.gmra.mrb[0].mxu0 %v381
  %v1177 = vpop.f32.mrb[0].mxu0
  %v1178 = vadd.f32 0.0, %v1177
  %v1179 = vpop.f32.mrb[0].mxu0
  %v1180 = vadd.f32 0.0, %v1179
  %1181 = vmatprep.mubr.f32.mxu0 0.0
  %1182 = vmatmul.mubr.f32.gmra.mrb[0].mxu0 %v384
  %v1183 = vpop.f32.mrb[0].mxu0
  %v1184 = vadd.f32 0.0, %v1183
  %v1185 = vpop.f32.mrb[0].mxu0
  %v1186 = vadd.f32 0.0, %v1185
  %1187 = vmatprep.mubr.f32.mxu0 0.0
  %1188 = vmatmul.mubr.f32.gmra.mrb[0].mxu0 %v387
  %v1189 = vpop.f32.mrb[0].mxu0
  %v1190 = vadd.f32 0.0, %v1189
  %v1191 = vpop.f32.mrb[0].mxu0
  %v1192 = vadd.f32 0.0, %v1191
  %1193 = vmatprep.mubr.f32.mxu0 0.0
  %1194 = vmatmul.mubr.f32.gmra.mrb[0].mxu0 %v1052
  %v1195 = vpop.f32.mrb[0].mxu0
  %v1196 = vadd.f32 0.0, %v1195
  %v1197 = vpop.f32.mrb[0].mxu0
  %v1198 = vadd.f32 0.0, %v1197
  %1199 = vmatprep.mubr.f32.mxu0 0.0
  %1200 = vmatmul.mubr.f32.gmra.mrb[0].mxu0 %v1055
  %v1201 = vpop.f32.mrb[0].mxu0
  %v1202 = vadd.f32 0.0, %v1201
  %v1203 = vpop.f32.mrb[0].mxu0
  %v1204 = vadd.f32 0.0, %v1203
  %1205 = vdwg.mxu0
  %v1206 = vadd.f32 %v998, %v1124
  %v1207 = vadd.f32 %v999, %v1126
  %v1208 = vadd.f32 %v1000, %v1130
  %v1209 = vadd.f32 %v1001, %v1132
  %v1210 = vadd.f32 %v1002, %v1136
  %v1211 = vadd.f32 %v1003, %v1138
  %v1212 = vadd.f32 %v1004, %v1142
  %v1213 = vadd.f32 %v1005, %v1144
  %v1214 = vadd.f32 %v1006, %v1148
  %v1215 = vadd.f32 %v1007, %v1150
  %v1216 = vadd.f32 %v1008, %v1154
  %v1217 = vadd.f32 %v1009, %v1156
  %v1218 = vadd.f32 %v1010, %v1160
  %v1219 = vadd.f32 %v1011, %v1162
  %v1220 = vadd.f32 %v1012, %v1166
  %v1221 = vadd.f32 %v1013, %v1168
  %v1222 = vadd.f32 %v1014, %v1172
  %v1223 = vadd.f32 %v1015, %v1174
  %v1224 = vadd.f32 %v1016, %v1178
  %v1225 = vadd.f32 %v1017, %v1180
  %v1226 = vadd.f32 %v1018, %v1184
  %v1227 = vadd.f32 %v1019, %v1186
  %v1228 = vadd.f32 %v1020, %v1190
  %v1229 = vadd.f32 %v1021, %v1192
  %v1230 = vadd.f32 %v1022, %v1196
  %v1231 = vadd.f32 %v1023, %v1198
  %v1232 = vadd.f32 %v1024, %v1202
  %v1233 = vadd.f32 %v1025, %v1204
  %v1235 = vlaneseq
  %v1236 = vshrl.u32 %v1235, 7
  %v1237 = vsub.s32 0, %v1236
  %v1238 = vrot.slane %v105, %v1237
  %v1239 = vlaneseq
  %v1240 = vshrl.u32 %v1239, 7
  %v1241 = vsub.s32 1, %v1240
  %v1242 = vrot.slane %v105, %v1241
  %v1245 = vadd.f32 %v1206, %v1238
  %v1246 = vadd.f32 %v1207, %v1242
  %v1247 = vadd.f32 %v1208, %v1238
  %v1248 = vadd.f32 %v1209, %v1242
  %v1249 = vadd.f32 %v1210, %v1238
  %v1250 = vadd.f32 %v1211, %v1242
  %v1251 = vadd.f32 %v1212, %v1238
  %v1252 = vadd.f32 %v1213, %v1242
  %v1253 = vadd.f32 %v1214, %v1238
  %v1254 = vadd.f32 %v1215, %v1242
  %v1255 = vadd.f32 %v1216, %v1238
  %v1256 = vadd.f32 %v1217, %v1242
  %v1257 = vadd.f32 %v1218, %v1238
  %v1258 = vadd.f32 %v1219, %v1242
  %v1259 = vadd.f32 %v1220, %v1238
  %v1260 = vadd.f32 %v1221, %v1242
  %v1261 = vadd.f32 %v1222, %v1238
  %v1262 = vadd.f32 %v1223, %v1242
  %v1263 = vadd.f32 %v1224, %v1238
  %v1264 = vadd.f32 %v1225, %v1242
  %v1265 = vadd.f32 %v1226, %v1238
  %v1266 = vadd.f32 %v1227, %v1242
  %v1267 = vadd.f32 %v1228, %v1238
  %v1268 = vadd.f32 %v1229, %v1242
  %v1269 = vadd.f32 %v1230, %v1238
  %v1270 = vadd.f32 %v1231, %v1242
  %v1271 = vadd.f32 %v1232, %v1238
  %v1272 = vadd.f32 %v1233, %v1242
  %v1273 = vmax.f32 %v1245, 0.0
  %v1274 = vmax.f32 %v1246, 0.0
  %v1275 = vmax.f32 %v1247, 0.0
  %v1276 = vmax.f32 %v1248, 0.0
  %v1277 = vmax.f32 %v1249, 0.0
  %v1278 = vmax.f32 %v1250, 0.0
  %v1279 = vmax.f32 %v1251, 0.0
  %v1280 = vmax.f32 %v1252, 0.0
  %v1281 = vmax.f32 %v1253, 0.0
  %v1282 = vmax.f32 %v1254, 0.0
  %v1283 = vmax.f32 %v1255, 0.0
  %v1284 = vmax.f32 %v1256, 0.0
  %v1285 = vmax.f32 %v1257, 0.0
  %v1286 = vmax.f32 %v1258, 0.0
  %v1287 = vmax.f32 %v1259, 0.0
  %v1288 = vmax.f32 %v1260, 0.0
  %v1289 = vmax.f32 %v1261, 0.0
  %v1290 = vmax.f32 %v1262, 0.0
  %v1291 = vmax.f32 %v1263, 0.0
  %v1292 = vmax.f32 %v1264, 0.0
  %v1293 = vmax.f32 %v1265, 0.0
  %v1294 = vmax.f32 %v1266, 0.0
  %v1295 = vmax.f32 %v1267, 0.0
  %v1296 = vmax.f32 %v1268, 0.0
  %v1297 = vmax.f32 %v1269, 0.0
  %v1298 = vmax.f32 %v1270, 0.0
  %v1299 = vmax.f32 %v1271, 0.0
  %v1300 = vmax.f32 %v1272, 0.0
  %1301 = vmatprep.subr.mxu0 %v132
  %1302 = vmatpush1.msra.mxu0 %v131
  %1303 = vmatprep.subr.mxu0 %v134
  %1304 = vmatpush1.msra.mxu0 %v133
  %1305 = vmatprep.subr.mxu0 %v136
  %1306 = vmatpush1.msra.mxu0 %v135
  %1307 = vmatprep.subr.mxu0 %v138
  %1308 = vmatpush1.msra.mxu0 %v137
  %1309 = vmatprep.subr.mxu0 %v140
  %1310 = vmatpush1.msra.mxu0 %v139
  %1311 = vmatprep.subr.mxu0 %v142
  %1312 = vmatpush1.msra.mxu0 %v141
  %1313 = vmatprep.subr.mxu0 %v144
  %1314 = vmatpush1.msra.mxu0 %v143
  %1315 = vmatprep.subr.mxu0 %v146
  %1316 = vmatpush1.msra.mxu0 %v145
  %1317 = vmatprep.subr.mxu0 %v148
  %1318 = vmatpush1.msra.mxu0 %v147
  %1319 = vmatprep.subr.mxu0 %v150
  %1320 = vmatpush1.msra.mxu0 %v149
  %1321 = vmatprep.subr.mxu0 %v152
  %1322 = vmatpush1.msra.mxu0 %v151
  %1323 = vmatprep.subr.mxu0 %v154
  %1324 = vmatpush1.msra.mxu0 %v153
  %1325 = vmatprep.subr.mxu0 0.0
  %1326 = vmatpush1.msra.mxu0 0.0
  %1327 = vmatprep.subr.mxu0 0.0
  %1328 = vmatpush1.msra.mxu0 0.0
  %1329 = vmatprep.subr.mxu0 0.0
  %1330 = vmatpush1.msra.mxu0 0.0
  %1331 = vmatprep.subr.mxu0 0.0
  %1332 = vmatpush1.msra.mxu0 0.0
  %1333 = vmatprep.subr.mxu0 0.0
  %1334 = vmatpush1.msra.mxu0 0.0
  %1335 = vmatprep.subr.mxu0 0.0
  %1336 = vmatpush1.msra.mxu0 0.0
  %1337 = vmatprep.subr.mxu0 0.0
  %1338 = vmatpush1.msra.mxu0 0.0
  %1339 = vmatprep.subr.mxu0 0.0
  %1340 = vmatpush1.msra.mxu0 0.0
  %1341 = vmatprep.subr.mxu0 0.0
  %1342 = vmatpush1.msra.mxu0 0.0
  %1343 = vmatprep.subr.mxu0 0.0
  %1344 = vmatpush1.msra.mxu0 0.0
  %1345 = vmatprep.subr.mxu0 0.0
  %1346 = vmatpush1.msra.mxu0 0.0
  %1347 = vmatprep.subr.mxu0 0.0
  %1348 = vmatpush1.msra.mxu0 0.0
  %1349 = vmatprep.subr.mxu0 0.0
  %1350 = vmatpush1.msra.mxu0 0.0
  %1351 = vmatprep.subr.mxu0 0.0
  %1352 = vmatpush1.msra.mxu0 0.0
  %1353 = vmatprep.subr.mxu0 0.0
  %1354 = vmatpush1.msra.mxu0 0.0
  %1355 = vmatprep.subr.mxu0 0.0
  %1356 = vmatpush1.msra.mxu0 0.0
  %1357 = vmatprep.subr.mxu0 0.0
  %1358 = vmatpush1.msra.mxu0 0.0
  %1359 = vmatprep.subr.mxu0 0.0
  %1360 = vmatpush1.msra.mxu0 0.0
  %1361 = vmatprep.subr.mxu0 0.0
  %1362 = vmatpush1.msra.mxu0 0.0
  %1363 = vmatprep.subr.mxu0 0.0
  %1364 = vmatpush1.msra.mxu0 0.0
  %1365 = vmatprep.mubr.f32.mxu0 0.0
  %1366 = vmatmul.mubr.f32.gmra.mrb[0].mxu0 %v564
  %v1367 = vpop.f32.mrb[0].mxu0
  %v1368 = vadd.f32 0.0, %v1367
  %v1369 = vpop.f32.mrb[0].mxu0
  %v1370 = vadd.f32 0.0, %v1369
  %1371 = vmatprep.mubr.f32.mxu0 0.0
  %1372 = vmatmul.mubr.f32.gmra.mrb[0].mxu0 %v567
  %v1373 = vpop.f32.mrb[0].mxu0
  %v1374 = vadd.f32 0.0, %v1373
  %v1375 = vpop.f32.mrb[0].mxu0
  %v1376 = vadd.f32 0.0, %v1375
  %1377 = vmatprep.mubr.f32.mxu0 0.0
  %1378 = vmatmul.mubr.f32.gmra.mrb[0].mxu0 %v570
  %v1379 = vpop.f32.mrb[0].mxu0
  %v1380 = vadd.f32 0.0, %v1379
  %v1381 = vpop.f32.mrb[0].mxu0
  %v1382 = vadd.f32 0.0, %v1381
  %1383 = vmatprep.mubr.f32.mxu0 0.0
  %1384 = vmatmul.mubr.f32.gmra.mrb[0].mxu0 %v573
  %v1385 = vpop.f32.mrb[0].mxu0
  %v1386 = vadd.f32 0.0, %v1385
  %v1387 = vpop.f32.mrb[0].mxu0
  %v1388 = vadd.f32 0.0, %v1387
  %1389 = vmatprep.mubr.f32.mxu0 0.0
  %1390 = vmatmul.mubr.f32.gmra.mrb[0].mxu0 %v576
  %v1391 = vpop.f32.mrb[0].mxu0
  %v1392 = vadd.f32 0.0, %v1391
  %v1393 = vpop.f32.mrb[0].mxu0
  %v1394 = vadd.f32 0.0, %v1393
  %1395 = vmatprep.mubr.f32.mxu0 0.0
  %1396 = vmatmul.mubr.f32.gmra.mrb[0].mxu0 %v579
  %v1397 = vpop.f32.mrb[0].mxu0
  %v1398 = vadd.f32 0.0, %v1397
  %v1399 = vpop.f32.mrb[0].mxu0
  %v1400 = vadd.f32 0.0, %v1399
  %1401 = vmatprep.mubr.f32.mxu0 0.0
  %1402 = vmatmul.mubr.f32.gmra.mrb[0].mxu0 %v582
  %v1403 = vpop.f32.mrb[0].mxu0
  %v1404 = vadd.f32 0.0, %v1403
  %v1405 = vpop.f32.mrb[0].mxu0
  %v1406 = vadd.f32 0.0, %v1405
  %1407 = vmatprep.mubr.f32.mxu0 0.0
  %1408 = vmatmul.mubr.f32.gmra.mrb[0].mxu0 %v585
  %v1409 = vpop.f32.mrb[0].mxu0
  %v1410 = vadd.f32 0.0, %v1409
  %v1411 = vpop.f32.mrb[0].mxu0
  %v1412 = vadd.f32 0.0, %v1411
  %1413 = vmatprep.mubr.f32.mxu0 0.0
  %1414 = vmatmul.mubr.f32.gmra.mrb[0].mxu0 %v588
  %v1415 = vpop.f32.mrb[0].mxu0
  %v1416 = vadd.f32 0.0, %v1415
  %v1417 = vpop.f32.mrb[0].mxu0
  %v1418 = vadd.f32 0.0, %v1417
  %1419 = vmatprep.mubr.f32.mxu0 0.0
  %1420 = vmatmul.mubr.f32.gmra.mrb[0].mxu0 %v591
  %v1421 = vpop.f32.mrb[0].mxu0
  %v1422 = vadd.f32 0.0, %v1421
  %v1423 = vpop.f32.mrb[0].mxu0
  %v1424 = vadd.f32 0.0, %v1423
  %1425 = vmatprep.mubr.f32.mxu0 0.0
  %1426 = vmatmul.mubr.f32.gmra.mrb[0].mxu0 %v594
  %v1427 = vpop.f32.mrb[0].mxu0
  %v1428 = vadd.f32 0.0, %v1427
  %v1429 = vpop.f32.mrb[0].mxu0
  %v1430 = vadd.f32 0.0, %v1429
  %1431 = vmatprep.mubr.f32.mxu0 0.0
  %1432 = vmatmul.mubr.f32.gmra.mrb[0].mxu0 %v597
  %v1433 = vpop.f32.mrb[0].mxu0
  %v1434 = vadd.f32 0.0, %v1433
  %v1435 = vpop.f32.mrb[0].mxu0
  %v1436 = vadd.f32 0.0, %v1435
  %1437 = vmatprep.mubr.f32.mxu0 0.0
  %1438 = vmatmul.mubr.f32.gmra.mrb[0].mxu0 %v600
  %v1439 = vpop.f32.mrb[0].mxu0
  %v1440 = vadd.f32 0.0, %v1439
  %v1441 = vpop.f32.mrb[0].mxu0
  %v1442 = vadd.f32 0.0, %v1441
  %1443 = vmatprep.mubr.f32.mxu0 0.0
  %1444 = vmatmul.mubr.f32.gmra.mrb[0].mxu0 %v603
  %v1445 = vpop.f32.mrb[0].mxu0
  %v1446 = vadd.f32 0.0, %v1445
  %v1447 = vpop.f32.mrb[0].mxu0
  %v1448 = vadd.f32 0.0, %v1447
  %1449 = vdwg.mxu0
  %1450 = vmatprep.subr.mxu0 %v107
  %1451 = vmatpush1.msra.mxu0 %v106
  %1452 = vmatprep.subr.mxu0 %v109
  %1453 = vmatpush1.msra.mxu0 %v108
  %1454 = vmatprep.subr.mxu0 %v111
  %1455 = vmatpush1.msra.mxu0 %v110
  %1456 = vmatprep.subr.mxu0 %v113
  %1457 = vmatpush1.msra.mxu0 %v112
  %1458 = vmatprep.subr.mxu0 %v115
  %1459 = vmatpush1.msra.mxu0 %v114
  %1460 = vmatprep.subr.mxu0 %v117
  %1461 = vmatpush1.msra.mxu0 %v116
  %1462 = vmatprep.subr.mxu0 %v119
  %1463 = vmatpush1.msra.mxu0 %v118
  %1464 = vmatprep.subr.mxu0 %v121
  %1465 = vmatpush1.msra.mxu0 %v120
  %1466 = vmatprep.subr.mxu0 %v123
  %1467 = vmatpush1.msra.mxu0 %v122
  %1468 = vmatprep.subr.mxu0 %v125
  %1469 = vmatpush1.msra.mxu0 %v124
  %1470 = vmatprep.subr.mxu0 %v127
  %1471 = vmatpush1.msra.mxu0 %v126
  %1472 = vmatprep.subr.mxu0 %v129
  %1473 = vmatpush1.msra.mxu0 %v128
  %1474 = vmatprep.subr.mxu0 0.0
  %1475 = vmatpush1.msra.mxu0 0.0
  %1476 = vmatprep.subr.mxu0 0.0
  %1477 = vmatpush1.msra.mxu0 0.0
  %1478 = vmatprep.subr.mxu0 0.0
  %1479 = vmatpush1.msra.mxu0 0.0
  %1480 = vmatprep.subr.mxu0 0.0
  %1481 = vmatpush1.msra.mxu0 0.0
  %1482 = vmatprep.subr.mxu0 0.0
  %1483 = vmatpush1.msra.mxu0 0.0
  %1484 = vmatprep.subr.mxu0 0.0
  %1485 = vmatpush1.msra.mxu0 0.0
  %1486 = vmatprep.subr.mxu0 0.0
  %1487 = vmatpush1.msra.mxu0 0.0
  %1488 = vmatprep.subr.mxu0 0.0
  %1489 = vmatpush1.msra.mxu0 0.0
  %1490 = vmatprep.subr.mxu0 0.0
  %1491 = vmatpush1.msra.mxu0 0.0
  %1492 = vmatprep.subr.mxu0 0.0
  %1493 = vmatpush1.msra.mxu0 0.0
  %1494 = vmatprep.subr.mxu0 0.0
  %1495 = vmatpush1.msra.mxu0 0.0
  %1496 = vmatprep.subr.mxu0 0.0
  %1497 = vmatpush1.msra.mxu0 0.0
  %1498 = vmatprep.subr.mxu0 0.0
  %1499 = vmatpush1.msra.mxu0 0.0
  %1500 = vmatprep.subr.mxu0 0.0
  %1501 = vmatpush1.msra.mxu0 0.0
  %1502 = vmatprep.subr.mxu0 0.0
  %1503 = vmatpush1.msra.mxu0 0.0
  %1504 = vmatprep.subr.mxu0 0.0
  %1505 = vmatpush1.msra.mxu0 0.0
  %1506 = vmatprep.subr.mxu0 0.0
  %1507 = vmatpush1.msra.mxu0 0.0
  %1508 = vmatprep.subr.mxu0 0.0
  %1509 = vmatpush1.msra.mxu0 0.0
  %1510 = vmatprep.subr.mxu0 0.0
  %1511 = vmatpush1.msra.mxu0 0.0
  %1512 = vmatprep.subr.mxu0 0.0
  %1513 = vmatpush1.msra.mxu0 0.0
  %1514 = vmatprep.mubr.f32.mxu0 0.0
  %1515 = vmatmul.mubr.f32.gmra.mrb[0].mxu0 %v157
  %v1516 = vpop.f32.mrb[0].mxu0
  %v1517 = vadd.f32 %v1368, %v1516
  %v1518 = vpop.f32.mrb[0].mxu0
  %v1519 = vadd.f32 %v1370, %v1518
  %1520 = vmatprep.mubr.f32.mxu0 0.0
  %1521 = vmatmul.mubr.f32.gmra.mrb[0].mxu0 %v160
  %v1522 = vpop.f32.mrb[0].mxu0
  %v1523 = vadd.f32 %v1374, %v1522
  %v1524 = vpop.f32.mrb[0].mxu0
  %v1525 = vadd.f32 %v1376, %v1524
  %1526 = vmatprep.mubr.f32.mxu0 0.0
  %1527 = vmatmul.mubr.f32.gmra.mrb[0].mxu0 %v163
  %v1528 = vpop.f32.mrb[0].mxu0
  %v1529 = vadd.f32 %v1380, %v1528
  %v1530 = vpop.f32.mrb[0].mxu0
  %v1531 = vadd.f32 %v1382, %v1530
  %1532 = vmatprep.mubr.f32.mxu0 0.0
  %1533 = vmatmul.mubr.f32.gmra.mrb[0].mxu0 %v166
  %v1534 = vpop.f32.mrb[0].mxu0
  %v1535 = vadd.f32 %v1386, %v1534
  %v1536 = vpop.f32.mrb[0].mxu0
  %v1537 = vadd.f32 %v1388, %v1536
  %1538 = vmatprep.mubr.f32.mxu0 0.0
  %1539 = vmatmul.mubr.f32.gmra.mrb[0].mxu0 %v169
  %v1540 = vpop.f32.mrb[0].mxu0
  %v1541 = vadd.f32 %v1392, %v1540
  %v1542 = vpop.f32.mrb[0].mxu0
  %v1543 = vadd.f32 %v1394, %v1542
  %1544 = vmatprep.mubr.f32.mxu0 0.0
  %1545 = vmatmul.mubr.f32.gmra.mrb[0].mxu0 %v172
  %v1546 = vpop.f32.mrb[0].mxu0
  %v1547 = vadd.f32 %v1398, %v1546
  %v1548 = vpop.f32.mrb[0].mxu0
  %v1549 = vadd.f32 %v1400, %v1548
  %1550 = vmatprep.mubr.f32.mxu0 0.0
  %1551 = vmatmul.mubr.f32.gmra.mrb[0].mxu0 %v175
  %v1552 = vpop.f32.mrb[0].mxu0
  %v1553 = vadd.f32 %v1404, %v1552
  %v1554 = vpop.f32.mrb[0].mxu0
  %v1555 = vadd.f32 %v1406, %v1554
  %1556 = vmatprep.mubr.f32.mxu0 0.0
  %1557 = vmatmul.mubr.f32.gmra.mrb[0].mxu0 %v178
  %v1558 = vpop.f32.mrb[0].mxu0
  %v1559 = vadd.f32 %v1410, %v1558
  %v1560 = vpop.f32.mrb[0].mxu0
  %v1561 = vadd.f32 %v1412, %v1560
  %1562 = vmatprep.mubr.f32.mxu0 0.0
  %1563 = vmatmul.mubr.f32.gmra.mrb[0].mxu0 %v181
  %v1564 = vpop.f32.mrb[0].mxu0
  %v1565 = vadd.f32 %v1416, %v1564
  %v1566 = vpop.f32.mrb[0].mxu0
  %v1567 = vadd.f32 %v1418, %v1566
  %1568 = vmatprep.mubr.f32.mxu0 0.0
  %1569 = vmatmul.mubr.f32.gmra.mrb[0].mxu0 %v184
  %v1570 = vpop.f32.mrb[0].mxu0
  %v1571 = vadd.f32 %v1422, %v1570
  %v1572 = vpop.f32.mrb[0].mxu0
  %v1573 = vadd.f32 %v1424, %v1572
  %1574 = vmatprep.mubr.f32.mxu0 0.0
  %1575 = vmatmul.mubr.f32.gmra.mrb[0].mxu0 %v187
  %v1576 = vpop.f32.mrb[0].mxu0
  %v1577 = vadd.f32 %v1428, %v1576
  %v1578 = vpop.f32.mrb[0].mxu0
  %v1579 = vadd.f32 %v1430, %v1578
  %1580 = vmatprep.mubr.f32.mxu0 0.0
  %1581 = vmatmul.mubr.f32.gmra.mrb[0].mxu0 %v190
  %v1582 = vpop.f32.mrb[0].mxu0
  %v1583 = vadd.f32 %v1434, %v1582
  %v1584 = vpop.f32.mrb[0].mxu0
  %v1585 = vadd.f32 %v1436, %v1584
  %1586 = vmatprep.mubr.f32.mxu0 0.0
  %1587 = vmatmul.mubr.f32.gmra.mrb[0].mxu0 %v193
  %v1588 = vpop.f32.mrb[0].mxu0
  %v1589 = vadd.f32 %v1440, %v1588
  %v1590 = vpop.f32.mrb[0].mxu0
  %v1591 = vadd.f32 %v1442, %v1590
  %1592 = vmatprep.mubr.f32.mxu0 0.0
  %1593 = vmatmul.mubr.f32.gmra.mrb[0].mxu0 %v196
  %v1594 = vpop.f32.mrb[0].mxu0
  %v1595 = vadd.f32 %v1446, %v1594
  %v1596 = vpop.f32.mrb[0].mxu0
  %v1597 = vadd.f32 %v1448, %v1596
  %1598 = vdwg.mxu0
  %1599 = vmatprep.subr.mxu0 %v540
  %1600 = vmatpush1.msra.mxu0 %v539
  %1601 = vmatprep.subr.mxu0 %v542
  %1602 = vmatpush1.msra.mxu0 %v541
  %1603 = vmatprep.subr.mxu0 %v544
  %1604 = vmatpush1.msra.mxu0 %v543
  %1605 = vmatprep.subr.mxu0 %v546
  %1606 = vmatpush1.msra.mxu0 %v545
  %1607 = vmatprep.subr.mxu0 %v548
  %1608 = vmatpush1.msra.mxu0 %v547
  %1609 = vmatprep.subr.mxu0 %v550
  %1610 = vmatpush1.msra.mxu0 %v549
  %1611 = vmatprep.subr.mxu0 %v552
  %1612 = vmatpush1.msra.mxu0 %v551
  %1613 = vmatprep.subr.mxu0 %v554
  %1614 = vmatpush1.msra.mxu0 %v553
  %1615 = vmatprep.subr.mxu0 %v556
  %1616 = vmatpush1.msra.mxu0 %v555
  %1617 = vmatprep.subr.mxu0 %v558
  %1618 = vmatpush1.msra.mxu0 %v557
  %1619 = vmatprep.subr.mxu0 %v560
  %1620 = vmatpush1.msra.mxu0 %v559
  %1621 = vmatprep.subr.mxu0 %v562
  %1622 = vmatpush1.msra.mxu0 %v561
  %1623 = vmatprep.subr.mxu0 0.0
  %1624 = vmatpush1.msra.mxu0 0.0
  %1625 = vmatprep.subr.mxu0 0.0
  %1626 = vmatpush1.msra.mxu0 0.0
  %1627 = vmatprep.subr.mxu0 0.0
  %1628 = vmatpush1.msra.mxu0 0.0
  %1629 = vmatprep.subr.mxu0 0.0
  %1630 = vmatpush1.msra.mxu0 0.0
  %1631 = vmatprep.subr.mxu0 0.0
  %1632 = vmatpush1.msra.mxu0 0.0
  %1633 = vmatprep.subr.mxu0 0.0
  %1634 = vmatpush1.msra.mxu0 0.0
  %1635 = vmatprep.subr.mxu0 0.0
  %1636 = vmatpush1.msra.mxu0 0.0
  %1637 = vmatprep.subr.mxu0 0.0
  %1638 = vmatpush1.msra.mxu0 0.0
  %1639 = vmatprep.subr.mxu0 0.0
  %1640 = vmatpush1.msra.mxu0 0.0
  %1641 = vmatprep.subr.mxu0 0.0
  %1642 = vmatpush1.msra.mxu0 0.0
  %1643 = vmatprep.subr.mxu0 0.0
  %1644 = vmatpush1.msra.mxu0 0.0
  %1645 = vmatprep.subr.mxu0 0.0
  %1646 = vmatpush1.msra.mxu0 0.0
  %1647 = vmatprep.subr.mxu0 0.0
  %1648 = vmatpush1.msra.mxu0 0.0
  %1649 = vmatprep.subr.mxu0 0.0
  %1650 = vmatpush1.msra.mxu0 0.0
  %1651 = vmatprep.subr.mxu0 0.0
  %1652 = vmatpush1.msra.mxu0 0.0
  %1653 = vmatprep.subr.mxu0 0.0
  %1654 = vmatpush1.msra.mxu0 0.0
  %1655 = vmatprep.subr.mxu0 0.0
  %1656 = vmatpush1.msra.mxu0 0.0
  %1657 = vmatprep.subr.mxu0 0.0
  %1658 = vmatpush1.msra.mxu0 0.0
  %1659 = vmatprep.subr.mxu0 0.0
  %1660 = vmatpush1.msra.mxu0 0.0
  %1661 = vmatprep.subr.mxu0 0.0
  %1662 = vmatpush1.msra.mxu0 0.0
  %1663 = vmatprep.mubr.f32.mxu0 0.0
  %1664 = vmatmul.mubr.f32.gmra.mrb[0].mxu0 %v808
  %v1665 = vpop.f32.mrb[0].mxu0
  %v1666 = vadd.f32 0.0, %v1665
  %v1667 = vpop.f32.mrb[0].mxu0
  %v1668 = vadd.f32 0.0, %v1667
  %1669 = vmatprep.mubr.f32.mxu0 0.0
  %1670 = vmatmul.mubr.f32.gmra.mrb[0].mxu0 %v811
  %v1671 = vpop.f32.mrb[0].mxu0
  %v1672 = vadd.f32 0.0, %v1671
  %v1673 = vpop.f32.mrb[0].mxu0
  %v1674 = vadd.f32 0.0, %v1673
  %1675 = vmatprep.mubr.f32.mxu0 0.0
  %1676 = vmatmul.mubr.f32.gmra.mrb[0].mxu0 %v814
  %v1677 = vpop.f32.mrb[0].mxu0
  %v1678 = vadd.f32 0.0, %v1677
  %v1679 = vpop.f32.mrb[0].mxu0
  %v1680 = vadd.f32 0.0, %v1679
  %1681 = vmatprep.mubr.f32.mxu0 0.0
  %1682 = vmatmul.mubr.f32.gmra.mrb[0].mxu0 %v817
  %v1683 = vpop.f32.mrb[0].mxu0
  %v1684 = vadd.f32 0.0, %v1683
  %v1685 = vpop.f32.mrb[0].mxu0
  %v1686 = vadd.f32 0.0, %v1685
  %1687 = vmatprep.mubr.f32.mxu0 0.0
  %1688 = vmatmul.mubr.f32.gmra.mrb[0].mxu0 %v820
  %v1689 = vpop.f32.mrb[0].mxu0
  %v1690 = vadd.f32 0.0, %v1689
  %v1691 = vpop.f32.mrb[0].mxu0
  %v1692 = vadd.f32 0.0, %v1691
  %1693 = vmatprep.mubr.f32.mxu0 0.0
  %1694 = vmatmul.mubr.f32.gmra.mrb[0].mxu0 %v823
  %v1695 = vpop.f32.mrb[0].mxu0
  %v1696 = vadd.f32 0.0, %v1695
  %v1697 = vpop.f32.mrb[0].mxu0
  %v1698 = vadd.f32 0.0, %v1697
  %1699 = vmatprep.mubr.f32.mxu0 0.0
  %1700 = vmatmul.mubr.f32.gmra.mrb[0].mxu0 %v826
  %v1701 = vpop.f32.mrb[0].mxu0
  %v1702 = vadd.f32 0.0, %v1701
  %v1703 = vpop.f32.mrb[0].mxu0
  %v1704 = vadd.f32 0.0, %v1703
  %1705 = vmatprep.mubr.f32.mxu0 0.0
  %1706 = vmatmul.mubr.f32.gmra.mrb[0].mxu0 %v829
  %v1707 = vpop.f32.mrb[0].mxu0
  %v1708 = vadd.f32 0.0, %v1707
  %v1709 = vpop.f32.mrb[0].mxu0
  %v1710 = vadd.f32 0.0, %v1709
  %1711 = vmatprep.mubr.f32.mxu0 0.0
  %1712 = vmatmul.mubr.f32.gmra.mrb[0].mxu0 %v832
  %v1713 = vpop.f32.mrb[0].mxu0
  %v1714 = vadd.f32 0.0, %v1713
  %v1715 = vpop.f32.mrb[0].mxu0
  %v1716 = vadd.f32 0.0, %v1715
  %1717 = vmatprep.mubr.f32.mxu0 0.0
  %1718 = vmatmul.mubr.f32.gmra.mrb[0].mxu0 %v835
  %v1719 = vpop.f32.mrb[0].mxu0
  %v1720 = vadd.f32 0.0, %v1719
  %v1721 = vpop.f32.mrb[0].mxu0
  %v1722 = vadd.f32 0.0, %v1721
  %1723 = vmatprep.mubr.f32.mxu0 0.0
  %1724 = vmatmul.mubr.f32.gmra.mrb[0].mxu0 %v838
  %v1725 = vpop.f32.mrb[0].mxu0
  %v1726 = vadd.f32 0.0, %v1725
  %v1727 = vpop.f32.mrb[0].mxu0
  %v1728 = vadd.f32 0.0, %v1727
  %1729 = vmatprep.mubr.f32.mxu0 0.0
  %1730 = vmatmul.mubr.f32.gmra.mrb[0].mxu0 %v841
  %v1731 = vpop.f32.mrb[0].mxu0
  %v1732 = vadd.f32 0.0, %v1731
  %v1733 = vpop.f32.mrb[0].mxu0
  %v1734 = vadd.f32 0.0, %v1733
  %1735 = vmatprep.mubr.f32.mxu0 0.0
  %1736 = vmatmul.mubr.f32.gmra.mrb[0].mxu0 %v844
  %v1737 = vpop.f32.mrb[0].mxu0
  %v1738 = vadd.f32 0.0, %v1737
  %v1739 = vpop.f32.mrb[0].mxu0
  %v1740 = vadd.f32 0.0, %v1739
  %1741 = vmatprep.mubr.f32.mxu0 0.0
  %1742 = vmatmul.mubr.f32.gmra.mrb[0].mxu0 %v847
  %v1743 = vpop.f32.mrb[0].mxu0
  %v1744 = vadd.f32 0.0, %v1743
  %v1745 = vpop.f32.mrb[0].mxu0
  %v1746 = vadd.f32 0.0, %v1745
  %1747 = vdwg.mxu0
  %v1748 = vadd.f32 %v1517, %v1666
  %v1749 = vadd.f32 %v1519, %v1668
  %v1750 = vadd.f32 %v1523, %v1672
  %v1751 = vadd.f32 %v1525, %v1674
  %v1752 = vadd.f32 %v1529, %v1678
  %v1753 = vadd.f32 %v1531, %v1680
  %v1754 = vadd.f32 %v1535, %v1684
  %v1755 = vadd.f32 %v1537, %v1686
  %v1756 = vadd.f32 %v1541, %v1690
  %v1757 = vadd.f32 %v1543, %v1692
  %v1758 = vadd.f32 %v1547, %v1696
  %v1759 = vadd.f32 %v1549, %v1698
  %v1760 = vadd.f32 %v1553, %v1702
  %v1761 = vadd.f32 %v1555, %v1704
  %v1762 = vadd.f32 %v1559, %v1708
  %v1763 = vadd.f32 %v1561, %v1710
  %v1764 = vadd.f32 %v1565, %v1714
  %v1765 = vadd.f32 %v1567, %v1716
  %v1766 = vadd.f32 %v1571, %v1720
  %v1767 = vadd.f32 %v1573, %v1722
  %v1768 = vadd.f32 %v1577, %v1726
  %v1769 = vadd.f32 %v1579, %v1728
  %v1770 = vadd.f32 %v1583, %v1732
  %v1771 = vadd.f32 %v1585, %v1734
  %v1772 = vadd.f32 %v1589, %v1738
  %v1773 = vadd.f32 %v1591, %v1740
  %v1774 = vadd.f32 %v1595, %v1744
  %v1775 = vadd.f32 %v1597, %v1746
  %1776 = vmatprep.subr.mxu0 %v784
  %1777 = vmatpush1.msra.mxu0 %v783
  %1778 = vmatprep.subr.mxu0 %v786
  %1779 = vmatpush1.msra.mxu0 %v785
  %1780 = vmatprep.subr.mxu0 %v788
  %1781 = vmatpush1.msra.mxu0 %v787
  %1782 = vmatprep.subr.mxu0 %v790
  %1783 = vmatpush1.msra.mxu0 %v789
  %1784 = vmatprep.subr.mxu0 %v792
  %1785 = vmatpush1.msra.mxu0 %v791
  %1786 = vmatprep.subr.mxu0 %v794
  %1787 = vmatpush1.msra.mxu0 %v793
  %1788 = vmatprep.subr.mxu0 %v796
  %1789 = vmatpush1.msra.mxu0 %v795
  %1790 = vmatprep.subr.mxu0 %v798
  %1791 = vmatpush1.msra.mxu0 %v797
  %1792 = vmatprep.subr.mxu0 %v800
  %1793 = vmatpush1.msra.mxu0 %v799
  %1794 = vmatprep.subr.mxu0 %v802
  %1795 = vmatpush1.msra.mxu0 %v801
  %1796 = vmatprep.subr.mxu0 %v804
  %1797 = vmatpush1.msra.mxu0 %v803
  %1798 = vmatprep.subr.mxu0 %v806
  %1799 = vmatpush1.msra.mxu0 %v805
  %1800 = vmatprep.subr.mxu0 0.0
  %1801 = vmatpush1.msra.mxu0 0.0
  %1802 = vmatprep.subr.mxu0 0.0
  %1803 = vmatpush1.msra.mxu0 0.0
  %1804 = vmatprep.subr.mxu0 0.0
  %1805 = vmatpush1.msra.mxu0 0.0
  %1806 = vmatprep.subr.mxu0 0.0
  %1807 = vmatpush1.msra.mxu0 0.0
  %1808 = vmatprep.subr.mxu0 0.0
  %1809 = vmatpush1.msra.mxu0 0.0
  %1810 = vmatprep.subr.mxu0 0.0
  %1811 = vmatpush1.msra.mxu0 0.0
  %1812 = vmatprep.subr.mxu0 0.0
  %1813 = vmatpush1.msra.mxu0 0.0
  %1814 = vmatprep.subr.mxu0 0.0
  %1815 = vmatpush1.msra.mxu0 0.0
  %1816 = vmatprep.subr.mxu0 0.0
  %1817 = vmatpush1.msra.mxu0 0.0
  %1818 = vmatprep.subr.mxu0 0.0
  %1819 = vmatpush1.msra.mxu0 0.0
  %1820 = vmatprep.subr.mxu0 0.0
  %1821 = vmatpush1.msra.mxu0 0.0
  %1822 = vmatprep.subr.mxu0 0.0
  %1823 = vmatpush1.msra.mxu0 0.0
  %1824 = vmatprep.subr.mxu0 0.0
  %1825 = vmatpush1.msra.mxu0 0.0
  %1826 = vmatprep.subr.mxu0 0.0
  %1827 = vmatpush1.msra.mxu0 0.0
  %1828 = vmatprep.subr.mxu0 0.0
  %1829 = vmatpush1.msra.mxu0 0.0
  %1830 = vmatprep.subr.mxu0 0.0
  %1831 = vmatpush1.msra.mxu0 0.0
  %1832 = vmatprep.subr.mxu0 0.0
  %1833 = vmatpush1.msra.mxu0 0.0
  %1834 = vmatprep.subr.mxu0 0.0
  %1835 = vmatpush1.msra.mxu0 0.0
  %1836 = vmatprep.subr.mxu0 0.0
  %1837 = vmatpush1.msra.mxu0 0.0
  %1838 = vmatprep.subr.mxu0 0.0
  %1839 = vmatpush1.msra.mxu0 0.0
  %1840 = vmatprep.mubr.f32.mxu0 0.0
  %1841 = vmatmul.mubr.f32.gmra.mrb[0].mxu0 %v354
  %v1842 = vpop.f32.mrb[0].mxu0
  %v1843 = vadd.f32 0.0, %v1842
  %v1844 = vpop.f32.mrb[0].mxu0
  %v1845 = vadd.f32 0.0, %v1844
  %1846 = vmatprep.mubr.f32.mxu0 0.0
  %1847 = vmatmul.mubr.f32.gmra.mrb[0].mxu0 %v357
  %v1848 = vpop.f32.mrb[0].mxu0
  %v1849 = vadd.f32 0.0, %v1848
  %v1850 = vpop.f32.mrb[0].mxu0
  %v1851 = vadd.f32 0.0, %v1850
  %1852 = vmatprep.mubr.f32.mxu0 0.0
  %1853 = vmatmul.mubr.f32.gmra.mrb[0].mxu0 %v360
  %v1854 = vpop.f32.mrb[0].mxu0
  %v1855 = vadd.f32 0.0, %v1854
  %v1856 = vpop.f32.mrb[0].mxu0
  %v1857 = vadd.f32 0.0, %v1856
  %1858 = vmatprep.mubr.f32.mxu0 0.0
  %1859 = vmatmul.mubr.f32.gmra.mrb[0].mxu0 %v363
  %v1860 = vpop.f32.mrb[0].mxu0
  %v1861 = vadd.f32 0.0, %v1860
  %v1862 = vpop.f32.mrb[0].mxu0
  %v1863 = vadd.f32 0.0, %v1862
  %1864 = vmatprep.mubr.f32.mxu0 0.0
  %1865 = vmatmul.mubr.f32.gmra.mrb[0].mxu0 %v366
  %v1866 = vpop.f32.mrb[0].mxu0
  %v1867 = vadd.f32 0.0, %v1866
  %v1868 = vpop.f32.mrb[0].mxu0
  %v1869 = vadd.f32 0.0, %v1868
  %1870 = vmatprep.mubr.f32.mxu0 0.0
  %1871 = vmatmul.mubr.f32.gmra.mrb[0].mxu0 %v369
  %v1872 = vpop.f32.mrb[0].mxu0
  %v1873 = vadd.f32 0.0, %v1872
  %v1874 = vpop.f32.mrb[0].mxu0
  %v1875 = vadd.f32 0.0, %v1874
  %1876 = vmatprep.mubr.f32.mxu0 0.0
  %1877 = vmatmul.mubr.f32.gmra.mrb[0].mxu0 %v372
  %v1878 = vpop.f32.mrb[0].mxu0
  %v1879 = vadd.f32 0.0, %v1878
  %v1880 = vpop.f32.mrb[0].mxu0
  %v1881 = vadd.f32 0.0, %v1880
  %1882 = vmatprep.mubr.f32.mxu0 0.0
  %1883 = vmatmul.mubr.f32.gmra.mrb[0].mxu0 %v375
  %v1884 = vpop.f32.mrb[0].mxu0
  %v1885 = vadd.f32 0.0, %v1884
  %v1886 = vpop.f32.mrb[0].mxu0
  %v1887 = vadd.f32 0.0, %v1886
  %1888 = vmatprep.mubr.f32.mxu0 0.0
  %1889 = vmatmul.mubr.f32.gmra.mrb[0].mxu0 %v378
  %v1890 = vpop.f32.mrb[0].mxu0
  %v1891 = vadd.f32 0.0, %v1890
  %v1892 = vpop.f32.mrb[0].mxu0
  %v1893 = vadd.f32 0.0, %v1892
  %1894 = vmatprep.mubr.f32.mxu0 0.0
  %1895 = vmatmul.mubr.f32.gmra.mrb[0].mxu0 %v381
  %v1896 = vpop.f32.mrb[0].mxu0
  %v1897 = vadd.f32 0.0, %v1896
  %v1898 = vpop.f32.mrb[0].mxu0
  %v1899 = vadd.f32 0.0, %v1898
  %1900 = vmatprep.mubr.f32.mxu0 0.0
  %1901 = vmatmul.mubr.f32.gmra.mrb[0].mxu0 %v384
  %v1902 = vpop.f32.mrb[0].mxu0
  %v1903 = vadd.f32 0.0, %v1902
  %v1904 = vpop.f32.mrb[0].mxu0
  %v1905 = vadd.f32 0.0, %v1904
  %1906 = vmatprep.mubr.f32.mxu0 0.0
  %1907 = vmatmul.mubr.f32.gmra.mrb[0].mxu0 %v387
  %v1908 = vpop.f32.mrb[0].mxu0
  %v1909 = vadd.f32 0.0, %v1908
  %v1910 = vpop.f32.mrb[0].mxu0
  %v1911 = vadd.f32 0.0, %v1910
  %1912 = vmatprep.mubr.f32.mxu0 0.0
  %1913 = vmatmul.mubr.f32.gmra.mrb[0].mxu0 %v1052
  %v1914 = vpop.f32.mrb[0].mxu0
  %v1915 = vadd.f32 0.0, %v1914
  %v1916 = vpop.f32.mrb[0].mxu0
  %v1917 = vadd.f32 0.0, %v1916
  %1918 = vmatprep.mubr.f32.mxu0 0.0
  %1919 = vmatmul.mubr.f32.gmra.mrb[0].mxu0 %v1055
  %v1920 = vpop.f32.mrb[0].mxu0
  %v1921 = vadd.f32 0.0, %v1920
  %v1922 = vpop.f32.mrb[0].mxu0
  %v1923 = vadd.f32 0.0, %v1922
  %1924 = vdwg.mxu0
  %v1925 = vadd.f32 %v1748, %v1843
  %v1926 = vadd.f32 %v1749, %v1845
  %v1927 = vadd.f32 %v1750, %v1849
  %v1928 = vadd.f32 %v1751, %v1851
  %v1929 = vadd.f32 %v1752, %v1855
  %v1930 = vadd.f32 %v1753, %v1857
  %v1931 = vadd.f32 %v1754, %v1861
  %v1932 = vadd.f32 %v1755, %v1863
  %v1933 = vadd.f32 %v1756, %v1867
  %v1934 = vadd.f32 %v1757, %v1869
  %v1935 = vadd.f32 %v1758, %v1873
  %v1936 = vadd.f32 %v1759, %v1875
  %v1937 = vadd.f32 %v1760, %v1879
  %v1938 = vadd.f32 %v1761, %v1881
  %v1939 = vadd.f32 %v1762, %v1885
  %v1940 = vadd.f32 %v1763, %v1887
  %v1941 = vadd.f32 %v1764, %v1891
  %v1942 = vadd.f32 %v1765, %v1893
  %v1943 = vadd.f32 %v1766, %v1897
  %v1944 = vadd.f32 %v1767, %v1899
  %v1945 = vadd.f32 %v1768, %v1903
  %v1946 = vadd.f32 %v1769, %v1905
  %v1947 = vadd.f32 %v1770, %v1909
  %v1948 = vadd.f32 %v1771, %v1911
  %v1949 = vadd.f32 %v1772, %v1915
  %v1950 = vadd.f32 %v1773, %v1917
  %v1951 = vadd.f32 %v1774, %v1921
  %v1952 = vadd.f32 %v1775, %v1923
  %v1954 = vsel %vm155, %v69, 0
  %v1957 = vsel %vm155, %v70, 0
  %1959 = vmatprep.subr.mxu0 %v1028
  %1960 = vmatpush1.msra.mxu0 %v1027
  %1961 = vmatprep.subr.mxu0 %v1030
  %1962 = vmatpush1.msra.mxu0 %v1029
  %1963 = vmatprep.subr.mxu0 %v1032
  %1964 = vmatpush1.msra.mxu0 %v1031
  %1965 = vmatprep.subr.mxu0 %v1034
  %1966 = vmatpush1.msra.mxu0 %v1033
  %1967 = vmatprep.subr.mxu0 %v1036
  %1968 = vmatpush1.msra.mxu0 %v1035
  %1969 = vmatprep.subr.mxu0 %v1038
  %1970 = vmatpush1.msra.mxu0 %v1037
  %1971 = vmatprep.subr.mxu0 %v1040
  %1972 = vmatpush1.msra.mxu0 %v1039
  %1973 = vmatprep.subr.mxu0 %v1042
  %1974 = vmatpush1.msra.mxu0 %v1041
  %1975 = vmatprep.subr.mxu0 %v1044
  %1976 = vmatpush1.msra.mxu0 %v1043
  %1977 = vmatprep.subr.mxu0 %v1046
  %1978 = vmatpush1.msra.mxu0 %v1045
  %1979 = vmatprep.subr.mxu0 %v1048
  %1980 = vmatpush1.msra.mxu0 %v1047
  %1981 = vmatprep.subr.mxu0 %v1050
  %1982 = vmatpush1.msra.mxu0 %v1049
  %1983 = vmatprep.subr.mxu0 0.0
  %1984 = vmatpush1.msra.mxu0 0.0
  %1985 = vmatprep.subr.mxu0 0.0
  %1986 = vmatpush1.msra.mxu0 0.0
  %1987 = vmatprep.subr.mxu0 0.0
  %1988 = vmatpush1.msra.mxu0 0.0
  %1989 = vmatprep.subr.mxu0 0.0
  %1990 = vmatpush1.msra.mxu0 0.0
  %1991 = vmatprep.subr.mxu0 0.0
  %1992 = vmatpush1.msra.mxu0 0.0
  %1993 = vmatprep.subr.mxu0 0.0
  %1994 = vmatpush1.msra.mxu0 0.0
  %1995 = vmatprep.subr.mxu0 0.0
  %1996 = vmatpush1.msra.mxu0 0.0
  %1997 = vmatprep.subr.mxu0 0.0
  %1998 = vmatpush1.msra.mxu0 0.0
  %1999 = vmatprep.subr.mxu0 0.0
  %2000 = vmatpush1.msra.mxu0 0.0
  %2001 = vmatprep.subr.mxu0 0.0
  %2002 = vmatpush1.msra.mxu0 0.0
  %2003 = vmatprep.subr.mxu0 0.0
  %2004 = vmatpush1.msra.mxu0 0.0
  %2005 = vmatprep.subr.mxu0 0.0
  %2006 = vmatpush1.msra.mxu0 0.0
  %2007 = vmatprep.subr.mxu0 0.0
  %2008 = vmatpush1.msra.mxu0 0.0
  %2009 = vmatprep.subr.mxu0 0.0
  %2010 = vmatpush1.msra.mxu0 0.0
  %2011 = vmatprep.subr.mxu0 0.0
  %2012 = vmatpush1.msra.mxu0 0.0
  %2013 = vmatprep.subr.mxu0 0.0
  %2014 = vmatpush1.msra.mxu0 0.0
  %2015 = vmatprep.subr.mxu0 0.0
  %2016 = vmatpush1.msra.mxu0 0.0
  %2017 = vmatprep.subr.mxu0 0.0
  %2018 = vmatpush1.msra.mxu0 0.0
  %2019 = vmatprep.subr.mxu0 0.0
  %2020 = vmatpush1.msra.mxu0 0.0
  %2021 = vmatprep.subr.mxu0 0.0
  %2022 = vmatpush1.msra.mxu0 0.0
  %2023 = vmatprep.mubr.f32.mxu0 0.0
  %2024 = vmatmul.mubr.f32.gmra.mrb[0].mxu0 %v163
  %v2025 = vpop.f32.mrb[0].mxu0
  %v2026 = vadd.f32 0.0, %v2025
  %v2027 = vpop.f32.mrb[0].mxu0
  %v2028 = vadd.f32 0.0, %v2027
  %2029 = vmatprep.mubr.f32.mxu0 0.0
  %2030 = vmatmul.mubr.f32.gmra.mrb[0].mxu0 %v166
  %v2031 = vpop.f32.mrb[0].mxu0
  %v2032 = vadd.f32 0.0, %v2031
  %v2033 = vpop.f32.mrb[0].mxu0
  %v2034 = vadd.f32 0.0, %v2033
  %2035 = vmatprep.mubr.f32.mxu0 0.0
  %2036 = vmatmul.mubr.f32.gmra.mrb[0].mxu0 %v169
  %v2037 = vpop.f32.mrb[0].mxu0
  %v2038 = vadd.f32 0.0, %v2037
  %v2039 = vpop.f32.mrb[0].mxu0
  %v2040 = vadd.f32 0.0, %v2039
  %2041 = vmatprep.mubr.f32.mxu0 0.0
  %2042 = vmatmul.mubr.f32.gmra.mrb[0].mxu0 %v172
  %v2043 = vpop.f32.mrb[0].mxu0
  %v2044 = vadd.f32 0.0, %v2043
  %v2045 = vpop.f32.mrb[0].mxu0
  %v2046 = vadd.f32 0.0, %v2045
  %2047 = vmatprep.mubr.f32.mxu0 0.0
  %2048 = vmatmul.mubr.f32.gmra.mrb[0].mxu0 %v175
  %v2049 = vpop.f32.mrb[0].mxu0
  %v2050 = vadd.f32 0.0, %v2049
  %v2051 = vpop.f32.mrb[0].mxu0
  %v2052 = vadd.f32 0.0, %v2051
  %2053 = vmatprep.mubr.f32.mxu0 0.0
  %2054 = vmatmul.mubr.f32.gmra.mrb[0].mxu0 %v178
  %v2055 = vpop.f32.mrb[0].mxu0
  %v2056 = vadd.f32 0.0, %v2055
  %v2057 = vpop.f32.mrb[0].mxu0
  %v2058 = vadd.f32 0.0, %v2057
  %2059 = vmatprep.mubr.f32.mxu0 0.0
  %2060 = vmatmul.mubr.f32.gmra.mrb[0].mxu0 %v181
  %v2061 = vpop.f32.mrb[0].mxu0
  %v2062 = vadd.f32 0.0, %v2061
  %v2063 = vpop.f32.mrb[0].mxu0
  %v2064 = vadd.f32 0.0, %v2063
  %2065 = vmatprep.mubr.f32.mxu0 0.0
  %2066 = vmatmul.mubr.f32.gmra.mrb[0].mxu0 %v184
  %v2067 = vpop.f32.mrb[0].mxu0
  %v2068 = vadd.f32 0.0, %v2067
  %v2069 = vpop.f32.mrb[0].mxu0
  %v2070 = vadd.f32 0.0, %v2069
  %2071 = vmatprep.mubr.f32.mxu0 0.0
  %2072 = vmatmul.mubr.f32.gmra.mrb[0].mxu0 %v187
  %v2073 = vpop.f32.mrb[0].mxu0
  %v2074 = vadd.f32 0.0, %v2073
  %v2075 = vpop.f32.mrb[0].mxu0
  %v2076 = vadd.f32 0.0, %v2075
  %2077 = vmatprep.mubr.f32.mxu0 0.0
  %2078 = vmatmul.mubr.f32.gmra.mrb[0].mxu0 %v190
  %v2079 = vpop.f32.mrb[0].mxu0
  %v2080 = vadd.f32 0.0, %v2079
  %v2081 = vpop.f32.mrb[0].mxu0
  %v2082 = vadd.f32 0.0, %v2081
  %2083 = vmatprep.mubr.f32.mxu0 0.0
  %2084 = vmatmul.mubr.f32.gmra.mrb[0].mxu0 %v193
  %v2085 = vpop.f32.mrb[0].mxu0
  %v2086 = vadd.f32 0.0, %v2085
  %v2087 = vpop.f32.mrb[0].mxu0
  %v2088 = vadd.f32 0.0, %v2087
  %2089 = vmatprep.mubr.f32.mxu0 0.0
  %2090 = vmatmul.mubr.f32.gmra.mrb[0].mxu0 %v196
  %v2091 = vpop.f32.mrb[0].mxu0
  %v2092 = vadd.f32 0.0, %v2091
  %v2093 = vpop.f32.mrb[0].mxu0
  %v2094 = vadd.f32 0.0, %v2093
  %2095 = vmatprep.mubr.f32.mxu0 0.0
  %2096 = vmatmul.mubr.f32.gmra.mrb[0].mxu0 %v1954
  %v2097 = vpop.f32.mrb[0].mxu0
  %v2098 = vadd.f32 0.0, %v2097
  %v2099 = vpop.f32.mrb[0].mxu0
  %v2100 = vadd.f32 0.0, %v2099
  %2101 = vmatprep.mubr.f32.mxu0 0.0
  %2102 = vmatmul.mubr.f32.gmra.mrb[0].mxu0 %v1957
  %v2103 = vpop.f32.mrb[0].mxu0
  %v2104 = vadd.f32 0.0, %v2103
  %v2105 = vpop.f32.mrb[0].mxu0
  %v2106 = vadd.f32 0.0, %v2105
  %2107 = vdwg.mxu0
  %v2108 = vadd.f32 %v1925, %v2026
  %v2109 = vadd.f32 %v1926, %v2028
  %v2110 = vadd.f32 %v1927, %v2032
  %v2111 = vadd.f32 %v1928, %v2034
  %v2112 = vadd.f32 %v1929, %v2038
  %v2113 = vadd.f32 %v1930, %v2040
  %v2114 = vadd.f32 %v1931, %v2044
  %v2115 = vadd.f32 %v1932, %v2046
  %v2116 = vadd.f32 %v1933, %v2050
  %v2117 = vadd.f32 %v1934, %v2052
  %v2118 = vadd.f32 %v1935, %v2056
  %v2119 = vadd.f32 %v1936, %v2058
  %v2120 = vadd.f32 %v1937, %v2062
  %v2121 = vadd.f32 %v1938, %v2064
  %v2122 = vadd.f32 %v1939, %v2068
  %v2123 = vadd.f32 %v1940, %v2070
  %v2124 = vadd.f32 %v1941, %v2074
  %v2125 = vadd.f32 %v1942, %v2076
  %v2126 = vadd.f32 %v1943, %v2080
  %v2127 = vadd.f32 %v1944, %v2082
  %v2128 = vadd.f32 %v1945, %v2086
  %v2129 = vadd.f32 %v1946, %v2088
  %v2130 = vadd.f32 %v1947, %v2092
  %v2131 = vadd.f32 %v1948, %v2094
  %v2132 = vadd.f32 %v1949, %v2098
  %v2133 = vadd.f32 %v1950, %v2100
  %v2134 = vadd.f32 %v1951, %v2104
  %v2135 = vadd.f32 %v1952, %v2106
  %v2136 = vadd.f32 %v2108, %v1238
  %v2137 = vadd.f32 %v2109, %v1242
  %v2138 = vadd.f32 %v2110, %v1238
  %v2139 = vadd.f32 %v2111, %v1242
  %v2140 = vadd.f32 %v2112, %v1238
  %v2141 = vadd.f32 %v2113, %v1242
  %v2142 = vadd.f32 %v2114, %v1238
  %v2143 = vadd.f32 %v2115, %v1242
  %v2144 = vadd.f32 %v2116, %v1238
  %v2145 = vadd.f32 %v2117, %v1242
  %v2146 = vadd.f32 %v2118, %v1238
  %v2147 = vadd.f32 %v2119, %v1242
  %v2148 = vadd.f32 %v2120, %v1238
  %v2149 = vadd.f32 %v2121, %v1242
  %v2150 = vadd.f32 %v2122, %v1238
  %v2151 = vadd.f32 %v2123, %v1242
  %v2152 = vadd.f32 %v2124, %v1238
  %v2153 = vadd.f32 %v2125, %v1242
  %v2154 = vadd.f32 %v2126, %v1238
  %v2155 = vadd.f32 %v2127, %v1242
  %v2156 = vadd.f32 %v2128, %v1238
  %v2157 = vadd.f32 %v2129, %v1242
  %v2158 = vadd.f32 %v2130, %v1238
  %v2159 = vadd.f32 %v2131, %v1242
  %v2160 = vadd.f32 %v2132, %v1238
  %v2161 = vadd.f32 %v2133, %v1242
  %v2162 = vadd.f32 %v2134, %v1238
  %v2163 = vadd.f32 %v2135, %v1242
  %v2164 = vmax.f32 %v2136, 0.0
  %v2165 = vmax.f32 %v2137, 0.0
  %v2166 = vmax.f32 %v2138, 0.0
  %v2167 = vmax.f32 %v2139, 0.0
  %v2168 = vmax.f32 %v2140, 0.0
  %v2169 = vmax.f32 %v2141, 0.0
  %v2170 = vmax.f32 %v2142, 0.0
  %v2171 = vmax.f32 %v2143, 0.0
  %v2172 = vmax.f32 %v2144, 0.0
  %v2173 = vmax.f32 %v2145, 0.0
  %v2174 = vmax.f32 %v2146, 0.0
  %v2175 = vmax.f32 %v2147, 0.0
  %v2176 = vmax.f32 %v2148, 0.0
  %v2177 = vmax.f32 %v2149, 0.0
  %v2178 = vmax.f32 %v2150, 0.0
  %v2179 = vmax.f32 %v2151, 0.0
  %v2180 = vmax.f32 %v2152, 0.0
  %v2181 = vmax.f32 %v2153, 0.0
  %v2182 = vmax.f32 %v2154, 0.0
  %v2183 = vmax.f32 %v2155, 0.0
  %v2184 = vmax.f32 %v2156, 0.0
  %v2185 = vmax.f32 %v2157, 0.0
  %v2186 = vmax.f32 %v2158, 0.0
  %v2187 = vmax.f32 %v2159, 0.0
  %v2188 = vmax.f32 %v2160, 0.0
  %v2189 = vmax.f32 %v2161, 0.0
  %v2190 = vmax.f32 %v2162, 0.0
  %v2191 = vmax.f32 %v2163, 0.0
  %2192 = vmatprep.subr.mxu0 %v132
  %2193 = vmatpush1.msra.mxu0 %v131
  %2194 = vmatprep.subr.mxu0 %v134
  %2195 = vmatpush1.msra.mxu0 %v133
  %2196 = vmatprep.subr.mxu0 %v136
  %2197 = vmatpush1.msra.mxu0 %v135
  %2198 = vmatprep.subr.mxu0 %v138
  %2199 = vmatpush1.msra.mxu0 %v137
  %2200 = vmatprep.subr.mxu0 %v140
  %2201 = vmatpush1.msra.mxu0 %v139
  %2202 = vmatprep.subr.mxu0 %v142
  %2203 = vmatpush1.msra.mxu0 %v141
  %2204 = vmatprep.subr.mxu0 %v144
  %2205 = vmatpush1.msra.mxu0 %v143
  %2206 = vmatprep.subr.mxu0 %v146
  %2207 = vmatpush1.msra.mxu0 %v145
  %2208 = vmatprep.subr.mxu0 %v148
  %2209 = vmatpush1.msra.mxu0 %v147
  %2210 = vmatprep.subr.mxu0 %v150
  %2211 = vmatpush1.msra.mxu0 %v149
  %2212 = vmatprep.subr.mxu0 %v152
  %2213 = vmatpush1.msra.mxu0 %v151
  %2214 = vmatprep.subr.mxu0 %v154
  %2215 = vmatpush1.msra.mxu0 %v153
  %2216 = vmatprep.subr.mxu0 0.0
  %2217 = vmatpush1.msra.mxu0 0.0
  %2218 = vmatprep.subr.mxu0 0.0
  %2219 = vmatpush1.msra.mxu0 0.0
  %2220 = vmatprep.subr.mxu0 0.0
  %2221 = vmatpush1.msra.mxu0 0.0
  %2222 = vmatprep.subr.mxu0 0.0
  %2223 = vmatpush1.msra.mxu0 0.0
  %2224 = vmatprep.subr.mxu0 0.0
  %2225 = vmatpush1.msra.mxu0 0.0
  %2226 = vmatprep.subr.mxu0 0.0
  %2227 = vmatpush1.msra.mxu0 0.0
  %2228 = vmatprep.subr.mxu0 0.0
  %2229 = vmatpush1.msra.mxu0 0.0
  %2230 = vmatprep.subr.mxu0 0.0
  %2231 = vmatpush1.msra.mxu0 0.0
  %2232 = vmatprep.subr.mxu0 0.0
  %2233 = vmatpush1.msra.mxu0 0.0
  %2234 = vmatprep.subr.mxu0 0.0
  %2235 = vmatpush1.msra.mxu0 0.0
  %2236 = vmatprep.subr.mxu0 0.0
  %2237 = vmatpush1.msra.mxu0 0.0
  %2238 = vmatprep.subr.mxu0 0.0
  %2239 = vmatpush1.msra.mxu0 0.0
  %2240 = vmatprep.subr.mxu0 0.0
  %2241 = vmatpush1.msra.mxu0 0.0
  %2242 = vmatprep.subr.mxu0 0.0
  %2243 = vmatpush1.msra.mxu0 0.0
  %2244 = vmatprep.subr.mxu0 0.0
  %2245 = vmatpush1.msra.mxu0 0.0
  %2246 = vmatprep.subr.mxu0 0.0
  %2247 = vmatpush1.msra.mxu0 0.0
  %2248 = vmatprep.subr.mxu0 0.0
  %2249 = vmatpush1.msra.mxu0 0.0
  %2250 = vmatprep.subr.mxu0 0.0
  %2251 = vmatpush1.msra.mxu0 0.0
  %2252 = vmatprep.subr.mxu0 0.0
  %2253 = vmatpush1.msra.mxu0 0.0
  %2254 = vmatprep.subr.mxu0 0.0
  %2255 = vmatpush1.msra.mxu0 0.0
  %2256 = vmatprep.mubr.f32.mxu0 0.0
  %2257 = vmatmul.mubr.f32.gmra.mrb[0].mxu0 %v808
  %v2258 = vpop.f32.mrb[0].mxu0
  %v2259 = vadd.f32 0.0, %v2258
  %v2260 = vpop.f32.mrb[0].mxu0
  %v2261 = vadd.f32 0.0, %v2260
  %2262 = vmatprep.mubr.f32.mxu0 0.0
  %2263 = vmatmul.mubr.f32.gmra.mrb[0].mxu0 %v811
  %v2264 = vpop.f32.mrb[0].mxu0
  %v2265 = vadd.f32 0.0, %v2264
  %v2266 = vpop.f32.mrb[0].mxu0
  %v2267 = vadd.f32 0.0, %v2266
  %2268 = vmatprep.mubr.f32.mxu0 0.0
  %2269 = vmatmul.mubr.f32.gmra.mrb[0].mxu0 %v814
  %v2270 = vpop.f32.mrb[0].mxu0
  %v2271 = vadd.f32 0.0, %v2270
  %v2272 = vpop.f32.mrb[0].mxu0
  %v2273 = vadd.f32 0.0, %v2272
  %2274 = vmatprep.mubr.f32.mxu0 0.0
  %2275 = vmatmul.mubr.f32.gmra.mrb[0].mxu0 %v817
  %v2276 = vpop.f32.mrb[0].mxu0
  %v2277 = vadd.f32 0.0, %v2276
  %v2278 = vpop.f32.mrb[0].mxu0
  %v2279 = vadd.f32 0.0, %v2278
  %2280 = vmatprep.mubr.f32.mxu0 0.0
  %2281 = vmatmul.mubr.f32.gmra.mrb[0].mxu0 %v820
  %v2282 = vpop.f32.mrb[0].mxu0
  %v2283 = vadd.f32 0.0, %v2282
  %v2284 = vpop.f32.mrb[0].mxu0
  %v2285 = vadd.f32 0.0, %v2284
  %2286 = vmatprep.mubr.f32.mxu0 0.0
  %2287 = vmatmul.mubr.f32.gmra.mrb[0].mxu0 %v823
  %v2288 = vpop.f32.mrb[0].mxu0
  %v2289 = vadd.f32 0.0, %v2288
  %v2290 = vpop.f32.mrb[0].mxu0
  %v2291 = vadd.f32 0.0, %v2290
  %2292 = vmatprep.mubr.f32.mxu0 0.0
  %2293 = vmatmul.mubr.f32.gmra.mrb[0].mxu0 %v826
  %v2294 = vpop.f32.mrb[0].mxu0
  %v2295 = vadd.f32 0.0, %v2294
  %v2296 = vpop.f32.mrb[0].mxu0
  %v2297 = vadd.f32 0.0, %v2296
  %2298 = vmatprep.mubr.f32.mxu0 0.0
  %2299 = vmatmul.mubr.f32.gmra.mrb[0].mxu0 %v829
  %v2300 = vpop.f32.mrb[0].mxu0
  %v2301 = vadd.f32 0.0, %v2300
  %v2302 = vpop.f32.mrb[0].mxu0
  %v2303 = vadd.f32 0.0, %v2302
  %2304 = vmatprep.mubr.f32.mxu0 0.0
  %2305 = vmatmul.mubr.f32.gmra.mrb[0].mxu0 %v832
  %v2306 = vpop.f32.mrb[0].mxu0
  %v2307 = vadd.f32 0.0, %v2306
  %v2308 = vpop.f32.mrb[0].mxu0
  %v2309 = vadd.f32 0.0, %v2308
  %2310 = vmatprep.mubr.f32.mxu0 0.0
  %2311 = vmatmul.mubr.f32.gmra.mrb[0].mxu0 %v835
  %v2312 = vpop.f32.mrb[0].mxu0
  %v2313 = vadd.f32 0.0, %v2312
  %v2314 = vpop.f32.mrb[0].mxu0
  %v2315 = vadd.f32 0.0, %v2314
  %2316 = vmatprep.mubr.f32.mxu0 0.0
  %2317 = vmatmul.mubr.f32.gmra.mrb[0].mxu0 %v838
  %v2318 = vpop.f32.mrb[0].mxu0
  %v2319 = vadd.f32 0.0, %v2318
  %v2320 = vpop.f32.mrb[0].mxu0
  %v2321 = vadd.f32 0.0, %v2320
  %2322 = vmatprep.mubr.f32.mxu0 0.0
  %2323 = vmatmul.mubr.f32.gmra.mrb[0].mxu0 %v841
  %v2324 = vpop.f32.mrb[0].mxu0
  %v2325 = vadd.f32 0.0, %v2324
  %v2326 = vpop.f32.mrb[0].mxu0
  %v2327 = vadd.f32 0.0, %v2326
  %2328 = vmatprep.mubr.f32.mxu0 0.0
  %2329 = vmatmul.mubr.f32.gmra.mrb[0].mxu0 %v844
  %v2330 = vpop.f32.mrb[0].mxu0
  %v2331 = vadd.f32 0.0, %v2330
  %v2332 = vpop.f32.mrb[0].mxu0
  %v2333 = vadd.f32 0.0, %v2332
  %2334 = vmatprep.mubr.f32.mxu0 0.0
  %2335 = vmatmul.mubr.f32.gmra.mrb[0].mxu0 %v847
  %v2336 = vpop.f32.mrb[0].mxu0
  %v2337 = vadd.f32 0.0, %v2336
  %v2338 = vpop.f32.mrb[0].mxu0
  %v2339 = vadd.f32 0.0, %v2338
  %2340 = vdwg.mxu0
  %2341 = vmatprep.subr.mxu0 %v107
  %2342 = vmatpush1.msra.mxu0 %v106
  %2343 = vmatprep.subr.mxu0 %v109
  %2344 = vmatpush1.msra.mxu0 %v108
  %2345 = vmatprep.subr.mxu0 %v111
  %2346 = vmatpush1.msra.mxu0 %v110
  %2347 = vmatprep.subr.mxu0 %v113
  %2348 = vmatpush1.msra.mxu0 %v112
  %2349 = vmatprep.subr.mxu0 %v115
  %2350 = vmatpush1.msra.mxu0 %v114
  %2351 = vmatprep.subr.mxu0 %v117
  %2352 = vmatpush1.msra.mxu0 %v116
  %2353 = vmatprep.subr.mxu0 %v119
  %2354 = vmatpush1.msra.mxu0 %v118
  %2355 = vmatprep.subr.mxu0 %v121
  %2356 = vmatpush1.msra.mxu0 %v120
  %2357 = vmatprep.subr.mxu0 %v123
  %2358 = vmatpush1.msra.mxu0 %v122
  %2359 = vmatprep.subr.mxu0 %v125
  %2360 = vmatpush1.msra.mxu0 %v124
  %2361 = vmatprep.subr.mxu0 %v127
  %2362 = vmatpush1.msra.mxu0 %v126
  %2363 = vmatprep.subr.mxu0 %v129
  %2364 = vmatpush1.msra.mxu0 %v128
  %2365 = vmatprep.subr.mxu0 0.0
  %2366 = vmatpush1.msra.mxu0 0.0
  %2367 = vmatprep.subr.mxu0 0.0
  %2368 = vmatpush1.msra.mxu0 0.0
  %2369 = vmatprep.subr.mxu0 0.0
  %2370 = vmatpush1.msra.mxu0 0.0
  %2371 = vmatprep.subr.mxu0 0.0
  %2372 = vmatpush1.msra.mxu0 0.0
  %2373 = vmatprep.subr.mxu0 0.0
  %2374 = vmatpush1.msra.mxu0 0.0
  %2375 = vmatprep.subr.mxu0 0.0
  %2376 = vmatpush1.msra.mxu0 0.0
  %2377 = vmatprep.subr.mxu0 0.0
  %2378 = vmatpush1.msra.mxu0 0.0
  %2379 = vmatprep.subr.mxu0 0.0
  %2380 = vmatpush1.msra.mxu0 0.0
  %2381 = vmatprep.subr.mxu0 0.0
  %2382 = vmatpush1.msra.mxu0 0.0
  %2383 = vmatprep.subr.mxu0 0.0
  %2384 = vmatpush1.msra.mxu0 0.0
  %2385 = vmatprep.subr.mxu0 0.0
  %2386 = vmatpush1.msra.mxu0 0.0
  %2387 = vmatprep.subr.mxu0 0.0
  %2388 = vmatpush1.msra.mxu0 0.0
  %2389 = vmatprep.subr.mxu0 0.0
  %2390 = vmatpush1.msra.mxu0 0.0
  %2391 = vmatprep.subr.mxu0 0.0
  %2392 = vmatpush1.msra.mxu0 0.0
  %2393 = vmatprep.subr.mxu0 0.0
  %2394 = vmatpush1.msra.mxu0 0.0
  %2395 = vmatprep.subr.mxu0 0.0
  %2396 = vmatpush1.msra.mxu0 0.0
  %2397 = vmatprep.subr.mxu0 0.0
  %2398 = vmatpush1.msra.mxu0 0.0
  %2399 = vmatprep.subr.mxu0 0.0
  %2400 = vmatpush1.msra.mxu0 0.0
  %2401 = vmatprep.subr.mxu0 0.0
  %2402 = vmatpush1.msra.mxu0 0.0
  %2403 = vmatprep.subr.mxu0 0.0
  %2404 = vmatpush1.msra.mxu0 0.0
  %2405 = vmatprep.mubr.f32.mxu0 0.0
  %2406 = vmatmul.mubr.f32.gmra.mrb[0].mxu0 %v564
  %v2407 = vpop.f32.mrb[0].mxu0
  %v2408 = vadd.f32 %v2259, %v2407
  %v2409 = vpop.f32.mrb[0].mxu0
  %v2410 = vadd.f32 %v2261, %v2409
  %2411 = vmatprep.mubr.f32.mxu0 0.0
  %2412 = vmatmul.mubr.f32.gmra.mrb[0].mxu0 %v567
  %v2413 = vpop.f32.mrb[0].mxu0
  %v2414 = vadd.f32 %v2265, %v2413
  %v2415 = vpop.f32.mrb[0].mxu0
  %v2416 = vadd.f32 %v2267, %v2415
  %2417 = vmatprep.mubr.f32.mxu0 0.0
  %2418 = vmatmul.mubr.f32.gmra.mrb[0].mxu0 %v570
  %v2419 = vpop.f32.mrb[0].mxu0
  %v2420 = vadd.f32 %v2271, %v2419
  %v2421 = vpop.f32.mrb[0].mxu0
  %v2422 = vadd.f32 %v2273, %v2421
  %2423 = vmatprep.mubr.f32.mxu0 0.0
  %2424 = vmatmul.mubr.f32.gmra.mrb[0].mxu0 %v573
  %v2425 = vpop.f32.mrb[0].mxu0
  %v2426 = vadd.f32 %v2277, %v2425
  %v2427 = vpop.f32.mrb[0].mxu0
  %v2428 = vadd.f32 %v2279, %v2427
  %2429 = vmatprep.mubr.f32.mxu0 0.0
  %2430 = vmatmul.mubr.f32.gmra.mrb[0].mxu0 %v576
  %v2431 = vpop.f32.mrb[0].mxu0
  %v2432 = vadd.f32 %v2283, %v2431
  %v2433 = vpop.f32.mrb[0].mxu0
  %v2434 = vadd.f32 %v2285, %v2433
  %2435 = vmatprep.mubr.f32.mxu0 0.0
  %2436 = vmatmul.mubr.f32.gmra.mrb[0].mxu0 %v579
  %v2437 = vpop.f32.mrb[0].mxu0
  %v2438 = vadd.f32 %v2289, %v2437
  %v2439 = vpop.f32.mrb[0].mxu0
  %v2440 = vadd.f32 %v2291, %v2439
  %2441 = vmatprep.mubr.f32.mxu0 0.0
  %2442 = vmatmul.mubr.f32.gmra.mrb[0].mxu0 %v582
  %v2443 = vpop.f32.mrb[0].mxu0
  %v2444 = vadd.f32 %v2295, %v2443
  %v2445 = vpop.f32.mrb[0].mxu0
  %v2446 = vadd.f32 %v2297, %v2445
  %2447 = vmatprep.mubr.f32.mxu0 0.0
  %2448 = vmatmul.mubr.f32.gmra.mrb[0].mxu0 %v585
  %v2449 = vpop.f32.mrb[0].mxu0
  %v2450 = vadd.f32 %v2301, %v2449
  %v2451 = vpop.f32.mrb[0].mxu0
  %v2452 = vadd.f32 %v2303, %v2451
  %2453 = vmatprep.mubr.f32.mxu0 0.0
  %2454 = vmatmul.mubr.f32.gmra.mrb[0].mxu0 %v588
  %v2455 = vpop.f32.mrb[0].mxu0
  %v2456 = vadd.f32 %v2307, %v2455
  %v2457 = vpop.f32.mrb[0].mxu0
  %v2458 = vadd.f32 %v2309, %v2457
  %2459 = vmatprep.mubr.f32.mxu0 0.0
  %2460 = vmatmul.mubr.f32.gmra.mrb[0].mxu0 %v591
  %v2461 = vpop.f32.mrb[0].mxu0
  %v2462 = vadd.f32 %v2313, %v2461
  %v2463 = vpop.f32.mrb[0].mxu0
  %v2464 = vadd.f32 %v2315, %v2463
  %2465 = vmatprep.mubr.f32.mxu0 0.0
  %2466 = vmatmul.mubr.f32.gmra.mrb[0].mxu0 %v594
  %v2467 = vpop.f32.mrb[0].mxu0
  %v2468 = vadd.f32 %v2319, %v2467
  %v2469 = vpop.f32.mrb[0].mxu0
  %v2470 = vadd.f32 %v2321, %v2469
  %2471 = vmatprep.mubr.f32.mxu0 0.0
  %2472 = vmatmul.mubr.f32.gmra.mrb[0].mxu0 %v597
  %v2473 = vpop.f32.mrb[0].mxu0
  %v2474 = vadd.f32 %v2325, %v2473
  %v2475 = vpop.f32.mrb[0].mxu0
  %v2476 = vadd.f32 %v2327, %v2475
  %2477 = vmatprep.mubr.f32.mxu0 0.0
  %2478 = vmatmul.mubr.f32.gmra.mrb[0].mxu0 %v600
  %v2479 = vpop.f32.mrb[0].mxu0
  %v2480 = vadd.f32 %v2331, %v2479
  %v2481 = vpop.f32.mrb[0].mxu0
  %v2482 = vadd.f32 %v2333, %v2481
  %2483 = vmatprep.mubr.f32.mxu0 0.0
  %2484 = vmatmul.mubr.f32.gmra.mrb[0].mxu0 %v603
  %v2485 = vpop.f32.mrb[0].mxu0
  %v2486 = vadd.f32 %v2337, %v2485
  %v2487 = vpop.f32.mrb[0].mxu0
  %v2488 = vadd.f32 %v2339, %v2487
  %2489 = vdwg.mxu0
  %2490 = vmatprep.subr.mxu0 %v540
  %2491 = vmatpush1.msra.mxu0 %v539
  %2492 = vmatprep.subr.mxu0 %v542
  %2493 = vmatpush1.msra.mxu0 %v541
  %2494 = vmatprep.subr.mxu0 %v544
  %2495 = vmatpush1.msra.mxu0 %v543
  %2496 = vmatprep.subr.mxu0 %v546
  %2497 = vmatpush1.msra.mxu0 %v545
  %2498 = vmatprep.subr.mxu0 %v548
  %2499 = vmatpush1.msra.mxu0 %v547
  %2500 = vmatprep.subr.mxu0 %v550
  %2501 = vmatpush1.msra.mxu0 %v549
  %2502 = vmatprep.subr.mxu0 %v552
  %2503 = vmatpush1.msra.mxu0 %v551
  %2504 = vmatprep.subr.mxu0 %v554
  %2505 = vmatpush1.msra.mxu0 %v553
  %2506 = vmatprep.subr.mxu0 %v556
  %2507 = vmatpush1.msra.mxu0 %v555
  %2508 = vmatprep.subr.mxu0 %v558
  %2509 = vmatpush1.msra.mxu0 %v557
  %2510 = vmatprep.subr.mxu0 %v560
  %2511 = vmatpush1.msra.mxu0 %v559
  %2512 = vmatprep.subr.mxu0 %v562
  %2513 = vmatpush1.msra.mxu0 %v561
  %2514 = vmatprep.subr.mxu0 0.0
  %2515 = vmatpush1.msra.mxu0 0.0
  %2516 = vmatprep.subr.mxu0 0.0
  %2517 = vmatpush1.msra.mxu0 0.0
  %2518 = vmatprep.subr.mxu0 0.0
  %2519 = vmatpush1.msra.mxu0 0.0
  %2520 = vmatprep.subr.mxu0 0.0
  %2521 = vmatpush1.msra.mxu0 0.0
  %2522 = vmatprep.subr.mxu0 0.0
  %2523 = vmatpush1.msra.mxu0 0.0
  %2524 = vmatprep.subr.mxu0 0.0
  %2525 = vmatpush1.msra.mxu0 0.0
  %2526 = vmatprep.subr.mxu0 0.0
  %2527 = vmatpush1.msra.mxu0 0.0
  %2528 = vmatprep.subr.mxu0 0.0
  %2529 = vmatpush1.msra.mxu0 0.0
  %2530 = vmatprep.subr.mxu0 0.0
  %2531 = vmatpush1.msra.mxu0 0.0
  %2532 = vmatprep.subr.mxu0 0.0
  %2533 = vmatpush1.msra.mxu0 0.0
  %2534 = vmatprep.subr.mxu0 0.0
  %2535 = vmatpush1.msra.mxu0 0.0
  %2536 = vmatprep.subr.mxu0 0.0
  %2537 = vmatpush1.msra.mxu0 0.0
  %2538 = vmatprep.subr.mxu0 0.0
  %2539 = vmatpush1.msra.mxu0 0.0
  %2540 = vmatprep.subr.mxu0 0.0
  %2541 = vmatpush1.msra.mxu0 0.0
  %2542 = vmatprep.subr.mxu0 0.0
  %2543 = vmatpush1.msra.mxu0 0.0
  %2544 = vmatprep.subr.mxu0 0.0
  %2545 = vmatpush1.msra.mxu0 0.0
  %2546 = vmatprep.subr.mxu0 0.0
  %2547 = vmatpush1.msra.mxu0 0.0
  %2548 = vmatprep.subr.mxu0 0.0
  %2549 = vmatpush1.msra.mxu0 0.0
  %2550 = vmatprep.subr.mxu0 0.0
  %2551 = vmatpush1.msra.mxu0 0.0
  %2552 = vmatprep.subr.mxu0 0.0
  %2553 = vmatpush1.msra.mxu0 0.0
  %2554 = vmatprep.mubr.f32.mxu0 0.0
  %2555 = vmatmul.mubr.f32.gmra.mrb[0].mxu0 %v354
  %v2556 = vpop.f32.mrb[0].mxu0
  %v2557 = vadd.f32 0.0, %v2556
  %v2558 = vpop.f32.mrb[0].mxu0
  %v2559 = vadd.f32 0.0, %v2558
  %2560 = vmatprep.mubr.f32.mxu0 0.0
  %2561 = vmatmul.mubr.f32.gmra.mrb[0].mxu0 %v357
  %v2562 = vpop.f32.mrb[0].mxu0
  %v2563 = vadd.f32 0.0, %v2562
  %v2564 = vpop.f32.mrb[0].mxu0
  %v2565 = vadd.f32 0.0, %v2564
  %2566 = vmatprep.mubr.f32.mxu0 0.0
  %2567 = vmatmul.mubr.f32.gmra.mrb[0].mxu0 %v360
  %v2568 = vpop.f32.mrb[0].mxu0
  %v2569 = vadd.f32 0.0, %v2568
  %v2570 = vpop.f32.mrb[0].mxu0
  %v2571 = vadd.f32 0.0, %v2570
  %2572 = vmatprep.mubr.f32.mxu0 0.0
  %2573 = vmatmul.mubr.f32.gmra.mrb[0].mxu0 %v363
  %v2574 = vpop.f32.mrb[0].mxu0
  %v2575 = vadd.f32 0.0, %v2574
  %v2576 = vpop.f32.mrb[0].mxu0
  %v2577 = vadd.f32 0.0, %v2576
  %2578 = vmatprep.mubr.f32.mxu0 0.0
  %2579 = vmatmul.mubr.f32.gmra.mrb[0].mxu0 %v366
  %v2580 = vpop.f32.mrb[0].mxu0
  %v2581 = vadd.f32 0.0, %v2580
  %v2582 = vpop.f32.mrb[0].mxu0
  %v2583 = vadd.f32 0.0, %v2582
  %2584 = vmatprep.mubr.f32.mxu0 0.0
  %2585 = vmatmul.mubr.f32.gmra.mrb[0].mxu0 %v369
  %v2586 = vpop.f32.mrb[0].mxu0
  %v2587 = vadd.f32 0.0, %v2586
  %v2588 = vpop.f32.mrb[0].mxu0
  %v2589 = vadd.f32 0.0, %v2588
  %2590 = vmatprep.mubr.f32.mxu0 0.0
  %2591 = vmatmul.mubr.f32.gmra.mrb[0].mxu0 %v372
  %v2592 = vpop.f32.mrb[0].mxu0
  %v2593 = vadd.f32 0.0, %v2592
  %v2594 = vpop.f32.mrb[0].mxu0
  %v2595 = vadd.f32 0.0, %v2594
  %2596 = vmatprep.mubr.f32.mxu0 0.0
  %2597 = vmatmul.mubr.f32.gmra.mrb[0].mxu0 %v375
  %v2598 = vpop.f32.mrb[0].mxu0
  %v2599 = vadd.f32 0.0, %v2598
  %v2600 = vpop.f32.mrb[0].mxu0
  %v2601 = vadd.f32 0.0, %v2600
  %2602 = vmatprep.mubr.f32.mxu0 0.0
  %2603 = vmatmul.mubr.f32.gmra.mrb[0].mxu0 %v378
  %v2604 = vpop.f32.mrb[0].mxu0
  %v2605 = vadd.f32 0.0, %v2604
  %v2606 = vpop.f32.mrb[0].mxu0
  %v2607 = vadd.f32 0.0, %v2606
  %2608 = vmatprep.mubr.f32.mxu0 0.0
  %2609 = vmatmul.mubr.f32.gmra.mrb[0].mxu0 %v381
  %v2610 = vpop.f32.mrb[0].mxu0
  %v2611 = vadd.f32 0.0, %v2610
  %v2612 = vpop.f32.mrb[0].mxu0
  %v2613 = vadd.f32 0.0, %v2612
  %2614 = vmatprep.mubr.f32.mxu0 0.0
  %2615 = vmatmul.mubr.f32.gmra.mrb[0].mxu0 %v384
  %v2616 = vpop.f32.mrb[0].mxu0
  %v2617 = vadd.f32 0.0, %v2616
  %v2618 = vpop.f32.mrb[0].mxu0
  %v2619 = vadd.f32 0.0, %v2618
  %2620 = vmatprep.mubr.f32.mxu0 0.0
  %2621 = vmatmul.mubr.f32.gmra.mrb[0].mxu0 %v387
  %v2622 = vpop.f32.mrb[0].mxu0
  %v2623 = vadd.f32 0.0, %v2622
  %v2624 = vpop.f32.mrb[0].mxu0
  %v2625 = vadd.f32 0.0, %v2624
  %2626 = vmatprep.mubr.f32.mxu0 0.0
  %2627 = vmatmul.mubr.f32.gmra.mrb[0].mxu0 %v1052
  %v2628 = vpop.f32.mrb[0].mxu0
  %v2629 = vadd.f32 0.0, %v2628
  %v2630 = vpop.f32.mrb[0].mxu0
  %v2631 = vadd.f32 0.0, %v2630
  %2632 = vmatprep.mubr.f32.mxu0 0.0
  %2633 = vmatmul.mubr.f32.gmra.mrb[0].mxu0 %v1055
  %v2634 = vpop.f32.mrb[0].mxu0
  %v2635 = vadd.f32 0.0, %v2634
  %v2636 = vpop.f32.mrb[0].mxu0
  %v2637 = vadd.f32 0.0, %v2636
  %2638 = vdwg.mxu0
  %v2639 = vadd.f32 %v2408, %v2557
  %v2640 = vadd.f32 %v2410, %v2559
  %v2641 = vadd.f32 %v2414, %v2563
  %v2642 = vadd.f32 %v2416, %v2565
  %v2643 = vadd.f32 %v2420, %v2569
  %v2644 = vadd.f32 %v2422, %v2571
  %v2645 = vadd.f32 %v2426, %v2575
  %v2646 = vadd.f32 %v2428, %v2577
  %v2647 = vadd.f32 %v2432, %v2581
  %v2648 = vadd.f32 %v2434, %v2583
  %v2649 = vadd.f32 %v2438, %v2587
  %v2650 = vadd.f32 %v2440, %v2589
  %v2651 = vadd.f32 %v2444, %v2593
  %v2652 = vadd.f32 %v2446, %v2595
  %v2653 = vadd.f32 %v2450, %v2599
  %v2654 = vadd.f32 %v2452, %v2601
  %v2655 = vadd.f32 %v2456, %v2605
  %v2656 = vadd.f32 %v2458, %v2607
  %v2657 = vadd.f32 %v2462, %v2611
  %v2658 = vadd.f32 %v2464, %v2613
  %v2659 = vadd.f32 %v2468, %v2617
  %v2660 = vadd.f32 %v2470, %v2619
  %v2661 = vadd.f32 %v2474, %v2623
  %v2662 = vadd.f32 %v2476, %v2625
  %v2663 = vadd.f32 %v2480, %v2629
  %v2664 = vadd.f32 %v2482, %v2631
  %v2665 = vadd.f32 %v2486, %v2635
  %v2666 = vadd.f32 %v2488, %v2637
  %2667 = vmatprep.subr.mxu0 %v784
  %2668 = vmatpush1.msra.mxu0 %v783
  %2669 = vmatprep.subr.mxu0 %v786
  %2670 = vmatpush1.msra.mxu0 %v785
  %2671 = vmatprep.subr.mxu0 %v788
  %2672 = vmatpush1.msra.mxu0 %v787
  %2673 = vmatprep.subr.mxu0 %v790
  %2674 = vmatpush1.msra.mxu0 %v789
  %2675 = vmatprep.subr.mxu0 %v792
  %2676 = vmatpush1.msra.mxu0 %v791
  %2677 = vmatprep.subr.mxu0 %v794
  %2678 = vmatpush1.msra.mxu0 %v793
  %2679 = vmatprep.subr.mxu0 %v796
  %2680 = vmatpush1.msra.mxu0 %v795
  %2681 = vmatprep.subr.mxu0 %v798
  %2682 = vmatpush1.msra.mxu0 %v797
  %2683 = vmatprep.subr.mxu0 %v800
  %2684 = vmatpush1.msra.mxu0 %v799
  %2685 = vmatprep.subr.mxu0 %v802
  %2686 = vmatpush1.msra.mxu0 %v801
  %2687 = vmatprep.subr.mxu0 %v804
  %2688 = vmatpush1.msra.mxu0 %v803
  %2689 = vmatprep.subr.mxu0 %v806
  %2690 = vmatpush1.msra.mxu0 %v805
  %2691 = vmatprep.subr.mxu0 0.0
  %2692 = vmatpush1.msra.mxu0 0.0
  %2693 = vmatprep.subr.mxu0 0.0
  %2694 = vmatpush1.msra.mxu0 0.0
  %2695 = vmatprep.subr.mxu0 0.0
  %2696 = vmatpush1.msra.mxu0 0.0
  %2697 = vmatprep.subr.mxu0 0.0
  %2698 = vmatpush1.msra.mxu0 0.0
  %2699 = vmatprep.subr.mxu0 0.0
  %2700 = vmatpush1.msra.mxu0 0.0
  %2701 = vmatprep.subr.mxu0 0.0
  %2702 = vmatpush1.msra.mxu0 0.0
  %2703 = vmatprep.subr.mxu0 0.0
  %2704 = vmatpush1.msra.mxu0 0.0
  %2705 = vmatprep.subr.mxu0 0.0
  %2706 = vmatpush1.msra.mxu0 0.0
  %2707 = vmatprep.subr.mxu0 0.0
  %2708 = vmatpush1.msra.mxu0 0.0
  %2709 = vmatprep.subr.mxu0 0.0
  %2710 = vmatpush1.msra.mxu0 0.0
  %2711 = vmatprep.subr.mxu0 0.0
  %2712 = vmatpush1.msra.mxu0 0.0
  %2713 = vmatprep.subr.mxu0 0.0
  %2714 = vmatpush1.msra.mxu0 0.0
  %2715 = vmatprep.subr.mxu0 0.0
  %2716 = vmatpush1.msra.mxu0 0.0
  %2717 = vmatprep.subr.mxu0 0.0
  %2718 = vmatpush1.msra.mxu0 0.0
  %2719 = vmatprep.subr.mxu0 0.0
  %2720 = vmatpush1.msra.mxu0 0.0
  %2721 = vmatprep.subr.mxu0 0.0
  %2722 = vmatpush1.msra.mxu0 0.0
  %2723 = vmatprep.subr.mxu0 0.0
  %2724 = vmatpush1.msra.mxu0 0.0
  %2725 = vmatprep.subr.mxu0 0.0
  %2726 = vmatpush1.msra.mxu0 0.0
  %2727 = vmatprep.subr.mxu0 0.0
  %2728 = vmatpush1.msra.mxu0 0.0
  %2729 = vmatprep.subr.mxu0 0.0
  %2730 = vmatpush1.msra.mxu0 0.0
  %2731 = vmatprep.mubr.f32.mxu0 0.0
  %2732 = vmatmul.mubr.f32.gmra.mrb[0].mxu0 %v163
  %v2733 = vpop.f32.mrb[0].mxu0
  %v2734 = vadd.f32 0.0, %v2733
  %v2735 = vpop.f32.mrb[0].mxu0
  %v2736 = vadd.f32 0.0, %v2735
  %2737 = vmatprep.mubr.f32.mxu0 0.0
  %2738 = vmatmul.mubr.f32.gmra.mrb[0].mxu0 %v166
  %v2739 = vpop.f32.mrb[0].mxu0
  %v2740 = vadd.f32 0.0, %v2739
  %v2741 = vpop.f32.mrb[0].mxu0
  %v2742 = vadd.f32 0.0, %v2741
  %2743 = vmatprep.mubr.f32.mxu0 0.0
  %2744 = vmatmul.mubr.f32.gmra.mrb[0].mxu0 %v169
  %v2745 = vpop.f32.mrb[0].mxu0
  %v2746 = vadd.f32 0.0, %v2745
  %v2747 = vpop.f32.mrb[0].mxu0
  %v2748 = vadd.f32 0.0, %v2747
  %2749 = vmatprep.mubr.f32.mxu0 0.0
  %2750 = vmatmul.mubr.f32.gmra.mrb[0].mxu0 %v172
  %v2751 = vpop.f32.mrb[0].mxu0
  %v2752 = vadd.f32 0.0, %v2751
  %v2753 = vpop.f32.mrb[0].mxu0
  %v2754 = vadd.f32 0.0, %v2753
  %2755 = vmatprep.mubr.f32.mxu0 0.0
  %2756 = vmatmul.mubr.f32.gmra.mrb[0].mxu0 %v175
  %v2757 = vpop.f32.mrb[0].mxu0
  %v2758 = vadd.f32 0.0, %v2757
  %v2759 = vpop.f32.mrb[0].mxu0
  %v2760 = vadd.f32 0.0, %v2759
  %2761 = vmatprep.mubr.f32.mxu0 0.0
  %2762 = vmatmul.mubr.f32.gmra.mrb[0].mxu0 %v178
  %v2763 = vpop.f32.mrb[0].mxu0
  %v2764 = vadd.f32 0.0, %v2763
  %v2765 = vpop.f32.mrb[0].mxu0
  %v2766 = vadd.f32 0.0, %v2765
  %2767 = vmatprep.mubr.f32.mxu0 0.0
  %2768 = vmatmul.mubr.f32.gmra.mrb[0].mxu0 %v181
  %v2769 = vpop.f32.mrb[0].mxu0
  %v2770 = vadd.f32 0.0, %v2769
  %v2771 = vpop.f32.mrb[0].mxu0
  %v2772 = vadd.f32 0.0, %v2771
  %2773 = vmatprep.mubr.f32.mxu0 0.0
  %2774 = vmatmul.mubr.f32.gmra.mrb[0].mxu0 %v184
  %v2775 = vpop.f32.mrb[0].mxu0
  %v2776 = vadd.f32 0.0, %v2775
  %v2777 = vpop.f32.mrb[0].mxu0
  %v2778 = vadd.f32 0.0, %v2777
  %2779 = vmatprep.mubr.f32.mxu0 0.0
  %2780 = vmatmul.mubr.f32.gmra.mrb[0].mxu0 %v187
  %v2781 = vpop.f32.mrb[0].mxu0
  %v2782 = vadd.f32 0.0, %v2781
  %v2783 = vpop.f32.mrb[0].mxu0
  %v2784 = vadd.f32 0.0, %v2783
  %2785 = vmatprep.mubr.f32.mxu0 0.0
  %2786 = vmatmul.mubr.f32.gmra.mrb[0].mxu0 %v190
  %v2787 = vpop.f32.mrb[0].mxu0
  %v2788 = vadd.f32 0.0, %v2787
  %v2789 = vpop.f32.mrb[0].mxu0
  %v2790 = vadd.f32 0.0, %v2789
  %2791 = vmatprep.mubr.f32.mxu0 0.0
  %2792 = vmatmul.mubr.f32.gmra.mrb[0].mxu0 %v193
  %v2793 = vpop.f32.mrb[0].mxu0
  %v2794 = vadd.f32 0.0, %v2793
  %v2795 = vpop.f32.mrb[0].mxu0
  %v2796 = vadd.f32 0.0, %v2795
  %2797 = vmatprep.mubr.f32.mxu0 0.0
  %2798 = vmatmul.mubr.f32.gmra.mrb[0].mxu0 %v196
  %v2799 = vpop.f32.mrb[0].mxu0
  %v2800 = vadd.f32 0.0, %v2799
  %v2801 = vpop.f32.mrb[0].mxu0
  %v2802 = vadd.f32 0.0, %v2801
  %2803 = vmatprep.mubr.f32.mxu0 0.0
  %2804 = vmatmul.mubr.f32.gmra.mrb[0].mxu0 %v1954
  %v2805 = vpop.f32.mrb[0].mxu0
  %v2806 = vadd.f32 0.0, %v2805
  %v2807 = vpop.f32.mrb[0].mxu0
  %v2808 = vadd.f32 0.0, %v2807
  %2809 = vmatprep.mubr.f32.mxu0 0.0
  %2810 = vmatmul.mubr.f32.gmra.mrb[0].mxu0 %v1957
  %v2811 = vpop.f32.mrb[0].mxu0
  %v2812 = vadd.f32 0.0, %v2811
  %v2813 = vpop.f32.mrb[0].mxu0
  %v2814 = vadd.f32 0.0, %v2813
  %2815 = vdwg.mxu0
  %v2816 = vadd.f32 %v2639, %v2734
  %v2817 = vadd.f32 %v2640, %v2736
  %v2818 = vadd.f32 %v2641, %v2740
  %v2819 = vadd.f32 %v2642, %v2742
  %v2820 = vadd.f32 %v2643, %v2746
  %v2821 = vadd.f32 %v2644, %v2748
  %v2822 = vadd.f32 %v2645, %v2752
  %v2823 = vadd.f32 %v2646, %v2754
  %v2824 = vadd.f32 %v2647, %v2758
  %v2825 = vadd.f32 %v2648, %v2760
  %v2826 = vadd.f32 %v2649, %v2764
  %v2827 = vadd.f32 %v2650, %v2766
  %v2828 = vadd.f32 %v2651, %v2770
  %v2829 = vadd.f32 %v2652, %v2772
  %v2830 = vadd.f32 %v2653, %v2776
  %v2831 = vadd.f32 %v2654, %v2778
  %v2832 = vadd.f32 %v2655, %v2782
  %v2833 = vadd.f32 %v2656, %v2784
  %v2834 = vadd.f32 %v2657, %v2788
  %v2835 = vadd.f32 %v2658, %v2790
  %v2836 = vadd.f32 %v2659, %v2794
  %v2837 = vadd.f32 %v2660, %v2796
  %v2838 = vadd.f32 %v2661, %v2800
  %v2839 = vadd.f32 %v2662, %v2802
  %v2840 = vadd.f32 %v2663, %v2806
  %v2841 = vadd.f32 %v2664, %v2808
  %v2842 = vadd.f32 %v2665, %v2812
  %v2843 = vadd.f32 %v2666, %v2814
  %v2845 = vsel %vm155, %v86, 0
  %v2848 = vsel %vm155, %v87, 0
  %2850 = vmatprep.subr.mxu0 %v1028
  %2851 = vmatpush1.msra.mxu0 %v1027
  %2852 = vmatprep.subr.mxu0 %v1030
  %2853 = vmatpush1.msra.mxu0 %v1029
  %2854 = vmatprep.subr.mxu0 %v1032
  %2855 = vmatpush1.msra.mxu0 %v1031
  %2856 = vmatprep.subr.mxu0 %v1034
  %2857 = vmatpush1.msra.mxu0 %v1033
  %2858 = vmatprep.subr.mxu0 %v1036
  %2859 = vmatpush1.msra.mxu0 %v1035
  %2860 = vmatprep.subr.mxu0 %v1038
  %2861 = vmatpush1.msra.mxu0 %v1037
  %2862 = vmatprep.subr.mxu0 %v1040
  %2863 = vmatpush1.msra.mxu0 %v1039
  %2864 = vmatprep.subr.mxu0 %v1042
  %2865 = vmatpush1.msra.mxu0 %v1041
  %2866 = vmatprep.subr.mxu0 %v1044
  %2867 = vmatpush1.msra.mxu0 %v1043
  %2868 = vmatprep.subr.mxu0 %v1046
  %2869 = vmatpush1.msra.mxu0 %v1045
  %2870 = vmatprep.subr.mxu0 %v1048
  %2871 = vmatpush1.msra.mxu0 %v1047
  %2872 = vmatprep.subr.mxu0 %v1050
  %2873 = vmatpush1.msra.mxu0 %v1049
  %2874 = vmatprep.subr.mxu0 0.0
  %2875 = vmatpush1.msra.mxu0 0.0
  %2876 = vmatprep.subr.mxu0 0.0
  %2877 = vmatpush1.msra.mxu0 0.0
  %2878 = vmatprep.subr.mxu0 0.0
  %2879 = vmatpush1.msra.mxu0 0.0
  %2880 = vmatprep.subr.mxu0 0.0
  %2881 = vmatpush1.msra.mxu0 0.0
  %2882 = vmatprep.subr.mxu0 0.0
  %2883 = vmatpush1.msra.mxu0 0.0
  %2884 = vmatprep.subr.mxu0 0.0
  %2885 = vmatpush1.msra.mxu0 0.0
  %2886 = vmatprep.subr.mxu0 0.0
  %2887 = vmatpush1.msra.mxu0 0.0
  %2888 = vmatprep.subr.mxu0 0.0
  %2889 = vmatpush1.msra.mxu0 0.0
  %2890 = vmatprep.subr.mxu0 0.0
  %2891 = vmatpush1.msra.mxu0 0.0
  %2892 = vmatprep.subr.mxu0 0.0
  %2893 = vmatpush1.msra.mxu0 0.0
  %2894 = vmatprep.subr.mxu0 0.0
  %2895 = vmatpush1.msra.mxu0 0.0
  %2896 = vmatprep.subr.mxu0 0.0
  %2897 = vmatpush1.msra.mxu0 0.0
  %2898 = vmatprep.subr.mxu0 0.0
  %2899 = vmatpush1.msra.mxu0 0.0
  %2900 = vmatprep.subr.mxu0 0.0
  %2901 = vmatpush1.msra.mxu0 0.0
  %2902 = vmatprep.subr.mxu0 0.0
  %2903 = vmatpush1.msra.mxu0 0.0
  %2904 = vmatprep.subr.mxu0 0.0
  %2905 = vmatpush1.msra.mxu0 0.0
  %2906 = vmatprep.subr.mxu0 0.0
  %2907 = vmatpush1.msra.mxu0 0.0
  %2908 = vmatprep.subr.mxu0 0.0
  %2909 = vmatpush1.msra.mxu0 0.0
  %2910 = vmatprep.subr.mxu0 0.0
  %2911 = vmatpush1.msra.mxu0 0.0
  %2912 = vmatprep.subr.mxu0 0.0
  %2913 = vmatpush1.msra.mxu0 0.0
  %2914 = vmatprep.mubr.f32.mxu0 0.0
  %2915 = vmatmul.mubr.f32.gmra.mrb[0].mxu0 %v570
  %v2916 = vpop.f32.mrb[0].mxu0
  %v2917 = vadd.f32 0.0, %v2916
  %v2918 = vpop.f32.mrb[0].mxu0
  %v2919 = vadd.f32 0.0, %v2918
  %2920 = vmatprep.mubr.f32.mxu0 0.0
  %2921 = vmatmul.mubr.f32.gmra.mrb[0].mxu0 %v573
  %v2922 = vpop.f32.mrb[0].mxu0
  %v2923 = vadd.f32 0.0, %v2922
  %v2924 = vpop.f32.mrb[0].mxu0
  %v2925 = vadd.f32 0.0, %v2924
  %2926 = vmatprep.mubr.f32.mxu0 0.0
  %2927 = vmatmul.mubr.f32.gmra.mrb[0].mxu0 %v576
  %v2928 = vpop.f32.mrb[0].mxu0
  %v2929 = vadd.f32 0.0, %v2928
  %v2930 = vpop.f32.mrb[0].mxu0
  %v2931 = vadd.f32 0.0, %v2930
  %2932 = vmatprep.mubr.f32.mxu0 0.0
  %2933 = vmatmul.mubr.f32.gmra.mrb[0].mxu0 %v579
  %v2934 = vpop.f32.mrb[0].mxu0
  %v2935 = vadd.f32 0.0, %v2934
  %v2936 = vpop.f32.mrb[0].mxu0
  %v2937 = vadd.f32 0.0, %v2936
  %2938 = vmatprep.mubr.f32.mxu0 0.0
  %2939 = vmatmul.mubr.f32.gmra.mrb[0].mxu0 %v582
  %v2940 = vpop.f32.mrb[0].mxu0
  %v2941 = vadd.f32 0.0, %v2940
  %v2942 = vpop.f32.mrb[0].mxu0
  %v2943 = vadd.f32 0.0, %v2942
  %2944 = vmatprep.mubr.f32.mxu0 0.0
  %2945 = vmatmul.mubr.f32.gmra.mrb[0].mxu0 %v585
  %v2946 = vpop.f32.mrb[0].mxu0
  %v2947 = vadd.f32 0.0, %v2946
  %v2948 = vpop.f32.mrb[0].mxu0
  %v2949 = vadd.f32 0.0, %v2948
  %2950 = vmatprep.mubr.f32.mxu0 0.0
  %2951 = vmatmul.mubr.f32.gmra.mrb[0].mxu0 %v588
  %v2952 = vpop.f32.mrb[0].mxu0
  %v2953 = vadd.f32 0.0, %v2952
  %v2954 = vpop.f32.mrb[0].mxu0
  %v2955 = vadd.f32 0.0, %v2954
  %2956 = vmatprep.mubr.f32.mxu0 0.0
  %2957 = vmatmul.mubr.f32.gmra.mrb[0].mxu0 %v591
  %v2958 = vpop.f32.mrb[0].mxu0
  %v2959 = vadd.f32 0.0, %v2958
  %v2960 = vpop.f32.mrb[0].mxu0
  %v2961 = vadd.f32 0.0, %v2960
  %2962 = vmatprep.mubr.f32.mxu0 0.0
  %2963 = vmatmul.mubr.f32.gmra.mrb[0].mxu0 %v594
  %v2964 = vpop.f32.mrb[0].mxu0
  %v2965 = vadd.f32 0.0, %v2964
  %v2966 = vpop.f32.mrb[0].mxu0
  %v2967 = vadd.f32 0.0, %v2966
  %2968 = vmatprep.mubr.f32.mxu0 0.0
  %2969 = vmatmul.mubr.f32.gmra.mrb[0].mxu0 %v597
  %v2970 = vpop.f32.mrb[0].mxu0
  %v2971 = vadd.f32 0.0, %v2970
  %v2972 = vpop.f32.mrb[0].mxu0
  %v2973 = vadd.f32 0.0, %v2972
  %2974 = vmatprep.mubr.f32.mxu0 0.0
  %2975 = vmatmul.mubr.f32.gmra.mrb[0].mxu0 %v600
  %v2976 = vpop.f32.mrb[0].mxu0
  %v2977 = vadd.f32 0.0, %v2976
  %v2978 = vpop.f32.mrb[0].mxu0
  %v2979 = vadd.f32 0.0, %v2978
  %2980 = vmatprep.mubr.f32.mxu0 0.0
  %2981 = vmatmul.mubr.f32.gmra.mrb[0].mxu0 %v603
  %v2982 = vpop.f32.mrb[0].mxu0
  %v2983 = vadd.f32 0.0, %v2982
  %v2984 = vpop.f32.mrb[0].mxu0
  %v2985 = vadd.f32 0.0, %v2984
  %2986 = vmatprep.mubr.f32.mxu0 0.0
  %2987 = vmatmul.mubr.f32.gmra.mrb[0].mxu0 %v2845
  %v2988 = vpop.f32.mrb[0].mxu0
  %v2989 = vadd.f32 0.0, %v2988
  %v2990 = vpop.f32.mrb[0].mxu0
  %v2991 = vadd.f32 0.0, %v2990
  %2992 = vmatprep.mubr.f32.mxu0 0.0
  %2993 = vmatmul.mubr.f32.gmra.mrb[0].mxu0 %v2848
  %v2994 = vpop.f32.mrb[0].mxu0
  %v2995 = vadd.f32 0.0, %v2994
  %v2996 = vpop.f32.mrb[0].mxu0
  %v2997 = vadd.f32 0.0, %v2996
  %2998 = vdwg.mxu0
  %v2999 = vadd.f32 %v2816, %v2917
  %v3000 = vadd.f32 %v2817, %v2919
  %v3001 = vadd.f32 %v2818, %v2923
  %v3002 = vadd.f32 %v2819, %v2925
  %v3003 = vadd.f32 %v2820, %v2929
  %v3004 = vadd.f32 %v2821, %v2931
  %v3005 = vadd.f32 %v2822, %v2935
  %v3006 = vadd.f32 %v2823, %v2937
  %v3007 = vadd.f32 %v2824, %v2941
  %v3008 = vadd.f32 %v2825, %v2943
  %v3009 = vadd.f32 %v2826, %v2947
  %v3010 = vadd.f32 %v2827, %v2949
  %v3011 = vadd.f32 %v2828, %v2953
  %v3012 = vadd.f32 %v2829, %v2955
  %v3013 = vadd.f32 %v2830, %v2959
  %v3014 = vadd.f32 %v2831, %v2961
  %v3015 = vadd.f32 %v2832, %v2965
  %v3016 = vadd.f32 %v2833, %v2967
  %v3017 = vadd.f32 %v2834, %v2971
  %v3018 = vadd.f32 %v2835, %v2973
  %v3019 = vadd.f32 %v2836, %v2977
  %v3020 = vadd.f32 %v2837, %v2979
  %v3021 = vadd.f32 %v2838, %v2983
  %v3022 = vadd.f32 %v2839, %v2985
  %v3023 = vadd.f32 %v2840, %v2989
  %v3024 = vadd.f32 %v2841, %v2991
  %v3025 = vadd.f32 %v2842, %v2995
  %v3026 = vadd.f32 %v2843, %v2997
  %v3027 = vadd.f32 %v2999, %v1238
  %v3028 = vadd.f32 %v3000, %v1242
  %v3029 = vadd.f32 %v3001, %v1238
  %v3030 = vadd.f32 %v3002, %v1242
  %v3031 = vadd.f32 %v3003, %v1238
  %v3032 = vadd.f32 %v3004, %v1242
  %v3033 = vadd.f32 %v3005, %v1238
  %v3034 = vadd.f32 %v3006, %v1242
  %v3035 = vadd.f32 %v3007, %v1238
  %v3036 = vadd.f32 %v3008, %v1242
  %v3037 = vadd.f32 %v3009, %v1238
  %v3038 = vadd.f32 %v3010, %v1242
  %v3039 = vadd.f32 %v3011, %v1238
  %v3040 = vadd.f32 %v3012, %v1242
  %v3041 = vadd.f32 %v3013, %v1238
  %v3042 = vadd.f32 %v3014, %v1242
  %v3043 = vadd.f32 %v3015, %v1238
  %v3044 = vadd.f32 %v3016, %v1242
  %v3045 = vadd.f32 %v3017, %v1238
  %v3046 = vadd.f32 %v3018, %v1242
  %v3047 = vadd.f32 %v3019, %v1238
  %v3048 = vadd.f32 %v3020, %v1242
  %v3049 = vadd.f32 %v3021, %v1238
  %v3050 = vadd.f32 %v3022, %v1242
  %v3051 = vadd.f32 %v3023, %v1238
  %v3052 = vadd.f32 %v3024, %v1242
  %v3053 = vadd.f32 %v3025, %v1238
  %v3054 = vadd.f32 %v3026, %v1242
  %v3055 = vmax.f32 %v3027, 0.0
  %v3056 = vmax.f32 %v3028, 0.0
  %v3057 = vmax.f32 %v3029, 0.0
  %v3058 = vmax.f32 %v3030, 0.0
  %v3059 = vmax.f32 %v3031, 0.0
  %v3060 = vmax.f32 %v3032, 0.0
  %v3061 = vmax.f32 %v3033, 0.0
  %v3062 = vmax.f32 %v3034, 0.0
  %v3063 = vmax.f32 %v3035, 0.0
  %v3064 = vmax.f32 %v3036, 0.0
  %v3065 = vmax.f32 %v3037, 0.0
  %v3066 = vmax.f32 %v3038, 0.0
  %v3067 = vmax.f32 %v3039, 0.0
  %v3068 = vmax.f32 %v3040, 0.0
  %v3069 = vmax.f32 %v3041, 0.0
  %v3070 = vmax.f32 %v3042, 0.0
  %v3071 = vmax.f32 %v3043, 0.0
  %v3072 = vmax.f32 %v3044, 0.0
  %v3073 = vmax.f32 %v3045, 0.0
  %v3074 = vmax.f32 %v3046, 0.0
  %v3075 = vmax.f32 %v3047, 0.0
  %v3076 = vmax.f32 %v3048, 0.0
  %v3077 = vmax.f32 %v3049, 0.0
  %v3078 = vmax.f32 %v3050, 0.0
  %v3079 = vmax.f32 %v3051, 0.0
  %v3080 = vmax.f32 %v3052, 0.0
  %v3081 = vmax.f32 %v3053, 0.0
  %v3082 = vmax.f32 %v3054, 0.0
  %3083 = vmatprep.subr.mxu0 %v132
  %3084 = vmatpush1.msra.mxu0 %v131
  %3085 = vmatprep.subr.mxu0 %v134
  %3086 = vmatpush1.msra.mxu0 %v133
  %3087 = vmatprep.subr.mxu0 %v136
  %3088 = vmatpush1.msra.mxu0 %v135
  %3089 = vmatprep.subr.mxu0 %v138
  %3090 = vmatpush1.msra.mxu0 %v137
  %3091 = vmatprep.subr.mxu0 %v140
  %3092 = vmatpush1.msra.mxu0 %v139
  %3093 = vmatprep.subr.mxu0 %v142
  %3094 = vmatpush1.msra.mxu0 %v141
  %3095 = vmatprep.subr.mxu0 %v144
  %3096 = vmatpush1.msra.mxu0 %v143
  %3097 = vmatprep.subr.mxu0 %v146
  %3098 = vmatpush1.msra.mxu0 %v145
  %3099 = vmatprep.subr.mxu0 %v148
  %3100 = vmatpush1.msra.mxu0 %v147
  %3101 = vmatprep.subr.mxu0 %v150
  %3102 = vmatpush1.msra.mxu0 %v149
  %3103 = vmatprep.subr.mxu0 %v152
  %3104 = vmatpush1.msra.mxu0 %v151
  %3105 = vmatprep.subr.mxu0 %v154
  %3106 = vmatpush1.msra.mxu0 %v153
  %3107 = vmatprep.subr.mxu0 0.0
  %3108 = vmatpush1.msra.mxu0 0.0
  %3109 = vmatprep.subr.mxu0 0.0
  %3110 = vmatpush1.msra.mxu0 0.0
  %3111 = vmatprep.subr.mxu0 0.0
  %3112 = vmatpush1.msra.mxu0 0.0
  %3113 = vmatprep.subr.mxu0 0.0
  %3114 = vmatpush1.msra.mxu0 0.0
  %3115 = vmatprep.subr.mxu0 0.0
  %3116 = vmatpush1.msra.mxu0 0.0
  %3117 = vmatprep.subr.mxu0 0.0
  %3118 = vmatpush1.msra.mxu0 0.0
  %3119 = vmatprep.subr.mxu0 0.0
  %3120 = vmatpush1.msra.mxu0 0.0
  %3121 = vmatprep.subr.mxu0 0.0
  %3122 = vmatpush1.msra.mxu0 0.0
  %3123 = vmatprep.subr.mxu0 0.0
  %3124 = vmatpush1.msra.mxu0 0.0
  %3125 = vmatprep.subr.mxu0 0.0
  %3126 = vmatpush1.msra.mxu0 0.0
  %3127 = vmatprep.subr.mxu0 0.0
  %3128 = vmatpush1.msra.mxu0 0.0
  %3129 = vmatprep.subr.mxu0 0.0
  %3130 = vmatpush1.msra.mxu0 0.0
  %3131 = vmatprep.subr.mxu0 0.0
  %3132 = vmatpush1.msra.mxu0 0.0
  %3133 = vmatprep.subr.mxu0 0.0
  %3134 = vmatpush1.msra.mxu0 0.0
  %3135 = vmatprep.subr.mxu0 0.0
  %3136 = vmatpush1.msra.mxu0 0.0
  %3137 = vmatprep.subr.mxu0 0.0
  %3138 = vmatpush1.msra.mxu0 0.0
  %3139 = vmatprep.subr.mxu0 0.0
  %3140 = vmatpush1.msra.mxu0 0.0
  %3141 = vmatprep.subr.mxu0 0.0
  %3142 = vmatpush1.msra.mxu0 0.0
  %3143 = vmatprep.subr.mxu0 0.0
  %3144 = vmatpush1.msra.mxu0 0.0
  %3145 = vmatprep.subr.mxu0 0.0
  %3146 = vmatpush1.msra.mxu0 0.0
  %3147 = vmatprep.mubr.f32.mxu0 0.0
  %3148 = vmatmul.mubr.f32.gmra.mrb[0].mxu0 %v354
  %v3149 = vpop.f32.mrb[0].mxu0
  %v3150 = vadd.f32 0.0, %v3149
  %v3151 = vpop.f32.mrb[0].mxu0
  %v3152 = vadd.f32 0.0, %v3151
  %3153 = vmatprep.mubr.f32.mxu0 0.0
  %3154 = vmatmul.mubr.f32.gmra.mrb[0].mxu0 %v357
  %v3155 = vpop.f32.mrb[0].mxu0
  %v3156 = vadd.f32 0.0, %v3155
  %v3157 = vpop.f32.mrb[0].mxu0
  %v3158 = vadd.f32 0.0, %v3157
  %3159 = vmatprep.mubr.f32.mxu0 0.0
  %3160 = vmatmul.mubr.f32.gmra.mrb[0].mxu0 %v360
  %v3161 = vpop.f32.mrb[0].mxu0
  %v3162 = vadd.f32 0.0, %v3161
  %v3163 = vpop.f32.mrb[0].mxu0
  %v3164 = vadd.f32 0.0, %v3163
  %3165 = vmatprep.mubr.f32.mxu0 0.0
  %3166 = vmatmul.mubr.f32.gmra.mrb[0].mxu0 %v363
  %v3167 = vpop.f32.mrb[0].mxu0
  %v3168 = vadd.f32 0.0, %v3167
  %v3169 = vpop.f32.mrb[0].mxu0
  %v3170 = vadd.f32 0.0, %v3169
  %3171 = vmatprep.mubr.f32.mxu0 0.0
  %3172 = vmatmul.mubr.f32.gmra.mrb[0].mxu0 %v366
  %v3173 = vpop.f32.mrb[0].mxu0
  %v3174 = vadd.f32 0.0, %v3173
  %v3175 = vpop.f32.mrb[0].mxu0
  %v3176 = vadd.f32 0.0, %v3175
  %3177 = vmatprep.mubr.f32.mxu0 0.0
  %3178 = vmatmul.mubr.f32.gmra.mrb[0].mxu0 %v369
  %v3179 = vpop.f32.mrb[0].mxu0
  %v3180 = vadd.f32 0.0, %v3179
  %v3181 = vpop.f32.mrb[0].mxu0
  %v3182 = vadd.f32 0.0, %v3181
  %3183 = vmatprep.mubr.f32.mxu0 0.0
  %3184 = vmatmul.mubr.f32.gmra.mrb[0].mxu0 %v372
  %v3185 = vpop.f32.mrb[0].mxu0
  %v3186 = vadd.f32 0.0, %v3185
  %v3187 = vpop.f32.mrb[0].mxu0
  %v3188 = vadd.f32 0.0, %v3187
  %3189 = vmatprep.mubr.f32.mxu0 0.0
  %3190 = vmatmul.mubr.f32.gmra.mrb[0].mxu0 %v375
  %v3191 = vpop.f32.mrb[0].mxu0
  %v3192 = vadd.f32 0.0, %v3191
  %v3193 = vpop.f32.mrb[0].mxu0
  %v3194 = vadd.f32 0.0, %v3193
  %3195 = vmatprep.mubr.f32.mxu0 0.0
  %3196 = vmatmul.mubr.f32.gmra.mrb[0].mxu0 %v378
  %v3197 = vpop.f32.mrb[0].mxu0
  %v3198 = vadd.f32 0.0, %v3197
  %v3199 = vpop.f32.mrb[0].mxu0
  %v3200 = vadd.f32 0.0, %v3199
  %3201 = vmatprep.mubr.f32.mxu0 0.0
  %3202 = vmatmul.mubr.f32.gmra.mrb[0].mxu0 %v381
  %v3203 = vpop.f32.mrb[0].mxu0
  %v3204 = vadd.f32 0.0, %v3203
  %v3205 = vpop.f32.mrb[0].mxu0
  %v3206 = vadd.f32 0.0, %v3205
  %3207 = vmatprep.mubr.f32.mxu0 0.0
  %3208 = vmatmul.mubr.f32.gmra.mrb[0].mxu0 %v384
  %v3209 = vpop.f32.mrb[0].mxu0
  %v3210 = vadd.f32 0.0, %v3209
  %v3211 = vpop.f32.mrb[0].mxu0
  %v3212 = vadd.f32 0.0, %v3211
  %3213 = vmatprep.mubr.f32.mxu0 0.0
  %3214 = vmatmul.mubr.f32.gmra.mrb[0].mxu0 %v387
  %v3215 = vpop.f32.mrb[0].mxu0
  %v3216 = vadd.f32 0.0, %v3215
  %v3217 = vpop.f32.mrb[0].mxu0
  %v3218 = vadd.f32 0.0, %v3217
  %3219 = vmatprep.mubr.f32.mxu0 0.0
  %3220 = vmatmul.mubr.f32.gmra.mrb[0].mxu0 %v1052
  %v3221 = vpop.f32.mrb[0].mxu0
  %v3222 = vadd.f32 0.0, %v3221
  %v3223 = vpop.f32.mrb[0].mxu0
  %v3224 = vadd.f32 0.0, %v3223
  %3225 = vmatprep.mubr.f32.mxu0 0.0
  %3226 = vmatmul.mubr.f32.gmra.mrb[0].mxu0 %v1055
  %v3227 = vpop.f32.mrb[0].mxu0
  %v3228 = vadd.f32 0.0, %v3227
  %v3229 = vpop.f32.mrb[0].mxu0
  %v3230 = vadd.f32 0.0, %v3229
  %3231 = vdwg.mxu0
  %3232 = vmatprep.subr.mxu0 %v107
  %3233 = vmatpush1.msra.mxu0 %v106
  %3234 = vmatprep.subr.mxu0 %v109
  %3235 = vmatpush1.msra.mxu0 %v108
  %3236 = vmatprep.subr.mxu0 %v111
  %3237 = vmatpush1.msra.mxu0 %v110
  %3238 = vmatprep.subr.mxu0 %v113
  %3239 = vmatpush1.msra.mxu0 %v112
  %3240 = vmatprep.subr.mxu0 %v115
  %3241 = vmatpush1.msra.mxu0 %v114
  %3242 = vmatprep.subr.mxu0 %v117
  %3243 = vmatpush1.msra.mxu0 %v116
  %3244 = vmatprep.subr.mxu0 %v119
  %3245 = vmatpush1.msra.mxu0 %v118
  %3246 = vmatprep.subr.mxu0 %v121
  %3247 = vmatpush1.msra.mxu0 %v120
  %3248 = vmatprep.subr.mxu0 %v123
  %3249 = vmatpush1.msra.mxu0 %v122
  %3250 = vmatprep.subr.mxu0 %v125
  %3251 = vmatpush1.msra.mxu0 %v124
  %3252 = vmatprep.subr.mxu0 %v127
  %3253 = vmatpush1.msra.mxu0 %v126
  %3254 = vmatprep.subr.mxu0 %v129
  %3255 = vmatpush1.msra.mxu0 %v128
  %3256 = vmatprep.subr.mxu0 0.0
  %3257 = vmatpush1.msra.mxu0 0.0
  %3258 = vmatprep.subr.mxu0 0.0
  %3259 = vmatpush1.msra.mxu0 0.0
  %3260 = vmatprep.subr.mxu0 0.0
  %3261 = vmatpush1.msra.mxu0 0.0
  %3262 = vmatprep.subr.mxu0 0.0
  %3263 = vmatpush1.msra.mxu0 0.0
  %3264 = vmatprep.subr.mxu0 0.0
  %3265 = vmatpush1.msra.mxu0 0.0
  %3266 = vmatprep.subr.mxu0 0.0
  %3267 = vmatpush1.msra.mxu0 0.0
  %3268 = vmatprep.subr.mxu0 0.0
  %3269 = vmatpush1.msra.mxu0 0.0
  %3270 = vmatprep.subr.mxu0 0.0
  %3271 = vmatpush1.msra.mxu0 0.0
  %3272 = vmatprep.subr.mxu0 0.0
  %3273 = vmatpush1.msra.mxu0 0.0
  %3274 = vmatprep.subr.mxu0 0.0
  %3275 = vmatpush1.msra.mxu0 0.0
  %3276 = vmatprep.subr.mxu0 0.0
  %3277 = vmatpush1.msra.mxu0 0.0
  %3278 = vmatprep.subr.mxu0 0.0
  %3279 = vmatpush1.msra.mxu0 0.0
  %3280 = vmatprep.subr.mxu0 0.0
  %3281 = vmatpush1.msra.mxu0 0.0
  %3282 = vmatprep.subr.mxu0 0.0
  %3283 = vmatpush1.msra.mxu0 0.0
  %3284 = vmatprep.subr.mxu0 0.0
  %3285 = vmatpush1.msra.mxu0 0.0
  %3286 = vmatprep.subr.mxu0 0.0
  %3287 = vmatpush1.msra.mxu0 0.0
  %3288 = vmatprep.subr.mxu0 0.0
  %3289 = vmatpush1.msra.mxu0 0.0
  %3290 = vmatprep.subr.mxu0 0.0
  %3291 = vmatpush1.msra.mxu0 0.0
  %3292 = vmatprep.subr.mxu0 0.0
  %3293 = vmatpush1.msra.mxu0 0.0
  %3294 = vmatprep.subr.mxu0 0.0
  %3295 = vmatpush1.msra.mxu0 0.0
  %3296 = vmatprep.mubr.f32.mxu0 0.0
  %3297 = vmatmul.mubr.f32.gmra.mrb[0].mxu0 %v808
  %v3298 = vpop.f32.mrb[0].mxu0
  %v3299 = vadd.f32 %v3150, %v3298
  %v3300 = vpop.f32.mrb[0].mxu0
  %v3301 = vadd.f32 %v3152, %v3300
  %3302 = vmatprep.mubr.f32.mxu0 0.0
  %3303 = vmatmul.mubr.f32.gmra.mrb[0].mxu0 %v811
  %v3304 = vpop.f32.mrb[0].mxu0
  %v3305 = vadd.f32 %v3156, %v3304
  %v3306 = vpop.f32.mrb[0].mxu0
  %v3307 = vadd.f32 %v3158, %v3306
  %3308 = vmatprep.mubr.f32.mxu0 0.0
  %3309 = vmatmul.mubr.f32.gmra.mrb[0].mxu0 %v814
  %v3310 = vpop.f32.mrb[0].mxu0
  %v3311 = vadd.f32 %v3162, %v3310
  %v3312 = vpop.f32.mrb[0].mxu0
  %v3313 = vadd.f32 %v3164, %v3312
  %3314 = vmatprep.mubr.f32.mxu0 0.0
  %3315 = vmatmul.mubr.f32.gmra.mrb[0].mxu0 %v817
  %v3316 = vpop.f32.mrb[0].mxu0
  %v3317 = vadd.f32 %v3168, %v3316
  %v3318 = vpop.f32.mrb[0].mxu0
  %v3319 = vadd.f32 %v3170, %v3318
  %3320 = vmatprep.mubr.f32.mxu0 0.0
  %3321 = vmatmul.mubr.f32.gmra.mrb[0].mxu0 %v820
  %v3322 = vpop.f32.mrb[0].mxu0
  %v3323 = vadd.f32 %v3174, %v3322
  %v3324 = vpop.f32.mrb[0].mxu0
  %v3325 = vadd.f32 %v3176, %v3324
  %3326 = vmatprep.mubr.f32.mxu0 0.0
  %3327 = vmatmul.mubr.f32.gmra.mrb[0].mxu0 %v823
  %v3328 = vpop.f32.mrb[0].mxu0
  %v3329 = vadd.f32 %v3180, %v3328
  %v3330 = vpop.f32.mrb[0].mxu0
  %v3331 = vadd.f32 %v3182, %v3330
  %3332 = vmatprep.mubr.f32.mxu0 0.0
  %3333 = vmatmul.mubr.f32.gmra.mrb[0].mxu0 %v826
  %v3334 = vpop.f32.mrb[0].mxu0
  %v3335 = vadd.f32 %v3186, %v3334
  %v3336 = vpop.f32.mrb[0].mxu0
  %v3337 = vadd.f32 %v3188, %v3336
  %3338 = vmatprep.mubr.f32.mxu0 0.0
  %3339 = vmatmul.mubr.f32.gmra.mrb[0].mxu0 %v829
  %v3340 = vpop.f32.mrb[0].mxu0
  %v3341 = vadd.f32 %v3192, %v3340
  %v3342 = vpop.f32.mrb[0].mxu0
  %v3343 = vadd.f32 %v3194, %v3342
  %3344 = vmatprep.mubr.f32.mxu0 0.0
  %3345 = vmatmul.mubr.f32.gmra.mrb[0].mxu0 %v832
  %v3346 = vpop.f32.mrb[0].mxu0
  %v3347 = vadd.f32 %v3198, %v3346
  %v3348 = vpop.f32.mrb[0].mxu0
  %v3349 = vadd.f32 %v3200, %v3348
  %3350 = vmatprep.mubr.f32.mxu0 0.0
  %3351 = vmatmul.mubr.f32.gmra.mrb[0].mxu0 %v835
  %v3352 = vpop.f32.mrb[0].mxu0
  %v3353 = vadd.f32 %v3204, %v3352
  %v3354 = vpop.f32.mrb[0].mxu0
  %v3355 = vadd.f32 %v3206, %v3354
  %3356 = vmatprep.mubr.f32.mxu0 0.0
  %3357 = vmatmul.mubr.f32.gmra.mrb[0].mxu0 %v838
  %v3358 = vpop.f32.mrb[0].mxu0
  %v3359 = vadd.f32 %v3210, %v3358
  %v3360 = vpop.f32.mrb[0].mxu0
  %v3361 = vadd.f32 %v3212, %v3360
  %3362 = vmatprep.mubr.f32.mxu0 0.0
  %3363 = vmatmul.mubr.f32.gmra.mrb[0].mxu0 %v841
  %v3364 = vpop.f32.mrb[0].mxu0
  %v3365 = vadd.f32 %v3216, %v3364
  %v3366 = vpop.f32.mrb[0].mxu0
  %v3367 = vadd.f32 %v3218, %v3366
  %3368 = vmatprep.mubr.f32.mxu0 0.0
  %3369 = vmatmul.mubr.f32.gmra.mrb[0].mxu0 %v844
  %v3370 = vpop.f32.mrb[0].mxu0
  %v3371 = vadd.f32 %v3222, %v3370
  %v3372 = vpop.f32.mrb[0].mxu0
  %v3373 = vadd.f32 %v3224, %v3372
  %3374 = vmatprep.mubr.f32.mxu0 0.0
  %3375 = vmatmul.mubr.f32.gmra.mrb[0].mxu0 %v847
  %v3376 = vpop.f32.mrb[0].mxu0
  %v3377 = vadd.f32 %v3228, %v3376
  %v3378 = vpop.f32.mrb[0].mxu0
  %v3379 = vadd.f32 %v3230, %v3378
  %3380 = vdwg.mxu0
  %3381 = vmatprep.subr.mxu0 %v540
  %3382 = vmatpush1.msra.mxu0 %v539
  %3383 = vmatprep.subr.mxu0 %v542
  %3384 = vmatpush1.msra.mxu0 %v541
  %3385 = vmatprep.subr.mxu0 %v544
  %3386 = vmatpush1.msra.mxu0 %v543
  %3387 = vmatprep.subr.mxu0 %v546
  %3388 = vmatpush1.msra.mxu0 %v545
  %3389 = vmatprep.subr.mxu0 %v548
  %3390 = vmatpush1.msra.mxu0 %v547
  %3391 = vmatprep.subr.mxu0 %v550
  %3392 = vmatpush1.msra.mxu0 %v549
  %3393 = vmatprep.subr.mxu0 %v552
  %3394 = vmatpush1.msra.mxu0 %v551
  %3395 = vmatprep.subr.mxu0 %v554
  %3396 = vmatpush1.msra.mxu0 %v553
  %3397 = vmatprep.subr.mxu0 %v556
  %3398 = vmatpush1.msra.mxu0 %v555
  %3399 = vmatprep.subr.mxu0 %v558
  %3400 = vmatpush1.msra.mxu0 %v557
  %3401 = vmatprep.subr.mxu0 %v560
  %3402 = vmatpush1.msra.mxu0 %v559
  %3403 = vmatprep.subr.mxu0 %v562
  %3404 = vmatpush1.msra.mxu0 %v561
  %3405 = vmatprep.subr.mxu0 0.0
  %3406 = vmatpush1.msra.mxu0 0.0
  %3407 = vmatprep.subr.mxu0 0.0
  %3408 = vmatpush1.msra.mxu0 0.0
  %3409 = vmatprep.subr.mxu0 0.0
  %3410 = vmatpush1.msra.mxu0 0.0
  %3411 = vmatprep.subr.mxu0 0.0
  %3412 = vmatpush1.msra.mxu0 0.0
  %3413 = vmatprep.subr.mxu0 0.0
  %3414 = vmatpush1.msra.mxu0 0.0
  %3415 = vmatprep.subr.mxu0 0.0
  %3416 = vmatpush1.msra.mxu0 0.0
  %3417 = vmatprep.subr.mxu0 0.0
  %3418 = vmatpush1.msra.mxu0 0.0
  %3419 = vmatprep.subr.mxu0 0.0
  %3420 = vmatpush1.msra.mxu0 0.0
  %3421 = vmatprep.subr.mxu0 0.0
  %3422 = vmatpush1.msra.mxu0 0.0
  %3423 = vmatprep.subr.mxu0 0.0
  %3424 = vmatpush1.msra.mxu0 0.0
  %3425 = vmatprep.subr.mxu0 0.0
  %3426 = vmatpush1.msra.mxu0 0.0
  %3427 = vmatprep.subr.mxu0 0.0
  %3428 = vmatpush1.msra.mxu0 0.0
  %3429 = vmatprep.subr.mxu0 0.0
  %3430 = vmatpush1.msra.mxu0 0.0
  %3431 = vmatprep.subr.mxu0 0.0
  %3432 = vmatpush1.msra.mxu0 0.0
  %3433 = vmatprep.subr.mxu0 0.0
  %3434 = vmatpush1.msra.mxu0 0.0
  %3435 = vmatprep.subr.mxu0 0.0
  %3436 = vmatpush1.msra.mxu0 0.0
  %3437 = vmatprep.subr.mxu0 0.0
  %3438 = vmatpush1.msra.mxu0 0.0
  %3439 = vmatprep.subr.mxu0 0.0
  %3440 = vmatpush1.msra.mxu0 0.0
  %3441 = vmatprep.subr.mxu0 0.0
  %3442 = vmatpush1.msra.mxu0 0.0
  %3443 = vmatprep.subr.mxu0 0.0
  %3444 = vmatpush1.msra.mxu0 0.0
  %3445 = vmatprep.mubr.f32.mxu0 0.0
  %3446 = vmatmul.mubr.f32.gmra.mrb[0].mxu0 %v163
  %v3447 = vpop.f32.mrb[0].mxu0
  %v3448 = vadd.f32 0.0, %v3447
  %v3449 = vpop.f32.mrb[0].mxu0
  %v3450 = vadd.f32 0.0, %v3449
  %3451 = vmatprep.mubr.f32.mxu0 0.0
  %3452 = vmatmul.mubr.f32.gmra.mrb[0].mxu0 %v166
  %v3453 = vpop.f32.mrb[0].mxu0
  %v3454 = vadd.f32 0.0, %v3453
  %v3455 = vpop.f32.mrb[0].mxu0
  %v3456 = vadd.f32 0.0, %v3455
  %3457 = vmatprep.mubr.f32.mxu0 0.0
  %3458 = vmatmul.mubr.f32.gmra.mrb[0].mxu0 %v169
  %v3459 = vpop.f32.mrb[0].mxu0
  %v3460 = vadd.f32 0.0, %v3459
  %v3461 = vpop.f32.mrb[0].mxu0
  %v3462 = vadd.f32 0.0, %v3461
  %3463 = vmatprep.mubr.f32.mxu0 0.0
  %3464 = vmatmul.mubr.f32.gmra.mrb[0].mxu0 %v172
  %v3465 = vpop.f32.mrb[0].mxu0
  %v3466 = vadd.f32 0.0, %v3465
  %v3467 = vpop.f32.mrb[0].mxu0
  %v3468 = vadd.f32 0.0, %v3467
  %3469 = vmatprep.mubr.f32.mxu0 0.0
  %3470 = vmatmul.mubr.f32.gmra.mrb[0].mxu0 %v175
  %v3471 = vpop.f32.mrb[0].mxu0
  %v3472 = vadd.f32 0.0, %v3471
  %v3473 = vpop.f32.mrb[0].mxu0
  %v3474 = vadd.f32 0.0, %v3473
  %3475 = vmatprep.mubr.f32.mxu0 0.0
  %3476 = vmatmul.mubr.f32.gmra.mrb[0].mxu0 %v178
  %v3477 = vpop.f32.mrb[0].mxu0
  %v3478 = vadd.f32 0.0, %v3477
  %v3479 = vpop.f32.mrb[0].mxu0
  %v3480 = vadd.f32 0.0, %v3479
  %3481 = vmatprep.mubr.f32.mxu0 0.0
  %3482 = vmatmul.mubr.f32.gmra.mrb[0].mxu0 %v181
  %v3483 = vpop.f32.mrb[0].mxu0
  %v3484 = vadd.f32 0.0, %v3483
  %v3485 = vpop.f32.mrb[0].mxu0
  %v3486 = vadd.f32 0.0, %v3485
  %3487 = vmatprep.mubr.f32.mxu0 0.0
  %3488 = vmatmul.mubr.f32.gmra.mrb[0].mxu0 %v184
  %v3489 = vpop.f32.mrb[0].mxu0
  %v3490 = vadd.f32 0.0, %v3489
  %v3491 = vpop.f32.mrb[0].mxu0
  %v3492 = vadd.f32 0.0, %v3491
  %3493 = vmatprep.mubr.f32.mxu0 0.0
  %3494 = vmatmul.mubr.f32.gmra.mrb[0].mxu0 %v187
  %v3495 = vpop.f32.mrb[0].mxu0
  %v3496 = vadd.f32 0.0, %v3495
  %v3497 = vpop.f32.mrb[0].mxu0
  %v3498 = vadd.f32 0.0, %v3497
  %3499 = vmatprep.mubr.f32.mxu0 0.0
  %3500 = vmatmul.mubr.f32.gmra.mrb[0].mxu0 %v190
  %v3501 = vpop.f32.mrb[0].mxu0
  %v3502 = vadd.f32 0.0, %v3501
  %v3503 = vpop.f32.mrb[0].mxu0
  %v3504 = vadd.f32 0.0, %v3503
  %3505 = vmatprep.mubr.f32.mxu0 0.0
  %3506 = vmatmul.mubr.f32.gmra.mrb[0].mxu0 %v193
  %v3507 = vpop.f32.mrb[0].mxu0
  %v3508 = vadd.f32 0.0, %v3507
  %v3509 = vpop.f32.mrb[0].mxu0
  %v3510 = vadd.f32 0.0, %v3509
  %3511 = vmatprep.mubr.f32.mxu0 0.0
  %3512 = vmatmul.mubr.f32.gmra.mrb[0].mxu0 %v196
  %v3513 = vpop.f32.mrb[0].mxu0
  %v3514 = vadd.f32 0.0, %v3513
  %v3515 = vpop.f32.mrb[0].mxu0
  %v3516 = vadd.f32 0.0, %v3515
  %3517 = vmatprep.mubr.f32.mxu0 0.0
  %3518 = vmatmul.mubr.f32.gmra.mrb[0].mxu0 %v1954
  %v3519 = vpop.f32.mrb[0].mxu0
  %v3520 = vadd.f32 0.0, %v3519
  %v3521 = vpop.f32.mrb[0].mxu0
  %v3522 = vadd.f32 0.0, %v3521
  %3523 = vmatprep.mubr.f32.mxu0 0.0
  %3524 = vmatmul.mubr.f32.gmra.mrb[0].mxu0 %v1957
  %v3525 = vpop.f32.mrb[0].mxu0
  %v3526 = vadd.f32 0.0, %v3525
  %v3527 = vpop.f32.mrb[0].mxu0
  %v3528 = vadd.f32 0.0, %v3527
  %3529 = vdwg.mxu0
  %v3530 = vadd.f32 %v3299, %v3448
  %v3531 = vadd.f32 %v3301, %v3450
  %v3532 = vadd.f32 %v3305, %v3454
  %v3533 = vadd.f32 %v3307, %v3456
  %v3534 = vadd.f32 %v3311, %v3460
  %v3535 = vadd.f32 %v3313, %v3462
  %v3536 = vadd.f32 %v3317, %v3466
  %v3537 = vadd.f32 %v3319, %v3468
  %v3538 = vadd.f32 %v3323, %v3472
  %v3539 = vadd.f32 %v3325, %v3474
  %v3540 = vadd.f32 %v3329, %v3478
  %v3541 = vadd.f32 %v3331, %v3480
  %v3542 = vadd.f32 %v3335, %v3484
  %v3543 = vadd.f32 %v3337, %v3486
  %v3544 = vadd.f32 %v3341, %v3490
  %v3545 = vadd.f32 %v3343, %v3492
  %v3546 = vadd.f32 %v3347, %v3496
  %v3547 = vadd.f32 %v3349, %v3498
  %v3548 = vadd.f32 %v3353, %v3502
  %v3549 = vadd.f32 %v3355, %v3504
  %v3550 = vadd.f32 %v3359, %v3508
  %v3551 = vadd.f32 %v3361, %v3510
  %v3552 = vadd.f32 %v3365, %v3514
  %v3553 = vadd.f32 %v3367, %v3516
  %v3554 = vadd.f32 %v3371, %v3520
  %v3555 = vadd.f32 %v3373, %v3522
  %v3556 = vadd.f32 %v3377, %v3526
  %v3557 = vadd.f32 %v3379, %v3528
  %3558 = vmatprep.subr.mxu0 %v784
  %3559 = vmatpush1.msra.mxu0 %v783
  %3560 = vmatprep.subr.mxu0 %v786
  %3561 = vmatpush1.msra.mxu0 %v785
  %3562 = vmatprep.subr.mxu0 %v788
  %3563 = vmatpush1.msra.mxu0 %v787
  %3564 = vmatprep.subr.mxu0 %v790
  %3565 = vmatpush1.msra.mxu0 %v789
  %3566 = vmatprep.subr.mxu0 %v792
  %3567 = vmatpush1.msra.mxu0 %v791
  %3568 = vmatprep.subr.mxu0 %v794
  %3569 = vmatpush1.msra.mxu0 %v793
  %3570 = vmatprep.subr.mxu0 %v796
  %3571 = vmatpush1.msra.mxu0 %v795
  %3572 = vmatprep.subr.mxu0 %v798
  %3573 = vmatpush1.msra.mxu0 %v797
  %3574 = vmatprep.subr.mxu0 %v800
  %3575 = vmatpush1.msra.mxu0 %v799
  %3576 = vmatprep.subr.mxu0 %v802
  %3577 = vmatpush1.msra.mxu0 %v801
  %3578 = vmatprep.subr.mxu0 %v804
  %3579 = vmatpush1.msra.mxu0 %v803
  %3580 = vmatprep.subr.mxu0 %v806
  %3581 = vmatpush1.msra.mxu0 %v805
  %3582 = vmatprep.subr.mxu0 0.0
  %3583 = vmatpush1.msra.mxu0 0.0
  %3584 = vmatprep.subr.mxu0 0.0
  %3585 = vmatpush1.msra.mxu0 0.0
  %3586 = vmatprep.subr.mxu0 0.0
  %3587 = vmatpush1.msra.mxu0 0.0
  %3588 = vmatprep.subr.mxu0 0.0
  %3589 = vmatpush1.msra.mxu0 0.0
  %3590 = vmatprep.subr.mxu0 0.0
  %3591 = vmatpush1.msra.mxu0 0.0
  %3592 = vmatprep.subr.mxu0 0.0
  %3593 = vmatpush1.msra.mxu0 0.0
  %3594 = vmatprep.subr.mxu0 0.0
  %3595 = vmatpush1.msra.mxu0 0.0
  %3596 = vmatprep.subr.mxu0 0.0
  %3597 = vmatpush1.msra.mxu0 0.0
  %3598 = vmatprep.subr.mxu0 0.0
  %3599 = vmatpush1.msra.mxu0 0.0
  %3600 = vmatprep.subr.mxu0 0.0
  %3601 = vmatpush1.msra.mxu0 0.0
  %3602 = vmatprep.subr.mxu0 0.0
  %3603 = vmatpush1.msra.mxu0 0.0
  %3604 = vmatprep.subr.mxu0 0.0
  %3605 = vmatpush1.msra.mxu0 0.0
  %3606 = vmatprep.subr.mxu0 0.0
  %3607 = vmatpush1.msra.mxu0 0.0
  %3608 = vmatprep.subr.mxu0 0.0
  %3609 = vmatpush1.msra.mxu0 0.0
  %3610 = vmatprep.subr.mxu0 0.0
  %3611 = vmatpush1.msra.mxu0 0.0
  %3612 = vmatprep.subr.mxu0 0.0
  %3613 = vmatpush1.msra.mxu0 0.0
  %3614 = vmatprep.subr.mxu0 0.0
  %3615 = vmatpush1.msra.mxu0 0.0
  %3616 = vmatprep.subr.mxu0 0.0
  %3617 = vmatpush1.msra.mxu0 0.0
  %3618 = vmatprep.subr.mxu0 0.0
  %3619 = vmatpush1.msra.mxu0 0.0
  %3620 = vmatprep.subr.mxu0 0.0
  %3621 = vmatpush1.msra.mxu0 0.0
  %3622 = vmatprep.mubr.f32.mxu0 0.0
  %3623 = vmatmul.mubr.f32.gmra.mrb[0].mxu0 %v570
  %v3624 = vpop.f32.mrb[0].mxu0
  %v3625 = vadd.f32 0.0, %v3624
  %v3626 = vpop.f32.mrb[0].mxu0
  %v3627 = vadd.f32 0.0, %v3626
  %3628 = vmatprep.mubr.f32.mxu0 0.0
  %3629 = vmatmul.mubr.f32.gmra.mrb[0].mxu0 %v573
  %v3630 = vpop.f32.mrb[0].mxu0
  %v3631 = vadd.f32 0.0, %v3630
  %v3632 = vpop.f32.mrb[0].mxu0
  %v3633 = vadd.f32 0.0, %v3632
  %3634 = vmatprep.mubr.f32.mxu0 0.0
  %3635 = vmatmul.mubr.f32.gmra.mrb[0].mxu0 %v576
  %v3636 = vpop.f32.mrb[0].mxu0
  %v3637 = vadd.f32 0.0, %v3636
  %v3638 = vpop.f32.mrb[0].mxu0
  %v3639 = vadd.f32 0.0, %v3638
  %3640 = vmatprep.mubr.f32.mxu0 0.0
  %3641 = vmatmul.mubr.f32.gmra.mrb[0].mxu0 %v579
  %v3642 = vpop.f32.mrb[0].mxu0
  %v3643 = vadd.f32 0.0, %v3642
  %v3644 = vpop.f32.mrb[0].mxu0
  %v3645 = vadd.f32 0.0, %v3644
  %3646 = vmatprep.mubr.f32.mxu0 0.0
  %3647 = vmatmul.mubr.f32.gmra.mrb[0].mxu0 %v582
  %v3648 = vpop.f32.mrb[0].mxu0
  %v3649 = vadd.f32 0.0, %v3648
  %v3650 = vpop.f32.mrb[0].mxu0
  %v3651 = vadd.f32 0.0, %v3650
  %3652 = vmatprep.mubr.f32.mxu0 0.0
  %3653 = vmatmul.mubr.f32.gmra.mrb[0].mxu0 %v585
  %v3654 = vpop.f32.mrb[0].mxu0
  %v3655 = vadd.f32 0.0, %v3654
  %v3656 = vpop.f32.mrb[0].mxu0
  %v3657 = vadd.f32 0.0, %v3656
  %3658 = vmatprep.mubr.f32.mxu0 0.0
  %3659 = vmatmul.mubr.f32.gmra.mrb[0].mxu0 %v588
  %v3660 = vpop.f32.mrb[0].mxu0
  %v3661 = vadd.f32 0.0, %v3660
  %v3662 = vpop.f32.mrb[0].mxu0
  %v3663 = vadd.f32 0.0, %v3662
  %3664 = vmatprep.mubr.f32.mxu0 0.0
  %3665 = vmatmul.mubr.f32.gmra.mrb[0].mxu0 %v591
  %v3666 = vpop.f32.mrb[0].mxu0
  %v3667 = vadd.f32 0.0, %v3666
  %v3668 = vpop.f32.mrb[0].mxu0
  %v3669 = vadd.f32 0.0, %v3668
  %3670 = vmatprep.mubr.f32.mxu0 0.0
  %3671 = vmatmul.mubr.f32.gmra.mrb[0].mxu0 %v594
  %v3672 = vpop.f32.mrb[0].mxu0
  %v3673 = vadd.f32 0.0, %v3672
  %v3674 = vpop.f32.mrb[0].mxu0
  %v3675 = vadd.f32 0.0, %v3674
  %3676 = vmatprep.mubr.f32.mxu0 0.0
  %3677 = vmatmul.mubr.f32.gmra.mrb[0].mxu0 %v597
  %v3678 = vpop.f32.mrb[0].mxu0
  %v3679 = vadd.f32 0.0, %v3678
  %v3680 = vpop.f32.mrb[0].mxu0
  %v3681 = vadd.f32 0.0, %v3680
  %3682 = vmatprep.mubr.f32.mxu0 0.0
  %3683 = vmatmul.mubr.f32.gmra.mrb[0].mxu0 %v600
  %v3684 = vpop.f32.mrb[0].mxu0
  %v3685 = vadd.f32 0.0, %v3684
  %v3686 = vpop.f32.mrb[0].mxu0
  %v3687 = vadd.f32 0.0, %v3686
  %3688 = vmatprep.mubr.f32.mxu0 0.0
  %3689 = vmatmul.mubr.f32.gmra.mrb[0].mxu0 %v603
  %v3690 = vpop.f32.mrb[0].mxu0
  %v3691 = vadd.f32 0.0, %v3690
  %v3692 = vpop.f32.mrb[0].mxu0
  %v3693 = vadd.f32 0.0, %v3692
  %3694 = vmatprep.mubr.f32.mxu0 0.0
  %3695 = vmatmul.mubr.f32.gmra.mrb[0].mxu0 %v2845
  %v3696 = vpop.f32.mrb[0].mxu0
  %v3697 = vadd.f32 0.0, %v3696
  %v3698 = vpop.f32.mrb[0].mxu0
  %v3699 = vadd.f32 0.0, %v3698
  %3700 = vmatprep.mubr.f32.mxu0 0.0
  %3701 = vmatmul.mubr.f32.gmra.mrb[0].mxu0 %v2848
  %v3702 = vpop.f32.mrb[0].mxu0
  %v3703 = vadd.f32 0.0, %v3702
  %v3704 = vpop.f32.mrb[0].mxu0
  %v3705 = vadd.f32 0.0, %v3704
  %3706 = vdwg.mxu0
  %v3707 = vadd.f32 %v3530, %v3625
  %v3708 = vadd.f32 %v3531, %v3627
  %v3709 = vadd.f32 %v3532, %v3631
  %v3710 = vadd.f32 %v3533, %v3633
  %v3711 = vadd.f32 %v3534, %v3637
  %v3712 = vadd.f32 %v3535, %v3639
  %v3713 = vadd.f32 %v3536, %v3643
  %v3714 = vadd.f32 %v3537, %v3645
  %v3715 = vadd.f32 %v3538, %v3649
  %v3716 = vadd.f32 %v3539, %v3651
  %v3717 = vadd.f32 %v3540, %v3655
  %v3718 = vadd.f32 %v3541, %v3657
  %v3719 = vadd.f32 %v3542, %v3661
  %v3720 = vadd.f32 %v3543, %v3663
  %v3721 = vadd.f32 %v3544, %v3667
  %v3722 = vadd.f32 %v3545, %v3669
  %v3723 = vadd.f32 %v3546, %v3673
  %v3724 = vadd.f32 %v3547, %v3675
  %v3725 = vadd.f32 %v3548, %v3679
  %v3726 = vadd.f32 %v3549, %v3681
  %v3727 = vadd.f32 %v3550, %v3685
  %v3728 = vadd.f32 %v3551, %v3687
  %v3729 = vadd.f32 %v3552, %v3691
  %v3730 = vadd.f32 %v3553, %v3693
  %v3731 = vadd.f32 %v3554, %v3697
  %v3732 = vadd.f32 %v3555, %v3699
  %v3733 = vadd.f32 %v3556, %v3703
  %v3734 = vadd.f32 %v3557, %v3705
  %v3736 = vsel %vm155, %v103, 0
  %v3739 = vsel %vm155, %v104, 0
  %3741 = vmatprep.subr.mxu0 %v1028
  %3742 = vmatpush1.msra.mxu0 %v1027
  %3743 = vmatprep.subr.mxu0 %v1030
  %3744 = vmatpush1.msra.mxu0 %v1029
  %3745 = vmatprep.subr.mxu0 %v1032
  %3746 = vmatpush1.msra.mxu0 %v1031
  %3747 = vmatprep.subr.mxu0 %v1034
  %3748 = vmatpush1.msra.mxu0 %v1033
  %3749 = vmatprep.subr.mxu0 %v1036
  %3750 = vmatpush1.msra.mxu0 %v1035
  %3751 = vmatprep.subr.mxu0 %v1038
  %3752 = vmatpush1.msra.mxu0 %v1037
  %3753 = vmatprep.subr.mxu0 %v1040
  %3754 = vmatpush1.msra.mxu0 %v1039
  %3755 = vmatprep.subr.mxu0 %v1042
  %3756 = vmatpush1.msra.mxu0 %v1041
  %3757 = vmatprep.subr.mxu0 %v1044
  %3758 = vmatpush1.msra.mxu0 %v1043
  %3759 = vmatprep.subr.mxu0 %v1046
  %3760 = vmatpush1.msra.mxu0 %v1045
  %3761 = vmatprep.subr.mxu0 %v1048
  %3762 = vmatpush1.msra.mxu0 %v1047
  %3763 = vmatprep.subr.mxu0 %v1050
  %3764 = vmatpush1.msra.mxu0 %v1049
  %3765 = vmatprep.subr.mxu0 0.0
  %3766 = vmatpush1.msra.mxu0 0.0
  %3767 = vmatprep.subr.mxu0 0.0
  %3768 = vmatpush1.msra.mxu0 0.0
  %3769 = vmatprep.subr.mxu0 0.0
  %3770 = vmatpush1.msra.mxu0 0.0
  %3771 = vmatprep.subr.mxu0 0.0
  %3772 = vmatpush1.msra.mxu0 0.0
  %3773 = vmatprep.subr.mxu0 0.0
  %3774 = vmatpush1.msra.mxu0 0.0
  %3775 = vmatprep.subr.mxu0 0.0
  %3776 = vmatpush1.msra.mxu0 0.0
  %3777 = vmatprep.subr.mxu0 0.0
  %3778 = vmatpush1.msra.mxu0 0.0
  %3779 = vmatprep.subr.mxu0 0.0
  %3780 = vmatpush1.msra.mxu0 0.0
  %3781 = vmatprep.subr.mxu0 0.0
  %3782 = vmatpush1.msra.mxu0 0.0
  %3783 = vmatprep.subr.mxu0 0.0
  %3784 = vmatpush1.msra.mxu0 0.0
  %3785 = vmatprep.subr.mxu0 0.0
  %3786 = vmatpush1.msra.mxu0 0.0
  %3787 = vmatprep.subr.mxu0 0.0
  %3788 = vmatpush1.msra.mxu0 0.0
  %3789 = vmatprep.subr.mxu0 0.0
  %3790 = vmatpush1.msra.mxu0 0.0
  %3791 = vmatprep.subr.mxu0 0.0
  %3792 = vmatpush1.msra.mxu0 0.0
  %3793 = vmatprep.subr.mxu0 0.0
  %3794 = vmatpush1.msra.mxu0 0.0
  %3795 = vmatprep.subr.mxu0 0.0
  %3796 = vmatpush1.msra.mxu0 0.0
  %3797 = vmatprep.subr.mxu0 0.0
  %3798 = vmatpush1.msra.mxu0 0.0
  %3799 = vmatprep.subr.mxu0 0.0
  %3800 = vmatpush1.msra.mxu0 0.0
  %3801 = vmatprep.subr.mxu0 0.0
  %3802 = vmatpush1.msra.mxu0 0.0
  %3803 = vmatprep.subr.mxu0 0.0
  %3804 = vmatpush1.msra.mxu0 0.0
  %3805 = vmatprep.mubr.f32.mxu0 0.0
  %3806 = vmatmul.mubr.f32.gmra.mrb[0].mxu0 %v814
  %v3807 = vpop.f32.mrb[0].mxu0
  %v3808 = vadd.f32 0.0, %v3807
  %v3809 = vpop.f32.mrb[0].mxu0
  %v3810 = vadd.f32 0.0, %v3809
  %3811 = vmatprep.mubr.f32.mxu0 0.0
  %3812 = vmatmul.mubr.f32.gmra.mrb[0].mxu0 %v817
  %v3813 = vpop.f32.mrb[0].mxu0
  %v3814 = vadd.f32 0.0, %v3813
  %v3815 = vpop.f32.mrb[0].mxu0
  %v3816 = vadd.f32 0.0, %v3815
  %3817 = vmatprep.mubr.f32.mxu0 0.0
  %3818 = vmatmul.mubr.f32.gmra.mrb[0].mxu0 %v820
  %v3819 = vpop.f32.mrb[0].mxu0
  %v3820 = vadd.f32 0.0, %v3819
  %v3821 = vpop.f32.mrb[0].mxu0
  %v3822 = vadd.f32 0.0, %v3821
  %3823 = vmatprep.mubr.f32.mxu0 0.0
  %3824 = vmatmul.mubr.f32.gmra.mrb[0].mxu0 %v823
  %v3825 = vpop.f32.mrb[0].mxu0
  %v3826 = vadd.f32 0.0, %v3825
  %v3827 = vpop.f32.mrb[0].mxu0
  %v3828 = vadd.f32 0.0, %v3827
  %3829 = vmatprep.mubr.f32.mxu0 0.0
  %3830 = vmatmul.mubr.f32.gmra.mrb[0].mxu0 %v826
  %v3831 = vpop.f32.mrb[0].mxu0
  %v3832 = vadd.f32 0.0, %v3831
  %v3833 = vpop.f32.mrb[0].mxu0
  %v3834 = vadd.f32 0.0, %v3833
  %3835 = vmatprep.mubr.f32.mxu0 0.0
  %3836 = vmatmul.mubr.f32.gmra.mrb[0].mxu0 %v829
  %v3837 = vpop.f32.mrb[0].mxu0
  %v3838 = vadd.f32 0.0, %v3837
  %v3839 = vpop.f32.mrb[0].mxu0
  %v3840 = vadd.f32 0.0, %v3839
  %3841 = vmatprep.mubr.f32.mxu0 0.0
  %3842 = vmatmul.mubr.f32.gmra.mrb[0].mxu0 %v832
  %v3843 = vpop.f32.mrb[0].mxu0
  %v3844 = vadd.f32 0.0, %v3843
  %v3845 = vpop.f32.mrb[0].mxu0
  %v3846 = vadd.f32 0.0, %v3845
  %3847 = vmatprep.mubr.f32.mxu0 0.0
  %3848 = vmatmul.mubr.f32.gmra.mrb[0].mxu0 %v835
  %v3849 = vpop.f32.mrb[0].mxu0
  %v3850 = vadd.f32 0.0, %v3849
  %v3851 = vpop.f32.mrb[0].mxu0
  %v3852 = vadd.f32 0.0, %v3851
  %3853 = vmatprep.mubr.f32.mxu0 0.0
  %3854 = vmatmul.mubr.f32.gmra.mrb[0].mxu0 %v838
  %v3855 = vpop.f32.mrb[0].mxu0
  %v3856 = vadd.f32 0.0, %v3855
  %v3857 = vpop.f32.mrb[0].mxu0
  %v3858 = vadd.f32 0.0, %v3857
  %3859 = vmatprep.mubr.f32.mxu0 0.0
  %3860 = vmatmul.mubr.f32.gmra.mrb[0].mxu0 %v841
  %v3861 = vpop.f32.mrb[0].mxu0
  %v3862 = vadd.f32 0.0, %v3861
  %v3863 = vpop.f32.mrb[0].mxu0
  %v3864 = vadd.f32 0.0, %v3863
  %3865 = vmatprep.mubr.f32.mxu0 0.0
  %3866 = vmatmul.mubr.f32.gmra.mrb[0].mxu0 %v844
  %v3867 = vpop.f32.mrb[0].mxu0
  %v3868 = vadd.f32 0.0, %v3867
  %v3869 = vpop.f32.mrb[0].mxu0
  %v3870 = vadd.f32 0.0, %v3869
  %3871 = vmatprep.mubr.f32.mxu0 0.0
  %3872 = vmatmul.mubr.f32.gmra.mrb[0].mxu0 %v847
  %v3873 = vpop.f32.mrb[0].mxu0
  %v3874 = vadd.f32 0.0, %v3873
  %v3875 = vpop.f32.mrb[0].mxu0
  %v3876 = vadd.f32 0.0, %v3875
  %3877 = vmatprep.mubr.f32.mxu0 0.0
  %3878 = vmatmul.mubr.f32.gmra.mrb[0].mxu0 %v3736
  %v3879 = vpop.f32.mrb[0].mxu0
  %v3880 = vadd.f32 0.0, %v3879
  %v3881 = vpop.f32.mrb[0].mxu0
  %v3882 = vadd.f32 0.0, %v3881
  %3883 = vmatprep.mubr.f32.mxu0 0.0
  %3884 = vmatmul.mubr.f32.gmra.mrb[0].mxu0 %v3739
  %v3885 = vpop.f32.mrb[0].mxu0
  %v3886 = vadd.f32 0.0, %v3885
  %v3887 = vpop.f32.mrb[0].mxu0
  %v3888 = vadd.f32 0.0, %v3887
  %3889 = vdwg.mxu0
  %v3890 = vadd.f32 %v3707, %v3808
  %v3891 = vadd.f32 %v3708, %v3810
  %v3892 = vadd.f32 %v3709, %v3814
  %v3893 = vadd.f32 %v3710, %v3816
  %v3894 = vadd.f32 %v3711, %v3820
  %v3895 = vadd.f32 %v3712, %v3822
  %v3896 = vadd.f32 %v3713, %v3826
  %v3897 = vadd.f32 %v3714, %v3828
  %v3898 = vadd.f32 %v3715, %v3832
  %v3899 = vadd.f32 %v3716, %v3834
  %v3900 = vadd.f32 %v3717, %v3838
  %v3901 = vadd.f32 %v3718, %v3840
  %v3902 = vadd.f32 %v3719, %v3844
  %v3903 = vadd.f32 %v3720, %v3846
  %v3904 = vadd.f32 %v3721, %v3850
  %v3905 = vadd.f32 %v3722, %v3852
  %v3906 = vadd.f32 %v3723, %v3856
  %v3907 = vadd.f32 %v3724, %v3858
  %v3908 = vadd.f32 %v3725, %v3862
  %v3909 = vadd.f32 %v3726, %v3864
  %v3910 = vadd.f32 %v3727, %v3868
  %v3911 = vadd.f32 %v3728, %v3870
  %v3912 = vadd.f32 %v3729, %v3874
  %v3913 = vadd.f32 %v3730, %v3876
  %v3914 = vadd.f32 %v3731, %v3880
  %v3915 = vadd.f32 %v3732, %v3882
  %v3916 = vadd.f32 %v3733, %v3886
  %v3917 = vadd.f32 %v3734, %v3888
  %v3918 = vadd.f32 %v3890, %v1238
  %v3919 = vadd.f32 %v3891, %v1242
  %v3920 = vadd.f32 %v3892, %v1238
  %v3921 = vadd.f32 %v3893, %v1242
  %v3922 = vadd.f32 %v3894, %v1238
  %v3923 = vadd.f32 %v3895, %v1242
  %v3924 = vadd.f32 %v3896, %v1238
  %v3925 = vadd.f32 %v3897, %v1242
  %v3926 = vadd.f32 %v3898, %v1238
  %v3927 = vadd.f32 %v3899, %v1242
  %v3928 = vadd.f32 %v3900, %v1238
  %v3929 = vadd.f32 %v3901, %v1242
  %v3930 = vadd.f32 %v3902, %v1238
  %v3931 = vadd.f32 %v3903, %v1242
  %v3932 = vadd.f32 %v3904, %v1238
  %v3933 = vadd.f32 %v3905, %v1242
  %v3934 = vadd.f32 %v3906, %v1238
  %v3935 = vadd.f32 %v3907, %v1242
  %v3936 = vadd.f32 %v3908, %v1238
  %v3937 = vadd.f32 %v3909, %v1242
  %v3938 = vadd.f32 %v3910, %v1238
  %v3939 = vadd.f32 %v3911, %v1242
  %v3940 = vadd.f32 %v3912, %v1238
  %v3941 = vadd.f32 %v3913, %v1242
  %v3942 = vadd.f32 %v3914, %v1238
  %v3943 = vadd.f32 %v3915, %v1242
  %v3944 = vadd.f32 %v3916, %v1238
  %v3945 = vadd.f32 %v3917, %v1242
  %v3946 = vmax.f32 %v3918, 0.0
  %v3947 = vmax.f32 %v3919, 0.0
  %v3948 = vmax.f32 %v3920, 0.0
  %v3949 = vmax.f32 %v3921, 0.0
  %v3950 = vmax.f32 %v3922, 0.0
  %v3951 = vmax.f32 %v3923, 0.0
  %v3952 = vmax.f32 %v3924, 0.0
  %v3953 = vmax.f32 %v3925, 0.0
  %v3954 = vmax.f32 %v3926, 0.0
  %v3955 = vmax.f32 %v3927, 0.0
  %v3956 = vmax.f32 %v3928, 0.0
  %v3957 = vmax.f32 %v3929, 0.0
  %v3958 = vmax.f32 %v3930, 0.0
  %v3959 = vmax.f32 %v3931, 0.0
  %v3960 = vmax.f32 %v3932, 0.0
  %v3961 = vmax.f32 %v3933, 0.0
  %v3962 = vmax.f32 %v3934, 0.0
  %v3963 = vmax.f32 %v3935, 0.0
  %v3964 = vmax.f32 %v3936, 0.0
  %v3965 = vmax.f32 %v3937, 0.0
  %v3966 = vmax.f32 %v3938, 0.0
  %v3967 = vmax.f32 %v3939, 0.0
  %v3968 = vmax.f32 %v3940, 0.0
  %v3969 = vmax.f32 %v3941, 0.0
  %v3970 = vmax.f32 %v3942, 0.0
  %v3971 = vmax.f32 %v3943, 0.0
  %v3972 = vmax.f32 %v3944, 0.0
  %v3973 = vmax.f32 %v3945, 0.0
  %v3974 = vmax.f32 %v1273, %v2164
  %v3975 = vmax.f32 %v1274, %v2165
  %v3976 = vmax.f32 %v1275, %v2166
  %v3977 = vmax.f32 %v1276, %v2167
  %v3978 = vmax.f32 %v1277, %v2168
  %v3979 = vmax.f32 %v1278, %v2169
  %v3980 = vmax.f32 %v1279, %v2170
  %v3981 = vmax.f32 %v1280, %v2171
  %v3982 = vmax.f32 %v1281, %v2172
  %v3983 = vmax.f32 %v1282, %v2173
  %v3984 = vmax.f32 %v1283, %v2174
  %v3985 = vmax.f32 %v1284, %v2175
  %v3986 = vmax.f32 %v1285, %v2176
  %v3987 = vmax.f32 %v1286, %v2177
  %v3988 = vmax.f32 %v1287, %v2178
  %v3989 = vmax.f32 %v1288, %v2179
  %v3990 = vmax.f32 %v1289, %v2180
  %v3991 = vmax.f32 %v1290, %v2181
  %v3992 = vmax.f32 %v1291, %v2182
  %v3993 = vmax.f32 %v1292, %v2183
  %v3994 = vmax.f32 %v1293, %v2184
  %v3995 = vmax.f32 %v1294, %v2185
  %v3996 = vmax.f32 %v1295, %v2186
  %v3997 = vmax.f32 %v1296, %v2187
  %v3998 = vmax.f32 %v1297, %v2188
  %v3999 = vmax.f32 %v1298, %v2189
  %v4000 = vmax.f32 %v1299, %v2190
  %v4001 = vmax.f32 %v1300, %v2191
  %v4002 = vmax.f32 %v3974, %v3975
  %v4003 = vmax.f32 %v3976, %v3977
  %v4004 = vmax.f32 %v3978, %v3979
  %v4005 = vmax.f32 %v3980, %v3981
  %v4006 = vmax.f32 %v3982, %v3983
  %v4007 = vmax.f32 %v3984, %v3985
  %v4008 = vmax.f32 %v3986, %v3987
  %v4009 = vmax.f32 %v3988, %v3989
  %v4010 = vmax.f32 %v3990, %v3991
  %v4011 = vmax.f32 %v3992, %v3993
  %v4012 = vmax.f32 %v3994, %v3995
  %v4013 = vmax.f32 %v3996, %v3997
  %v4014 = vmax.f32 %v3998, %v3999
  %v4015 = vmax.f32 %v4000, %v4001
  %v4016 = vmax.f32 %v3055, %v3946
  %v4017 = vmax.f32 %v3056, %v3947
  %v4018 = vmax.f32 %v3057, %v3948
  %v4019 = vmax.f32 %v3058, %v3949
  %v4020 = vmax.f32 %v3059, %v3950
  %v4021 = vmax.f32 %v3060, %v3951
  %v4022 = vmax.f32 %v3061, %v3952
  %v4023 = vmax.f32 %v3062, %v3953
  %v4024 = vmax.f32 %v3063, %v3954
  %v4025 = vmax.f32 %v3064, %v3955
  %v4026 = vmax.f32 %v3065, %v3956
  %v4027 = vmax.f32 %v3066, %v3957
  %v4028 = vmax.f32 %v3067, %v3958
  %v4029 = vmax.f32 %v3068, %v3959
  %v4030 = vmax.f32 %v3069, %v3960
  %v4031 = vmax.f32 %v3070, %v3961
  %v4032 = vmax.f32 %v3071, %v3962
  %v4033 = vmax.f32 %v3072, %v3963
  %v4034 = vmax.f32 %v3073, %v3964
  %v4035 = vmax.f32 %v3074, %v3965
  %v4036 = vmax.f32 %v3075, %v3966
  %v4037 = vmax.f32 %v3076, %v3967
  %v4038 = vmax.f32 %v3077, %v3968
  %v4039 = vmax.f32 %v3078, %v3969
  %v4040 = vmax.f32 %v3079, %v3970
  %v4041 = vmax.f32 %v3080, %v3971
  %v4042 = vmax.f32 %v3081, %v3972
  %v4043 = vmax.f32 %v3082, %v3973
  %v4044 = vmax.f32 %v4016, %v4017
  %v4045 = vmax.f32 %v4018, %v4019
  %v4046 = vmax.f32 %v4020, %v4021
  %v4047 = vmax.f32 %v4022, %v4023
  %v4048 = vmax.f32 %v4024, %v4025
  %v4049 = vmax.f32 %v4026, %v4027
  %v4050 = vmax.f32 %v4028, %v4029
  %v4051 = vmax.f32 %v4030, %v4031
  %v4052 = vmax.f32 %v4032, %v4033
  %v4053 = vmax.f32 %v4034, %v4035
  %v4054 = vmax.f32 %v4036, %v4037
  %v4055 = vmax.f32 %v4038, %v4039
  %v4056 = vmax.f32 %v4040, %v4041
  %v4057 = vmax.f32 %v4042, %v4043
  %v4058 = vld [vmem:[%s4] sm:$0x3]
  %v4059 = vld [vmem:[%s3] sm:$0xff]
  %v4060 = vld [vmem:[%s3 + $0x8] sm:$0xff]
  %v4061 = vld [vmem:[%s3 + $0x10] sm:$0xff]
  %v4062 = vld [vmem:[%s3 + $0x18] sm:$0xff]
  %v4063 = vld [vmem:[%s3 + $0x20] sm:$0xff]
  %v4064 = vld [vmem:[%s3 + $0x28] sm:$0xff]
  %v4065 = vld [vmem:[%s3 + $0x30] sm:$0xff]
  %v4066 = vld [vmem:[%s3 + $0x38] sm:$0xff]
  %v4067 = vld [vmem:[%s3 + $0x40] sm:$0xff]
  %v4068 = vld [vmem:[%s3 + $0x48] sm:$0xff]
  %v4069 = vld [vmem:[%s3 + $0x50] sm:$0xff]
  %v4070 = vld [vmem:[%s3 + $0x58] sm:$0xff]
  %v4071 = vld [vmem:[%s3 + $0x60] sm:$0xff]
  %v4072 = vld [vmem:[%s3 + $0x68] sm:$0xff]
  %v4073 = vld [vmem:[%s3 + $0x70] sm:$0xff]
  %v4074 = vld [vmem:[%s3 + $0x78] sm:$0xff]
  %v4075 = vld [vmem:[%s3 + $0x80] sm:$0xff]
  %v4076 = vld [vmem:[%s3 + $0x88] sm:$0xff]
  %v4077 = vld [vmem:[%s3 + $0x90] sm:$0xff]
  %v4078 = vld [vmem:[%s3 + $0x98] sm:$0xff]
  %v4079 = vld [vmem:[%s3 + $0xa0] sm:$0xff]
  %v4080 = vld [vmem:[%s3 + $0xa8] sm:$0xff]
  %v4081 = vld [vmem:[%s3 + $0xb0] sm:$0xff]
  %v4082 = vld [vmem:[%s3 + $0xb8] sm:$0xff]
  %v4083 = vld [vmem:[%s3 + $0xc0] sm:$0xff]
  %v4084 = vld [vmem:[%s3 + $0xc8] sm:$0xff]
  %v4085 = vld [vmem:[%s3 + $0xd0] sm:$0xff]
  %v4086 = vld [vmem:[%s3 + $0xd8] sm:$0xff]
  %v4087 = vld [vmem:[%s3 + $0xe0] sm:$0xff]
  %v4088 = vld [vmem:[%s3 + $0xe8] sm:$0xff]
  %v4089 = vld [vmem:[%s3 + $0xf0] sm:$0xff]
  %v4090 = vld [vmem:[%s3 + $0xf8] sm:$0xff]
  %s4091 = scalar_lea.vmem %s3, 256
  %v4092 = vld [vmem:[%s4091] sm:$0xff]
  %v4093 = vld [vmem:[%s4091 + $0x8] sm:$0xff]
  %v4094 = vld [vmem:[%s4091 + $0x10] sm:$0xff]
  %v4095 = vld [vmem:[%s4091 + $0x18] sm:$0xff]
  %v4096 = vld [vmem:[%s4091 + $0x20] sm:$0xff]
  %v4097 = vld [vmem:[%s4091 + $0x28] sm:$0xff]
  %v4098 = vld [vmem:[%s4091 + $0x30] sm:$0xff]
  %v4099 = vld [vmem:[%s4091 + $0x38] sm:$0xff]
  %v4100 = vld [vmem:[%s4091 + $0x40] sm:$0xff]
  %v4101 = vld [vmem:[%s4091 + $0x48] sm:$0xff]
  %v4102 = vld [vmem:[%s4091 + $0x50] sm:$0xff]
  %v4103 = vld [vmem:[%s4091 + $0x58] sm:$0xff]
  %v4104 = vld [vmem:[%s4091 + $0x60] sm:$0xff]
  %v4105 = vld [vmem:[%s4091 + $0x68] sm:$0xff]
  %v4106 = vld [vmem:[%s4091 + $0x70] sm:$0xff]
  %v4107 = vld [vmem:[%s4091 + $0x78] sm:$0xff]
  %v4108 = vld [vmem:[%s4091 + $0x80] sm:$0xff]
  %v4109 = vld [vmem:[%s4091 + $0x88] sm:$0xff]
  %v4110 = vld [vmem:[%s4091 + $0x90] sm:$0xff]
  %v4111 = vld [vmem:[%s4091 + $0x98] sm:$0xff]
  %v4112 = vld [vmem:[%s4091 + $0xa0] sm:$0xff]
  %v4113 = vld [vmem:[%s4091 + $0xa8] sm:$0xff]
  %v4114 = vld [vmem:[%s4091 + $0xb0] sm:$0xff]
  %v4115 = vld [vmem:[%s4091 + $0xb8] sm:$0xff]
  %v4116 = vld [vmem:[%s4091 + $0xc0] sm:$0xff]
  %v4117 = vld [vmem:[%s4091 + $0xc8] sm:$0xff]
  %v4118 = vld [vmem:[%s4091 + $0xd0] sm:$0xff]
  %v4119 = vld [vmem:[%s4091 + $0xd8] sm:$0xff]
  %v4120 = vld [vmem:[%s4091 + $0xe0] sm:$0xff]
  %v4121 = vld [vmem:[%s4091 + $0xe8] sm:$0xff]
  %v4122 = vld [vmem:[%s4091 + $0xf0] sm:$0xff]
  %v4123 = vld [vmem:[%s4091 + $0xf8] sm:$0xff]
  %4124 = vmatprep.subr.mxu0 %v4093
  %4125 = vmatpush1.msra.mxu0 %v4092
  %4126 = vmatprep.subr.mxu0 %v4095
  %4127 = vmatpush1.msra.mxu0 %v4094
  %4128 = vmatprep.subr.mxu0 %v4097
  %4129 = vmatpush1.msra.mxu0 %v4096
  %4130 = vmatprep.subr.mxu0 %v4099
  %4131 = vmatpush1.msra.mxu0 %v4098
  %4132 = vmatprep.subr.mxu0 %v4101
  %4133 = vmatpush1.msra.mxu0 %v4100
  %4134 = vmatprep.subr.mxu0 %v4103
  %4135 = vmatpush1.msra.mxu0 %v4102
  %4136 = vmatprep.subr.mxu0 %v4105
  %4137 = vmatpush1.msra.mxu0 %v4104
  %4138 = vmatprep.subr.mxu0 %v4107
  %4139 = vmatpush1.msra.mxu0 %v4106
  %4140 = vmatprep.subr.mxu0 %v4109
  %4141 = vmatpush1.msra.mxu0 %v4108
  %4142 = vmatprep.subr.mxu0 %v4111
  %4143 = vmatpush1.msra.mxu0 %v4110
  %4144 = vmatprep.subr.mxu0 %v4113
  %4145 = vmatpush1.msra.mxu0 %v4112
  %4146 = vmatprep.subr.mxu0 %v4115
  %4147 = vmatpush1.msra.mxu0 %v4114
  %4148 = vmatprep.subr.mxu0 %v4117
  %4149 = vmatpush1.msra.mxu0 %v4116
  %4150 = vmatprep.subr.mxu0 %v4119
  %4151 = vmatpush1.msra.mxu0 %v4118
  %4152 = vmatprep.subr.mxu0 %v4121
  %4153 = vmatpush1.msra.mxu0 %v4120
  %4154 = vmatprep.subr.mxu0 %v4123
  %4155 = vmatpush1.msra.mxu0 %v4122
  %4156 = vmatprep.subr.mxu0 0.0
  %4157 = vmatpush1.msra.mxu0 0.0
  %4158 = vmatprep.subr.mxu0 0.0
  %4159 = vmatpush1.msra.mxu0 0.0
  %4160 = vmatprep.subr.mxu0 0.0
  %4161 = vmatpush1.msra.mxu0 0.0
  %4162 = vmatprep.subr.mxu0 0.0
  %4163 = vmatpush1.msra.mxu0 0.0
  %4164 = vmatprep.subr.mxu0 0.0
  %4165 = vmatpush1.msra.mxu0 0.0
  %4166 = vmatprep.subr.mxu0 0.0
  %4167 = vmatpush1.msra.mxu0 0.0
  %4168 = vmatprep.subr.mxu0 0.0
  %4169 = vmatpush1.msra.mxu0 0.0
  %4170 = vmatprep.subr.mxu0 0.0
  %4171 = vmatpush1.msra.mxu0 0.0
  %4172 = vmatprep.subr.mxu0 0.0
  %4173 = vmatpush1.msra.mxu0 0.0
  %4174 = vmatprep.subr.mxu0 0.0
  %4175 = vmatpush1.msra.mxu0 0.0
  %4176 = vmatprep.subr.mxu0 0.0
  %4177 = vmatpush1.msra.mxu0 0.0
  %4178 = vmatprep.subr.mxu0 0.0
  %4179 = vmatpush1.msra.mxu0 0.0
  %4180 = vmatprep.subr.mxu0 0.0
  %4181 = vmatpush1.msra.mxu0 0.0
  %4182 = vmatprep.subr.mxu0 0.0
  %4183 = vmatpush1.msra.mxu0 0.0
  %4184 = vmatprep.subr.mxu0 0.0
  %4185 = vmatpush1.msra.mxu0 0.0
  %4186 = vmatprep.subr.mxu0 0.0
  %4187 = vmatpush1.msra.mxu0 0.0
  %4188 = vmatprep.mubr.f32.mxu0 0.0
  %4189 = vmatmul.mubr.f32.gmra.mrb[0].mxu0 %v4044
  %v4190 = vpop.f32.mrb[0].mxu0
  %v4191 = vadd.f32 0.0, %v4190
  %v4192 = vpop.f32.mrb[0].mxu0
  %v4193 = vadd.f32 0.0, %v4192
  %4194 = vmatprep.mubr.f32.mxu0 0.0
  %4195 = vmatmul.mubr.f32.gmra.mrb[0].mxu0 %v4045
  %v4196 = vpop.f32.mrb[0].mxu0
  %v4197 = vadd.f32 0.0, %v4196
  %v4198 = vpop.f32.mrb[0].mxu0
  %v4199 = vadd.f32 0.0, %v4198
  %4200 = vmatprep.mubr.f32.mxu0 0.0
  %4201 = vmatmul.mubr.f32.gmra.mrb[0].mxu0 %v4046
  %v4202 = vpop.f32.mrb[0].mxu0
  %v4203 = vadd.f32 0.0, %v4202
  %v4204 = vpop.f32.mrb[0].mxu0
  %v4205 = vadd.f32 0.0, %v4204
  %4206 = vmatprep.mubr.f32.mxu0 0.0
  %4207 = vmatmul.mubr.f32.gmra.mrb[0].mxu0 %v4047
  %v4208 = vpop.f32.mrb[0].mxu0
  %v4209 = vadd.f32 0.0, %v4208
  %v4210 = vpop.f32.mrb[0].mxu0
  %v4211 = vadd.f32 0.0, %v4210
  %4212 = vmatprep.mubr.f32.mxu0 0.0
  %4213 = vmatmul.mubr.f32.gmra.mrb[0].mxu0 %v4048
  %v4214 = vpop.f32.mrb[0].mxu0
  %v4215 = vadd.f32 0.0, %v4214
  %v4216 = vpop.f32.mrb[0].mxu0
  %v4217 = vadd.f32 0.0, %v4216
  %4218 = vmatprep.mubr.f32.mxu0 0.0
  %4219 = vmatmul.mubr.f32.gmra.mrb[0].mxu0 %v4049
  %v4220 = vpop.f32.mrb[0].mxu0
  %v4221 = vadd.f32 0.0, %v4220
  %v4222 = vpop.f32.mrb[0].mxu0
  %v4223 = vadd.f32 0.0, %v4222
  %4224 = vmatprep.mubr.f32.mxu0 0.0
  %4225 = vmatmul.mubr.f32.gmra.mrb[0].mxu0 %v4050
  %v4226 = vpop.f32.mrb[0].mxu0
  %v4227 = vadd.f32 0.0, %v4226
  %v4228 = vpop.f32.mrb[0].mxu0
  %v4229 = vadd.f32 0.0, %v4228
  %4230 = vmatprep.mubr.f32.mxu0 0.0
  %4231 = vmatmul.mubr.f32.gmra.mrb[0].mxu0 %v4051
  %v4232 = vpop.f32.mrb[0].mxu0
  %v4233 = vadd.f32 0.0, %v4232
  %v4234 = vpop.f32.mrb[0].mxu0
  %v4235 = vadd.f32 0.0, %v4234
  %4236 = vmatprep.mubr.f32.mxu0 0.0
  %4237 = vmatmul.mubr.f32.gmra.mrb[0].mxu0 %v4052
  %v4238 = vpop.f32.mrb[0].mxu0
  %v4239 = vadd.f32 0.0, %v4238
  %v4240 = vpop.f32.mrb[0].mxu0
  %v4241 = vadd.f32 0.0, %v4240
  %4242 = vmatprep.mubr.f32.mxu0 0.0
  %4243 = vmatmul.mubr.f32.gmra.mrb[0].mxu0 %v4053
  %v4244 = vpop.f32.mrb[0].mxu0
  %v4245 = vadd.f32 0.0, %v4244
  %v4246 = vpop.f32.mrb[0].mxu0
  %v4247 = vadd.f32 0.0, %v4246
  %4248 = vdwg.mxu0
  %4249 = vmatprep.subr.mxu0 %v4060
  %4250 = vmatpush1.msra.mxu0 %v4059
  %4251 = vmatprep.subr.mxu0 %v4062
  %4252 = vmatpush1.msra.mxu0 %v4061
  %4253 = vmatprep.subr.mxu0 %v4064
  %4254 = vmatpush1.msra.mxu0 %v4063
  %4255 = vmatprep.subr.mxu0 %v4066
  %4256 = vmatpush1.msra.mxu0 %v4065
  %4257 = vmatprep.subr.mxu0 %v4068
  %4258 = vmatpush1.msra.mxu0 %v4067
  %4259 = vmatprep.subr.mxu0 %v4070
  %4260 = vmatpush1.msra.mxu0 %v4069
  %4261 = vmatprep.subr.mxu0 %v4072
  %4262 = vmatpush1.msra.mxu0 %v4071
  %4263 = vmatprep.subr.mxu0 %v4074
  %4264 = vmatpush1.msra.mxu0 %v4073
  %4265 = vmatprep.subr.mxu0 %v4076
  %4266 = vmatpush1.msra.mxu0 %v4075
  %4267 = vmatprep.subr.mxu0 %v4078
  %4268 = vmatpush1.msra.mxu0 %v4077
  %4269 = vmatprep.subr.mxu0 %v4080
  %4270 = vmatpush1.msra.mxu0 %v4079
  %4271 = vmatprep.subr.mxu0 %v4082
  %4272 = vmatpush1.msra.mxu0 %v4081
  %4273 = vmatprep.subr.mxu0 %v4084
  %4274 = vmatpush1.msra.mxu0 %v4083
  %4275 = vmatprep.subr.mxu0 %v4086
  %4276 = vmatpush1.msra.mxu0 %v4085
  %4277 = vmatprep.subr.mxu0 %v4088
  %4278 = vmatpush1.msra.mxu0 %v4087
  %4279 = vmatprep.subr.mxu0 %v4090
  %4280 = vmatpush1.msra.mxu0 %v4089
  %4281 = vmatprep.subr.mxu0 0.0
  %4282 = vmatpush1.msra.mxu0 0.0
  %4283 = vmatprep.subr.mxu0 0.0
  %4284 = vmatpush1.msra.mxu0 0.0
  %4285 = vmatprep.subr.mxu0 0.0
  %4286 = vmatpush1.msra.mxu0 0.0
  %4287 = vmatprep.subr.mxu0 0.0
  %4288 = vmatpush1.msra.mxu0 0.0
  %4289 = vmatprep.subr.mxu0 0.0
  %4290 = vmatpush1.msra.mxu0 0.0
  %4291 = vmatprep.subr.mxu0 0.0
  %4292 = vmatpush1.msra.mxu0 0.0
  %4293 = vmatprep.subr.mxu0 0.0
  %4294 = vmatpush1.msra.mxu0 0.0
  %4295 = vmatprep.subr.mxu0 0.0
  %4296 = vmatpush1.msra.mxu0 0.0
  %4297 = vmatprep.subr.mxu0 0.0
  %4298 = vmatpush1.msra.mxu0 0.0
  %4299 = vmatprep.subr.mxu0 0.0
  %4300 = vmatpush1.msra.mxu0 0.0
  %4301 = vmatprep.subr.mxu0 0.0
  %4302 = vmatpush1.msra.mxu0 0.0
  %4303 = vmatprep.subr.mxu0 0.0
  %4304 = vmatpush1.msra.mxu0 0.0
  %4305 = vmatprep.subr.mxu0 0.0
  %4306 = vmatpush1.msra.mxu0 0.0
  %4307 = vmatprep.subr.mxu0 0.0
  %4308 = vmatpush1.msra.mxu0 0.0
  %4309 = vmatprep.subr.mxu0 0.0
  %4310 = vmatpush1.msra.mxu0 0.0
  %4311 = vmatprep.subr.mxu0 0.0
  %4312 = vmatpush1.msra.mxu0 0.0
  %4313 = vmatprep.mubr.f32.mxu0 0.0
  %4314 = vmatmul.mubr.f32.gmra.mrb[0].mxu0 %v4002
  %v4315 = vpop.f32.mrb[0].mxu0
  %v4316 = vadd.f32 %v4191, %v4315
  %v4317 = vpop.f32.mrb[0].mxu0
  %v4318 = vadd.f32 %v4193, %v4317
  %4319 = vmatprep.mubr.f32.mxu0 0.0
  %4320 = vmatmul.mubr.f32.gmra.mrb[0].mxu0 %v4003
  %v4321 = vpop.f32.mrb[0].mxu0
  %v4322 = vadd.f32 %v4197, %v4321
  %v4323 = vpop.f32.mrb[0].mxu0
  %v4324 = vadd.f32 %v4199, %v4323
  %4325 = vmatprep.mubr.f32.mxu0 0.0
  %4326 = vmatmul.mubr.f32.gmra.mrb[0].mxu0 %v4004
  %v4327 = vpop.f32.mrb[0].mxu0
  %v4328 = vadd.f32 %v4203, %v4327
  %v4329 = vpop.f32.mrb[0].mxu0
  %v4330 = vadd.f32 %v4205, %v4329
  %4331 = vmatprep.mubr.f32.mxu0 0.0
  %4332 = vmatmul.mubr.f32.gmra.mrb[0].mxu0 %v4005
  %v4333 = vpop.f32.mrb[0].mxu0
  %v4334 = vadd.f32 %v4209, %v4333
  %v4335 = vpop.f32.mrb[0].mxu0
  %v4336 = vadd.f32 %v4211, %v4335
  %4337 = vmatprep.mubr.f32.mxu0 0.0
  %4338 = vmatmul.mubr.f32.gmra.mrb[0].mxu0 %v4006
  %v4339 = vpop.f32.mrb[0].mxu0
  %v4340 = vadd.f32 %v4215, %v4339
  %v4341 = vpop.f32.mrb[0].mxu0
  %v4342 = vadd.f32 %v4217, %v4341
  %4343 = vmatprep.mubr.f32.mxu0 0.0
  %4344 = vmatmul.mubr.f32.gmra.mrb[0].mxu0 %v4007
  %v4345 = vpop.f32.mrb[0].mxu0
  %v4346 = vadd.f32 %v4221, %v4345
  %v4347 = vpop.f32.mrb[0].mxu0
  %v4348 = vadd.f32 %v4223, %v4347
  %4349 = vmatprep.mubr.f32.mxu0 0.0
  %4350 = vmatmul.mubr.f32.gmra.mrb[0].mxu0 %v4008
  %v4351 = vpop.f32.mrb[0].mxu0
  %v4352 = vadd.f32 %v4227, %v4351
  %v4353 = vpop.f32.mrb[0].mxu0
  %v4354 = vadd.f32 %v4229, %v4353
  %4355 = vmatprep.mubr.f32.mxu0 0.0
  %4356 = vmatmul.mubr.f32.gmra.mrb[0].mxu0 %v4009
  %v4357 = vpop.f32.mrb[0].mxu0
  %v4358 = vadd.f32 %v4233, %v4357
  %v4359 = vpop.f32.mrb[0].mxu0
  %v4360 = vadd.f32 %v4235, %v4359
  %4361 = vmatprep.mubr.f32.mxu0 0.0
  %4362 = vmatmul.mubr.f32.gmra.mrb[0].mxu0 %v4010
  %v4363 = vpop.f32.mrb[0].mxu0
  %v4364 = vadd.f32 %v4239, %v4363
  %v4365 = vpop.f32.mrb[0].mxu0
  %v4366 = vadd.f32 %v4241, %v4365
  %4367 = vmatprep.mubr.f32.mxu0 0.0
  %4368 = vmatmul.mubr.f32.gmra.mrb[0].mxu0 %v4011
  %v4369 = vpop.f32.mrb[0].mxu0
  %v4370 = vadd.f32 %v4245, %v4369
  %v4371 = vpop.f32.mrb[0].mxu0
  %v4372 = vadd.f32 %v4247, %v4371
  %4373 = vdwg.mxu0
  %s4374 = scalar_lea.vmem %s3, 512
  %v4375 = vld [vmem:[%s4374] sm:$0xff]
  %v4376 = vld [vmem:[%s4374 + $0x8] sm:$0xff]
  %v4377 = vld [vmem:[%s4374 + $0x10] sm:$0xff]
  %v4378 = vld [vmem:[%s4374 + $0x18] sm:$0xff]
  %v4379 = vld [vmem:[%s4374 + $0x20] sm:$0xff]
  %v4380 = vld [vmem:[%s4374 + $0x28] sm:$0xff]
  %v4381 = vld [vmem:[%s4374 + $0x30] sm:$0xff]
  %v4382 = vld [vmem:[%s4374 + $0x38] sm:$0xff]
  %v4383 = vld [vmem:[%s4374 + $0x40] sm:$0xff]
  %v4384 = vld [vmem:[%s4374 + $0x48] sm:$0xff]
  %v4385 = vld [vmem:[%s4374 + $0x50] sm:$0xff]
  %v4386 = vld [vmem:[%s4374 + $0x58] sm:$0xff]
  %v4387 = vld [vmem:[%s4374 + $0x60] sm:$0xff]
  %v4388 = vld [vmem:[%s4374 + $0x68] sm:$0xff]
  %v4389 = vld [vmem:[%s4374 + $0x70] sm:$0xff]
  %v4390 = vld [vmem:[%s4374 + $0x78] sm:$0xff]
  %v4391 = vld [vmem:[%s4374 + $0x80] sm:$0xff]
  %v4392 = vld [vmem:[%s4374 + $0x88] sm:$0xff]
  %v4393 = vld [vmem:[%s4374 + $0x90] sm:$0xff]
  %v4394 = vld [vmem:[%s4374 + $0x98] sm:$0xff]
  %v4395 = vld [vmem:[%s4374 + $0xa0] sm:$0xff]
  %v4396 = vld [vmem:[%s4374 + $0xa8] sm:$0xff]
  %v4397 = vld [vmem:[%s4374 + $0xb0] sm:$0xff]
  %v4398 = vld [vmem:[%s4374 + $0xb8] sm:$0xff]
  %v4399 = vld [vmem:[%s4374 + $0xc0] sm:$0xff]
  %v4400 = vld [vmem:[%s4374 + $0xc8] sm:$0xff]
  %v4401 = vld [vmem:[%s4374 + $0xd0] sm:$0xff]
  %v4402 = vld [vmem:[%s4374 + $0xd8] sm:$0xff]
  %v4403 = vld [vmem:[%s4374 + $0xe0] sm:$0xff]
  %v4404 = vld [vmem:[%s4374 + $0xe8] sm:$0xff]
  %v4405 = vld [vmem:[%s4374 + $0xf0] sm:$0xff]
  %v4406 = vld [vmem:[%s4374 + $0xf8] sm:$0xff]
  %4407 = vmatprep.subr.mxu0 %v4376
  %4408 = vmatpush1.msra.mxu0 %v4375
  %4409 = vmatprep.subr.mxu0 %v4378
  %4410 = vmatpush1.msra.mxu0 %v4377
  %4411 = vmatprep.subr.mxu0 %v4380
  %4412 = vmatpush1.msra.mxu0 %v4379
  %4413 = vmatprep.subr.mxu0 %v4382
  %4414 = vmatpush1.msra.mxu0 %v4381
  %4415 = vmatprep.subr.mxu0 %v4384
  %4416 = vmatpush1.msra.mxu0 %v4383
  %4417 = vmatprep.subr.mxu0 %v4386
  %4418 = vmatpush1.msra.mxu0 %v4385
  %4419 = vmatprep.subr.mxu0 %v4388
  %4420 = vmatpush1.msra.mxu0 %v4387
  %4421 = vmatprep.subr.mxu0 %v4390
  %4422 = vmatpush1.msra.mxu0 %v4389
  %4423 = vmatprep.subr.mxu0 %v4392
  %4424 = vmatpush1.msra.mxu0 %v4391
  %4425 = vmatprep.subr.mxu0 %v4394
  %4426 = vmatpush1.msra.mxu0 %v4393
  %4427 = vmatprep.subr.mxu0 %v4396
  %4428 = vmatpush1.msra.mxu0 %v4395
  %4429 = vmatprep.subr.mxu0 %v4398
  %4430 = vmatpush1.msra.mxu0 %v4397
  %4431 = vmatprep.subr.mxu0 %v4400
  %4432 = vmatpush1.msra.mxu0 %v4399
  %4433 = vmatprep.subr.mxu0 %v4402
  %4434 = vmatpush1.msra.mxu0 %v4401
  %4435 = vmatprep.subr.mxu0 %v4404
  %4436 = vmatpush1.msra.mxu0 %v4403
  %4437 = vmatprep.subr.mxu0 %v4406
  %4438 = vmatpush1.msra.mxu0 %v4405
  %4439 = vmatprep.subr.mxu0 0.0
  %4440 = vmatpush1.msra.mxu0 0.0
  %4441 = vmatprep.subr.mxu0 0.0
  %4442 = vmatpush1.msra.mxu0 0.0
  %4443 = vmatprep.subr.mxu0 0.0
  %4444 = vmatpush1.msra.mxu0 0.0
  %4445 = vmatprep.subr.mxu0 0.0
  %4446 = vmatpush1.msra.mxu0 0.0
  %4447 = vmatprep.subr.mxu0 0.0
  %4448 = vmatpush1.msra.mxu0 0.0
  %4449 = vmatprep.subr.mxu0 0.0
  %4450 = vmatpush1.msra.mxu0 0.0
  %4451 = vmatprep.subr.mxu0 0.0
  %4452 = vmatpush1.msra.mxu0 0.0
  %4453 = vmatprep.subr.mxu0 0.0
  %4454 = vmatpush1.msra.mxu0 0.0
  %4455 = vmatprep.subr.mxu0 0.0
  %4456 = vmatpush1.msra.mxu0 0.0
  %4457 = vmatprep.subr.mxu0 0.0
  %4458 = vmatpush1.msra.mxu0 0.0
  %4459 = vmatprep.subr.mxu0 0.0
  %4460 = vmatpush1.msra.mxu0 0.0
  %4461 = vmatprep.subr.mxu0 0.0
  %4462 = vmatpush1.msra.mxu0 0.0
  %4463 = vmatprep.subr.mxu0 0.0
  %4464 = vmatpush1.msra.mxu0 0.0
  %4465 = vmatprep.subr.mxu0 0.0
  %4466 = vmatpush1.msra.mxu0 0.0
  %4467 = vmatprep.subr.mxu0 0.0
  %4468 = vmatpush1.msra.mxu0 0.0
  %4469 = vmatprep.subr.mxu0 0.0
  %4470 = vmatpush1.msra.mxu0 0.0
  %4471 = vmatprep.mubr.f32.mxu0 0.0
  %4472 = vmatmul.mubr.f32.gmra.mrb[0].mxu0 %v4004
  %v4473 = vpop.f32.mrb[0].mxu0
  %v4474 = vadd.f32 0.0, %v4473
  %v4475 = vpop.f32.mrb[0].mxu0
  %v4476 = vadd.f32 0.0, %v4475
  %4477 = vmatprep.mubr.f32.mxu0 0.0
  %4478 = vmatmul.mubr.f32.gmra.mrb[0].mxu0 %v4005
  %v4479 = vpop.f32.mrb[0].mxu0
  %v4480 = vadd.f32 0.0, %v4479
  %v4481 = vpop.f32.mrb[0].mxu0
  %v4482 = vadd.f32 0.0, %v4481
  %4483 = vmatprep.mubr.f32.mxu0 0.0
  %4484 = vmatmul.mubr.f32.gmra.mrb[0].mxu0 %v4006
  %v4485 = vpop.f32.mrb[0].mxu0
  %v4486 = vadd.f32 0.0, %v4485
  %v4487 = vpop.f32.mrb[0].mxu0
  %v4488 = vadd.f32 0.0, %v4487
  %4489 = vmatprep.mubr.f32.mxu0 0.0
  %4490 = vmatmul.mubr.f32.gmra.mrb[0].mxu0 %v4007
  %v4491 = vpop.f32.mrb[0].mxu0
  %v4492 = vadd.f32 0.0, %v4491
  %v4493 = vpop.f32.mrb[0].mxu0
  %v4494 = vadd.f32 0.0, %v4493
  %4495 = vmatprep.mubr.f32.mxu0 0.0
  %4496 = vmatmul.mubr.f32.gmra.mrb[0].mxu0 %v4008
  %v4497 = vpop.f32.mrb[0].mxu0
  %v4498 = vadd.f32 0.0, %v4497
  %v4499 = vpop.f32.mrb[0].mxu0
  %v4500 = vadd.f32 0.0, %v4499
  %4501 = vmatprep.mubr.f32.mxu0 0.0
  %4502 = vmatmul.mubr.f32.gmra.mrb[0].mxu0 %v4009
  %v4503 = vpop.f32.mrb[0].mxu0
  %v4504 = vadd.f32 0.0, %v4503
  %v4505 = vpop.f32.mrb[0].mxu0
  %v4506 = vadd.f32 0.0, %v4505
  %4507 = vmatprep.mubr.f32.mxu0 0.0
  %4508 = vmatmul.mubr.f32.gmra.mrb[0].mxu0 %v4010
  %v4509 = vpop.f32.mrb[0].mxu0
  %v4510 = vadd.f32 0.0, %v4509
  %v4511 = vpop.f32.mrb[0].mxu0
  %v4512 = vadd.f32 0.0, %v4511
  %4513 = vmatprep.mubr.f32.mxu0 0.0
  %4514 = vmatmul.mubr.f32.gmra.mrb[0].mxu0 %v4011
  %v4515 = vpop.f32.mrb[0].mxu0
  %v4516 = vadd.f32 0.0, %v4515
  %v4517 = vpop.f32.mrb[0].mxu0
  %v4518 = vadd.f32 0.0, %v4517
  %4519 = vmatprep.mubr.f32.mxu0 0.0
  %4520 = vmatmul.mubr.f32.gmra.mrb[0].mxu0 %v4012
  %v4521 = vpop.f32.mrb[0].mxu0
  %v4522 = vadd.f32 0.0, %v4521
  %v4523 = vpop.f32.mrb[0].mxu0
  %v4524 = vadd.f32 0.0, %v4523
  %4525 = vmatprep.mubr.f32.mxu0 0.0
  %4526 = vmatmul.mubr.f32.gmra.mrb[0].mxu0 %v4013
  %v4527 = vpop.f32.mrb[0].mxu0
  %v4528 = vadd.f32 0.0, %v4527
  %v4529 = vpop.f32.mrb[0].mxu0
  %v4530 = vadd.f32 0.0, %v4529
  %4531 = vdwg.mxu0
  %v4532 = vadd.f32 %v4316, %v4474
  %v4533 = vadd.f32 %v4318, %v4476
  %v4534 = vadd.f32 %v4322, %v4480
  %v4535 = vadd.f32 %v4324, %v4482
  %v4536 = vadd.f32 %v4328, %v4486
  %v4537 = vadd.f32 %v4330, %v4488
  %v4538 = vadd.f32 %v4334, %v4492
  %v4539 = vadd.f32 %v4336, %v4494
  %v4540 = vadd.f32 %v4340, %v4498
  %v4541 = vadd.f32 %v4342, %v4500
  %v4542 = vadd.f32 %v4346, %v4504
  %v4543 = vadd.f32 %v4348, %v4506
  %v4544 = vadd.f32 %v4352, %v4510
  %v4545 = vadd.f32 %v4354, %v4512
  %v4546 = vadd.f32 %v4358, %v4516
  %v4547 = vadd.f32 %v4360, %v4518
  %v4548 = vadd.f32 %v4364, %v4522
  %v4549 = vadd.f32 %v4366, %v4524
  %v4550 = vadd.f32 %v4370, %v4528
  %v4551 = vadd.f32 %v4372, %v4530
  %s4552 = scalar_lea.vmem %s3, 768
  %v4553 = vld [vmem:[%s4552] sm:$0xff]
  %v4554 = vld [vmem:[%s4552 + $0x8] sm:$0xff]
  %v4555 = vld [vmem:[%s4552 + $0x10] sm:$0xff]
  %v4556 = vld [vmem:[%s4552 + $0x18] sm:$0xff]
  %v4557 = vld [vmem:[%s4552 + $0x20] sm:$0xff]
  %v4558 = vld [vmem:[%s4552 + $0x28] sm:$0xff]
  %v4559 = vld [vmem:[%s4552 + $0x30] sm:$0xff]
  %v4560 = vld [vmem:[%s4552 + $0x38] sm:$0xff]
  %v4561 = vld [vmem:[%s4552 + $0x40] sm:$0xff]
  %v4562 = vld [vmem:[%s4552 + $0x48] sm:$0xff]
  %v4563 = vld [vmem:[%s4552 + $0x50] sm:$0xff]
  %v4564 = vld [vmem:[%s4552 + $0x58] sm:$0xff]
  %v4565 = vld [vmem:[%s4552 + $0x60] sm:$0xff]
  %v4566 = vld [vmem:[%s4552 + $0x68] sm:$0xff]
  %v4567 = vld [vmem:[%s4552 + $0x70] sm:$0xff]
  %v4568 = vld [vmem:[%s4552 + $0x78] sm:$0xff]
  %v4569 = vld [vmem:[%s4552 + $0x80] sm:$0xff]
  %v4570 = vld [vmem:[%s4552 + $0x88] sm:$0xff]
  %v4571 = vld [vmem:[%s4552 + $0x90] sm:$0xff]
  %v4572 = vld [vmem:[%s4552 + $0x98] sm:$0xff]
  %v4573 = vld [vmem:[%s4552 + $0xa0] sm:$0xff]
  %v4574 = vld [vmem:[%s4552 + $0xa8] sm:$0xff]
  %v4575 = vld [vmem:[%s4552 + $0xb0] sm:$0xff]
  %v4576 = vld [vmem:[%s4552 + $0xb8] sm:$0xff]
  %v4577 = vld [vmem:[%s4552 + $0xc0] sm:$0xff]
  %v4578 = vld [vmem:[%s4552 + $0xc8] sm:$0xff]
  %v4579 = vld [vmem:[%s4552 + $0xd0] sm:$0xff]
  %v4580 = vld [vmem:[%s4552 + $0xd8] sm:$0xff]
  %v4581 = vld [vmem:[%s4552 + $0xe0] sm:$0xff]
  %v4582 = vld [vmem:[%s4552 + $0xe8] sm:$0xff]
  %v4583 = vld [vmem:[%s4552 + $0xf0] sm:$0xff]
  %v4584 = vld [vmem:[%s4552 + $0xf8] sm:$0xff]
  %4585 = vmatprep.subr.mxu0 %v4554
  %4586 = vmatpush1.msra.mxu0 %v4553
  %4587 = vmatprep.subr.mxu0 %v4556
  %4588 = vmatpush1.msra.mxu0 %v4555
  %4589 = vmatprep.subr.mxu0 %v4558
  %4590 = vmatpush1.msra.mxu0 %v4557
  %4591 = vmatprep.subr.mxu0 %v4560
  %4592 = vmatpush1.msra.mxu0 %v4559
  %4593 = vmatprep.subr.mxu0 %v4562
  %4594 = vmatpush1.msra.mxu0 %v4561
  %4595 = vmatprep.subr.mxu0 %v4564
  %4596 = vmatpush1.msra.mxu0 %v4563
  %4597 = vmatprep.subr.mxu0 %v4566
  %4598 = vmatpush1.msra.mxu0 %v4565
  %4599 = vmatprep.subr.mxu0 %v4568
  %4600 = vmatpush1.msra.mxu0 %v4567
  %4601 = vmatprep.subr.mxu0 %v4570
  %4602 = vmatpush1.msra.mxu0 %v4569
  %4603 = vmatprep.subr.mxu0 %v4572
  %4604 = vmatpush1.msra.mxu0 %v4571
  %4605 = vmatprep.subr.mxu0 %v4574
  %4606 = vmatpush1.msra.mxu0 %v4573
  %4607 = vmatprep.subr.mxu0 %v4576
  %4608 = vmatpush1.msra.mxu0 %v4575
  %4609 = vmatprep.subr.mxu0 %v4578
  %4610 = vmatpush1.msra.mxu0 %v4577
  %4611 = vmatprep.subr.mxu0 %v4580
  %4612 = vmatpush1.msra.mxu0 %v4579
  %4613 = vmatprep.subr.mxu0 %v4582
  %4614 = vmatpush1.msra.mxu0 %v4581
  %4615 = vmatprep.subr.mxu0 %v4584
  %4616 = vmatpush1.msra.mxu0 %v4583
  %4617 = vmatprep.subr.mxu0 0.0
  %4618 = vmatpush1.msra.mxu0 0.0
  %4619 = vmatprep.subr.mxu0 0.0
  %4620 = vmatpush1.msra.mxu0 0.0
  %4621 = vmatprep.subr.mxu0 0.0
  %4622 = vmatpush1.msra.mxu0 0.0
  %4623 = vmatprep.subr.mxu0 0.0
  %4624 = vmatpush1.msra.mxu0 0.0
  %4625 = vmatprep.subr.mxu0 0.0
  %4626 = vmatpush1.msra.mxu0 0.0
  %4627 = vmatprep.subr.mxu0 0.0
  %4628 = vmatpush1.msra.mxu0 0.0
  %4629 = vmatprep.subr.mxu0 0.0
  %4630 = vmatpush1.msra.mxu0 0.0
  %4631 = vmatprep.subr.mxu0 0.0
  %4632 = vmatpush1.msra.mxu0 0.0
  %4633 = vmatprep.subr.mxu0 0.0
  %4634 = vmatpush1.msra.mxu0 0.0
  %4635 = vmatprep.subr.mxu0 0.0
  %4636 = vmatpush1.msra.mxu0 0.0
  %4637 = vmatprep.subr.mxu0 0.0
  %4638 = vmatpush1.msra.mxu0 0.0
  %4639 = vmatprep.subr.mxu0 0.0
  %4640 = vmatpush1.msra.mxu0 0.0
  %4641 = vmatprep.subr.mxu0 0.0
  %4642 = vmatpush1.msra.mxu0 0.0
  %4643 = vmatprep.subr.mxu0 0.0
  %4644 = vmatpush1.msra.mxu0 0.0
  %4645 = vmatprep.subr.mxu0 0.0
  %4646 = vmatpush1.msra.mxu0 0.0
  %4647 = vmatprep.subr.mxu0 0.0
  %4648 = vmatpush1.msra.mxu0 0.0
  %4649 = vmatprep.mubr.f32.mxu0 0.0
  %4650 = vmatmul.mubr.f32.gmra.mrb[0].mxu0 %v4046
  %v4651 = vpop.f32.mrb[0].mxu0
  %v4652 = vadd.f32 0.0, %v4651
  %v4653 = vpop.f32.mrb[0].mxu0
  %v4654 = vadd.f32 0.0, %v4653
  %4655 = vmatprep.mubr.f32.mxu0 0.0
  %4656 = vmatmul.mubr.f32.gmra.mrb[0].mxu0 %v4047
  %v4657 = vpop.f32.mrb[0].mxu0
  %v4658 = vadd.f32 0.0, %v4657
  %v4659 = vpop.f32.mrb[0].mxu0
  %v4660 = vadd.f32 0.0, %v4659
  %4661 = vmatprep.mubr.f32.mxu0 0.0
  %4662 = vmatmul.mubr.f32.gmra.mrb[0].mxu0 %v4048
  %v4663 = vpop.f32.mrb[0].mxu0
  %v4664 = vadd.f32 0.0, %v4663
  %v4665 = vpop.f32.mrb[0].mxu0
  %v4666 = vadd.f32 0.0, %v4665
  %4667 = vmatprep.mubr.f32.mxu0 0.0
  %4668 = vmatmul.mubr.f32.gmra.mrb[0].mxu0 %v4049
  %v4669 = vpop.f32.mrb[0].mxu0
  %v4670 = vadd.f32 0.0, %v4669
  %v4671 = vpop.f32.mrb[0].mxu0
  %v4672 = vadd.f32 0.0, %v4671
  %4673 = vmatprep.mubr.f32.mxu0 0.0
  %4674 = vmatmul.mubr.f32.gmra.mrb[0].mxu0 %v4050
  %v4675 = vpop.f32.mrb[0].mxu0
  %v4676 = vadd.f32 0.0, %v4675
  %v4677 = vpop.f32.mrb[0].mxu0
  %v4678 = vadd.f32 0.0, %v4677
  %4679 = vmatprep.mubr.f32.mxu0 0.0
  %4680 = vmatmul.mubr.f32.gmra.mrb[0].mxu0 %v4051
  %v4681 = vpop.f32.mrb[0].mxu0
  %v4682 = vadd.f32 0.0, %v4681
  %v4683 = vpop.f32.mrb[0].mxu0
  %v4684 = vadd.f32 0.0, %v4683
  %4685 = vmatprep.mubr.f32.mxu0 0.0
  %4686 = vmatmul.mubr.f32.gmra.mrb[0].mxu0 %v4052
  %v4687 = vpop.f32.mrb[0].mxu0
  %v4688 = vadd.f32 0.0, %v4687
  %v4689 = vpop.f32.mrb[0].mxu0
  %v4690 = vadd.f32 0.0, %v4689
  %4691 = vmatprep.mubr.f32.mxu0 0.0
  %4692 = vmatmul.mubr.f32.gmra.mrb[0].mxu0 %v4053
  %v4693 = vpop.f32.mrb[0].mxu0
  %v4694 = vadd.f32 0.0, %v4693
  %v4695 = vpop.f32.mrb[0].mxu0
  %v4696 = vadd.f32 0.0, %v4695
  %4697 = vmatprep.mubr.f32.mxu0 0.0
  %4698 = vmatmul.mubr.f32.gmra.mrb[0].mxu0 %v4054
  %v4699 = vpop.f32.mrb[0].mxu0
  %v4700 = vadd.f32 0.0, %v4699
  %v4701 = vpop.f32.mrb[0].mxu0
  %v4702 = vadd.f32 0.0, %v4701
  %4703 = vmatprep.mubr.f32.mxu0 0.0
  %4704 = vmatmul.mubr.f32.gmra.mrb[0].mxu0 %v4055
  %v4705 = vpop.f32.mrb[0].mxu0
  %v4706 = vadd.f32 0.0, %v4705
  %v4707 = vpop.f32.mrb[0].mxu0
  %v4708 = vadd.f32 0.0, %v4707
  %4709 = vdwg.mxu0
  %v4710 = vadd.f32 %v4532, %v4652
  %v4711 = vadd.f32 %v4533, %v4654
  %v4712 = vadd.f32 %v4534, %v4658
  %v4713 = vadd.f32 %v4535, %v4660
  %v4714 = vadd.f32 %v4536, %v4664
  %v4715 = vadd.f32 %v4537, %v4666
  %v4716 = vadd.f32 %v4538, %v4670
  %v4717 = vadd.f32 %v4539, %v4672
  %v4718 = vadd.f32 %v4540, %v4676
  %v4719 = vadd.f32 %v4541, %v4678
  %v4720 = vadd.f32 %v4542, %v4682
  %v4721 = vadd.f32 %v4543, %v4684
  %v4722 = vadd.f32 %v4544, %v4688
  %v4723 = vadd.f32 %v4545, %v4690
  %v4724 = vadd.f32 %v4546, %v4694
  %v4725 = vadd.f32 %v4547, %v4696
  %v4726 = vadd.f32 %v4548, %v4700
  %v4727 = vadd.f32 %v4549, %v4702
  %v4728 = vadd.f32 %v4550, %v4706
  %v4729 = vadd.f32 %v4551, %v4708
  %s4730 = scalar_lea.vmem %s3, 1024
  %v4731 = vld [vmem:[%s4730] sm:$0xff]
  %v4732 = vld [vmem:[%s4730 + $0x8] sm:$0xff]
  %v4733 = vld [vmem:[%s4730 + $0x10] sm:$0xff]
  %v4734 = vld [vmem:[%s4730 + $0x18] sm:$0xff]
  %v4735 = vld [vmem:[%s4730 + $0x20] sm:$0xff]
  %v4736 = vld [vmem:[%s4730 + $0x28] sm:$0xff]
  %v4737 = vld [vmem:[%s4730 + $0x30] sm:$0xff]
  %v4738 = vld [vmem:[%s4730 + $0x38] sm:$0xff]
  %v4739 = vld [vmem:[%s4730 + $0x40] sm:$0xff]
  %v4740 = vld [vmem:[%s4730 + $0x48] sm:$0xff]
  %v4741 = vld [vmem:[%s4730 + $0x50] sm:$0xff]
  %v4742 = vld [vmem:[%s4730 + $0x58] sm:$0xff]
  %v4743 = vld [vmem:[%s4730 + $0x60] sm:$0xff]
  %v4744 = vld [vmem:[%s4730 + $0x68] sm:$0xff]
  %v4745 = vld [vmem:[%s4730 + $0x70] sm:$0xff]
  %v4746 = vld [vmem:[%s4730 + $0x78] sm:$0xff]
  %v4747 = vld [vmem:[%s4730 + $0x80] sm:$0xff]
  %v4748 = vld [vmem:[%s4730 + $0x88] sm:$0xff]
  %v4749 = vld [vmem:[%s4730 + $0x90] sm:$0xff]
  %v4750 = vld [vmem:[%s4730 + $0x98] sm:$0xff]
  %v4751 = vld [vmem:[%s4730 + $0xa0] sm:$0xff]
  %v4752 = vld [vmem:[%s4730 + $0xa8] sm:$0xff]
  %v4753 = vld [vmem:[%s4730 + $0xb0] sm:$0xff]
  %v4754 = vld [vmem:[%s4730 + $0xb8] sm:$0xff]
  %v4755 = vld [vmem:[%s4730 + $0xc0] sm:$0xff]
  %v4756 = vld [vmem:[%s4730 + $0xc8] sm:$0xff]
  %v4757 = vld [vmem:[%s4730 + $0xd0] sm:$0xff]
  %v4758 = vld [vmem:[%s4730 + $0xd8] sm:$0xff]
  %v4759 = vld [vmem:[%s4730 + $0xe0] sm:$0xff]
  %v4760 = vld [vmem:[%s4730 + $0xe8] sm:$0xff]
  %v4761 = vld [vmem:[%s4730 + $0xf0] sm:$0xff]
  %v4762 = vld [vmem:[%s4730 + $0xf8] sm:$0xff]
  %4763 = vmatprep.subr.mxu0 %v4732
  %4764 = vmatpush1.msra.mxu0 %v4731
  %4765 = vmatprep.subr.mxu0 %v4734
  %4766 = vmatpush1.msra.mxu0 %v4733
  %4767 = vmatprep.subr.mxu0 %v4736
  %4768 = vmatpush1.msra.mxu0 %v4735
  %4769 = vmatprep.subr.mxu0 %v4738
  %4770 = vmatpush1.msra.mxu0 %v4737
  %4771 = vmatprep.subr.mxu0 %v4740
  %4772 = vmatpush1.msra.mxu0 %v4739
  %4773 = vmatprep.subr.mxu0 %v4742
  %4774 = vmatpush1.msra.mxu0 %v4741
  %4775 = vmatprep.subr.mxu0 %v4744
  %4776 = vmatpush1.msra.mxu0 %v4743
  %4777 = vmatprep.subr.mxu0 %v4746
  %4778 = vmatpush1.msra.mxu0 %v4745
  %4779 = vmatprep.subr.mxu0 %v4748
  %4780 = vmatpush1.msra.mxu0 %v4747
  %4781 = vmatprep.subr.mxu0 %v4750
  %4782 = vmatpush1.msra.mxu0 %v4749
  %4783 = vmatprep.subr.mxu0 %v4752
  %4784 = vmatpush1.msra.mxu0 %v4751
  %4785 = vmatprep.subr.mxu0 %v4754
  %4786 = vmatpush1.msra.mxu0 %v4753
  %4787 = vmatprep.subr.mxu0 %v4756
  %4788 = vmatpush1.msra.mxu0 %v4755
  %4789 = vmatprep.subr.mxu0 %v4758
  %4790 = vmatpush1.msra.mxu0 %v4757
  %4791 = vmatprep.subr.mxu0 %v4760
  %4792 = vmatpush1.msra.mxu0 %v4759
  %4793 = vmatprep.subr.mxu0 %v4762
  %4794 = vmatpush1.msra.mxu0 %v4761
  %4795 = vmatprep.subr.mxu0 0.0
  %4796 = vmatpush1.msra.mxu0 0.0
  %4797 = vmatprep.subr.mxu0 0.0
  %4798 = vmatpush1.msra.mxu0 0.0
  %4799 = vmatprep.subr.mxu0 0.0
  %4800 = vmatpush1.msra.mxu0 0.0
  %4801 = vmatprep.subr.mxu0 0.0
  %4802 = vmatpush1.msra.mxu0 0.0
  %4803 = vmatprep.subr.mxu0 0.0
  %4804 = vmatpush1.msra.mxu0 0.0
  %4805 = vmatprep.subr.mxu0 0.0
  %4806 = vmatpush1.msra.mxu0 0.0
  %4807 = vmatprep.subr.mxu0 0.0
  %4808 = vmatpush1.msra.mxu0 0.0
  %4809 = vmatprep.subr.mxu0 0.0
  %4810 = vmatpush1.msra.mxu0 0.0
  %4811 = vmatprep.subr.mxu0 0.0
  %4812 = vmatpush1.msra.mxu0 0.0
  %4813 = vmatprep.subr.mxu0 0.0
  %4814 = vmatpush1.msra.mxu0 0.0
  %4815 = vmatprep.subr.mxu0 0.0
  %4816 = vmatpush1.msra.mxu0 0.0
  %4817 = vmatprep.subr.mxu0 0.0
  %4818 = vmatpush1.msra.mxu0 0.0
  %4819 = vmatprep.subr.mxu0 0.0
  %4820 = vmatpush1.msra.mxu0 0.0
  %4821 = vmatprep.subr.mxu0 0.0
  %4822 = vmatpush1.msra.mxu0 0.0
  %4823 = vmatprep.subr.mxu0 0.0
  %4824 = vmatpush1.msra.mxu0 0.0
  %4825 = vmatprep.subr.mxu0 0.0
  %4826 = vmatpush1.msra.mxu0 0.0
  %4827 = vmatprep.mubr.f32.mxu0 0.0
  %4828 = vmatmul.mubr.f32.gmra.mrb[0].mxu0 %v4006
  %v4829 = vpop.f32.mrb[0].mxu0
  %v4830 = vadd.f32 0.0, %v4829
  %v4831 = vpop.f32.mrb[0].mxu0
  %v4832 = vadd.f32 0.0, %v4831
  %4833 = vmatprep.mubr.f32.mxu0 0.0
  %4834 = vmatmul.mubr.f32.gmra.mrb[0].mxu0 %v4007
  %v4835 = vpop.f32.mrb[0].mxu0
  %v4836 = vadd.f32 0.0, %v4835
  %v4837 = vpop.f32.mrb[0].mxu0
  %v4838 = vadd.f32 0.0, %v4837
  %4839 = vmatprep.mubr.f32.mxu0 0.0
  %4840 = vmatmul.mubr.f32.gmra.mrb[0].mxu0 %v4008
  %v4841 = vpop.f32.mrb[0].mxu0
  %v4842 = vadd.f32 0.0, %v4841
  %v4843 = vpop.f32.mrb[0].mxu0
  %v4844 = vadd.f32 0.0, %v4843
  %4845 = vmatprep.mubr.f32.mxu0 0.0
  %4846 = vmatmul.mubr.f32.gmra.mrb[0].mxu0 %v4009
  %v4847 = vpop.f32.mrb[0].mxu0
  %v4848 = vadd.f32 0.0, %v4847
  %v4849 = vpop.f32.mrb[0].mxu0
  %v4850 = vadd.f32 0.0, %v4849
  %4851 = vmatprep.mubr.f32.mxu0 0.0
  %4852 = vmatmul.mubr.f32.gmra.mrb[0].mxu0 %v4010
  %v4853 = vpop.f32.mrb[0].mxu0
  %v4854 = vadd.f32 0.0, %v4853
  %v4855 = vpop.f32.mrb[0].mxu0
  %v4856 = vadd.f32 0.0, %v4855
  %4857 = vmatprep.mubr.f32.mxu0 0.0
  %4858 = vmatmul.mubr.f32.gmra.mrb[0].mxu0 %v4011
  %v4859 = vpop.f32.mrb[0].mxu0
  %v4860 = vadd.f32 0.0, %v4859
  %v4861 = vpop.f32.mrb[0].mxu0
  %v4862 = vadd.f32 0.0, %v4861
  %4863 = vmatprep.mubr.f32.mxu0 0.0
  %4864 = vmatmul.mubr.f32.gmra.mrb[0].mxu0 %v4012
  %v4865 = vpop.f32.mrb[0].mxu0
  %v4866 = vadd.f32 0.0, %v4865
  %v4867 = vpop.f32.mrb[0].mxu0
  %v4868 = vadd.f32 0.0, %v4867
  %4869 = vmatprep.mubr.f32.mxu0 0.0
  %4870 = vmatmul.mubr.f32.gmra.mrb[0].mxu0 %v4013
  %v4871 = vpop.f32.mrb[0].mxu0
  %v4872 = vadd.f32 0.0, %v4871
  %v4873 = vpop.f32.mrb[0].mxu0
  %v4874 = vadd.f32 0.0, %v4873
  %4875 = vmatprep.mubr.f32.mxu0 0.0
  %4876 = vmatmul.mubr.f32.gmra.mrb[0].mxu0 %v4014
  %v4877 = vpop.f32.mrb[0].mxu0
  %v4878 = vadd.f32 0.0, %v4877
  %v4879 = vpop.f32.mrb[0].mxu0
  %v4880 = vadd.f32 0.0, %v4879
  %4881 = vmatprep.mubr.f32.mxu0 0.0
  %4882 = vmatmul.mubr.f32.gmra.mrb[0].mxu0 %v4015
  %v4883 = vpop.f32.mrb[0].mxu0
  %v4884 = vadd.f32 0.0, %v4883
  %v4885 = vpop.f32.mrb[0].mxu0
  %v4886 = vadd.f32 0.0, %v4885
  %4887 = vdwg.mxu0
  %v4888 = vadd.f32 %v4710, %v4830
  %v4889 = vadd.f32 %v4711, %v4832
  %v4890 = vadd.f32 %v4712, %v4836
  %v4891 = vadd.f32 %v4713, %v4838
  %v4892 = vadd.f32 %v4714, %v4842
  %v4893 = vadd.f32 %v4715, %v4844
  %v4894 = vadd.f32 %v4716, %v4848
  %v4895 = vadd.f32 %v4717, %v4850
  %v4896 = vadd.f32 %v4718, %v4854
  %v4897 = vadd.f32 %v4719, %v4856
  %v4898 = vadd.f32 %v4720, %v4860
  %v4899 = vadd.f32 %v4721, %v4862
  %v4900 = vadd.f32 %v4722, %v4866
  %v4901 = vadd.f32 %v4723, %v4868
  %v4902 = vadd.f32 %v4724, %v4872
  %v4903 = vadd.f32 %v4725, %v4874
  %v4904 = vadd.f32 %v4726, %v4878
  %v4905 = vadd.f32 %v4727, %v4880
  %v4906 = vadd.f32 %v4728, %v4884
  %v4907 = vadd.f32 %v4729, %v4886
  %v4909 = vlaneseq
  %v4910 = vshrl.u32 %v4909, 7
  %v4911 = vsub.s32 0, %v4910
  %v4912 = vrot.slane %v4058, %v4911
  %v4913 = vlaneseq
  %v4914 = vshrl.u32 %v4913, 7
  %v4915 = vsub.s32 1, %v4914
  %v4916 = vrot.slane %v4058, %v4915
  %v4919 = vadd.f32 %v4888, %v4912
  %v4920 = vadd.f32 %v4889, %v4916
  %v4921 = vadd.f32 %v4890, %v4912
  %v4922 = vadd.f32 %v4891, %v4916
  %v4923 = vadd.f32 %v4892, %v4912
  %v4924 = vadd.f32 %v4893, %v4916
  %v4925 = vadd.f32 %v4894, %v4912
  %v4926 = vadd.f32 %v4895, %v4916
  %v4927 = vadd.f32 %v4896, %v4912
  %v4928 = vadd.f32 %v4897, %v4916
  %v4929 = vadd.f32 %v4898, %v4912
  %v4930 = vadd.f32 %v4899, %v4916
  %v4931 = vadd.f32 %v4900, %v4912
  %v4932 = vadd.f32 %v4901, %v4916
  %v4933 = vadd.f32 %v4902, %v4912
  %v4934 = vadd.f32 %v4903, %v4916
  %v4935 = vadd.f32 %v4904, %v4912
  %v4936 = vadd.f32 %v4905, %v4916
  %v4937 = vadd.f32 %v4906, %v4912
  %v4938 = vadd.f32 %v4907, %v4916
  %v4939 = vmax.f32 %v4919, 0.0
  %v4940 = vmax.f32 %v4920, 0.0
  %v4941 = vmax.f32 %v4921, 0.0
  %v4942 = vmax.f32 %v4922, 0.0
  %v4943 = vmax.f32 %v4923, 0.0
  %v4944 = vmax.f32 %v4924, 0.0
  %v4945 = vmax.f32 %v4925, 0.0
  %v4946 = vmax.f32 %v4926, 0.0
  %v4947 = vmax.f32 %v4927, 0.0
  %v4948 = vmax.f32 %v4928, 0.0
  %v4949 = vmax.f32 %v4929, 0.0
  %v4950 = vmax.f32 %v4930, 0.0
  %v4951 = vmax.f32 %v4931, 0.0
  %v4952 = vmax.f32 %v4932, 0.0
  %v4953 = vmax.f32 %v4933, 0.0
  %v4954 = vmax.f32 %v4934, 0.0
  %v4955 = vmax.f32 %v4935, 0.0
  %v4956 = vmax.f32 %v4936, 0.0
  %v4957 = vmax.f32 %v4937, 0.0
  %v4958 = vmax.f32 %v4938, 0.0
  %4959 = vmatprep.subr.mxu0 %v4093
  %4960 = vmatpush1.msra.mxu0 %v4092
  %4961 = vmatprep.subr.mxu0 %v4095
  %4962 = vmatpush1.msra.mxu0 %v4094
  %4963 = vmatprep.subr.mxu0 %v4097
  %4964 = vmatpush1.msra.mxu0 %v4096
  %4965 = vmatprep.subr.mxu0 %v4099
  %4966 = vmatpush1.msra.mxu0 %v4098
  %4967 = vmatprep.subr.mxu0 %v4101
  %4968 = vmatpush1.msra.mxu0 %v4100
  %4969 = vmatprep.subr.mxu0 %v4103
  %4970 = vmatpush1.msra.mxu0 %v4102
  %4971 = vmatprep.subr.mxu0 %v4105
  %4972 = vmatpush1.msra.mxu0 %v4104
  %4973 = vmatprep.subr.mxu0 %v4107
  %4974 = vmatpush1.msra.mxu0 %v4106
  %4975 = vmatprep.subr.mxu0 %v4109
  %4976 = vmatpush1.msra.mxu0 %v4108
  %4977 = vmatprep.subr.mxu0 %v4111
  %4978 = vmatpush1.msra.mxu0 %v4110
  %4979 = vmatprep.subr.mxu0 %v4113
  %4980 = vmatpush1.msra.mxu0 %v4112
  %4981 = vmatprep.subr.mxu0 %v4115
  %4982 = vmatpush1.msra.mxu0 %v4114
  %4983 = vmatprep.subr.mxu0 %v4117
  %4984 = vmatpush1.msra.mxu0 %v4116
  %4985 = vmatprep.subr.mxu0 %v4119
  %4986 = vmatpush1.msra.mxu0 %v4118
  %4987 = vmatprep.subr.mxu0 %v4121
  %4988 = vmatpush1.msra.mxu0 %v4120
  %4989 = vmatprep.subr.mxu0 %v4123
  %4990 = vmatpush1.msra.mxu0 %v4122
  %4991 = vmatprep.subr.mxu0 0.0
  %4992 = vmatpush1.msra.mxu0 0.0
  %4993 = vmatprep.subr.mxu0 0.0
  %4994 = vmatpush1.msra.mxu0 0.0
  %4995 = vmatprep.subr.mxu0 0.0
  %4996 = vmatpush1.msra.mxu0 0.0
  %4997 = vmatprep.subr.mxu0 0.0
  %4998 = vmatpush1.msra.mxu0 0.0
  %4999 = vmatprep.subr.mxu0 0.0
  %5000 = vmatpush1.msra.mxu0 0.0
  %5001 = vmatprep.subr.mxu0 0.0
  %5002 = vmatpush1.msra.mxu0 0.0
  %5003 = vmatprep.subr.mxu0 0.0
  %5004 = vmatpush1.msra.mxu0 0.0
  %5005 = vmatprep.subr.mxu0 0.0
  %5006 = vmatpush1.msra.mxu0 0.0
  %5007 = vmatprep.subr.mxu0 0.0
  %5008 = vmatpush1.msra.mxu0 0.0
  %5009 = vmatprep.subr.mxu0 0.0
  %5010 = vmatpush1.msra.mxu0 0.0
  %5011 = vmatprep.subr.mxu0 0.0
  %5012 = vmatpush1.msra.mxu0 0.0
  %5013 = vmatprep.subr.mxu0 0.0
  %5014 = vmatpush1.msra.mxu0 0.0
  %5015 = vmatprep.subr.mxu0 0.0
  %5016 = vmatpush1.msra.mxu0 0.0
  %5017 = vmatprep.subr.mxu0 0.0
  %5018 = vmatpush1.msra.mxu0 0.0
  %5019 = vmatprep.subr.mxu0 0.0
  %5020 = vmatpush1.msra.mxu0 0.0
  %5021 = vmatprep.subr.mxu0 0.0
  %5022 = vmatpush1.msra.mxu0 0.0
  %5023 = vmatprep.mubr.f32.mxu0 0.0
  %5024 = vmatmul.mubr.f32.gmra.mrb[0].mxu0 %v4004
  %v5025 = vpop.f32.mrb[0].mxu0
  %v5026 = vadd.f32 0.0, %v5025
  %v5027 = vpop.f32.mrb[0].mxu0
  %v5028 = vadd.f32 0.0, %v5027
  %5029 = vmatprep.mubr.f32.mxu0 0.0
  %5030 = vmatmul.mubr.f32.gmra.mrb[0].mxu0 %v4005
  %v5031 = vpop.f32.mrb[0].mxu0
  %v5032 = vadd.f32 0.0, %v5031
  %v5033 = vpop.f32.mrb[0].mxu0
  %v5034 = vadd.f32 0.0, %v5033
  %5035 = vmatprep.mubr.f32.mxu0 0.0
  %5036 = vmatmul.mubr.f32.gmra.mrb[0].mxu0 %v4006
  %v5037 = vpop.f32.mrb[0].mxu0
  %v5038 = vadd.f32 0.0, %v5037
  %v5039 = vpop.f32.mrb[0].mxu0
  %v5040 = vadd.f32 0.0, %v5039
  %5041 = vmatprep.mubr.f32.mxu0 0.0
  %5042 = vmatmul.mubr.f32.gmra.mrb[0].mxu0 %v4007
  %v5043 = vpop.f32.mrb[0].mxu0
  %v5044 = vadd.f32 0.0, %v5043
  %v5045 = vpop.f32.mrb[0].mxu0
  %v5046 = vadd.f32 0.0, %v5045
  %5047 = vmatprep.mubr.f32.mxu0 0.0
  %5048 = vmatmul.mubr.f32.gmra.mrb[0].mxu0 %v4008
  %v5049 = vpop.f32.mrb[0].mxu0
  %v5050 = vadd.f32 0.0, %v5049
  %v5051 = vpop.f32.mrb[0].mxu0
  %v5052 = vadd.f32 0.0, %v5051
  %5053 = vmatprep.mubr.f32.mxu0 0.0
  %5054 = vmatmul.mubr.f32.gmra.mrb[0].mxu0 %v4009
  %v5055 = vpop.f32.mrb[0].mxu0
  %v5056 = vadd.f32 0.0, %v5055
  %v5057 = vpop.f32.mrb[0].mxu0
  %v5058 = vadd.f32 0.0, %v5057
  %5059 = vmatprep.mubr.f32.mxu0 0.0
  %5060 = vmatmul.mubr.f32.gmra.mrb[0].mxu0 %v4010
  %v5061 = vpop.f32.mrb[0].mxu0
  %v5062 = vadd.f32 0.0, %v5061
  %v5063 = vpop.f32.mrb[0].mxu0
  %v5064 = vadd.f32 0.0, %v5063
  %5065 = vmatprep.mubr.f32.mxu0 0.0
  %5066 = vmatmul.mubr.f32.gmra.mrb[0].mxu0 %v4011
  %v5067 = vpop.f32.mrb[0].mxu0
  %v5068 = vadd.f32 0.0, %v5067
  %v5069 = vpop.f32.mrb[0].mxu0
  %v5070 = vadd.f32 0.0, %v5069
  %5071 = vmatprep.mubr.f32.mxu0 0.0
  %5072 = vmatmul.mubr.f32.gmra.mrb[0].mxu0 %v4012
  %v5073 = vpop.f32.mrb[0].mxu0
  %v5074 = vadd.f32 0.0, %v5073
  %v5075 = vpop.f32.mrb[0].mxu0
  %v5076 = vadd.f32 0.0, %v5075
  %5077 = vmatprep.mubr.f32.mxu0 0.0
  %5078 = vmatmul.mubr.f32.gmra.mrb[0].mxu0 %v4013
  %v5079 = vpop.f32.mrb[0].mxu0
  %v5080 = vadd.f32 0.0, %v5079
  %v5081 = vpop.f32.mrb[0].mxu0
  %v5082 = vadd.f32 0.0, %v5081
  %5083 = vdwg.mxu0
  %5084 = vmatprep.subr.mxu0 %v4060
  %5085 = vmatpush1.msra.mxu0 %v4059
  %5086 = vmatprep.subr.mxu0 %v4062
  %5087 = vmatpush1.msra.mxu0 %v4061
  %5088 = vmatprep.subr.mxu0 %v4064
  %5089 = vmatpush1.msra.mxu0 %v4063
  %5090 = vmatprep.subr.mxu0 %v4066
  %5091 = vmatpush1.msra.mxu0 %v4065
  %5092 = vmatprep.subr.mxu0 %v4068
  %5093 = vmatpush1.msra.mxu0 %v4067
  %5094 = vmatprep.subr.mxu0 %v4070
  %5095 = vmatpush1.msra.mxu0 %v4069
  %5096 = vmatprep.subr.mxu0 %v4072
  %5097 = vmatpush1.msra.mxu0 %v4071
  %5098 = vmatprep.subr.mxu0 %v4074
  %5099 = vmatpush1.msra.mxu0 %v4073
  %5100 = vmatprep.subr.mxu0 %v4076
  %5101 = vmatpush1.msra.mxu0 %v4075
  %5102 = vmatprep.subr.mxu0 %v4078
  %5103 = vmatpush1.msra.mxu0 %v4077
  %5104 = vmatprep.subr.mxu0 %v4080
  %5105 = vmatpush1.msra.mxu0 %v4079
  %5106 = vmatprep.subr.mxu0 %v4082
  %5107 = vmatpush1.msra.mxu0 %v4081
  %5108 = vmatprep.subr.mxu0 %v4084
  %5109 = vmatpush1.msra.mxu0 %v4083
  %5110 = vmatprep.subr.mxu0 %v4086
  %5111 = vmatpush1.msra.mxu0 %v4085
  %5112 = vmatprep.subr.mxu0 %v4088
  %5113 = vmatpush1.msra.mxu0 %v4087
  %5114 = vmatprep.subr.mxu0 %v4090
  %5115 = vmatpush1.msra.mxu0 %v4089
  %5116 = vmatprep.subr.mxu0 0.0
  %5117 = vmatpush1.msra.mxu0 0.0
  %5118 = vmatprep.subr.mxu0 0.0
  %5119 = vmatpush1.msra.mxu0 0.0
  %5120 = vmatprep.subr.mxu0 0.0
  %5121 = vmatpush1.msra.mxu0 0.0
  %5122 = vmatprep.subr.mxu0 0.0
  %5123 = vmatpush1.msra.mxu0 0.0
  %5124 = vmatprep.subr.mxu0 0.0
  %5125 = vmatpush1.msra.mxu0 0.0
  %5126 = vmatprep.subr.mxu0 0.0
  %5127 = vmatpush1.msra.mxu0 0.0
  %5128 = vmatprep.subr.mxu0 0.0
  %5129 = vmatpush1.msra.mxu0 0.0
  %5130 = vmatprep.subr.mxu0 0.0
  %5131 = vmatpush1.msra.mxu0 0.0
  %5132 = vmatprep.subr.mxu0 0.0
  %5133 = vmatpush1.msra.mxu0 0.0
  %5134 = vmatprep.subr.mxu0 0.0
  %5135 = vmatpush1.msra.mxu0 0.0
  %5136 = vmatprep.subr.mxu0 0.0
  %5137 = vmatpush1.msra.mxu0 0.0
  %5138 = vmatprep.subr.mxu0 0.0
  %5139 = vmatpush1.msra.mxu0 0.0
  %5140 = vmatprep.subr.mxu0 0.0
  %5141 = vmatpush1.msra.mxu0 0.0
  %5142 = vmatprep.subr.mxu0 0.0
  %5143 = vmatpush1.msra.mxu0 0.0
  %5144 = vmatprep.subr.mxu0 0.0
  %5145 = vmatpush1.msra.mxu0 0.0
  %5146 = vmatprep.subr.mxu0 0.0
  %5147 = vmatpush1.msra.mxu0 0.0
  %5148 = vmatprep.mubr.f32.mxu0 0.0
  %5149 = vmatmul.mubr.f32.gmra.mrb[0].mxu0 %v4044
  %v5150 = vpop.f32.mrb[0].mxu0
  %v5151 = vadd.f32 %v5026, %v5150
  %v5152 = vpop.f32.mrb[0].mxu0
  %v5153 = vadd.f32 %v5028, %v5152
  %5154 = vmatprep.mubr.f32.mxu0 0.0
  %5155 = vmatmul.mubr.f32.gmra.mrb[0].mxu0 %v4045
  %v5156 = vpop.f32.mrb[0].mxu0
  %v5157 = vadd.f32 %v5032, %v5156
  %v5158 = vpop.f32.mrb[0].mxu0
  %v5159 = vadd.f32 %v5034, %v5158
  %5160 = vmatprep.mubr.f32.mxu0 0.0
  %5161 = vmatmul.mubr.f32.gmra.mrb[0].mxu0 %v4046
  %v5162 = vpop.f32.mrb[0].mxu0
  %v5163 = vadd.f32 %v5038, %v5162
  %v5164 = vpop.f32.mrb[0].mxu0
  %v5165 = vadd.f32 %v5040, %v5164
  %5166 = vmatprep.mubr.f32.mxu0 0.0
  %5167 = vmatmul.mubr.f32.gmra.mrb[0].mxu0 %v4047
  %v5168 = vpop.f32.mrb[0].mxu0
  %v5169 = vadd.f32 %v5044, %v5168
  %v5170 = vpop.f32.mrb[0].mxu0
  %v5171 = vadd.f32 %v5046, %v5170
  %5172 = vmatprep.mubr.f32.mxu0 0.0
  %5173 = vmatmul.mubr.f32.gmra.mrb[0].mxu0 %v4048
  %v5174 = vpop.f32.mrb[0].mxu0
  %v5175 = vadd.f32 %v5050, %v5174
  %v5176 = vpop.f32.mrb[0].mxu0
  %v5177 = vadd.f32 %v5052, %v5176
  %5178 = vmatprep.mubr.f32.mxu0 0.0
  %5179 = vmatmul.mubr.f32.gmra.mrb[0].mxu0 %v4049
  %v5180 = vpop.f32.mrb[0].mxu0
  %v5181 = vadd.f32 %v5056, %v5180
  %v5182 = vpop.f32.mrb[0].mxu0
  %v5183 = vadd.f32 %v5058, %v5182
  %5184 = vmatprep.mubr.f32.mxu0 0.0
  %5185 = vmatmul.mubr.f32.gmra.mrb[0].mxu0 %v4050
  %v5186 = vpop.f32.mrb[0].mxu0
  %v5187 = vadd.f32 %v5062, %v5186
  %v5188 = vpop.f32.mrb[0].mxu0
  %v5189 = vadd.f32 %v5064, %v5188
  %5190 = vmatprep.mubr.f32.mxu0 0.0
  %5191 = vmatmul.mubr.f32.gmra.mrb[0].mxu0 %v4051
  %v5192 = vpop.f32.mrb[0].mxu0
  %v5193 = vadd.f32 %v5068, %v5192
  %v5194 = vpop.f32.mrb[0].mxu0
  %v5195 = vadd.f32 %v5070, %v5194
  %5196 = vmatprep.mubr.f32.mxu0 0.0
  %5197 = vmatmul.mubr.f32.gmra.mrb[0].mxu0 %v4052
  %v5198 = vpop.f32.mrb[0].mxu0
  %v5199 = vadd.f32 %v5074, %v5198
  %v5200 = vpop.f32.mrb[0].mxu0
  %v5201 = vadd.f32 %v5076, %v5200
  %5202 = vmatprep.mubr.f32.mxu0 0.0
  %5203 = vmatmul.mubr.f32.gmra.mrb[0].mxu0 %v4053
  %v5204 = vpop.f32.mrb[0].mxu0
  %v5205 = vadd.f32 %v5080, %v5204
  %v5206 = vpop.f32.mrb[0].mxu0
  %v5207 = vadd.f32 %v5082, %v5206
  %5208 = vdwg.mxu0
  %5209 = vmatprep.subr.mxu0 %v4376
  %5210 = vmatpush1.msra.mxu0 %v4375
  %5211 = vmatprep.subr.mxu0 %v4378
  %5212 = vmatpush1.msra.mxu0 %v4377
  %5213 = vmatprep.subr.mxu0 %v4380
  %5214 = vmatpush1.msra.mxu0 %v4379
  %5215 = vmatprep.subr.mxu0 %v4382
  %5216 = vmatpush1.msra.mxu0 %v4381
  %5217 = vmatprep.subr.mxu0 %v4384
  %5218 = vmatpush1.msra.mxu0 %v4383
  %5219 = vmatprep.subr.mxu0 %v4386
  %5220 = vmatpush1.msra.mxu0 %v4385
  %5221 = vmatprep.subr.mxu0 %v4388
  %5222 = vmatpush1.msra.mxu0 %v4387
  %5223 = vmatprep.subr.mxu0 %v4390
  %5224 = vmatpush1.msra.mxu0 %v4389
  %5225 = vmatprep.subr.mxu0 %v4392
  %5226 = vmatpush1.msra.mxu0 %v4391
  %5227 = vmatprep.subr.mxu0 %v4394
  %5228 = vmatpush1.msra.mxu0 %v4393
  %5229 = vmatprep.subr.mxu0 %v4396
  %5230 = vmatpush1.msra.mxu0 %v4395
  %5231 = vmatprep.subr.mxu0 %v4398
  %5232 = vmatpush1.msra.mxu0 %v4397
  %5233 = vmatprep.subr.mxu0 %v4400
  %5234 = vmatpush1.msra.mxu0 %v4399
  %5235 = vmatprep.subr.mxu0 %v4402
  %5236 = vmatpush1.msra.mxu0 %v4401
  %5237 = vmatprep.subr.mxu0 %v4404
  %5238 = vmatpush1.msra.mxu0 %v4403
  %5239 = vmatprep.subr.mxu0 %v4406
  %5240 = vmatpush1.msra.mxu0 %v4405
  %5241 = vmatprep.subr.mxu0 0.0
  %5242 = vmatpush1.msra.mxu0 0.0
  %5243 = vmatprep.subr.mxu0 0.0
  %5244 = vmatpush1.msra.mxu0 0.0
  %5245 = vmatprep.subr.mxu0 0.0
  %5246 = vmatpush1.msra.mxu0 0.0
  %5247 = vmatprep.subr.mxu0 0.0
  %5248 = vmatpush1.msra.mxu0 0.0
  %5249 = vmatprep.subr.mxu0 0.0
  %5250 = vmatpush1.msra.mxu0 0.0
  %5251 = vmatprep.subr.mxu0 0.0
  %5252 = vmatpush1.msra.mxu0 0.0
  %5253 = vmatprep.subr.mxu0 0.0
  %5254 = vmatpush1.msra.mxu0 0.0
  %5255 = vmatprep.subr.mxu0 0.0
  %5256 = vmatpush1.msra.mxu0 0.0
  %5257 = vmatprep.subr.mxu0 0.0
  %5258 = vmatpush1.msra.mxu0 0.0
  %5259 = vmatprep.subr.mxu0 0.0
  %5260 = vmatpush1.msra.mxu0 0.0
  %5261 = vmatprep.subr.mxu0 0.0
  %5262 = vmatpush1.msra.mxu0 0.0
  %5263 = vmatprep.subr.mxu0 0.0
  %5264 = vmatpush1.msra.mxu0 0.0
  %5265 = vmatprep.subr.mxu0 0.0
  %5266 = vmatpush1.msra.mxu0 0.0
  %5267 = vmatprep.subr.mxu0 0.0
  %5268 = vmatpush1.msra.mxu0 0.0
  %5269 = vmatprep.subr.mxu0 0.0
  %5270 = vmatpush1.msra.mxu0 0.0
  %5271 = vmatprep.subr.mxu0 0.0
  %5272 = vmatpush1.msra.mxu0 0.0
  %5273 = vmatprep.mubr.f32.mxu0 0.0
  %5274 = vmatmul.mubr.f32.gmra.mrb[0].mxu0 %v4046
  %v5275 = vpop.f32.mrb[0].mxu0
  %v5276 = vadd.f32 0.0, %v5275
  %v5277 = vpop.f32.mrb[0].mxu0
  %v5278 = vadd.f32 0.0, %v5277
  %5279 = vmatprep.mubr.f32.mxu0 0.0
  %5280 = vmatmul.mubr.f32.gmra.mrb[0].mxu0 %v4047
  %v5281 = vpop.f32.mrb[0].mxu0
  %v5282 = vadd.f32 0.0, %v5281
  %v5283 = vpop.f32.mrb[0].mxu0
  %v5284 = vadd.f32 0.0, %v5283
  %5285 = vmatprep.mubr.f32.mxu0 0.0
  %5286 = vmatmul.mubr.f32.gmra.mrb[0].mxu0 %v4048
  %v5287 = vpop.f32.mrb[0].mxu0
  %v5288 = vadd.f32 0.0, %v5287
  %v5289 = vpop.f32.mrb[0].mxu0
  %v5290 = vadd.f32 0.0, %v5289
  %5291 = vmatprep.mubr.f32.mxu0 0.0
  %5292 = vmatmul.mubr.f32.gmra.mrb[0].mxu0 %v4049
  %v5293 = vpop.f32.mrb[0].mxu0
  %v5294 = vadd.f32 0.0, %v5293
  %v5295 = vpop.f32.mrb[0].mxu0
  %v5296 = vadd.f32 0.0, %v5295
  %5297 = vmatprep.mubr.f32.mxu0 0.0
  %5298 = vmatmul.mubr.f32.gmra.mrb[0].mxu0 %v4050
  %v5299 = vpop.f32.mrb[0].mxu0
  %v5300 = vadd.f32 0.0, %v5299
  %v5301 = vpop.f32.mrb[0].mxu0
  %v5302 = vadd.f32 0.0, %v5301
  %5303 = vmatprep.mubr.f32.mxu0 0.0
  %5304 = vmatmul.mubr.f32.gmra.mrb[0].mxu0 %v4051
  %v5305 = vpop.f32.mrb[0].mxu0
  %v5306 = vadd.f32 0.0, %v5305
  %v5307 = vpop.f32.mrb[0].mxu0
  %v5308 = vadd.f32 0.0, %v5307
  %5309 = vmatprep.mubr.f32.mxu0 0.0
  %5310 = vmatmul.mubr.f32.gmra.mrb[0].mxu0 %v4052
  %v5311 = vpop.f32.mrb[0].mxu0
  %v5312 = vadd.f32 0.0, %v5311
  %v5313 = vpop.f32.mrb[0].mxu0
  %v5314 = vadd.f32 0.0, %v5313
  %5315 = vmatprep.mubr.f32.mxu0 0.0
  %5316 = vmatmul.mubr.f32.gmra.mrb[0].mxu0 %v4053
  %v5317 = vpop.f32.mrb[0].mxu0
  %v5318 = vadd.f32 0.0, %v5317
  %v5319 = vpop.f32.mrb[0].mxu0
  %v5320 = vadd.f32 0.0, %v5319
  %5321 = vmatprep.mubr.f32.mxu0 0.0
  %5322 = vmatmul.mubr.f32.gmra.mrb[0].mxu0 %v4054
  %v5323 = vpop.f32.mrb[0].mxu0
  %v5324 = vadd.f32 0.0, %v5323
  %v5325 = vpop.f32.mrb[0].mxu0
  %v5326 = vadd.f32 0.0, %v5325
  %5327 = vmatprep.mubr.f32.mxu0 0.0
  %5328 = vmatmul.mubr.f32.gmra.mrb[0].mxu0 %v4055
  %v5329 = vpop.f32.mrb[0].mxu0
  %v5330 = vadd.f32 0.0, %v5329
  %v5331 = vpop.f32.mrb[0].mxu0
  %v5332 = vadd.f32 0.0, %v5331
  %5333 = vdwg.mxu0
  %v5334 = vadd.f32 %v5151, %v5276
  %v5335 = vadd.f32 %v5153, %v5278
  %v5336 = vadd.f32 %v5157, %v5282
  %v5337 = vadd.f32 %v5159, %v5284
  %v5338 = vadd.f32 %v5163, %v5288
  %v5339 = vadd.f32 %v5165, %v5290
  %v5340 = vadd.f32 %v5169, %v5294
  %v5341 = vadd.f32 %v5171, %v5296
  %v5342 = vadd.f32 %v5175, %v5300
  %v5343 = vadd.f32 %v5177, %v5302
  %v5344 = vadd.f32 %v5181, %v5306
  %v5345 = vadd.f32 %v5183, %v5308
  %v5346 = vadd.f32 %v5187, %v5312
  %v5347 = vadd.f32 %v5189, %v5314
  %v5348 = vadd.f32 %v5193, %v5318
  %v5349 = vadd.f32 %v5195, %v5320
  %v5350 = vadd.f32 %v5199, %v5324
  %v5351 = vadd.f32 %v5201, %v5326
  %v5352 = vadd.f32 %v5205, %v5330
  %v5353 = vadd.f32 %v5207, %v5332
  %5354 = vmatprep.subr.mxu0 %v4554
  %5355 = vmatpush1.msra.mxu0 %v4553
  %5356 = vmatprep.subr.mxu0 %v4556
  %5357 = vmatpush1.msra.mxu0 %v4555
  %5358 = vmatprep.subr.mxu0 %v4558
  %5359 = vmatpush1.msra.mxu0 %v4557
  %5360 = vmatprep.subr.mxu0 %v4560
  %5361 = vmatpush1.msra.mxu0 %v4559
  %5362 = vmatprep.subr.mxu0 %v4562
  %5363 = vmatpush1.msra.mxu0 %v4561
  %5364 = vmatprep.subr.mxu0 %v4564
  %5365 = vmatpush1.msra.mxu0 %v4563
  %5366 = vmatprep.subr.mxu0 %v4566
  %5367 = vmatpush1.msra.mxu0 %v4565
  %5368 = vmatprep.subr.mxu0 %v4568
  %5369 = vmatpush1.msra.mxu0 %v4567
  %5370 = vmatprep.subr.mxu0 %v4570
  %5371 = vmatpush1.msra.mxu0 %v4569
  %5372 = vmatprep.subr.mxu0 %v4572
  %5373 = vmatpush1.msra.mxu0 %v4571
  %5374 = vmatprep.subr.mxu0 %v4574
  %5375 = vmatpush1.msra.mxu0 %v4573
  %5376 = vmatprep.subr.mxu0 %v4576
  %5377 = vmatpush1.msra.mxu0 %v4575
  %5378 = vmatprep.subr.mxu0 %v4578
  %5379 = vmatpush1.msra.mxu0 %v4577
  %5380 = vmatprep.subr.mxu0 %v4580
  %5381 = vmatpush1.msra.mxu0 %v4579
  %5382 = vmatprep.subr.mxu0 %v4582
  %5383 = vmatpush1.msra.mxu0 %v4581
  %5384 = vmatprep.subr.mxu0 %v4584
  %5385 = vmatpush1.msra.mxu0 %v4583
  %5386 = vmatprep.subr.mxu0 0.0
  %5387 = vmatpush1.msra.mxu0 0.0
  %5388 = vmatprep.subr.mxu0 0.0
  %5389 = vmatpush1.msra.mxu0 0.0
  %5390 = vmatprep.subr.mxu0 0.0
  %5391 = vmatpush1.msra.mxu0 0.0
  %5392 = vmatprep.subr.mxu0 0.0
  %5393 = vmatpush1.msra.mxu0 0.0
  %5394 = vmatprep.subr.mxu0 0.0
  %5395 = vmatpush1.msra.mxu0 0.0
  %5396 = vmatprep.subr.mxu0 0.0
  %5397 = vmatpush1.msra.mxu0 0.0
  %5398 = vmatprep.subr.mxu0 0.0
  %5399 = vmatpush1.msra.mxu0 0.0
  %5400 = vmatprep.subr.mxu0 0.0
  %5401 = vmatpush1.msra.mxu0 0.0
  %5402 = vmatprep.subr.mxu0 0.0
  %5403 = vmatpush1.msra.mxu0 0.0
  %5404 = vmatprep.subr.mxu0 0.0
  %5405 = vmatpush1.msra.mxu0 0.0
  %5406 = vmatprep.subr.mxu0 0.0
  %5407 = vmatpush1.msra.mxu0 0.0
  %5408 = vmatprep.subr.mxu0 0.0
  %5409 = vmatpush1.msra.mxu0 0.0
  %5410 = vmatprep.subr.mxu0 0.0
  %5411 = vmatpush1.msra.mxu0 0.0
  %5412 = vmatprep.subr.mxu0 0.0
  %5413 = vmatpush1.msra.mxu0 0.0
  %5414 = vmatprep.subr.mxu0 0.0
  %5415 = vmatpush1.msra.mxu0 0.0
  %5416 = vmatprep.subr.mxu0 0.0
  %5417 = vmatpush1.msra.mxu0 0.0
  %5418 = vmatprep.mubr.f32.mxu0 0.0
  %5419 = vmatmul.mubr.f32.gmra.mrb[0].mxu0 %v4006
  %v5420 = vpop.f32.mrb[0].mxu0
  %v5421 = vadd.f32 0.0, %v5420
  %v5422 = vpop.f32.mrb[0].mxu0
  %v5423 = vadd.f32 0.0, %v5422
  %5424 = vmatprep.mubr.f32.mxu0 0.0
  %5425 = vmatmul.mubr.f32.gmra.mrb[0].mxu0 %v4007
  %v5426 = vpop.f32.mrb[0].mxu0
  %v5427 = vadd.f32 0.0, %v5426
  %v5428 = vpop.f32.mrb[0].mxu0
  %v5429 = vadd.f32 0.0, %v5428
  %5430 = vmatprep.mubr.f32.mxu0 0.0
  %5431 = vmatmul.mubr.f32.gmra.mrb[0].mxu0 %v4008
  %v5432 = vpop.f32.mrb[0].mxu0
  %v5433 = vadd.f32 0.0, %v5432
  %v5434 = vpop.f32.mrb[0].mxu0
  %v5435 = vadd.f32 0.0, %v5434
  %5436 = vmatprep.mubr.f32.mxu0 0.0
  %5437 = vmatmul.mubr.f32.gmra.mrb[0].mxu0 %v4009
  %v5438 = vpop.f32.mrb[0].mxu0
  %v5439 = vadd.f32 0.0, %v5438
  %v5440 = vpop.f32.mrb[0].mxu0
  %v5441 = vadd.f32 0.0, %v5440
  %5442 = vmatprep.mubr.f32.mxu0 0.0
  %5443 = vmatmul.mubr.f32.gmra.mrb[0].mxu0 %v4010
  %v5444 = vpop.f32.mrb[0].mxu0
  %v5445 = vadd.f32 0.0, %v5444
  %v5446 = vpop.f32.mrb[0].mxu0
  %v5447 = vadd.f32 0.0, %v5446
  %5448 = vmatprep.mubr.f32.mxu0 0.0
  %5449 = vmatmul.mubr.f32.gmra.mrb[0].mxu0 %v4011
  %v5450 = vpop.f32.mrb[0].mxu0
  %v5451 = vadd.f32 0.0, %v5450
  %v5452 = vpop.f32.mrb[0].mxu0
  %v5453 = vadd.f32 0.0, %v5452
  %5454 = vmatprep.mubr.f32.mxu0 0.0
  %5455 = vmatmul.mubr.f32.gmra.mrb[0].mxu0 %v4012
  %v5456 = vpop.f32.mrb[0].mxu0
  %v5457 = vadd.f32 0.0, %v5456
  %v5458 = vpop.f32.mrb[0].mxu0
  %v5459 = vadd.f32 0.0, %v5458
  %5460 = vmatprep.mubr.f32.mxu0 0.0
  %5461 = vmatmul.mubr.f32.gmra.mrb[0].mxu0 %v4013
  %v5462 = vpop.f32.mrb[0].mxu0
  %v5463 = vadd.f32 0.0, %v5462
  %v5464 = vpop.f32.mrb[0].mxu0
  %v5465 = vadd.f32 0.0, %v5464
  %5466 = vmatprep.mubr.f32.mxu0 0.0
  %5467 = vmatmul.mubr.f32.gmra.mrb[0].mxu0 %v4014
  %v5468 = vpop.f32.mrb[0].mxu0
  %v5469 = vadd.f32 0.0, %v5468
  %v5470 = vpop.f32.mrb[0].mxu0
  %v5471 = vadd.f32 0.0, %v5470
  %5472 = vmatprep.mubr.f32.mxu0 0.0
  %5473 = vmatmul.mubr.f32.gmra.mrb[0].mxu0 %v4015
  %v5474 = vpop.f32.mrb[0].mxu0
  %v5475 = vadd.f32 0.0, %v5474
  %v5476 = vpop.f32.mrb[0].mxu0
  %v5477 = vadd.f32 0.0, %v5476
  %5478 = vdwg.mxu0
  %v5479 = vadd.f32 %v5334, %v5421
  %v5480 = vadd.f32 %v5335, %v5423
  %v5481 = vadd.f32 %v5336, %v5427
  %v5482 = vadd.f32 %v5337, %v5429
  %v5483 = vadd.f32 %v5338, %v5433
  %v5484 = vadd.f32 %v5339, %v5435
  %v5485 = vadd.f32 %v5340, %v5439
  %v5486 = vadd.f32 %v5341, %v5441
  %v5487 = vadd.f32 %v5342, %v5445
  %v5488 = vadd.f32 %v5343, %v5447
  %v5489 = vadd.f32 %v5344, %v5451
  %v5490 = vadd.f32 %v5345, %v5453
  %v5491 = vadd.f32 %v5346, %v5457
  %v5492 = vadd.f32 %v5347, %v5459
  %v5493 = vadd.f32 %v5348, %v5463
  %v5494 = vadd.f32 %v5349, %v5465
  %v5495 = vadd.f32 %v5350, %v5469
  %v5496 = vadd.f32 %v5351, %v5471
  %v5497 = vadd.f32 %v5352, %v5475
  %v5498 = vadd.f32 %v5353, %v5477
  %5499 = vmatprep.subr.mxu0 %v4732
  %5500 = vmatpush1.msra.mxu0 %v4731
  %5501 = vmatprep.subr.mxu0 %v4734
  %5502 = vmatpush1.msra.mxu0 %v4733
  %5503 = vmatprep.subr.mxu0 %v4736
  %5504 = vmatpush1.msra.mxu0 %v4735
  %5505 = vmatprep.subr.mxu0 %v4738
  %5506 = vmatpush1.msra.mxu0 %v4737
  %5507 = vmatprep.subr.mxu0 %v4740
  %5508 = vmatpush1.msra.mxu0 %v4739
  %5509 = vmatprep.subr.mxu0 %v4742
  %5510 = vmatpush1.msra.mxu0 %v4741
  %5511 = vmatprep.subr.mxu0 %v4744
  %5512 = vmatpush1.msra.mxu0 %v4743
  %5513 = vmatprep.subr.mxu0 %v4746
  %5514 = vmatpush1.msra.mxu0 %v4745
  %5515 = vmatprep.subr.mxu0 %v4748
  %5516 = vmatpush1.msra.mxu0 %v4747
  %5517 = vmatprep.subr.mxu0 %v4750
  %5518 = vmatpush1.msra.mxu0 %v4749
  %5519 = vmatprep.subr.mxu0 %v4752
  %5520 = vmatpush1.msra.mxu0 %v4751
  %5521 = vmatprep.subr.mxu0 %v4754
  %5522 = vmatpush1.msra.mxu0 %v4753
  %5523 = vmatprep.subr.mxu0 %v4756
  %5524 = vmatpush1.msra.mxu0 %v4755
  %5525 = vmatprep.subr.mxu0 %v4758
  %5526 = vmatpush1.msra.mxu0 %v4757
  %5527 = vmatprep.subr.mxu0 %v4760
  %5528 = vmatpush1.msra.mxu0 %v4759
  %5529 = vmatprep.subr.mxu0 %v4762
  %5530 = vmatpush1.msra.mxu0 %v4761
  %5531 = vmatprep.subr.mxu0 0.0
  %5532 = vmatpush1.msra.mxu0 0.0
  %5533 = vmatprep.subr.mxu0 0.0
  %5534 = vmatpush1.msra.mxu0 0.0
  %5535 = vmatprep.subr.mxu0 0.0
  %5536 = vmatpush1.msra.mxu0 0.0
  %5537 = vmatprep.subr.mxu0 0.0
  %5538 = vmatpush1.msra.mxu0 0.0
  %5539 = vmatprep.subr.mxu0 0.0
  %5540 = vmatpush1.msra.mxu0 0.0
  %5541 = vmatprep.subr.mxu0 0.0
  %5542 = vmatpush1.msra.mxu0 0.0
  %5543 = vmatprep.subr.mxu0 0.0
  %5544 = vmatpush1.msra.mxu0 0.0
  %5545 = vmatprep.subr.mxu0 0.0
  %5546 = vmatpush1.msra.mxu0 0.0
  %5547 = vmatprep.subr.mxu0 0.0
  %5548 = vmatpush1.msra.mxu0 0.0
  %5549 = vmatprep.subr.mxu0 0.0
  %5550 = vmatpush1.msra.mxu0 0.0
  %5551 = vmatprep.subr.mxu0 0.0
  %5552 = vmatpush1.msra.mxu0 0.0
  %5553 = vmatprep.subr.mxu0 0.0
  %5554 = vmatpush1.msra.mxu0 0.0
  %5555 = vmatprep.subr.mxu0 0.0
  %5556 = vmatpush1.msra.mxu0 0.0
  %5557 = vmatprep.subr.mxu0 0.0
  %5558 = vmatpush1.msra.mxu0 0.0
  %5559 = vmatprep.subr.mxu0 0.0
  %5560 = vmatpush1.msra.mxu0 0.0
  %5561 = vmatprep.subr.mxu0 0.0
  %5562 = vmatpush1.msra.mxu0 0.0
  %5563 = vmatprep.mubr.f32.mxu0 0.0
  %5564 = vmatmul.mubr.f32.gmra.mrb[0].mxu0 %v4048
  %v5565 = vpop.f32.mrb[0].mxu0
  %v5566 = vadd.f32 0.0, %v5565
  %v5567 = vpop.f32.mrb[0].mxu0
  %v5568 = vadd.f32 0.0, %v5567
  %5569 = vmatprep.mubr.f32.mxu0 0.0
  %5570 = vmatmul.mubr.f32.gmra.mrb[0].mxu0 %v4049
  %v5571 = vpop.f32.mrb[0].mxu0
  %v5572 = vadd.f32 0.0, %v5571
  %v5573 = vpop.f32.mrb[0].mxu0
  %v5574 = vadd.f32 0.0, %v5573
  %5575 = vmatprep.mubr.f32.mxu0 0.0
  %5576 = vmatmul.mubr.f32.gmra.mrb[0].mxu0 %v4050
  %v5577 = vpop.f32.mrb[0].mxu0
  %v5578 = vadd.f32 0.0, %v5577
  %v5579 = vpop.f32.mrb[0].mxu0
  %v5580 = vadd.f32 0.0, %v5579
  %5581 = vmatprep.mubr.f32.mxu0 0.0
  %5582 = vmatmul.mubr.f32.gmra.mrb[0].mxu0 %v4051
  %v5583 = vpop.f32.mrb[0].mxu0
  %v5584 = vadd.f32 0.0, %v5583
  %v5585 = vpop.f32.mrb[0].mxu0
  %v5586 = vadd.f32 0.0, %v5585
  %5587 = vmatprep.mubr.f32.mxu0 0.0
  %5588 = vmatmul.mubr.f32.gmra.mrb[0].mxu0 %v4052
  %v5589 = vpop.f32.mrb[0].mxu0
  %v5590 = vadd.f32 0.0, %v5589
  %v5591 = vpop.f32.mrb[0].mxu0
  %v5592 = vadd.f32 0.0, %v5591
  %5593 = vmatprep.mubr.f32.mxu0 0.0
  %5594 = vmatmul.mubr.f32.gmra.mrb[0].mxu0 %v4053
  %v5595 = vpop.f32.mrb[0].mxu0
  %v5596 = vadd.f32 0.0, %v5595
  %v5597 = vpop.f32.mrb[0].mxu0
  %v5598 = vadd.f32 0.0, %v5597
  %5599 = vmatprep.mubr.f32.mxu0 0.0
  %5600 = vmatmul.mubr.f32.gmra.mrb[0].mxu0 %v4054
  %v5601 = vpop.f32.mrb[0].mxu0
  %v5602 = vadd.f32 0.0, %v5601
  %v5603 = vpop.f32.mrb[0].mxu0
  %v5604 = vadd.f32 0.0, %v5603
  %5605 = vmatprep.mubr.f32.mxu0 0.0
  %5606 = vmatmul.mubr.f32.gmra.mrb[0].mxu0 %v4055
  %v5607 = vpop.f32.mrb[0].mxu0
  %v5608 = vadd.f32 0.0, %v5607
  %v5609 = vpop.f32.mrb[0].mxu0
  %v5610 = vadd.f32 0.0, %v5609
  %5611 = vmatprep.mubr.f32.mxu0 0.0
  %5612 = vmatmul.mubr.f32.gmra.mrb[0].mxu0 %v4056
  %v5613 = vpop.f32.mrb[0].mxu0
  %v5614 = vadd.f32 0.0, %v5613
  %v5615 = vpop.f32.mrb[0].mxu0
  %v5616 = vadd.f32 0.0, %v5615
  %5617 = vmatprep.mubr.f32.mxu0 0.0
  %5618 = vmatmul.mubr.f32.gmra.mrb[0].mxu0 %v4057
  %v5619 = vpop.f32.mrb[0].mxu0
  %v5620 = vadd.f32 0.0, %v5619
  %v5621 = vpop.f32.mrb[0].mxu0
  %v5622 = vadd.f32 0.0, %v5621
  %5623 = vdwg.mxu0
  %v5624 = vadd.f32 %v5479, %v5566
  %v5625 = vadd.f32 %v5480, %v5568
  %v5626 = vadd.f32 %v5481, %v5572
  %v5627 = vadd.f32 %v5482, %v5574
  %v5628 = vadd.f32 %v5483, %v5578
  %v5629 = vadd.f32 %v5484, %v5580
  %v5630 = vadd.f32 %v5485, %v5584
  %v5631 = vadd.f32 %v5486, %v5586
  %v5632 = vadd.f32 %v5487, %v5590
  %v5633 = vadd.f32 %v5488, %v5592
  %v5634 = vadd.f32 %v5489, %v5596
  %v5635 = vadd.f32 %v5490, %v5598
  %v5636 = vadd.f32 %v5491, %v5602
  %v5637 = vadd.f32 %v5492, %v5604
  %v5638 = vadd.f32 %v5493, %v5608
  %v5639 = vadd.f32 %v5494, %v5610
  %v5640 = vadd.f32 %v5495, %v5614
  %v5641 = vadd.f32 %v5496, %v5616
  %v5642 = vadd.f32 %v5497, %v5620
  %v5643 = vadd.f32 %v5498, %v5622
  %v5644 = vadd.f32 %v5624, %v4912
  %v5645 = vadd.f32 %v5625, %v4916
  %v5646 = vadd.f32 %v5626, %v4912
  %v5647 = vadd.f32 %v5627, %v4916
  %v5648 = vadd.f32 %v5628, %v4912
  %v5649 = vadd.f32 %v5629, %v4916
  %v5650 = vadd.f32 %v5630, %v4912
  %v5651 = vadd.f32 %v5631, %v4916
  %v5652 = vadd.f32 %v5632, %v4912
  %v5653 = vadd.f32 %v5633, %v4916
  %v5654 = vadd.f32 %v5634, %v4912
  %v5655 = vadd.f32 %v5635, %v4916
  %v5656 = vadd.f32 %v5636, %v4912
  %v5657 = vadd.f32 %v5637, %v4916
  %v5658 = vadd.f32 %v5638, %v4912
  %v5659 = vadd.f32 %v5639, %v4916
  %v5660 = vadd.f32 %v5640, %v4912
  %v5661 = vadd.f32 %v5641, %v4916
  %v5662 = vadd.f32 %v5642, %v4912
  %v5663 = vadd.f32 %v5643, %v4916
  %v5664 = vmax.f32 %v5644, 0.0
  %v5665 = vmax.f32 %v5645, 0.0
  %v5666 = vmax.f32 %v5646, 0.0
  %v5667 = vmax.f32 %v5647, 0.0
  %v5668 = vmax.f32 %v5648, 0.0
  %v5669 = vmax.f32 %v5649, 0.0
  %v5670 = vmax.f32 %v5650, 0.0
  %v5671 = vmax.f32 %v5651, 0.0
  %v5672 = vmax.f32 %v5652, 0.0
  %v5673 = vmax.f32 %v5653, 0.0
  %v5674 = vmax.f32 %v5654, 0.0
  %v5675 = vmax.f32 %v5655, 0.0
  %v5676 = vmax.f32 %v5656, 0.0
  %v5677 = vmax.f32 %v5657, 0.0
  %v5678 = vmax.f32 %v5658, 0.0
  %v5679 = vmax.f32 %v5659, 0.0
  %v5680 = vmax.f32 %v5660, 0.0
  %v5681 = vmax.f32 %v5661, 0.0
  %v5682 = vmax.f32 %v5662, 0.0
  %v5683 = vmax.f32 %v5663, 0.0
  %v5684 = vmax.f32 %v4939, %v5664
  %v5685 = vmax.f32 %v4940, %v5665
  %v5686 = vmax.f32 %v4941, %v5666
  %v5687 = vmax.f32 %v4942, %v5667
  %v5688 = vmax.f32 %v4943, %v5668
  %v5689 = vmax.f32 %v4944, %v5669
  %v5690 = vmax.f32 %v4945, %v5670
  %v5691 = vmax.f32 %v4946, %v5671
  %v5692 = vmax.f32 %v4947, %v5672
  %v5693 = vmax.f32 %v4948, %v5673
  %v5694 = vmax.f32 %v4949, %v5674
  %v5695 = vmax.f32 %v4950, %v5675
  %v5696 = vmax.f32 %v4951, %v5676
  %v5697 = vmax.f32 %v4952, %v5677
  %v5698 = vmax.f32 %v4953, %v5678
  %v5699 = vmax.f32 %v4954, %v5679
  %v5700 = vmax.f32 %v4955, %v5680
  %v5701 = vmax.f32 %v4956, %v5681
  %v5702 = vmax.f32 %v4957, %v5682
  %v5703 = vmax.f32 %v4958, %v5683
  %v5704 = vmax.f32 %v5684, %v5685
  %v5705 = vmax.f32 %v5686, %v5687
  %v5706 = vmax.f32 %v5688, %v5689
  %v5707 = vmax.f32 %v5690, %v5691
  %v5708 = vmax.f32 %v5692, %v5693
  %v5709 = vmax.f32 %v5694, %v5695
  %v5710 = vmax.f32 %v5696, %v5697
  %v5711 = vmax.f32 %v5698, %v5699
  %v5712 = vmax.f32 %v5700, %v5701
  %v5713 = vmax.f32 %v5702, %v5703
  %v5714 = vld [vmem:[%s5] sm:$0xff]
  %v5715 = vld [vmem:[%s5 + $0x8] sm:$0xff]
  %v5716 = vld [vmem:[%s5 + $0x10] sm:$0xff]
  %v5717 = vld [vmem:[%s5 + $0x18] sm:$0xff]
  %v5718 = vld [vmem:[%s5 + $0x20] sm:$0xff]
  %v5719 = vld [vmem:[%s5 + $0x28] sm:$0xff]
  %v5720 = vld [vmem:[%s5 + $0x30] sm:$0xff]
  %v5721 = vld [vmem:[%s5 + $0x38] sm:$0xff]
  %v5722 = vld [vmem:[%s5 + $0x40] sm:$0xff]
  %v5723 = vld [vmem:[%s5 + $0x48] sm:$0xff]
  %v5724 = vld [vmem:[%s5 + $0x50] sm:$0xff]
  %v5725 = vld [vmem:[%s5 + $0x58] sm:$0xff]
  %v5726 = vld [vmem:[%s5 + $0x60] sm:$0xff]
  %v5727 = vld [vmem:[%s5 + $0x68] sm:$0xff]
  %v5728 = vld [vmem:[%s5 + $0x70] sm:$0xff]
  %v5729 = vld [vmem:[%s5 + $0x78] sm:$0xff]
  %s5730 = scalar_lea.vmem %s5, 128
  %v5731 = vld [vmem:[%s5730] sm:$0xff]
  %v5732 = vld [vmem:[%s5730 + $0x8] sm:$0xff]
  %v5733 = vld [vmem:[%s5730 + $0x10] sm:$0xff]
  %v5734 = vld [vmem:[%s5730 + $0x18] sm:$0xff]
  %v5735 = vld [vmem:[%s5730 + $0x20] sm:$0xff]
  %v5736 = vld [vmem:[%s5730 + $0x28] sm:$0xff]
  %v5737 = vld [vmem:[%s5730 + $0x30] sm:$0xff]
  %v5738 = vld [vmem:[%s5730 + $0x38] sm:$0xff]
  %v5739 = vld [vmem:[%s5730 + $0x40] sm:$0xff]
  %v5740 = vld [vmem:[%s5730 + $0x48] sm:$0xff]
  %v5741 = vld [vmem:[%s5730 + $0x50] sm:$0xff]
  %v5742 = vld [vmem:[%s5730 + $0x58] sm:$0xff]
  %v5743 = vld [vmem:[%s5730 + $0x60] sm:$0xff]
  %v5744 = vld [vmem:[%s5730 + $0x68] sm:$0xff]
  %v5745 = vld [vmem:[%s5730 + $0x70] sm:$0xff]
  %v5746 = vld [vmem:[%s5730 + $0x78] sm:$0xff]
  %5747 = vmatprep.subr.mxu0 0.0
  %5748 = vmatpush1.msra.mxu0 %v5731
  %5749 = vmatprep.subr.mxu0 0.0
  %5750 = vmatpush1.msra.mxu0 %v5732
  %5751 = vmatprep.subr.mxu0 0.0
  %5752 = vmatpush1.msra.mxu0 %v5733
  %5753 = vmatprep.subr.mxu0 0.0
  %5754 = vmatpush1.msra.mxu0 %v5734
  %5755 = vmatprep.subr.mxu0 0.0
  %5756 = vmatpush1.msra.mxu0 %v5735
  %5757 = vmatprep.subr.mxu0 0.0
  %5758 = vmatpush1.msra.mxu0 %v5736
  %5759 = vmatprep.subr.mxu0 0.0
  %5760 = vmatpush1.msra.mxu0 %v5737
  %5761 = vmatprep.subr.mxu0 0.0
  %5762 = vmatpush1.msra.mxu0 %v5738
  %5763 = vmatprep.subr.mxu0 0.0
  %5764 = vmatpush1.msra.mxu0 %v5739
  %5765 = vmatprep.subr.mxu0 0.0
  %5766 = vmatpush1.msra.mxu0 %v5740
  %5767 = vmatprep.subr.mxu0 0.0
  %5768 = vmatpush1.msra.mxu0 %v5741
  %5769 = vmatprep.subr.mxu0 0.0
  %5770 = vmatpush1.msra.mxu0 %v5742
  %5771 = vmatprep.subr.mxu0 0.0
  %5772 = vmatpush1.msra.mxu0 %v5743
  %5773 = vmatprep.subr.mxu0 0.0
  %5774 = vmatpush1.msra.mxu0 %v5744
  %5775 = vmatprep.subr.mxu0 0.0
  %5776 = vmatpush1.msra.mxu0 %v5745
  %5777 = vmatprep.subr.mxu0 0.0
  %5778 = vmatpush1.msra.mxu0 %v5746
  %5779 = vmatprep.subr.mxu0 0.0
  %5780 = vmatpush1.msra.mxu0 0.0
  %5781 = vmatprep.subr.mxu0 0.0
  %5782 = vmatpush1.msra.mxu0 0.0
  %5783 = vmatprep.subr.mxu0 0.0
  %5784 = vmatpush1.msra.mxu0 0.0
  %5785 = vmatprep.subr.mxu0 0.0
  %5786 = vmatpush1.msra.mxu0 0.0
  %5787 = vmatprep.subr.mxu0 0.0
  %5788 = vmatpush1.msra.mxu0 0.0
  %5789 = vmatprep.subr.mxu0 0.0
  %5790 = vmatpush1.msra.mxu0 0.0
  %5791 = vmatprep.subr.mxu0 0.0
  %5792 = vmatpush1.msra.mxu0 0.0
  %5793 = vmatprep.subr.mxu0 0.0
  %5794 = vmatpush1.msra.mxu0 0.0
  %5795 = vmatprep.subr.mxu0 0.0
  %5796 = vmatpush1.msra.mxu0 0.0
  %5797 = vmatprep.subr.mxu0 0.0
  %5798 = vmatpush1.msra.mxu0 0.0
  %5799 = vmatprep.subr.mxu0 0.0
  %5800 = vmatpush1.msra.mxu0 0.0
  %5801 = vmatprep.subr.mxu0 0.0
  %5802 = vmatpush1.msra.mxu0 0.0
  %5803 = vmatprep.subr.mxu0 0.0
  %5804 = vmatpush1.msra.mxu0 0.0
  %5805 = vmatprep.subr.mxu0 0.0
  %5806 = vmatpush1.msra.mxu0 0.0
  %5807 = vmatprep.subr.mxu0 0.0
  %5808 = vmatpush1.msra.mxu0 0.0
  %5809 = vmatprep.subr.mxu0 0.0
  %5810 = vmatpush1.msra.mxu0 0.0
  %5811 = vmatprep.mubr.f32.mxu0 0.0
  %5812 = vmatmul.mubr.f32.gmra.mrb[0].mxu0 %v5706
  %v5813 = vpop.f32.mrb[0].mxu0
  %v5814 = vadd.f32 0.0, %v5813
  %v5815 = vpop.f32.mrb[0].mxu0
  %5816 = vmatprep.mubr.f32.mxu0 0.0
  %5817 = vmatmul.mubr.f32.gmra.mrb[0].mxu0 %v5707
  %v5818 = vpop.f32.mrb[0].mxu0
  %v5819 = vadd.f32 0.0, %v5818
  %v5820 = vpop.f32.mrb[0].mxu0
  %5821 = vdwg.mxu0
  %5822 = vmatprep.subr.mxu0 0.0
  %5823 = vmatpush1.msra.mxu0 %v5714
  %5824 = vmatprep.subr.mxu0 0.0
  %5825 = vmatpush1.msra.mxu0 %v5715
  %5826 = vmatprep.subr.mxu0 0.0
  %5827 = vmatpush1.msra.mxu0 %v5716
  %5828 = vmatprep.subr.mxu0 0.0
  %5829 = vmatpush1.msra.mxu0 %v5717
  %5830 = vmatprep.subr.mxu0 0.0
  %5831 = vmatpush1.msra.mxu0 %v5718
  %5832 = vmatprep.subr.mxu0 0.0
  %5833 = vmatpush1.msra.mxu0 %v5719
  %5834 = vmatprep.subr.mxu0 0.0
  %5835 = vmatpush1.msra.mxu0 %v5720
  %5836 = vmatprep.subr.mxu0 0.0
  %5837 = vmatpush1.msra.mxu0 %v5721
  %5838 = vmatprep.subr.mxu0 0.0
  %5839 = vmatpush1.msra.mxu0 %v5722
  %5840 = vmatprep.subr.mxu0 0.0
  %5841 = vmatpush1.msra.mxu0 %v5723
  %5842 = vmatprep.subr.mxu0 0.0
  %5843 = vmatpush1.msra.mxu0 %v5724
  %5844 = vmatprep.subr.mxu0 0.0
  %5845 = vmatpush1.msra.mxu0 %v5725
  %5846 = vmatprep.subr.mxu0 0.0
  %5847 = vmatpush1.msra.mxu0 %v5726
  %5848 = vmatprep.subr.mxu0 0.0
  %5849 = vmatpush1.msra.mxu0 %v5727
  %5850 = vmatprep.subr.mxu0 0.0
  %5851 = vmatpush1.msra.mxu0 %v5728
  %5852 = vmatprep.subr.mxu0 0.0
  %5853 = vmatpush1.msra.mxu0 %v5729
  %5854 = vmatprep.subr.mxu0 0.0
  %5855 = vmatpush1.msra.mxu0 0.0
  %5856 = vmatprep.subr.mxu0 0.0
  %5857 = vmatpush1.msra.mxu0 0.0
  %5858 = vmatprep.subr.mxu0 0.0
  %5859 = vmatpush1.msra.mxu0 0.0
  %5860 = vmatprep.subr.mxu0 0.0
  %5861 = vmatpush1.msra.mxu0 0.0
  %5862 = vmatprep.subr.mxu0 0.0
  %5863 = vmatpush1.msra.mxu0 0.0
  %5864 = vmatprep.subr.mxu0 0.0
  %5865 = vmatpush1.msra.mxu0 0.0
  %5866 = vmatprep.subr.mxu0 0.0
  %5867 = vmatpush1.msra.mxu0 0.0
  %5868 = vmatprep.subr.mxu0 0.0
  %5869 = vmatpush1.msra.mxu0 0.0
  %5870 = vmatprep.subr.mxu0 0.0
  %5871 = vmatpush1.msra.mxu0 0.0
  %5872 = vmatprep.subr.mxu0 0.0
  %5873 = vmatpush1.msra.mxu0 0.0
  %5874 = vmatprep.subr.mxu0 0.0
  %5875 = vmatpush1.msra.mxu0 0.0
  %5876 = vmatprep.subr.mxu0 0.0
  %5877 = vmatpush1.msra.mxu0 0.0
  %5878 = vmatprep.subr.mxu0 0.0
  %5879 = vmatpush1.msra.mxu0 0.0
  %5880 = vmatprep.subr.mxu0 0.0
  %5881 = vmatpush1.msra.mxu0 0.0
  %5882 = vmatprep.subr.mxu0 0.0
  %5883 = vmatpush1.msra.mxu0 0.0
  %5884 = vmatprep.subr.mxu0 0.0
  %5885 = vmatpush1.msra.mxu0 0.0
  %5886 = vmatprep.mubr.f32.mxu0 0.0
  %5887 = vmatmul.mubr.f32.gmra.mrb[0].mxu0 %v5704
  %v5888 = vpop.f32.mrb[0].mxu0
  %v5889 = vadd.f32 %v5814, %v5888
  %v5890 = vpop.f32.mrb[0].mxu0
  %5891 = vmatprep.mubr.f32.mxu0 0.0
  %5892 = vmatmul.mubr.f32.gmra.mrb[0].mxu0 %v5705
  %v5893 = vpop.f32.mrb[0].mxu0
  %v5894 = vadd.f32 %v5819, %v5893
  %v5895 = vpop.f32.mrb[0].mxu0
  %5896 = vdwg.mxu0
  %s5897 = scalar_lea.vmem %s5, 256
  %v5898 = vld [vmem:[%s5897] sm:$0xff]
  %v5899 = vld [vmem:[%s5897 + $0x8] sm:$0xff]
  %v5900 = vld [vmem:[%s5897 + $0x10] sm:$0xff]
  %v5901 = vld [vmem:[%s5897 + $0x18] sm:$0xff]
  %v5902 = vld [vmem:[%s5897 + $0x20] sm:$0xff]
  %v5903 = vld [vmem:[%s5897 + $0x28] sm:$0xff]
  %v5904 = vld [vmem:[%s5897 + $0x30] sm:$0xff]
  %v5905 = vld [vmem:[%s5897 + $0x38] sm:$0xff]
  %v5906 = vld [vmem:[%s5897 + $0x40] sm:$0xff]
  %v5907 = vld [vmem:[%s5897 + $0x48] sm:$0xff]
  %v5908 = vld [vmem:[%s5897 + $0x50] sm:$0xff]
  %v5909 = vld [vmem:[%s5897 + $0x58] sm:$0xff]
  %v5910 = vld [vmem:[%s5897 + $0x60] sm:$0xff]
  %v5911 = vld [vmem:[%s5897 + $0x68] sm:$0xff]
  %v5912 = vld [vmem:[%s5897 + $0x70] sm:$0xff]
  %v5913 = vld [vmem:[%s5897 + $0x78] sm:$0xff]
  %5914 = vmatprep.subr.mxu0 0.0
  %5915 = vmatpush1.msra.mxu0 %v5898
  %5916 = vmatprep.subr.mxu0 0.0
  %5917 = vmatpush1.msra.mxu0 %v5899
  %5918 = vmatprep.subr.mxu0 0.0
  %5919 = vmatpush1.msra.mxu0 %v5900
  %5920 = vmatprep.subr.mxu0 0.0
  %5921 = vmatpush1.msra.mxu0 %v5901
  %5922 = vmatprep.subr.mxu0 0.0
  %5923 = vmatpush1.msra.mxu0 %v5902
  %5924 = vmatprep.subr.mxu0 0.0
  %5925 = vmatpush1.msra.mxu0 %v5903
  %5926 = vmatprep.subr.mxu0 0.0
  %5927 = vmatpush1.msra.mxu0 %v5904
  %5928 = vmatprep.subr.mxu0 0.0
  %5929 = vmatpush1.msra.mxu0 %v5905
  %5930 = vmatprep.subr.mxu0 0.0
  %5931 = vmatpush1.msra.mxu0 %v5906
  %5932 = vmatprep.subr.mxu0 0.0
  %5933 = vmatpush1.msra.mxu0 %v5907
  %5934 = vmatprep.subr.mxu0 0.0
  %5935 = vmatpush1.msra.mxu0 %v5908
  %5936 = vmatprep.subr.mxu0 0.0
  %5937 = vmatpush1.msra.mxu0 %v5909
  %5938 = vmatprep.subr.mxu0 0.0
  %5939 = vmatpush1.msra.mxu0 %v5910
  %5940 = vmatprep.subr.mxu0 0.0
  %5941 = vmatpush1.msra.mxu0 %v5911
  %5942 = vmatprep.subr.mxu0 0.0
  %5943 = vmatpush1.msra.mxu0 %v5912
  %5944 = vmatprep.subr.mxu0 0.0
  %5945 = vmatpush1.msra.mxu0 %v5913
  %5946 = vmatprep.subr.mxu0 0.0
  %5947 = vmatpush1.msra.mxu0 0.0
  %5948 = vmatprep.subr.mxu0 0.0
  %5949 = vmatpush1.msra.mxu0 0.0
  %5950 = vmatprep.subr.mxu0 0.0
  %5951 = vmatpush1.msra.mxu0 0.0
  %5952 = vmatprep.subr.mxu0 0.0
  %5953 = vmatpush1.msra.mxu0 0.0
  %5954 = vmatprep.subr.mxu0 0.0
  %5955 = vmatpush1.msra.mxu0 0.0
  %5956 = vmatprep.subr.mxu0 0.0
  %5957 = vmatpush1.msra.mxu0 0.0
  %5958 = vmatprep.subr.mxu0 0.0
  %5959 = vmatpush1.msra.mxu0 0.0
  %5960 = vmatprep.subr.mxu0 0.0
  %5961 = vmatpush1.msra.mxu0 0.0
  %5962 = vmatprep.subr.mxu0 0.0
  %5963 = vmatpush1.msra.mxu0 0.0
  %5964 = vmatprep.subr.mxu0 0.0
  %5965 = vmatpush1.msra.mxu0 0.0
  %5966 = vmatprep.subr.mxu0 0.0
  %5967 = vmatpush1.msra.mxu0 0.0
  %5968 = vmatprep.subr.mxu0 0.0
  %5969 = vmatpush1.msra.mxu0 0.0
  %5970 = vmatprep.subr.mxu0 0.0
  %5971 = vmatpush1.msra.mxu0 0.0
  %5972 = vmatprep.subr.mxu0 0.0
  %5973 = vmatpush1.msra.mxu0 0.0
  %5974 = vmatprep.subr.mxu0 0.0
  %5975 = vmatpush1.msra.mxu0 0.0
  %5976 = vmatprep.subr.mxu0 0.0
  %5977 = vmatpush1.msra.mxu0 0.0
  %5978 = vmatprep.mubr.f32.mxu0 0.0
  %5979 = vmatmul.mubr.f32.gmra.mrb[0].mxu0 %v5708
  %v5980 = vpop.f32.mrb[0].mxu0
  %v5981 = vadd.f32 0.0, %v5980
  %v5982 = vpop.f32.mrb[0].mxu0
  %5983 = vmatprep.mubr.f32.mxu0 0.0
  %5984 = vmatmul.mubr.f32.gmra.mrb[0].mxu0 %v5709
  %v5985 = vpop.f32.mrb[0].mxu0
  %v5986 = vadd.f32 0.0, %v5985
  %v5987 = vpop.f32.mrb[0].mxu0
  %5988 = vdwg.mxu0
  %v5989 = vadd.f32 %v5889, %v5981
  %v5990 = vadd.f32 %v5894, %v5986
  %s5991 = scalar_lea.vmem %s5, 384
  %v5992 = vld [vmem:[%s5991] sm:$0xff]
  %v5993 = vld [vmem:[%s5991 + $0x8] sm:$0xff]
  %v5994 = vld [vmem:[%s5991 + $0x10] sm:$0xff]
  %v5995 = vld [vmem:[%s5991 + $0x18] sm:$0xff]
  %v5996 = vld [vmem:[%s5991 + $0x20] sm:$0xff]
  %v5997 = vld [vmem:[%s5991 + $0x28] sm:$0xff]
  %v5998 = vld [vmem:[%s5991 + $0x30] sm:$0xff]
  %v5999 = vld [vmem:[%s5991 + $0x38] sm:$0xff]
  %v6000 = vld [vmem:[%s5991 + $0x40] sm:$0xff]
  %v6001 = vld [vmem:[%s5991 + $0x48] sm:$0xff]
  %v6002 = vld [vmem:[%s5991 + $0x50] sm:$0xff]
  %v6003 = vld [vmem:[%s5991 + $0x58] sm:$0xff]
  %v6004 = vld [vmem:[%s5991 + $0x60] sm:$0xff]
  %v6005 = vld [vmem:[%s5991 + $0x68] sm:$0xff]
  %v6006 = vld [vmem:[%s5991 + $0x70] sm:$0xff]
  %v6007 = vld [vmem:[%s5991 + $0x78] sm:$0xff]
  %6008 = vmatprep.subr.mxu0 0.0
  %6009 = vmatpush1.msra.mxu0 %v5992
  %6010 = vmatprep.subr.mxu0 0.0
  %6011 = vmatpush1.msra.mxu0 %v5993
  %6012 = vmatprep.subr.mxu0 0.0
  %6013 = vmatpush1.msra.mxu0 %v5994
  %6014 = vmatprep.subr.mxu0 0.0
  %6015 = vmatpush1.msra.mxu0 %v5995
  %6016 = vmatprep.subr.mxu0 0.0
  %6017 = vmatpush1.msra.mxu0 %v5996
  %6018 = vmatprep.subr.mxu0 0.0
  %6019 = vmatpush1.msra.mxu0 %v5997
  %6020 = vmatprep.subr.mxu0 0.0
  %6021 = vmatpush1.msra.mxu0 %v5998
  %6022 = vmatprep.subr.mxu0 0.0
  %6023 = vmatpush1.msra.mxu0 %v5999
  %6024 = vmatprep.subr.mxu0 0.0
  %6025 = vmatpush1.msra.mxu0 %v6000
  %6026 = vmatprep.subr.mxu0 0.0
  %6027 = vmatpush1.msra.mxu0 %v6001
  %6028 = vmatprep.subr.mxu0 0.0
  %6029 = vmatpush1.msra.mxu0 %v6002
  %6030 = vmatprep.subr.mxu0 0.0
  %6031 = vmatpush1.msra.mxu0 %v6003
  %6032 = vmatprep.subr.mxu0 0.0
  %6033 = vmatpush1.msra.mxu0 %v6004
  %6034 = vmatprep.subr.mxu0 0.0
  %6035 = vmatpush1.msra.mxu0 %v6005
  %6036 = vmatprep.subr.mxu0 0.0
  %6037 = vmatpush1.msra.mxu0 %v6006
  %6038 = vmatprep.subr.mxu0 0.0
  %6039 = vmatpush1.msra.mxu0 %v6007
  %6040 = vmatprep.subr.mxu0 0.0
  %6041 = vmatpush1.msra.mxu0 0.0
  %6042 = vmatprep.subr.mxu0 0.0
  %6043 = vmatpush1.msra.mxu0 0.0
  %6044 = vmatprep.subr.mxu0 0.0
  %6045 = vmatpush1.msra.mxu0 0.0
  %6046 = vmatprep.subr.mxu0 0.0
  %6047 = vmatpush1.msra.mxu0 0.0
  %6048 = vmatprep.subr.mxu0 0.0
  %6049 = vmatpush1.msra.mxu0 0.0
  %6050 = vmatprep.subr.mxu0 0.0
  %6051 = vmatpush1.msra.mxu0 0.0
  %6052 = vmatprep.subr.mxu0 0.0
  %6053 = vmatpush1.msra.mxu0 0.0
  %6054 = vmatprep.subr.mxu0 0.0
  %6055 = vmatpush1.msra.mxu0 0.0
  %6056 = vmatprep.subr.mxu0 0.0
  %6057 = vmatpush1.msra.mxu0 0.0
  %6058 = vmatprep.subr.mxu0 0.0
  %6059 = vmatpush1.msra.mxu0 0.0
  %6060 = vmatprep.subr.mxu0 0.0
  %6061 = vmatpush1.msra.mxu0 0.0
  %6062 = vmatprep.subr.mxu0 0.0
  %6063 = vmatpush1.msra.mxu0 0.0
  %6064 = vmatprep.subr.mxu0 0.0
  %6065 = vmatpush1.msra.mxu0 0.0
  %6066 = vmatprep.subr.mxu0 0.0
  %6067 = vmatpush1.msra.mxu0 0.0
  %6068 = vmatprep.subr.mxu0 0.0
  %6069 = vmatpush1.msra.mxu0 0.0
  %6070 = vmatprep.subr.mxu0 0.0
  %6071 = vmatpush1.msra.mxu0 0.0
  %6072 = vmatprep.mubr.f32.mxu0 0.0
  %6073 = vmatmul.mubr.f32.gmra.mrb[0].mxu0 %v5710
  %v6074 = vpop.f32.mrb[0].mxu0
  %v6075 = vadd.f32 0.0, %v6074
  %v6076 = vpop.f32.mrb[0].mxu0
  %6077 = vmatprep.mubr.f32.mxu0 0.0
  %6078 = vmatmul.mubr.f32.gmra.mrb[0].mxu0 %v5711
  %v6079 = vpop.f32.mrb[0].mxu0
  %v6080 = vadd.f32 0.0, %v6079
  %v6081 = vpop.f32.mrb[0].mxu0
  %6082 = vdwg.mxu0
  %v6083 = vadd.f32 %v5989, %v6075
  %v6084 = vadd.f32 %v5990, %v6080
  %s6085 = scalar_lea.vmem %s5, 512
  %v6086 = vld [vmem:[%s6085] sm:$0xff]
  %v6087 = vld [vmem:[%s6085 + $0x8] sm:$0xff]
  %v6088 = vld [vmem:[%s6085 + $0x10] sm:$0xff]
  %v6089 = vld [vmem:[%s6085 + $0x18] sm:$0xff]
  %v6090 = vld [vmem:[%s6085 + $0x20] sm:$0xff]
  %v6091 = vld [vmem:[%s6085 + $0x28] sm:$0xff]
  %v6092 = vld [vmem:[%s6085 + $0x30] sm:$0xff]
  %v6093 = vld [vmem:[%s6085 + $0x38] sm:$0xff]
  %v6094 = vld [vmem:[%s6085 + $0x40] sm:$0xff]
  %v6095 = vld [vmem:[%s6085 + $0x48] sm:$0xff]
  %v6096 = vld [vmem:[%s6085 + $0x50] sm:$0xff]
  %v6097 = vld [vmem:[%s6085 + $0x58] sm:$0xff]
  %v6098 = vld [vmem:[%s6085 + $0x60] sm:$0xff]
  %v6099 = vld [vmem:[%s6085 + $0x68] sm:$0xff]
  %v6100 = vld [vmem:[%s6085 + $0x70] sm:$0xff]
  %v6101 = vld [vmem:[%s6085 + $0x78] sm:$0xff]
  %6102 = vmatprep.subr.mxu0 0.0
  %6103 = vmatpush1.msra.mxu0 %v6086
  %6104 = vmatprep.subr.mxu0 0.0
  %6105 = vmatpush1.msra.mxu0 %v6087
  %6106 = vmatprep.subr.mxu0 0.0
  %6107 = vmatpush1.msra.mxu0 %v6088
  %6108 = vmatprep.subr.mxu0 0.0
  %6109 = vmatpush1.msra.mxu0 %v6089
  %6110 = vmatprep.subr.mxu0 0.0
  %6111 = vmatpush1.msra.mxu0 %v6090
  %6112 = vmatprep.subr.mxu0 0.0
  %6113 = vmatpush1.msra.mxu0 %v6091
  %6114 = vmatprep.subr.mxu0 0.0
  %6115 = vmatpush1.msra.mxu0 %v6092
  %6116 = vmatprep.subr.mxu0 0.0
  %6117 = vmatpush1.msra.mxu0 %v6093
  %6118 = vmatprep.subr.mxu0 0.0
  %6119 = vmatpush1.msra.mxu0 %v6094
  %6120 = vmatprep.subr.mxu0 0.0
  %6121 = vmatpush1.msra.mxu0 %v6095
  %6122 = vmatprep.subr.mxu0 0.0
  %6123 = vmatpush1.msra.mxu0 %v6096
  %6124 = vmatprep.subr.mxu0 0.0
  %6125 = vmatpush1.msra.mxu0 %v6097
  %6126 = vmatprep.subr.mxu0 0.0
  %6127 = vmatpush1.msra.mxu0 %v6098
  %6128 = vmatprep.subr.mxu0 0.0
  %6129 = vmatpush1.msra.mxu0 %v6099
  %6130 = vmatprep.subr.mxu0 0.0
  %6131 = vmatpush1.msra.mxu0 %v6100
  %6132 = vmatprep.subr.mxu0 0.0
  %6133 = vmatpush1.msra.mxu0 %v6101
  %6134 = vmatprep.subr.mxu0 0.0
  %6135 = vmatpush1.msra.mxu0 0.0
  %6136 = vmatprep.subr.mxu0 0.0
  %6137 = vmatpush1.msra.mxu0 0.0
  %6138 = vmatprep.subr.mxu0 0.0
  %6139 = vmatpush1.msra.mxu0 0.0
  %6140 = vmatprep.subr.mxu0 0.0
  %6141 = vmatpush1.msra.mxu0 0.0
  %6142 = vmatprep.subr.mxu0 0.0
  %6143 = vmatpush1.msra.mxu0 0.0
  %6144 = vmatprep.subr.mxu0 0.0
  %6145 = vmatpush1.msra.mxu0 0.0
  %6146 = vmatprep.subr.mxu0 0.0
  %6147 = vmatpush1.msra.mxu0 0.0
  %6148 = vmatprep.subr.mxu0 0.0
  %6149 = vmatpush1.msra.mxu0 0.0
  %6150 = vmatprep.subr.mxu0 0.0
  %6151 = vmatpush1.msra.mxu0 0.0
  %6152 = vmatprep.subr.mxu0 0.0
  %6153 = vmatpush1.msra.mxu0 0.0
  %6154 = vmatprep.subr.mxu0 0.0
  %6155 = vmatpush1.msra.mxu0 0.0
  %6156 = vmatprep.subr.mxu0 0.0
  %6157 = vmatpush1.msra.mxu0 0.0
  %6158 = vmatprep.subr.mxu0 0.0
  %6159 = vmatpush1.msra.mxu0 0.0
  %6160 = vmatprep.subr.mxu0 0.0
  %6161 = vmatpush1.msra.mxu0 0.0
  %6162 = vmatprep.subr.mxu0 0.0
  %6163 = vmatpush1.msra.mxu0 0.0
  %6164 = vmatprep.subr.mxu0 0.0
  %6165 = vmatpush1.msra.mxu0 0.0
  %6166 = vmatprep.mubr.f32.mxu0 0.0
  %6167 = vmatmul.mubr.f32.gmra.mrb[0].mxu0 %v5712
  %v6168 = vpop.f32.mrb[0].mxu0
  %v6169 = vadd.f32 0.0, %v6168
  %v6170 = vpop.f32.mrb[0].mxu0
  %6171 = vmatprep.mubr.f32.mxu0 0.0
  %6172 = vmatmul.mubr.f32.gmra.mrb[0].mxu0 %v5713
  %v6173 = vpop.f32.mrb[0].mxu0
  %v6174 = vadd.f32 0.0, %v6173
  %v6175 = vpop.f32.mrb[0].mxu0
  %6176 = vdwg.mxu0
  %v6177 = vadd.f32 %v6083, %v6169
  %v6178 = vadd.f32 %v6084, %v6174
  %v6179 = vld [vmem:[%s6] sm:$0x1]
  %v6181 = vlaneseq
  %v6182 = vshrl.u32 %v6181, 7
  %v6183 = vsub.s32 0, %v6182
  %v6184 = vrot.slane %v6179, %v6183
  %v6186 = vadd.f32 %v6177, %v6184
  %v6187 = vadd.f32 %v6178, %v6184
  %v6188 = vmax.f32 %v6186, 0.0
  %v6189 = vmax.f32 %v6187, 0.0
  %v6190 = vld [vmem:[%s7] sm:$0xff]
  %v6191 = vld [vmem:[%s7 + $0x8] sm:$0xff]
  %v6192 = vld [vmem:[%s7 + $0x10] sm:$0xff]
  %v6193 = vld [vmem:[%s7 + $0x18] sm:$0xff]
  %v6194 = vld [vmem:[%s7 + $0x20] sm:$0xff]
  %v6195 = vld [vmem:[%s7 + $0x28] sm:$0xff]
  %v6196 = vld [vmem:[%s7 + $0x30] sm:$0xff]
  %v6197 = vld [vmem:[%s7 + $0x38] sm:$0xff]
  %v6198 = vld [vmem:[%s7 + $0x40] sm:$0xff]
  %v6199 = vld [vmem:[%s7 + $0x48] sm:$0xff]
  %v6200 = vld [vmem:[%s7 + $0x50] sm:$0xff]
  %v6201 = vld [vmem:[%s7 + $0x58] sm:$0xff]
  %v6202 = vld [vmem:[%s7 + $0x60] sm:$0xff]
  %v6203 = vld [vmem:[%s7 + $0x68] sm:$0xff]
  %v6204 = vld [vmem:[%s7 + $0x70] sm:$0xff]
  %v6205 = vld [vmem:[%s7 + $0x78] sm:$0xff]
  %v6206 = vld [vmem:[%s8] sm:$0x1]
  %v6208 = vlaneseq
  %v6209 = vshrl.u32 %v6208, 7
  %v6210 = vsub.s32 0, %v6209
  %v6211 = vrot.slane %v6206, %v6210
  %6213 = vmatprep.subr.mxu0 0.0
  %6214 = vmatpush1.msra.mxu0 %v6190
  %6215 = vmatprep.subr.mxu0 0.0
  %6216 = vmatpush1.msra.mxu0 %v6191
  %6217 = vmatprep.subr.mxu0 0.0
  %6218 = vmatpush1.msra.mxu0 %v6192
  %6219 = vmatprep.subr.mxu0 0.0
  %6220 = vmatpush1.msra.mxu0 %v6193
  %6221 = vmatprep.subr.mxu0 0.0
  %6222 = vmatpush1.msra.mxu0 %v6194
  %6223 = vmatprep.subr.mxu0 0.0
  %6224 = vmatpush1.msra.mxu0 %v6195
  %6225 = vmatprep.subr.mxu0 0.0
  %6226 = vmatpush1.msra.mxu0 %v6196
  %6227 = vmatprep.subr.mxu0 0.0
  %6228 = vmatpush1.msra.mxu0 %v6197
  %6229 = vmatprep.subr.mxu0 0.0
  %6230 = vmatpush1.msra.mxu0 %v6198
  %6231 = vmatprep.subr.mxu0 0.0
  %6232 = vmatpush1.msra.mxu0 %v6199
  %6233 = vmatprep.subr.mxu0 0.0
  %6234 = vmatpush1.msra.mxu0 %v6200
  %6235 = vmatprep.subr.mxu0 0.0
  %6236 = vmatpush1.msra.mxu0 %v6201
  %6237 = vmatprep.subr.mxu0 0.0
  %6238 = vmatpush1.msra.mxu0 %v6202
  %6239 = vmatprep.subr.mxu0 0.0
  %6240 = vmatpush1.msra.mxu0 %v6203
  %6241 = vmatprep.subr.mxu0 0.0
  %6242 = vmatpush1.msra.mxu0 %v6204
  %6243 = vmatprep.subr.mxu0 0.0
  %6244 = vmatpush1.msra.mxu0 %v6205
  %6245 = vmatprep.subr.mxu0 0.0
  %6246 = vmatpush1.msra.mxu0 0.0
  %6247 = vmatprep.subr.mxu0 0.0
  %6248 = vmatpush1.msra.mxu0 0.0
  %6249 = vmatprep.subr.mxu0 0.0
  %6250 = vmatpush1.msra.mxu0 0.0
  %6251 = vmatprep.subr.mxu0 0.0
  %6252 = vmatpush1.msra.mxu0 0.0
  %6253 = vmatprep.subr.mxu0 0.0
  %6254 = vmatpush1.msra.mxu0 0.0
  %6255 = vmatprep.subr.mxu0 0.0
  %6256 = vmatpush1.msra.mxu0 0.0
  %6257 = vmatprep.subr.mxu0 0.0
  %6258 = vmatpush1.msra.mxu0 0.0
  %6259 = vmatprep.subr.mxu0 0.0
  %6260 = vmatpush1.msra.mxu0 0.0
  %6261 = vmatprep.subr.mxu0 0.0
  %6262 = vmatpush1.msra.mxu0 0.0
  %6263 = vmatprep.subr.mxu0 0.0
  %6264 = vmatpush1.msra.mxu0 0.0
  %6265 = vmatprep.subr.mxu0 0.0
  %6266 = vmatpush1.msra.mxu0 0.0
  %6267 = vmatprep.subr.mxu0 0.0
  %6268 = vmatpush1.msra.mxu0 0.0
  %6269 = vmatprep.subr.mxu0 0.0
  %6270 = vmatpush1.msra.mxu0 0.0
  %6271 = vmatprep.subr.mxu0 0.0
  %6272 = vmatpush1.msra.mxu0 0.0
  %6273 = vmatprep.subr.mxu0 0.0
  %6274 = vmatpush1.msra.mxu0 0.0
  %6275 = vmatprep.subr.mxu0 0.0
  %6276 = vmatpush1.msra.mxu0 0.0
  %6277 = vmatprep.mubr.f32.mxu0 0.0
  %6278 = vmatmul.mubr.f32.gmra.mrb[0].mxu0 %v6188
  %v6279 = vpop.f32.mrb[0].mxu0
  %v6280 = vadd.f32 %v6211, %v6279
  %v6281 = vpop.f32.mrb[0].mxu0
  %6282 = vmatprep.mubr.f32.mxu0 0.0
  %6283 = vmatmul.mubr.f32.gmra.mrb[0].mxu0 %v6189
  %v6284 = vpop.f32.mrb[0].mxu0
  %v6285 = vadd.f32 %v6211, %v6284
  %v6286 = vpop.f32.mrb[0].mxu0
  %6287 = vdwg.mxu0
  %v6288 = vmax.f32 %v6280, 0.0
  %v6289 = vmax.f32 %v6285, 0.0
  %v6290 = vld [vmem:[%s9] sm:$0xff]
  %v6291 = vld [vmem:[%s9 + $0x8] sm:$0xff]
  %v6292 = vld [vmem:[%s9 + $0x10] sm:$0xff]
  %v6293 = vld [vmem:[%s9 + $0x18] sm:$0xff]
  %v6294 = vld [vmem:[%s9 + $0x20] sm:$0xff]
  %v6295 = vld [vmem:[%s9 + $0x28] sm:$0xff]
  %v6296 = vld [vmem:[%s9 + $0x30] sm:$0xff]
  %v6297 = vld [vmem:[%s9 + $0x38] sm:$0xff]
  %v6298 = vld [vmem:[%s9 + $0x40] sm:$0xff]
  %v6299 = vld [vmem:[%s9 + $0x48] sm:$0xff]
  %v6300 = vld [vmem:[%s9 + $0x50] sm:$0xff]
  %v6301 = vld [vmem:[%s9 + $0x58] sm:$0xff]
  %v6302 = vld [vmem:[%s9 + $0x60] sm:$0xff]
  %v6303 = vld [vmem:[%s9 + $0x68] sm:$0xff]
  %v6304 = vld [vmem:[%s9 + $0x70] sm:$0xff]
  %v6305 = vld [vmem:[%s9 + $0x78] sm:$0xff]
  %v6306 = vld [vmem:[%s10] sm:$0x1]
  %v6308 = vlaneseq
  %v6309 = vshrl.u32 %v6308, 7
  %v6310 = vsub.s32 0, %v6309
  %v6311 = vrot.slane %v6306, %v6310
  %6313 = vmatprep.subr.mxu0 0.0
  %6314 = vmatpush1.msra.mxu0 %v6290
  %6315 = vmatprep.subr.mxu0 0.0
  %6316 = vmatpush1.msra.mxu0 %v6291
  %6317 = vmatprep.subr.mxu0 0.0
  %6318 = vmatpush1.msra.mxu0 %v6292
  %6319 = vmatprep.subr.mxu0 0.0
  %6320 = vmatpush1.msra.mxu0 %v6293
  %6321 = vmatprep.subr.mxu0 0.0
  %6322 = vmatpush1.msra.mxu0 %v6294
  %6323 = vmatprep.subr.mxu0 0.0
  %6324 = vmatpush1.msra.mxu0 %v6295
  %6325 = vmatprep.subr.mxu0 0.0
  %6326 = vmatpush1.msra.mxu0 %v6296
  %6327 = vmatprep.subr.mxu0 0.0
  %6328 = vmatpush1.msra.mxu0 %v6297
  %6329 = vmatprep.subr.mxu0 0.0
  %6330 = vmatpush1.msra.mxu0 %v6298
  %6331 = vmatprep.subr.mxu0 0.0
  %6332 = vmatpush1.msra.mxu0 %v6299
  %6333 = vmatprep.subr.mxu0 0.0
  %6334 = vmatpush1.msra.mxu0 %v6300
  %6335 = vmatprep.subr.mxu0 0.0
  %6336 = vmatpush1.msra.mxu0 %v6301
  %6337 = vmatprep.subr.mxu0 0.0
  %6338 = vmatpush1.msra.mxu0 %v6302
  %6339 = vmatprep.subr.mxu0 0.0
  %6340 = vmatpush1.msra.mxu0 %v6303
  %6341 = vmatprep.subr.mxu0 0.0
  %6342 = vmatpush1.msra.mxu0 %v6304
  %6343 = vmatprep.subr.mxu0 0.0
  %6344 = vmatpush1.msra.mxu0 %v6305
  %6345 = vmatprep.subr.mxu0 0.0
  %6346 = vmatpush1.msra.mxu0 0.0
  %6347 = vmatprep.subr.mxu0 0.0
  %6348 = vmatpush1.msra.mxu0 0.0
  %6349 = vmatprep.subr.mxu0 0.0
  %6350 = vmatpush1.msra.mxu0 0.0
  %6351 = vmatprep.subr.mxu0 0.0
  %6352 = vmatpush1.msra.mxu0 0.0
  %6353 = vmatprep.subr.mxu0 0.0
  %6354 = vmatpush1.msra.mxu0 0.0
  %6355 = vmatprep.subr.mxu0 0.0
  %6356 = vmatpush1.msra.mxu0 0.0
  %6357 = vmatprep.subr.mxu0 0.0
  %6358 = vmatpush1.msra.mxu0 0.0
  %6359 = vmatprep.subr.mxu0 0.0
  %6360 = vmatpush1.msra.mxu0 0.0
  %6361 = vmatprep.subr.mxu0 0.0
  %6362 = vmatpush1.msra.mxu0 0.0
  %6363 = vmatprep.subr.mxu0 0.0
  %6364 = vmatpush1.msra.mxu0 0.0
  %6365 = vmatprep.subr.mxu0 0.0
  %6366 = vmatpush1.msra.mxu0 0.0
  %6367 = vmatprep.subr.mxu0 0.0
  %6368 = vmatpush1.msra.mxu0 0.0
  %6369 = vmatprep.subr.mxu0 0.0
  %6370 = vmatpush1.msra.mxu0 0.0
  %6371 = vmatprep.subr.mxu0 0.0
  %6372 = vmatpush1.msra.mxu0 0.0
  %6373 = vmatprep.subr.mxu0 0.0
  %6374 = vmatpush1.msra.mxu0 0.0
  %6375 = vmatprep.subr.mxu0 0.0
  %6376 = vmatpush1.msra.mxu0 0.0
  %6377 = vmatprep.mubr.f32.mxu0 0.0
  %6378 = vmatmul.mubr.f32.gmra.mrb[0].mxu0 %v6288
  %v6379 = vpop.f32.mrb[0].mxu0
  %v6380 = vadd.f32 %v6311, %v6379
  %v6381 = vpop.f32.mrb[0].mxu0
  %6382 = vmatprep.mubr.f32.mxu0 0.0
  %6383 = vmatmul.mubr.f32.gmra.mrb[0].mxu0 %v6289
  %v6384 = vpop.f32.mrb[0].mxu0
  %v6385 = vadd.f32 %v6311, %v6384
  %v6386 = vpop.f32.mrb[0].mxu0
  %6387 = vdwg.mxu0
  %6388 = vst [vmem:[%s11] sm:$0xff] %v6380
  %6389 = vst [vmem:[%s11 + $0x8] sm:$0xff] %v6385
  // Predicated region
  $region46: #{lenet_apply.1} parent=0 // pred_check
    _
  $region47: #{lenet_apply.1} parent=0 // pred_check_branch
    %6391 = sbr.rel (0) target = $region49
  $region48: #{lenet_apply.1} parent=0 // pred_region
    _
  $region49: #{lenet_apply.1} parent=0 // pred_fallthru
    _
  // Predicated region
  $region50: #{lenet_apply.1} parent=0 // pred_check
    _
  $region51: #{lenet_apply.1} parent=0 // pred_check_branch
    %6393 = sbr.rel (0) target = $region53
  $region52: #{lenet_apply.1} parent=0 // pred_region
    _
  $region53: #{lenet_apply.1} parent=0 // pred_fallthru
    _

</llo_original>
